<compile_context>
chip_gen: v6e
topology: v6e:2x2x1
jax: 0.10.0
libtpu: 0.0.40
codegen_flags: <defaults>
</compile_context>

<pallas_src>
import jax
import jax.numpy as jnp
from jax import lax
from jax.experimental import pallas as pl
from jax.experimental.pallas import tpu as pltpu

# -- module hyper-parameters (from the PyTorch module's globals) --
N_EMBD = 384                  # n_embd
N_HEAD = 6                    # num_heads
HEAD_SIZE = N_EMBD // N_HEAD  # 64 (head_size * num_heads == n_embd)
BLOCK_SIZE = 128              # block_size (max sequence length / tril size)
B_TILE = 2                    # sequences per grid step


def mha_kernel(x_ref, wqkv_ref, wproj_ref, bproj_ref, out_ref, att_ref):
    """One grid step processes B_TILE sequences of (T, C)."""
    Bt, T, C = x_ref.shape
    H, HS = N_HEAD, HEAD_SIZE
    M = Bt * T

    # flatten batch rows -> (M, C); cast activations to bf16 for the MXU
    x = x_ref[...].reshape(M, C).astype(jnp.bfloat16)

    # ---- fused q/k/v projection for all heads: one lane-dense matmul ----
    # wqkv column layout: [(q|k|v) major, head, head_dim] -> col = (s*H + h)*HS + d
    qkv = jnp.dot(x, wqkv_ref[...], preferred_element_type=jnp.float32)   # (M, 3*H*HS)

    def head_slice(s, h):   # contiguous 64-lane slice -> (Bt, T, HS) bf16
        start = (s * H + h) * HS
        return qkv[:, start:start + HS].reshape(Bt, T, HS).astype(jnp.bfloat16)

    # causal mask tril[:T, :T], shared by all heads
    row = lax.broadcasted_iota(jnp.int32, (T, T), 0)
    col = lax.broadcasted_iota(jnp.int32, (T, T), 1)
    causal = (col <= row)[None]                     # (1, T, T)
    scale = jnp.bfloat16(HS ** -0.5)                # 0.125, exact power of two

    # ---- per-head causal attention, batched over the batch-tile dim ----
    for h in range(H):                              # static unroll over heads
        q = head_slice(0, h) * scale                # fold scale into q (lossless)
        k = head_slice(1, h)
        v = head_slice(2, h)
        wei = jnp.einsum('bqd,bkd->bqk', q, k,
                         preferred_element_type=jnp.float32)              # (Bt, T, T)
        wei = jnp.where(causal, wei, -jnp.inf)      # -inf safe in f32 (diag unmasked)
        m = jnp.max(wei, axis=-1, keepdims=True)
        e = jnp.exp(wei - m)
        p = e * pl.reciprocal(jnp.sum(e, axis=-1, keepdims=True), approx=True)
        o = jnp.einsum('bqk,bkd->bqd', p.astype(jnp.bfloat16), v,
                       preferred_element_type=jnp.float32)                # (Bt, T, HS)
        # write head output into its static lane slice (no concatenate relayout)
        att_ref[:, h * HS:(h + 1) * HS] = o.reshape(M, HS).astype(jnp.bfloat16)

    # ---- output projection (lane-dense (M,384)@(384,384)) + bias ----
    out = jnp.dot(att_ref[...], wproj_ref[...],
                  preferred_element_type=jnp.float32) + bproj_ref[0]
    out_ref[...] = out.reshape(Bt, T, C).astype(out_ref.dtype)


def mha_forward(x, wqkv, wproj, bproj):
    B, T, C = x.shape
    assert C == N_EMBD and T <= BLOCK_SIZE and B % B_TILE == 0

    return pl.pallas_call(
        mha_kernel,
        out_shape=jax.ShapeDtypeStruct((B, T, C), jnp.float32),
        grid=(B // B_TILE,),
        in_specs=[
            pl.BlockSpec((B_TILE, T, C), lambda b: (b, 0, 0)),
            # constant index maps: weight blocks are not re-fetched across steps
            pl.BlockSpec(wqkv.shape, lambda b: (0, 0)),
            pl.BlockSpec(wproj.shape, lambda b: (0, 0)),
            pl.BlockSpec(bproj.shape, lambda b: (0, 0)),
        ],
        out_specs=pl.BlockSpec((B_TILE, T, C), lambda b: (b, 0, 0)),
        scratch_shapes=[pltpu.VMEM((B_TILE * T, N_EMBD), jnp.bfloat16)],
        compiler_params=pltpu.CompilerParams(dimension_semantics=("parallel",)),
    )(x, wqkv, wproj, bproj)


# ---------------- parameter construction (deterministic) ----------------
def init_params(key):
    C, H, HS = N_EMBD, N_HEAD, HEAD_SIZE
    keys = jax.random.split(key, 3 * H + 2)

    def lin_w(k, fan_in, fan_out):
        bound = fan_in ** -0.5          # nn.Linear default init bound
        return jax.random.uniform(k, (fan_in, fan_out), jnp.float32, -bound, bound)

    wq = jnp.stack([lin_w(keys[i], C, HS) for i in range(H)])          # (H, C, HS)
    wk = jnp.stack([lin_w(keys[H + i], C, HS) for i in range(H)])      # (H, C, HS)
    wv = jnp.stack([lin_w(keys[2 * H + i], C, HS) for i in range(H)])  # (H, C, HS)
    wproj = lin_w(keys[3 * H], H * HS, C)                              # (C, C)
    bound = (H * HS) ** -0.5
    bproj = jax.random.uniform(keys[3 * H + 1], (1, C), jnp.float32, -bound, bound)
    return wq, wk, wv, wproj, bproj


def fuse_params(wq, wk, wv, wproj, bproj):
    """Fuse per-head q/k/v weights into one (C, 3*H*HS) matrix and pre-cast to bf16."""
    C, H, HS = N_EMBD, N_HEAD, HEAD_SIZE
    # (3, H, C, HS) -> (C, 3, H, HS) -> (C, 3*H*HS); matches kernel head_slice indexing
    wqkv = jnp.stack([wq, wk, wv], axis=0).transpose(2, 0, 1, 3).reshape(C, 3 * H * HS)
    return wqkv.astype(jnp.bfloat16), wproj.astype(jnp.bfloat16), bproj


# ---------------- pure-JAX reference (f32, for sanity check) ----------------
def reference(x, wq, wk, wv, wproj, bproj):
    T = x.shape[1]
    mask = jnp.tril(jnp.ones((T, T), bool))
    outs = []
    for h in range(N_HEAD):
        q = x @ wq[h]
        k = x @ wk[h]
        v = x @ wv[h]
        wei = jnp.einsum('btd,bsd->bts', q, k) * HEAD_SIZE ** -0.5
        wei = jnp.where(mask, wei, -jnp.inf)
        outs.append(jax.nn.softmax(wei, axis=-1) @ v)
    att = jnp.concatenate(outs, axis=-1)
    return att @ wproj + bproj[0]


if __name__ == "__main__":
    key = jax.random.PRNGKey(0)
    kp, kx = jax.random.split(key)
    wq, wk, wv, wproj, bproj = init_params(kp)
    wqkv_b, wproj_b, bproj_f = fuse_params(wq, wk, wv, wproj, bproj)

    B, T = 4, BLOCK_SIZE                       # T <= block_size
    x = jax.random.normal(kx, (B, T, N_EMBD), jnp.float32)

    out = jax.block_until_ready(mha_forward(x, wqkv_b, wproj_b, bproj_f))
    ref = reference(x, wq, wk, wv, wproj, bproj)

    assert out.shape == (B, T, N_EMBD)
    assert bool(jnp.all(jnp.isfinite(out)))
    assert bool(jnp.allclose(out, ref, rtol=5e-2, atol=5e-2))
    print("KERNEL_OK")
</pallas_src>

<mosaic_0001>
module attributes {stable_mosaic.version = 11 : i64} {
  func.func @mha_kernel(%arg0: i32, %arg1: memref<2x128x384xf32, #tpu.memory_space<vmem>>, %arg2: memref<384x1152xbf16, #tpu.memory_space<vmem>>, %arg3: memref<384x384xbf16, #tpu.memory_space<vmem>>, %arg4: memref<1x384xf32, #tpu.memory_space<vmem>>, %arg5: memref<2x128x384xf32, #tpu.memory_space<vmem>>, %arg6: memref<256x384xbf16, #tpu.memory_space<vmem>>) attributes {dimension_semantics = [#tpu.dimension_semantics<parallel>], iteration_bounds = array<i64: 2>, scalar_prefetch = 0 : i64, scratch_operands = 1 : i64, tpu.core_type = #tpu.core_type<tc>, window_params = [{transform_indices = @transform_0, window_bounds = array<i64: 2, 128, 384>}, {pipeline_mode = #tpu.pipeline_mode<synchronous>, transform_indices = @transform_1, window_bounds = array<i64: 384, 1152>}, {pipeline_mode = #tpu.pipeline_mode<synchronous>, transform_indices = @transform_2, window_bounds = array<i64: 384, 384>}, {pipeline_mode = #tpu.pipeline_mode<synchronous>, transform_indices = @transform_3, window_bounds = array<i64: 1, 384>}, {transform_indices = @transform_4, window_bounds = array<i64: 2, 128, 384>}]} {
    %c0 = arith.constant 0 : index
    %c0_0 = arith.constant 0 : index
    %c0_1 = arith.constant 0 : index
    %0 = vector.load %arg1[%c0, %c0_0, %c0_1] : memref<2x128x384xf32, #tpu.memory_space<vmem>>, vector<2x128x384xf32>
    %1 = vector.shape_cast %0 : vector<2x128x384xf32> to vector<256x384xf32>
    %2 = arith.truncf %1 : vector<256x384xf32> to vector<256x384xbf16>
    %c0_2 = arith.constant 0 : index
    %c0_3 = arith.constant 0 : index
    %3 = vector.load %arg2[%c0_2, %c0_3] : memref<384x1152xbf16, #tpu.memory_space<vmem>>, vector<384x1152xbf16>
    %cst = arith.constant dense<0.000000e+00> : vector<256x1152xf32>
    %4 = tpu.matmul %2, %3, %cst {dimension_numbers = #tpu.dot_dimension_numbers<[1], [0], [0], [1], [0, 0, 1, 1], [], []>} : vector<256x384xbf16>, vector<384x1152xbf16>, vector<256x1152xf32> -> vector<256x1152xf32>
    %5 = tpu.iota {dimensions = array<i32: 0>} : vector<128x128xi32>
    %6 = tpu.iota {dimensions = array<i32: 1>} : vector<128x128xi32>
    %7 = arith.cmpi sle, %6, %5 : vector<128x128xi32>
    %8 = vector.shape_cast %7 : vector<128x128xi1> to vector<1x128x128xi1>
    %9 = vector.extract_strided_slice %4 {offsets = [0, 0], sizes = [256, 64], strides = [1, 1]} : vector<256x1152xf32> to vector<256x64xf32>
    %10 = vector.shape_cast %9 : vector<256x64xf32> to vector<2x128x64xf32>
    %11 = arith.truncf %10 : vector<2x128x64xf32> to vector<2x128x64xbf16>
    %cst_4 = arith.constant 1.250000e-01 : bf16
    %12 = vector.broadcast %cst_4 : bf16 to vector<2x128x64xbf16>
    %13 = arith.mulf %11, %12 : vector<2x128x64xbf16>
    %14 = vector.extract_strided_slice %4 {offsets = [0, 384], sizes = [256, 64], strides = [1, 1]} : vector<256x1152xf32> to vector<256x64xf32>
    %15 = vector.shape_cast %14 : vector<256x64xf32> to vector<2x128x64xf32>
    %16 = arith.truncf %15 : vector<2x128x64xf32> to vector<2x128x64xbf16>
    %17 = vector.extract_strided_slice %4 {offsets = [0, 768], sizes = [256, 64], strides = [1, 1]} : vector<256x1152xf32> to vector<256x64xf32>
    %18 = vector.shape_cast %17 : vector<256x64xf32> to vector<2x128x64xf32>
    %19 = arith.truncf %18 : vector<2x128x64xf32> to vector<2x128x64xbf16>
    "tpu.trace_start"() <{level = 10 : i32, message = "bqd,bkd->bqk"}> : () -> ()
    %cst_5 = arith.constant dense<0.000000e+00> : vector<2x128x128xf32>
    %20 = tpu.matmul %13, %16, %cst_5 {dimension_numbers = #tpu.dot_dimension_numbers<[2], [2], [1], [1], [0, 0, 0, 1, 1, 1], [0], [0]>} : vector<2x128x64xbf16>, vector<2x128x64xbf16>, vector<2x128x128xf32> -> vector<2x128x128xf32>
    %cst_6 = arith.constant 0xFF800000 : f32
    "tpu.trace_stop"() : () -> ()
    %21 = vector.shape_cast %8 : vector<1x128x128xi1> to vector<1x128x128xi1>
    %22 = vector.broadcast %21 : vector<1x128x128xi1> to vector<2x128x128xi1>
    %23 = vector.broadcast %cst_6 : f32 to vector<2x128x128xf32>
    %24 = arith.select %22, %20, %23 : vector<2x128x128xi1>, vector<2x128x128xf32>
    %cst_7 = arith.constant dense<0xFF800000> : vector<2x128xf32>
    %25 = vector.multi_reduction <maximumf>, %24, %cst_7 [2] : vector<2x128x128xf32> to vector<2x128xf32>
    %26 = vector.shape_cast %25 : vector<2x128xf32> to vector<2x128x1xf32>
    %27 = vector.broadcast %26 : vector<2x128x1xf32> to vector<2x128x128xf32>
    %28 = arith.subf %24, %27 : vector<2x128x128xf32>
    %29 = math.exp %28 : vector<2x128x128xf32>
    %cst_8 = arith.constant dense<0.000000e+00> : vector<2x128xf32>
    %30 = vector.multi_reduction <add>, %29, %cst_8 [2] : vector<2x128x128xf32> to vector<2x128xf32>
    %31 = vector.shape_cast %30 : vector<2x128xf32> to vector<2x128x1xf32>
    %32 = tpu.reciprocal %31 {approx = true} : vector<2x128x1xf32> -> vector<2x128x1xf32>
    %33 = vector.broadcast %32 : vector<2x128x1xf32> to vector<2x128x128xf32>
    %34 = arith.mulf %29, %33 : vector<2x128x128xf32>
    %35 = arith.truncf %34 : vector<2x128x128xf32> to vector<2x128x128xbf16>
    "tpu.trace_start"() <{level = 10 : i32, message = "bqk,bkd->bqd"}> : () -> ()
    %cst_9 = arith.constant dense<0.000000e+00> : vector<2x128x64xf32>
    %36 = tpu.matmul %35, %19, %cst_9 {dimension_numbers = #tpu.dot_dimension_numbers<[2], [1], [1], [2], [0, 0, 0, 1, 1, 2], [0], [0]>} : vector<2x128x128xbf16>, vector<2x128x64xbf16>, vector<2x128x64xf32> -> vector<2x128x64xf32>
    "tpu.trace_stop"() : () -> ()
    %37 = vector.shape_cast %36 : vector<2x128x64xf32> to vector<256x64xf32>
    %38 = arith.truncf %37 : vector<256x64xf32> to vector<256x64xbf16>
    %c0_10 = arith.constant 0 : index
    %c0_11 = arith.constant 0 : index
    %39 = vector.load %arg6[%c0_10, %c0_11] : memref<256x384xbf16, #tpu.memory_space<vmem>>, vector<256x64xbf16>
    tpu.vector_store %arg6[%c0_10, %c0_11], %38 {strides = array<i32>} : memref<256x384xbf16, #tpu.memory_space<vmem>>, vector<256x64xbf16>,
    %40 = vector.extract_strided_slice %4 {offsets = [0, 64], sizes = [256, 64], strides = [1, 1]} : vector<256x1152xf32> to vector<256x64xf32>
    %41 = vector.shape_cast %40 : vector<256x64xf32> to vector<2x128x64xf32>
    %42 = arith.truncf %41 : vector<2x128x64xf32> to vector<2x128x64xbf16>
    %cst_12 = arith.constant 1.250000e-01 : bf16
    %43 = vector.broadcast %cst_12 : bf16 to vector<2x128x64xbf16>
    %44 = arith.mulf %42, %43 : vector<2x128x64xbf16>
    %45 = vector.extract_strided_slice %4 {offsets = [0, 448], sizes = [256, 64], strides = [1, 1]} : vector<256x1152xf32> to vector<256x64xf32>
    %46 = vector.shape_cast %45 : vector<256x64xf32> to vector<2x128x64xf32>
    %47 = arith.truncf %46 : vector<2x128x64xf32> to vector<2x128x64xbf16>
    %48 = vector.extract_strided_slice %4 {offsets = [0, 832], sizes = [256, 64], strides = [1, 1]} : vector<256x1152xf32> to vector<256x64xf32>
    %49 = vector.shape_cast %48 : vector<256x64xf32> to vector<2x128x64xf32>
    %50 = arith.truncf %49 : vector<2x128x64xf32> to vector<2x128x64xbf16>
    "tpu.trace_start"() <{level = 10 : i32, message = "bqd,bkd->bqk"}> : () -> ()
    %cst_13 = arith.constant dense<0.000000e+00> : vector<2x128x128xf32>
    %51 = tpu.matmul %44, %47, %cst_13 {dimension_numbers = #tpu.dot_dimension_numbers<[2], [2], [1], [1], [0, 0, 0, 1, 1, 1], [0], [0]>} : vector<2x128x64xbf16>, vector<2x128x64xbf16>, vector<2x128x128xf32> -> vector<2x128x128xf32>
    %cst_14 = arith.constant 0xFF800000 : f32
    "tpu.trace_stop"() : () -> ()
    %52 = vector.shape_cast %8 : vector<1x128x128xi1> to vector<1x128x128xi1>
    %53 = vector.broadcast %52 : vector<1x128x128xi1> to vector<2x128x128xi1>
    %54 = vector.broadcast %cst_14 : f32 to vector<2x128x128xf32>
    %55 = arith.select %53, %51, %54 : vector<2x128x128xi1>, vector<2x128x128xf32>
    %cst_15 = arith.constant dense<0xFF800000> : vector<2x128xf32>
    %56 = vector.multi_reduction <maximumf>, %55, %cst_15 [2] : vector<2x128x128xf32> to vector<2x128xf32>
    %57 = vector.shape_cast %56 : vector<2x128xf32> to vector<2x128x1xf32>
    %58 = vector.broadcast %57 : vector<2x128x1xf32> to vector<2x128x128xf32>
    %59 = arith.subf %55, %58 : vector<2x128x128xf32>
    %60 = math.exp %59 : vector<2x128x128xf32>
    %cst_16 = arith.constant dense<0.000000e+00> : vector<2x128xf32>
    %61 = vector.multi_reduction <add>, %60, %cst_16 [2] : vector<2x128x128xf32> to vector<2x128xf32>
    %62 = vector.shape_cast %61 : vector<2x128xf32> to vector<2x128x1xf32>
    %63 = tpu.reciprocal %62 {approx = true} : vector<2x128x1xf32> -> vector<2x128x1xf32>
    %64 = vector.broadcast %63 : vector<2x128x1xf32> to vector<2x128x128xf32>
    %65 = arith.mulf %60, %64 : vector<2x128x128xf32>
    %66 = arith.truncf %65 : vector<2x128x128xf32> to vector<2x128x128xbf16>
    "tpu.trace_start"() <{level = 10 : i32, message = "bqk,bkd->bqd"}> : () -> ()
    %cst_17 = arith.constant dense<0.000000e+00> : vector<2x128x64xf32>
    %67 = tpu.matmul %66, %50, %cst_17 {dimension_numbers = #tpu.dot_dimension_numbers<[2], [1], [1], [2], [0, 0, 0, 1, 1, 2], [0], [0]>} : vector<2x128x128xbf16>, vector<2x128x64xbf16>, vector<2x128x64xf32> -> vector<2x128x64xf32>
    "tpu.trace_stop"() : () -> ()
    %68 = vector.shape_cast %67 : vector<2x128x64xf32> to vector<256x64xf32>
    %69 = arith.truncf %68 : vector<256x64xf32> to vector<256x64xbf16>
    %c0_18 = arith.constant 0 : index
    %c64 = arith.constant 64 : index
    %70 = vector.load %arg6[%c0_18, %c64] : memref<256x384xbf16, #tpu.memory_space<vmem>>, vector<256x64xbf16>
    tpu.vector_store %arg6[%c0_18, %c64], %69 {strides = array<i32>} : memref<256x384xbf16, #tpu.memory_space<vmem>>, vector<256x64xbf16>,
    %71 = vector.extract_strided_slice %4 {offsets = [0, 128], sizes = [256, 64], strides = [1, 1]} : vector<256x1152xf32> to vector<256x64xf32>
    %72 = vector.shape_cast %71 : vector<256x64xf32> to vector<2x128x64xf32>
    %73 = arith.truncf %72 : vector<2x128x64xf32> to vector<2x128x64xbf16>
    %cst_19 = arith.constant 1.250000e-01 : bf16
    %74 = vector.broadcast %cst_19 : bf16 to vector<2x128x64xbf16>
    %75 = arith.mulf %73, %74 : vector<2x128x64xbf16>
    %76 = vector.extract_strided_slice %4 {offsets = [0, 512], sizes = [256, 64], strides = [1, 1]} : vector<256x1152xf32> to vector<256x64xf32>
    %77 = vector.shape_cast %76 : vector<256x64xf32> to vector<2x128x64xf32>
    %78 = arith.truncf %77 : vector<2x128x64xf32> to vector<2x128x64xbf16>
    %79 = vector.extract_strided_slice %4 {offsets = [0, 896], sizes = [256, 64], strides = [1, 1]} : vector<256x1152xf32> to vector<256x64xf32>
    %80 = vector.shape_cast %79 : vector<256x64xf32> to vector<2x128x64xf32>
    %81 = arith.truncf %80 : vector<2x128x64xf32> to vector<2x128x64xbf16>
    "tpu.trace_start"() <{level = 10 : i32, message = "bqd,bkd->bqk"}> : () -> ()
    %cst_20 = arith.constant dense<0.000000e+00> : vector<2x128x128xf32>
    %82 = tpu.matmul %75, %78, %cst_20 {dimension_numbers = #tpu.dot_dimension_numbers<[2], [2], [1], [1], [0, 0, 0, 1, 1, 1], [0], [0]>} : vector<2x128x64xbf16>, vector<2x128x64xbf16>, vector<2x128x128xf32> -> vector<2x128x128xf32>
    %cst_21 = arith.constant 0xFF800000 : f32
    "tpu.trace_stop"() : () -> ()
    %83 = vector.shape_cast %8 : vector<1x128x128xi1> to vector<1x128x128xi1>
    %84 = vector.broadcast %83 : vector<1x128x128xi1> to vector<2x128x128xi1>
    %85 = vector.broadcast %cst_21 : f32 to vector<2x128x128xf32>
    %86 = arith.select %84, %82, %85 : vector<2x128x128xi1>, vector<2x128x128xf32>
    %cst_22 = arith.constant dense<0xFF800000> : vector<2x128xf32>
    %87 = vector.multi_reduction <maximumf>, %86, %cst_22 [2] : vector<2x128x128xf32> to vector<2x128xf32>
    %88 = vector.shape_cast %87 : vector<2x128xf32> to vector<2x128x1xf32>
    %89 = vector.broadcast %88 : vector<2x128x1xf32> to vector<2x128x128xf32>
    %90 = arith.subf %86, %89 : vector<2x128x128xf32>
    %91 = math.exp %90 : vector<2x128x128xf32>
    %cst_23 = arith.constant dense<0.000000e+00> : vector<2x128xf32>
    %92 = vector.multi_reduction <add>, %91, %cst_23 [2] : vector<2x128x128xf32> to vector<2x128xf32>
    %93 = vector.shape_cast %92 : vector<2x128xf32> to vector<2x128x1xf32>
    %94 = tpu.reciprocal %93 {approx = true} : vector<2x128x1xf32> -> vector<2x128x1xf32>
    %95 = vector.broadcast %94 : vector<2x128x1xf32> to vector<2x128x128xf32>
    %96 = arith.mulf %91, %95 : vector<2x128x128xf32>
    %97 = arith.truncf %96 : vector<2x128x128xf32> to vector<2x128x128xbf16>
    "tpu.trace_start"() <{level = 10 : i32, message = "bqk,bkd->bqd"}> : () -> ()
    %cst_24 = arith.constant dense<0.000000e+00> : vector<2x128x64xf32>
    %98 = tpu.matmul %97, %81, %cst_24 {dimension_numbers = #tpu.dot_dimension_numbers<[2], [1], [1], [2], [0, 0, 0, 1, 1, 2], [0], [0]>} : vector<2x128x128xbf16>, vector<2x128x64xbf16>, vector<2x128x64xf32> -> vector<2x128x64xf32>
    "tpu.trace_stop"() : () -> ()
    %99 = vector.shape_cast %98 : vector<2x128x64xf32> to vector<256x64xf32>
    %100 = arith.truncf %99 : vector<256x64xf32> to vector<256x64xbf16>
    %c0_25 = arith.constant 0 : index
    %c128 = arith.constant 128 : index
    %101 = vector.load %arg6[%c0_25, %c128] : memref<256x384xbf16, #tpu.memory_space<vmem>>, vector<256x64xbf16>
    tpu.vector_store %arg6[%c0_25, %c128], %100 {strides = array<i32>} : memref<256x384xbf16, #tpu.memory_space<vmem>>, vector<256x64xbf16>,
    %102 = vector.extract_strided_slice %4 {offsets = [0, 192], sizes = [256, 64], strides = [1, 1]} : vector<256x1152xf32> to vector<256x64xf32>
    %103 = vector.shape_cast %102 : vector<256x64xf32> to vector<2x128x64xf32>
    %104 = arith.truncf %103 : vector<2x128x64xf32> to vector<2x128x64xbf16>
    %cst_26 = arith.constant 1.250000e-01 : bf16
    %105 = vector.broadcast %cst_26 : bf16 to vector<2x128x64xbf16>
    %106 = arith.mulf %104, %105 : vector<2x128x64xbf16>
    %107 = vector.extract_strided_slice %4 {offsets = [0, 576], sizes = [256, 64], strides = [1, 1]} : vector<256x1152xf32> to vector<256x64xf32>
    %108 = vector.shape_cast %107 : vector<256x64xf32> to vector<2x128x64xf32>
    %109 = arith.truncf %108 : vector<2x128x64xf32> to vector<2x128x64xbf16>
    %110 = vector.extract_strided_slice %4 {offsets = [0, 960], sizes = [256, 64], strides = [1, 1]} : vector<256x1152xf32> to vector<256x64xf32>
    %111 = vector.shape_cast %110 : vector<256x64xf32> to vector<2x128x64xf32>
    %112 = arith.truncf %111 : vector<2x128x64xf32> to vector<2x128x64xbf16>
    "tpu.trace_start"() <{level = 10 : i32, message = "bqd,bkd->bqk"}> : () -> ()
    %cst_27 = arith.constant dense<0.000000e+00> : vector<2x128x128xf32>
    %113 = tpu.matmul %106, %109, %cst_27 {dimension_numbers = #tpu.dot_dimension_numbers<[2], [2], [1], [1], [0, 0, 0, 1, 1, 1], [0], [0]>} : vector<2x128x64xbf16>, vector<2x128x64xbf16>, vector<2x128x128xf32> -> vector<2x128x128xf32>
    %cst_28 = arith.constant 0xFF800000 : f32
    "tpu.trace_stop"() : () -> ()
    %114 = vector.shape_cast %8 : vector<1x128x128xi1> to vector<1x128x128xi1>
    %115 = vector.broadcast %114 : vector<1x128x128xi1> to vector<2x128x128xi1>
    %116 = vector.broadcast %cst_28 : f32 to vector<2x128x128xf32>
    %117 = arith.select %115, %113, %116 : vector<2x128x128xi1>, vector<2x128x128xf32>
    %cst_29 = arith.constant dense<0xFF800000> : vector<2x128xf32>
    %118 = vector.multi_reduction <maximumf>, %117, %cst_29 [2] : vector<2x128x128xf32> to vector<2x128xf32>
    %119 = vector.shape_cast %118 : vector<2x128xf32> to vector<2x128x1xf32>
    %120 = vector.broadcast %119 : vector<2x128x1xf32> to vector<2x128x128xf32>
    %121 = arith.subf %117, %120 : vector<2x128x128xf32>
    %122 = math.exp %121 : vector<2x128x128xf32>
    %cst_30 = arith.constant dense<0.000000e+00> : vector<2x128xf32>
    %123 = vector.multi_reduction <add>, %122, %cst_30 [2] : vector<2x128x128xf32> to vector<2x128xf32>
    %124 = vector.shape_cast %123 : vector<2x128xf32> to vector<2x128x1xf32>
    %125 = tpu.reciprocal %124 {approx = true} : vector<2x128x1xf32> -> vector<2x128x1xf32>
    %126 = vector.broadcast %125 : vector<2x128x1xf32> to vector<2x128x128xf32>
    %127 = arith.mulf %122, %126 : vector<2x128x128xf32>
    %128 = arith.truncf %127 : vector<2x128x128xf32> to vector<2x128x128xbf16>
    "tpu.trace_start"() <{level = 10 : i32, message = "bqk,bkd->bqd"}> : () -> ()
    %cst_31 = arith.constant dense<0.000000e+00> : vector<2x128x64xf32>
    %129 = tpu.matmul %128, %112, %cst_31 {dimension_numbers = #tpu.dot_dimension_numbers<[2], [1], [1], [2], [0, 0, 0, 1, 1, 2], [0], [0]>} : vector<2x128x128xbf16>, vector<2x128x64xbf16>, vector<2x128x64xf32> -> vector<2x128x64xf32>
    "tpu.trace_stop"() : () -> ()
    %130 = vector.shape_cast %129 : vector<2x128x64xf32> to vector<256x64xf32>
    %131 = arith.truncf %130 : vector<256x64xf32> to vector<256x64xbf16>
    %c0_32 = arith.constant 0 : index
    %c192 = arith.constant 192 : index
    %132 = vector.load %arg6[%c0_32, %c192] : memref<256x384xbf16, #tpu.memory_space<vmem>>, vector<256x64xbf16>
    tpu.vector_store %arg6[%c0_32, %c192], %131 {strides = array<i32>} : memref<256x384xbf16, #tpu.memory_space<vmem>>, vector<256x64xbf16>,
    %133 = vector.extract_strided_slice %4 {offsets = [0, 256], sizes = [256, 64], strides = [1, 1]} : vector<256x1152xf32> to vector<256x64xf32>
    %134 = vector.shape_cast %133 : vector<256x64xf32> to vector<2x128x64xf32>
    %135 = arith.truncf %134 : vector<2x128x64xf32> to vector<2x128x64xbf16>
    %cst_33 = arith.constant 1.250000e-01 : bf16
    %136 = vector.broadcast %cst_33 : bf16 to vector<2x128x64xbf16>
    %137 = arith.mulf %135, %136 : vector<2x128x64xbf16>
    %138 = vector.extract_strided_slice %4 {offsets = [0, 640], sizes = [256, 64], strides = [1, 1]} : vector<256x1152xf32> to vector<256x64xf32>
    %139 = vector.shape_cast %138 : vector<256x64xf32> to vector<2x128x64xf32>
    %140 = arith.truncf %139 : vector<2x128x64xf32> to vector<2x128x64xbf16>
    %141 = vector.extract_strided_slice %4 {offsets = [0, 1024], sizes = [256, 64], strides = [1, 1]} : vector<256x1152xf32> to vector<256x64xf32>
    %142 = vector.shape_cast %141 : vector<256x64xf32> to vector<2x128x64xf32>
    %143 = arith.truncf %142 : vector<2x128x64xf32> to vector<2x128x64xbf16>
    "tpu.trace_start"() <{level = 10 : i32, message = "bqd,bkd->bqk"}> : () -> ()
    %cst_34 = arith.constant dense<0.000000e+00> : vector<2x128x128xf32>
    %144 = tpu.matmul %137, %140, %cst_34 {dimension_numbers = #tpu.dot_dimension_numbers<[2], [2], [1], [1], [0, 0, 0, 1, 1, 1], [0], [0]>} : vector<2x128x64xbf16>, vector<2x128x64xbf16>, vector<2x128x128xf32> -> vector<2x128x128xf32>
    %cst_35 = arith.constant 0xFF800000 : f32
    "tpu.trace_stop"() : () -> ()
    %145 = vector.shape_cast %8 : vector<1x128x128xi1> to vector<1x128x128xi1>
    %146 = vector.broadcast %145 : vector<1x128x128xi1> to vector<2x128x128xi1>
    %147 = vector.broadcast %cst_35 : f32 to vector<2x128x128xf32>
    %148 = arith.select %146, %144, %147 : vector<2x128x128xi1>, vector<2x128x128xf32>
    %cst_36 = arith.constant dense<0xFF800000> : vector<2x128xf32>
    %149 = vector.multi_reduction <maximumf>, %148, %cst_36 [2] : vector<2x128x128xf32> to vector<2x128xf32>
    %150 = vector.shape_cast %149 : vector<2x128xf32> to vector<2x128x1xf32>
    %151 = vector.broadcast %150 : vector<2x128x1xf32> to vector<2x128x128xf32>
    %152 = arith.subf %148, %151 : vector<2x128x128xf32>
    %153 = math.exp %152 : vector<2x128x128xf32>
    %cst_37 = arith.constant dense<0.000000e+00> : vector<2x128xf32>
    %154 = vector.multi_reduction <add>, %153, %cst_37 [2] : vector<2x128x128xf32> to vector<2x128xf32>
    %155 = vector.shape_cast %154 : vector<2x128xf32> to vector<2x128x1xf32>
    %156 = tpu.reciprocal %155 {approx = true} : vector<2x128x1xf32> -> vector<2x128x1xf32>
    %157 = vector.broadcast %156 : vector<2x128x1xf32> to vector<2x128x128xf32>
    %158 = arith.mulf %153, %157 : vector<2x128x128xf32>
    %159 = arith.truncf %158 : vector<2x128x128xf32> to vector<2x128x128xbf16>
    "tpu.trace_start"() <{level = 10 : i32, message = "bqk,bkd->bqd"}> : () -> ()
    %cst_38 = arith.constant dense<0.000000e+00> : vector<2x128x64xf32>
    %160 = tpu.matmul %159, %143, %cst_38 {dimension_numbers = #tpu.dot_dimension_numbers<[2], [1], [1], [2], [0, 0, 0, 1, 1, 2], [0], [0]>} : vector<2x128x128xbf16>, vector<2x128x64xbf16>, vector<2x128x64xf32> -> vector<2x128x64xf32>
    "tpu.trace_stop"() : () -> ()
    %161 = vector.shape_cast %160 : vector<2x128x64xf32> to vector<256x64xf32>
    %162 = arith.truncf %161 : vector<256x64xf32> to vector<256x64xbf16>
    %c0_39 = arith.constant 0 : index
    %c256 = arith.constant 256 : index
    %163 = vector.load %arg6[%c0_39, %c256] : memref<256x384xbf16, #tpu.memory_space<vmem>>, vector<256x64xbf16>
    tpu.vector_store %arg6[%c0_39, %c256], %162 {strides = array<i32>} : memref<256x384xbf16, #tpu.memory_space<vmem>>, vector<256x64xbf16>,
    %164 = vector.extract_strided_slice %4 {offsets = [0, 320], sizes = [256, 64], strides = [1, 1]} : vector<256x1152xf32> to vector<256x64xf32>
    %165 = vector.shape_cast %164 : vector<256x64xf32> to vector<2x128x64xf32>
    %166 = arith.truncf %165 : vector<2x128x64xf32> to vector<2x128x64xbf16>
    %cst_40 = arith.constant 1.250000e-01 : bf16
    %167 = vector.broadcast %cst_40 : bf16 to vector<2x128x64xbf16>
    %168 = arith.mulf %166, %167 : vector<2x128x64xbf16>
    %169 = vector.extract_strided_slice %4 {offsets = [0, 704], sizes = [256, 64], strides = [1, 1]} : vector<256x1152xf32> to vector<256x64xf32>
    %170 = vector.shape_cast %169 : vector<256x64xf32> to vector<2x128x64xf32>
    %171 = arith.truncf %170 : vector<2x128x64xf32> to vector<2x128x64xbf16>
    %172 = vector.extract_strided_slice %4 {offsets = [0, 1088], sizes = [256, 64], strides = [1, 1]} : vector<256x1152xf32> to vector<256x64xf32>
    %173 = vector.shape_cast %172 : vector<256x64xf32> to vector<2x128x64xf32>
    %174 = arith.truncf %173 : vector<2x128x64xf32> to vector<2x128x64xbf16>
    "tpu.trace_start"() <{level = 10 : i32, message = "bqd,bkd->bqk"}> : () -> ()
    %cst_41 = arith.constant dense<0.000000e+00> : vector<2x128x128xf32>
    %175 = tpu.matmul %168, %171, %cst_41 {dimension_numbers = #tpu.dot_dimension_numbers<[2], [2], [1], [1], [0, 0, 0, 1, 1, 1], [0], [0]>} : vector<2x128x64xbf16>, vector<2x128x64xbf16>, vector<2x128x128xf32> -> vector<2x128x128xf32>
    %cst_42 = arith.constant 0xFF800000 : f32
    "tpu.trace_stop"() : () -> ()
    %176 = vector.shape_cast %8 : vector<1x128x128xi1> to vector<1x128x128xi1>
    %177 = vector.broadcast %176 : vector<1x128x128xi1> to vector<2x128x128xi1>
    %178 = vector.broadcast %cst_42 : f32 to vector<2x128x128xf32>
    %179 = arith.select %177, %175, %178 : vector<2x128x128xi1>, vector<2x128x128xf32>
    %cst_43 = arith.constant dense<0xFF800000> : vector<2x128xf32>
    %180 = vector.multi_reduction <maximumf>, %179, %cst_43 [2] : vector<2x128x128xf32> to vector<2x128xf32>
    %181 = vector.shape_cast %180 : vector<2x128xf32> to vector<2x128x1xf32>
    %182 = vector.broadcast %181 : vector<2x128x1xf32> to vector<2x128x128xf32>
    %183 = arith.subf %179, %182 : vector<2x128x128xf32>
    %184 = math.exp %183 : vector<2x128x128xf32>
    %cst_44 = arith.constant dense<0.000000e+00> : vector<2x128xf32>
    %185 = vector.multi_reduction <add>, %184, %cst_44 [2] : vector<2x128x128xf32> to vector<2x128xf32>
    %186 = vector.shape_cast %185 : vector<2x128xf32> to vector<2x128x1xf32>
    %187 = tpu.reciprocal %186 {approx = true} : vector<2x128x1xf32> -> vector<2x128x1xf32>
    %188 = vector.broadcast %187 : vector<2x128x1xf32> to vector<2x128x128xf32>
    %189 = arith.mulf %184, %188 : vector<2x128x128xf32>
    %190 = arith.truncf %189 : vector<2x128x128xf32> to vector<2x128x128xbf16>
    "tpu.trace_start"() <{level = 10 : i32, message = "bqk,bkd->bqd"}> : () -> ()
    %cst_45 = arith.constant dense<0.000000e+00> : vector<2x128x64xf32>
    %191 = tpu.matmul %190, %174, %cst_45 {dimension_numbers = #tpu.dot_dimension_numbers<[2], [1], [1], [2], [0, 0, 0, 1, 1, 2], [0], [0]>} : vector<2x128x128xbf16>, vector<2x128x64xbf16>, vector<2x128x64xf32> -> vector<2x128x64xf32>
    "tpu.trace_stop"() : () -> ()
    %192 = vector.shape_cast %191 : vector<2x128x64xf32> to vector<256x64xf32>
    %193 = arith.truncf %192 : vector<256x64xf32> to vector<256x64xbf16>
    %c0_46 = arith.constant 0 : index
    %c320 = arith.constant 320 : index
    %194 = vector.load %arg6[%c0_46, %c320] : memref<256x384xbf16, #tpu.memory_space<vmem>>, vector<256x64xbf16>
    tpu.vector_store %arg6[%c0_46, %c320], %193 {strides = array<i32>} : memref<256x384xbf16, #tpu.memory_space<vmem>>, vector<256x64xbf16>,
    %c0_47 = arith.constant 0 : index
    %c0_48 = arith.constant 0 : index
    %195 = vector.load %arg6[%c0_47, %c0_48] : memref<256x384xbf16, #tpu.memory_space<vmem>>, vector<256x384xbf16>
    %c0_49 = arith.constant 0 : index
    %c0_50 = arith.constant 0 : index
    %196 = vector.load %arg3[%c0_49, %c0_50] : memref<384x384xbf16, #tpu.memory_space<vmem>>, vector<384x384xbf16>
    %cst_51 = arith.constant dense<0.000000e+00> : vector<256x384xf32>
    %197 = tpu.matmul %195, %196, %cst_51 {dimension_numbers = #tpu.dot_dimension_numbers<[1], [0], [0], [1], [0, 0, 1, 1], [], []>} : vector<256x384xbf16>, vector<384x384xbf16>, vector<256x384xf32> -> vector<256x384xf32>
    %c0_52 = arith.constant 0 : index
    %c0_53 = arith.constant 0 : index
    %198 = vector.load %arg4[%c0_52, %c0_53] : memref<1x384xf32, #tpu.memory_space<vmem>>, vector<1x384xf32>
    %199 = vector.shape_cast %198 : vector<1x384xf32> to vector<384xf32>
    %200 = vector.shape_cast %199 : vector<384xf32> to vector<1x384xf32>
    %201 = vector.broadcast %200 : vector<1x384xf32> to vector<256x384xf32>
    %202 = arith.addf %197, %201 : vector<256x384xf32>
    %203 = vector.shape_cast %202 : vector<256x384xf32> to vector<2x128x384xf32>
    %c0_54 = arith.constant 0 : index
    %c0_55 = arith.constant 0 : index
    %c0_56 = arith.constant 0 : index
    %204 = vector.load %arg5[%c0_54, %c0_55, %c0_56] : memref<2x128x384xf32, #tpu.memory_space<vmem>>, vector<2x128x384xf32>
    tpu.vector_store %arg5[%c0_54, %c0_55, %c0_56], %203 {strides = array<i32>} : memref<2x128x384xf32, #tpu.memory_space<vmem>>, vector<2x128x384xf32>,
    return
  }
  func.func @transform_0(%arg0: i32) -> (i32, i32, i32) {
    %c0_i32 = arith.constant 0 : i32
    %c0_i32_0 = arith.constant 0 : i32
    %c0_i32_1 = arith.constant 0 : i32
    return %arg0, %c0_i32, %c0_i32_0 : i32, i32, i32
  }
  func.func @transform_1(%arg0: i32) -> (i32, i32) {
    %c0_i32 = arith.constant 0 : i32
    %c0_i32_0 = arith.constant 0 : i32
    %c0_i32_1 = arith.constant 0 : i32
    return %c0_i32, %c0_i32_0 : i32, i32
  }
  func.func @transform_2(%arg0: i32) -> (i32, i32) {
    %c0_i32 = arith.constant 0 : i32
    %c0_i32_0 = arith.constant 0 : i32
    %c0_i32_1 = arith.constant 0 : i32
    return %c0_i32, %c0_i32_0 : i32, i32
  }
  func.func @transform_3(%arg0: i32) -> (i32, i32) {
    %c0_i32 = arith.constant 0 : i32
    %c0_i32_0 = arith.constant 0 : i32
    %c0_i32_1 = arith.constant 0 : i32
    return %c0_i32, %c0_i32_0 : i32, i32
  }
  func.func @transform_4(%arg0: i32) -> (i32, i32, i32) {
    %c0_i32 = arith.constant 0 : i32
    %c0_i32_0 = arith.constant 0 : i32
    %c0_i32_1 = arith.constant 0 : i32
    return %arg0, %c0_i32, %c0_i32_0 : i32, i32, i32
  }
}

</mosaic_0001>

<llo_original>
// kernel: tpu_custom_call.1
$region0: #{tpu_custom_call.1}
  #allocation0 [shape = 'u32[]', space=smem, size = 0x4, offset = 0x4, fixed_abs, tag = 'smem constant byte address 0x4 - core index']
  #allocation1 [shape = 'u32[144,128]{1,0:T(1,128)}', space=vmem, size = 0x12000, scoped, tag = 'internal scratch']
  #allocation2 [shape = 'bf16[256,384]{1,0:T(8,128)(2,1)}', space=vmem, size = 0x30000, scoped, tag = 'scratch operand']
  %s0 = inlined_call_operand.hbm [shape: f32[4,128,384], index: 0, kind: input, shape index: {}]
  %s1 = inlined_call_operand.hbm [shape: bf16[384,1152], index: 1, kind: input, shape index: {}]
  %s2 = inlined_call_operand.hbm [shape: bf16[384,384], index: 2, kind: input, shape index: {}]
  %s3 = inlined_call_operand.vmem [shape: f32[1,384], index: 3, kind: input, shape index: {}]
  %s4 = inlined_call_operand.hbm [shape: f32[4,128,384], index: 4, kind: output, shape index: {}]
  %s5 = sld [smem:[#allocation0]]
  $region61: #{tpu_custom_call.1} parent=0
    _
  %s7 = ssub.s32 1, %s5
  %s8 = scalar_select 0, %s7, %s5
  $region1: #{tpu_custom_call.1} parent=0
    #allocation3 [shape = 'u8[786432]{0}', space=vmem, size = 0xc0000, scoped, tag = 'input window, operand 0']
    #allocation4 [shape = 's32[2]{0}', space=sflag, size = 0x8, scoped, tag = 'scoped memory for tpu_custom_call.1']
    #allocation5 [shape = 's32[2]{0}', space=sflag, size = 0x8, scoped, tag = 'scoped memory for tpu_custom_call.1']
    #allocation6 [shape = 'u8[884736]{0}', space=vmem, size = 0xd8000, scoped, tag = 'input window, operand 1, single buffered']
    #allocation7 [shape = 's32[1]{0}', space=sflag, size = 0x4, scoped, tag = 'scoped memory for tpu_custom_call.1']
    #allocation8 [shape = 'u8[294912]{0}', space=vmem, size = 0x48000, scoped, tag = 'input window, operand 2, single buffered']
    #allocation9 [shape = 'u8[786432]{0}', space=vmem, size = 0xc0000, scoped, tag = 'output window, operand 0']
    %9 = vsyncpa [#allocation4], 0
    %s10 = scalar_lea.sflag [#allocation4], 1
    %11 = vsyncpa %s10, 0
    %12 = vsyncpa [#allocation7], 0
    %13 = vsyncpa [#allocation5], 0
    %s14 = scalar_lea.sflag [#allocation5], 1
    %15 = vsyncpa %s14, 0
    loop: start=0, step=1, limit=4
    $region2: #{tpu_custom_call.1} parent=1 // loop_pre_header
      _
    $region3: #{tpu_custom_call.1} parent=1 // loop_header
      %s17 = sphi 0, %s21
      %p18 = scmp.ge.s32.totalorder %s17, 4
      %s27 = sphi 0, %s29
      %s30 = sphi 0, %s27
      %s31 = sphi 0, %s30
      %s47 = sphi 0, %s31
      %s51 = sphi 0, %s51
      %s53 = sphi 0, %s51
      %s54 = sphi 0, %s53
      %s68 = sphi 0, %s54
      %s72 = sphi 0, %s72
      %s74 = sphi 0, %s72
      %s75 = sphi 0, %s74
      %s89 = sphi 0, %s75
      %s93 = sphi 0, %s93
      %s95 = sphi 0, %s93
      %s96 = sphi 0, %s95
      %s110 = sphi 0, %s96
      %s116 = sphi 0, %s118
      %s119 = sphi 0, %s116
      %s120 = sphi 0, %s119
      %s136 = sphi 0, %s120
    $region4: #{tpu_custom_call.1} parent=1 // loop_header_branch
      %20 = sbr.rel (%p18) target = $region8
    $region5: #{tpu_custom_call.1} parent=1 // loop_body
      %s22 = ssub.s32 %s17, 1
      %s23 = ssub.s32 %s17, 2
      %s24 = sadd.s32 %s17, 1
      %s25 = ssub.s32 %s17, %s24
      %p26 = scmp.eq.s32.totalorder %s25, 0
      %s28 = sadd.s32 %s27, 1
      %s29 = scalar_select %p26, %s27, %s28
      %p32 = pneg %p26
      %p33 = scmp.eq.s32.totalorder %s17, 1
      %p34 = por %p32, %p33
      %p35 = scmp.ne.s32.totalorder %s27, %s30
      %p36 = scmp.eq.s32.totalorder %s17, 0
      %p37 = por %p35, %p36
      %p38 = scmp.ne.s32.totalorder %s27, %s30
      %p39 = scmp.eq.s32.totalorder %s22, 1
      %p40 = por %p38, %p39
      %p41 = scmp.ne.s32.totalorder %s30, %s31
      %p42 = scmp.eq.s32.totalorder %s22, 0
      %p43 = por %p41, %p42
      %p44 = scmp.ne.s32.totalorder %s30, %s31
      %p45 = scmp.eq.s32.totalorder %s23, 1
      %p46 = por %p44, %p45
      %p48 = scmp.ne.s32.totalorder %s31, %s47
      %p49 = scmp.eq.s32.totalorder %s23, 0
      %p50 = por %p48, %p49
      %s52 = sadd.s32 %s51, 1
      %p55 = scmp.eq.s32.totalorder %s17, 1
      %p56 = scmp.ne.s32.totalorder %s51, %s53
      %p57 = scmp.eq.s32.totalorder %s17, 0
      %p58 = por %p56, %p57
      %p59 = scmp.ne.s32.totalorder %s51, %s53
      %p60 = scmp.eq.s32.totalorder %s22, 1
      %p61 = por %p59, %p60
      %p62 = scmp.ne.s32.totalorder %s53, %s54
      %p63 = scmp.eq.s32.totalorder %s22, 0
      %p64 = por %p62, %p63
      %p65 = scmp.ne.s32.totalorder %s53, %s54
      %p66 = scmp.eq.s32.totalorder %s23, 1
      %p67 = por %p65, %p66
      %p69 = scmp.ne.s32.totalorder %s54, %s68
      %p70 = scmp.eq.s32.totalorder %s23, 0
      %p71 = por %p69, %p70
      %s73 = sadd.s32 %s72, 1
      %p76 = scmp.eq.s32.totalorder %s17, 1
      %p77 = scmp.ne.s32.totalorder %s72, %s74
      %p78 = scmp.eq.s32.totalorder %s17, 0
      %p79 = por %p77, %p78
      %p80 = scmp.ne.s32.totalorder %s72, %s74
      %p81 = scmp.eq.s32.totalorder %s22, 1
      %p82 = por %p80, %p81
      %p83 = scmp.ne.s32.totalorder %s74, %s75
      %p84 = scmp.eq.s32.totalorder %s22, 0
      %p85 = por %p83, %p84
      %p86 = scmp.ne.s32.totalorder %s74, %s75
      %p87 = scmp.eq.s32.totalorder %s23, 1
      %p88 = por %p86, %p87
      %p90 = scmp.ne.s32.totalorder %s75, %s89
      %p91 = scmp.eq.s32.totalorder %s23, 0
      %p92 = por %p90, %p91
      %s94 = sadd.s32 %s93, 1
      %p97 = scmp.eq.s32.totalorder %s17, 1
      %p98 = scmp.ne.s32.totalorder %s93, %s95
      %p99 = scmp.eq.s32.totalorder %s17, 0
      %p100 = por %p98, %p99
      %p101 = scmp.ne.s32.totalorder %s93, %s95
      %p102 = scmp.eq.s32.totalorder %s22, 1
      %p103 = por %p101, %p102
      %p104 = scmp.ne.s32.totalorder %s95, %s96
      %p105 = scmp.eq.s32.totalorder %s22, 0
      %p106 = por %p104, %p105
      %p107 = scmp.ne.s32.totalorder %s95, %s96
      %p108 = scmp.eq.s32.totalorder %s23, 1
      %p109 = por %p107, %p108
      %p111 = scmp.ne.s32.totalorder %s96, %s110
      %p112 = scmp.eq.s32.totalorder %s23, 0
      %p113 = por %p111, %p112
      %s114 = ssub.s32 %s17, %s24
      %p115 = scmp.eq.s32.totalorder %s114, 0
      %s117 = sadd.s32 %s116, 1
      %s118 = scalar_select %p115, %s116, %s117
      %p121 = pneg %p115
      %p122 = scmp.eq.s32.totalorder %s17, 1
      %p123 = por %p121, %p122
      %p124 = scmp.ne.s32.totalorder %s116, %s119
      %p125 = scmp.eq.s32.totalorder %s17, 0
      %p126 = por %p124, %p125
      %p127 = scmp.ne.s32.totalorder %s116, %s119
      %p128 = scmp.eq.s32.totalorder %s22, 1
      %p129 = por %p127, %p128
      %p130 = scmp.ne.s32.totalorder %s119, %s120
      %p131 = scmp.eq.s32.totalorder %s22, 0
      %p132 = por %p130, %p131
      %p133 = scmp.ne.s32.totalorder %s119, %s120
      %p134 = scmp.eq.s32.totalorder %s23, 1
      %p135 = por %p133, %p134
      %p137 = scmp.ne.s32.totalorder %s120, %s136
      %p138 = scmp.eq.s32.totalorder %s23, 0
      %p139 = por %p137, %p138
      %p140 = scmp.le.s32.totalorder 1, %s17
      %p141 = scmp.lt.s32.totalorder %s17, 3
      %p142 = pnand %p140, %p141
      %p143 = pneg %p142
      // Predicated region
      $region9: #{tpu_custom_call.1} parent=5 // pred_check
        _
      $region10: #{tpu_custom_call.1} parent=5 // pred_check_branch
        %145 = sbr.rel (%p142) target = $region12
      $region11: #{tpu_custom_call.1} parent=5 // pred_region
        %s146 = ssub.s32 %s17, 1
        // Predicated region
        $region13: #{tpu_custom_call.1} parent=11 // pred_check
          %p147 = pneg %p64
        $region14: #{tpu_custom_call.1} parent=11 // pred_check_branch
          %149 = sbr.rel (%p147) target = $region16
        $region15: #{tpu_custom_call.1} parent=11 // pred_region
          %s151 = ssub.s32 27648, 27648
          %152 = vsyncadd [#allocation7], %s151
          %s153 = sshll.u32 [#allocation6], 4
          %s154 = int_to_ptr.vmem [resolvable:$true] %s153
          %159 = dma.hbm_to_vmem [thread:$0]  %s1, 27648, %s154, [#allocation7], 576, 576, 36
        $region16: #{tpu_custom_call.1} parent=11 // pred_fallthru
          _
        // Predicated region
        $region17: #{tpu_custom_call.1} parent=11 // pred_check
          %p160 = pneg %p85
        $region18: #{tpu_custom_call.1} parent=11 // pred_check_branch
          %162 = sbr.rel (%p160) target = $region20
        $region19: #{tpu_custom_call.1} parent=11 // pred_region
          %s164 = ssub.s32 9216, 9216
          %165 = vsyncadd [#allocation7], %s164
          %s166 = sshll.u32 [#allocation8], 4
          %s167 = int_to_ptr.vmem [resolvable:$true] %s166
          %172 = dma.hbm_to_vmem [thread:$0]  %s2, 9216, %s167, [#allocation7], 192, 192, 12
        $region20: #{tpu_custom_call.1} parent=11 // pred_fallthru
          _
        // Predicated region
        $region21: #{tpu_custom_call.1} parent=11 // pred_check
          %p173 = pneg %p106
        $region22: #{tpu_custom_call.1} parent=11 // pred_check_branch
          %175 = sbr.rel (%p173) target = $region24
        $region23: #{tpu_custom_call.1} parent=11 // pred_region
          _
        $region24: #{tpu_custom_call.1} parent=11 // pred_fallthru
          _
      $region12: #{tpu_custom_call.1} parent=5 // pred_fallthru
        _
      %p176 = scmp.lt.s32.totalorder %s17, 2
      // Predicated region
      $region25: #{tpu_custom_call.1} parent=5 // pred_check
        %p177 = pneg %p176
      $region26: #{tpu_custom_call.1} parent=5 // pred_check_branch
        %179 = sbr.rel (%p177) target = $region28
      $region27: #{tpu_custom_call.1} parent=5 // pred_region
        // Predicated region
        $region29: #{tpu_custom_call.1} parent=27 // pred_check
          %p180 = pneg %p37
        $region30: #{tpu_custom_call.1} parent=27 // pred_check_branch
          %182 = sbr.rel (%p180) target = $region32
        $region31: #{tpu_custom_call.1} parent=27 // pred_region
          %s183 = sand.u32 %s27, 1
          %s184 = scalar_lea.sflag [#allocation4], %s183
          %s185 = sand.u32 %s27, 1
          %s186 = smul.addr %s185, 768
          %s187 = scalar_lea.vmem [#allocation3], %s186
          %s188 = smul.u32 2, %s17
          %s190 = ssub.s32 12288, 12288
          %191 = vsyncadd %s184, %s190
          %s192 = smul.addr %s188, 48
          %s193 = smul.addr %s192, 128
          %s194 = scalar_lea.hbm %s0, %s193
          %s195 = sshll.u32 %s187, 4
          %s196 = int_to_ptr.vmem [resolvable:$true] %s195
          %201 = dma.hbm_to_vmem [thread:$0]  %s194, 12288, %s196, %s184, 384, 384, 24
        $region32: #{tpu_custom_call.1} parent=27 // pred_fallthru
          _
      $region28: #{tpu_custom_call.1} parent=5 // pred_fallthru
        _
      %p202 = scmp.le.s32.totalorder 1, %s17
      %p203 = scmp.lt.s32.totalorder %s17, 3
      %p204 = pnand %p202, %p203
      %p205 = pneg %p204
      // Predicated region
      $region33: #{tpu_custom_call.1} parent=5 // pred_check
        _
      $region34: #{tpu_custom_call.1} parent=5 // pred_check_branch
        %207 = sbr.rel (%p204) target = $region36
      $region35: #{tpu_custom_call.1} parent=5 // pred_region
        %s208 = ssub.s32 %s17, 1
        %s209 = sand.u32 %s30, 1
        %s210 = scalar_lea.sflag [#allocation4], %s209
        %s211 = sand.u32 %s30, 1
        %s212 = smul.addr %s211, 768
        %s213 = scalar_lea.vmem [#allocation3], %s212
        // Predicated region
        $region37: #{tpu_custom_call.1} parent=35 // pred_check
          %p214 = pneg %p43
        $region38: #{tpu_custom_call.1} parent=35 // pred_check_branch
          %216 = sbr.rel (%p214) target = $region40
        $region39: #{tpu_custom_call.1} parent=35 // pred_region
          %217 = dma.done %s210, 12288
        $region40: #{tpu_custom_call.1} parent=35 // pred_fallthru
          _
        // Predicated region
        $region41: #{tpu_custom_call.1} parent=35 // pred_check
          %p218 = pneg %p64
        $region42: #{tpu_custom_call.1} parent=35 // pred_check_branch
          %220 = sbr.rel (%p218) target = $region44
        $region43: #{tpu_custom_call.1} parent=35 // pred_region
          %221 = dma.done [#allocation7], 27648
        $region44: #{tpu_custom_call.1} parent=35 // pred_fallthru
          _
        // Predicated region
        $region45: #{tpu_custom_call.1} parent=35 // pred_check
          %p222 = pneg %p85
        $region46: #{tpu_custom_call.1} parent=35 // pred_check_branch
          %224 = sbr.rel (%p222) target = $region48
        $region47: #{tpu_custom_call.1} parent=35 // pred_region
          %225 = dma.done [#allocation7], 9216
        $region48: #{tpu_custom_call.1} parent=35 // pred_fallthru
          _
        %s226 = sand.u32 %s30, 1
        %s227 = scalar_lea.sflag [#allocation4], %s226
        %s228 = sand.u32 %s30, 1
        %s229 = smul.addr %s228, 768
        %s230 = scalar_lea.vmem [#allocation3], %s229
        %p231 = pneg %p43
        %p232 = pneg %p40
        %p233 = pneg %p64
        %p234 = pneg %p61
        %p235 = pneg %p85
        %p236 = pneg %p82
        %p237 = pneg %p106
        %p238 = pneg %p103
        %p239 = pneg %p132
        %p240 = pneg %p129
        %s241 = sand.u32 %s119, 1
        %s242 = scalar_lea.sflag [#allocation5], %s241
        %s243 = sand.u32 %s119, 1
        %s244 = smul.addr %s243, 768
        %s245 = scalar_lea.vmem [#allocation9], %s244
        %s246 = smul.u32 2, %s22
        %s247 = smul.u32 2, %s22
        %v250 = vld [vmem:[%s213] sm:$0xff]
        %v251 = vld [vmem:[%s213 + $0x8] sm:$0xff]
        %v252 = vld [vmem:[%s213 + $0x10] sm:$0xff]
        %v253 = vld [vmem:[%s213 + $0x18] sm:$0xff]
        %v254 = vld [vmem:[%s213 + $0x20] sm:$0xff]
        %v255 = vld [vmem:[%s213 + $0x28] sm:$0xff]
        %v256 = vld [vmem:[%s213 + $0x30] sm:$0xff]
        %v257 = vld [vmem:[%s213 + $0x38] sm:$0xff]
        %v258 = vld [vmem:[%s213 + $0x40] sm:$0xff]
        %v259 = vld [vmem:[%s213 + $0x48] sm:$0xff]
        %v260 = vld [vmem:[%s213 + $0x50] sm:$0xff]
        %v261 = vld [vmem:[%s213 + $0x58] sm:$0xff]
        %v262 = vld [vmem:[%s213 + $0x60] sm:$0xff]
        %v263 = vld [vmem:[%s213 + $0x68] sm:$0xff]
        %v264 = vld [vmem:[%s213 + $0x70] sm:$0xff]
        %v265 = vld [vmem:[%s213 + $0x78] sm:$0xff]
        %v266 = vld [vmem:[%s213 + $0x80] sm:$0xff]
        %v267 = vld [vmem:[%s213 + $0x88] sm:$0xff]
        %v268 = vld [vmem:[%s213 + $0x90] sm:$0xff]
        %v269 = vld [vmem:[%s213 + $0x98] sm:$0xff]
        %v270 = vld [vmem:[%s213 + $0xa0] sm:$0xff]
        %v271 = vld [vmem:[%s213 + $0xa8] sm:$0xff]
        %v272 = vld [vmem:[%s213 + $0xb0] sm:$0xff]
        %v273 = vld [vmem:[%s213 + $0xb8] sm:$0xff]
        %v274 = vld [vmem:[%s213 + $0xc0] sm:$0xff]
        %v275 = vld [vmem:[%s213 + $0xc8] sm:$0xff]
        %v276 = vld [vmem:[%s213 + $0xd0] sm:$0xff]
        %v277 = vld [vmem:[%s213 + $0xd8] sm:$0xff]
        %v278 = vld [vmem:[%s213 + $0xe0] sm:$0xff]
        %v279 = vld [vmem:[%s213 + $0xe8] sm:$0xff]
        %v280 = vld [vmem:[%s213 + $0xf0] sm:$0xff]
        %v281 = vld [vmem:[%s213 + $0xf8] sm:$0xff]
        %v282 = vld [vmem:[%s213 + $0x100] sm:$0xff]
        %v283 = vld [vmem:[%s213 + $0x108] sm:$0xff]
        %v284 = vld [vmem:[%s213 + $0x110] sm:$0xff]
        %v285 = vld [vmem:[%s213 + $0x118] sm:$0xff]
        %v286 = vld [vmem:[%s213 + $0x120] sm:$0xff]
        %v287 = vld [vmem:[%s213 + $0x128] sm:$0xff]
        %v288 = vld [vmem:[%s213 + $0x130] sm:$0xff]
        %v289 = vld [vmem:[%s213 + $0x138] sm:$0xff]
        %v290 = vld [vmem:[%s213 + $0x140] sm:$0xff]
        %v291 = vld [vmem:[%s213 + $0x148] sm:$0xff]
        %v292 = vld [vmem:[%s213 + $0x150] sm:$0xff]
        %v293 = vld [vmem:[%s213 + $0x158] sm:$0xff]
        %v294 = vld [vmem:[%s213 + $0x160] sm:$0xff]
        %v295 = vld [vmem:[%s213 + $0x168] sm:$0xff]
        %v296 = vld [vmem:[%s213 + $0x170] sm:$0xff]
        %v297 = vld [vmem:[%s213 + $0x178] sm:$0xff]
        %v298 = vld [vmem:[%s213 + $0x180] sm:$0xff]
        %v299 = vld [vmem:[%s213 + $0x188] sm:$0xff]
        %v300 = vld [vmem:[%s213 + $0x190] sm:$0xff]
        %v301 = vld [vmem:[%s213 + $0x198] sm:$0xff]
        %v302 = vld [vmem:[%s213 + $0x1a0] sm:$0xff]
        %v303 = vld [vmem:[%s213 + $0x1a8] sm:$0xff]
        %v304 = vld [vmem:[%s213 + $0x1b0] sm:$0xff]
        %v305 = vld [vmem:[%s213 + $0x1b8] sm:$0xff]
        %v306 = vld [vmem:[%s213 + $0x1c0] sm:$0xff]
        %v307 = vld [vmem:[%s213 + $0x1c8] sm:$0xff]
        %v308 = vld [vmem:[%s213 + $0x1d0] sm:$0xff]
        %v309 = vld [vmem:[%s213 + $0x1d8] sm:$0xff]
        %v310 = vld [vmem:[%s213 + $0x1e0] sm:$0xff]
        %v311 = vld [vmem:[%s213 + $0x1e8] sm:$0xff]
        %v312 = vld [vmem:[%s213 + $0x1f0] sm:$0xff]
        %v313 = vld [vmem:[%s213 + $0x1f8] sm:$0xff]
        %v314 = vld [vmem:[%s213 + $0x200] sm:$0xff]
        %v315 = vld [vmem:[%s213 + $0x208] sm:$0xff]
        %v316 = vld [vmem:[%s213 + $0x210] sm:$0xff]
        %v317 = vld [vmem:[%s213 + $0x218] sm:$0xff]
        %v318 = vld [vmem:[%s213 + $0x220] sm:$0xff]
        %v319 = vld [vmem:[%s213 + $0x228] sm:$0xff]
        %v320 = vld [vmem:[%s213 + $0x230] sm:$0xff]
        %v321 = vld [vmem:[%s213 + $0x238] sm:$0xff]
        %v322 = vld [vmem:[%s213 + $0x240] sm:$0xff]
        %v323 = vld [vmem:[%s213 + $0x248] sm:$0xff]
        %v324 = vld [vmem:[%s213 + $0x250] sm:$0xff]
        %v325 = vld [vmem:[%s213 + $0x258] sm:$0xff]
        %v326 = vld [vmem:[%s213 + $0x260] sm:$0xff]
        %v327 = vld [vmem:[%s213 + $0x268] sm:$0xff]
        %v328 = vld [vmem:[%s213 + $0x270] sm:$0xff]
        %v329 = vld [vmem:[%s213 + $0x278] sm:$0xff]
        %v330 = vld [vmem:[%s213 + $0x280] sm:$0xff]
        %v331 = vld [vmem:[%s213 + $0x288] sm:$0xff]
        %v332 = vld [vmem:[%s213 + $0x290] sm:$0xff]
        %v333 = vld [vmem:[%s213 + $0x298] sm:$0xff]
        %v334 = vld [vmem:[%s213 + $0x2a0] sm:$0xff]
        %v335 = vld [vmem:[%s213 + $0x2a8] sm:$0xff]
        %v336 = vld [vmem:[%s213 + $0x2b0] sm:$0xff]
        %v337 = vld [vmem:[%s213 + $0x2b8] sm:$0xff]
        %v338 = vld [vmem:[%s213 + $0x2c0] sm:$0xff]
        %v339 = vld [vmem:[%s213 + $0x2c8] sm:$0xff]
        %v340 = vld [vmem:[%s213 + $0x2d0] sm:$0xff]
        %v341 = vld [vmem:[%s213 + $0x2d8] sm:$0xff]
        %v342 = vld [vmem:[%s213 + $0x2e0] sm:$0xff]
        %v343 = vld [vmem:[%s213 + $0x2e8] sm:$0xff]
        %v344 = vld [vmem:[%s213 + $0x2f0] sm:$0xff]
        %v345 = vld [vmem:[%s213 + $0x2f8] sm:$0xff]
        %v346 = vpack.c.bf16 %v253, %v250
        %v347 = vpack.c.bf16 %v254, %v251
        %v348 = vpack.c.bf16 %v255, %v252
        %v349 = vpack.c.bf16 %v259, %v256
        %v350 = vpack.c.bf16 %v260, %v257
        %v351 = vpack.c.bf16 %v261, %v258
        %v352 = vpack.c.bf16 %v265, %v262
        %v353 = vpack.c.bf16 %v266, %v263
        %v354 = vpack.c.bf16 %v267, %v264
        %v355 = vpack.c.bf16 %v271, %v268
        %v356 = vpack.c.bf16 %v272, %v269
        %v357 = vpack.c.bf16 %v273, %v270
        %v358 = vpack.c.bf16 %v277, %v274
        %v359 = vpack.c.bf16 %v278, %v275
        %v360 = vpack.c.bf16 %v279, %v276
        %v361 = vpack.c.bf16 %v283, %v280
        %v362 = vpack.c.bf16 %v284, %v281
        %v363 = vpack.c.bf16 %v285, %v282
        %v364 = vpack.c.bf16 %v289, %v286
        %v365 = vpack.c.bf16 %v290, %v287
        %v366 = vpack.c.bf16 %v291, %v288
        %v367 = vpack.c.bf16 %v295, %v292
        %v368 = vpack.c.bf16 %v296, %v293
        %v369 = vpack.c.bf16 %v297, %v294
        %v370 = vpack.c.bf16 %v301, %v298
        %v371 = vpack.c.bf16 %v302, %v299
        %v372 = vpack.c.bf16 %v303, %v300
        %v373 = vpack.c.bf16 %v307, %v304
        %v374 = vpack.c.bf16 %v308, %v305
        %v375 = vpack.c.bf16 %v309, %v306
        %v376 = vpack.c.bf16 %v313, %v310
        %v377 = vpack.c.bf16 %v314, %v311
        %v378 = vpack.c.bf16 %v315, %v312
        %v379 = vpack.c.bf16 %v319, %v316
        %v380 = vpack.c.bf16 %v320, %v317
        %v381 = vpack.c.bf16 %v321, %v318
        %v382 = vpack.c.bf16 %v325, %v322
        %v383 = vpack.c.bf16 %v326, %v323
        %v384 = vpack.c.bf16 %v327, %v324
        %v385 = vpack.c.bf16 %v331, %v328
        %v386 = vpack.c.bf16 %v332, %v329
        %v387 = vpack.c.bf16 %v333, %v330
        %v388 = vpack.c.bf16 %v337, %v334
        %v389 = vpack.c.bf16 %v338, %v335
        %v390 = vpack.c.bf16 %v339, %v336
        %v391 = vpack.c.bf16 %v343, %v340
        %v392 = vpack.c.bf16 %v344, %v341
        %v393 = vpack.c.bf16 %v345, %v342
        %v394 = vld [vmem:[#allocation6] sm:$0xff]
        %v395 = vld [vmem:[#allocation6 + $0x8] sm:$0xff]
        %v396 = vld [vmem:[#allocation6 + $0x10] sm:$0xff]
        %v397 = vld [vmem:[#allocation6 + $0x18] sm:$0xff]
        %v398 = vld [vmem:[#allocation6 + $0x20] sm:$0xf]
        %v399 = vld [vmem:[#allocation6 + $0x24] sm:$0xff]
        %v400 = vld [vmem:[#allocation6 + $0x2c] sm:$0xff]
        %v401 = vld [vmem:[#allocation6 + $0x34] sm:$0xff]
        %v402 = vld [vmem:[#allocation6 + $0x3c] sm:$0xff]
        %v403 = vld [vmem:[#allocation6 + $0x44] sm:$0xf]
        %v404 = vld [vmem:[#allocation6 + $0x48] sm:$0xff]
        %v405 = vld [vmem:[#allocation6 + $0x50] sm:$0xff]
        %v406 = vld [vmem:[#allocation6 + $0x58] sm:$0xff]
        %v407 = vld [vmem:[#allocation6 + $0x60] sm:$0xff]
        %v408 = vld [vmem:[#allocation6 + $0x68] sm:$0xf]
        %v409 = vld [vmem:[#allocation6 + $0x6c] sm:$0xff]
        %v410 = vld [vmem:[#allocation6 + $0x74] sm:$0xff]
        %v411 = vld [vmem:[#allocation6 + $0x7c] sm:$0xff]
        %v412 = vld [vmem:[#allocation6 + $0x84] sm:$0xff]
        %v413 = vld [vmem:[#allocation6 + $0x8c] sm:$0xf]
        %v414 = vld [vmem:[#allocation6 + $0x90] sm:$0xff]
        %v415 = vld [vmem:[#allocation6 + $0x98] sm:$0xff]
        %v416 = vld [vmem:[#allocation6 + $0xa0] sm:$0xff]
        %v417 = vld [vmem:[#allocation6 + $0xa8] sm:$0xff]
        %v418 = vld [vmem:[#allocation6 + $0xb0] sm:$0xf]
        %v419 = vld [vmem:[#allocation6 + $0xb4] sm:$0xff]
        %v420 = vld [vmem:[#allocation6 + $0xbc] sm:$0xff]
        %v421 = vld [vmem:[#allocation6 + $0xc4] sm:$0xff]
        %v422 = vld [vmem:[#allocation6 + $0xcc] sm:$0xff]
        %v423 = vld [vmem:[#allocation6 + $0xd4] sm:$0xf]
        %v424 = vld [vmem:[#allocation6 + $0xd8] sm:$0xff]
        %v425 = vld [vmem:[#allocation6 + $0xe0] sm:$0xff]
        %v426 = vld [vmem:[#allocation6 + $0xe8] sm:$0xff]
        %v427 = vld [vmem:[#allocation6 + $0xf0] sm:$0xff]
        %v428 = vld [vmem:[#allocation6 + $0xf8] sm:$0xf]
        %v429 = vld [vmem:[#allocation6 + $0xfc] sm:$0xff]
        %v430 = vld [vmem:[#allocation6 + $0x104] sm:$0xff]
        %v431 = vld [vmem:[#allocation6 + $0x10c] sm:$0xff]
        %v432 = vld [vmem:[#allocation6 + $0x114] sm:$0xff]
        %v433 = vld [vmem:[#allocation6 + $0x11c] sm:$0xf]
        %v434 = vld [vmem:[#allocation6 + $0x120] sm:$0xff]
        %v435 = vld [vmem:[#allocation6 + $0x128] sm:$0xff]
        %v436 = vld [vmem:[#allocation6 + $0x130] sm:$0xff]
        %v437 = vld [vmem:[#allocation6 + $0x138] sm:$0xff]
        %v438 = vld [vmem:[#allocation6 + $0x140] sm:$0xf]
        %v439 = vld [vmem:[#allocation6 + $0x144] sm:$0xff]
        %v440 = vld [vmem:[#allocation6 + $0x14c] sm:$0xff]
        %v441 = vld [vmem:[#allocation6 + $0x154] sm:$0xff]
        %v442 = vld [vmem:[#allocation6 + $0x15c] sm:$0xff]
        %v443 = vld [vmem:[#allocation6 + $0x164] sm:$0xf]
        %v444 = vld [vmem:[#allocation6 + $0x168] sm:$0xff]
        %v445 = vld [vmem:[#allocation6 + $0x170] sm:$0xff]
        %v446 = vld [vmem:[#allocation6 + $0x178] sm:$0xff]
        %v447 = vld [vmem:[#allocation6 + $0x180] sm:$0xff]
        %v448 = vld [vmem:[#allocation6 + $0x188] sm:$0xf]
        %v449 = vld [vmem:[#allocation6 + $0x18c] sm:$0xff]
        %v450 = vld [vmem:[#allocation6 + $0x194] sm:$0xff]
        %v451 = vld [vmem:[#allocation6 + $0x19c] sm:$0xff]
        %v452 = vld [vmem:[#allocation6 + $0x1a4] sm:$0xff]
        %v453 = vld [vmem:[#allocation6 + $0x1ac] sm:$0xf]
        %v454 = vld [vmem:[#allocation6 + $0x1b0] sm:$0xff]
        %v455 = vld [vmem:[#allocation6 + $0x1b8] sm:$0xff]
        %v456 = vld [vmem:[#allocation6 + $0x1c0] sm:$0xff]
        %v457 = vld [vmem:[#allocation6 + $0x1c8] sm:$0xff]
        %v458 = vld [vmem:[#allocation6 + $0x1d0] sm:$0xf]
        %v459 = vld [vmem:[#allocation6 + $0x1d4] sm:$0xff]
        %v460 = vld [vmem:[#allocation6 + $0x1dc] sm:$0xff]
        %v461 = vld [vmem:[#allocation6 + $0x1e4] sm:$0xff]
        %v462 = vld [vmem:[#allocation6 + $0x1ec] sm:$0xff]
        %v463 = vld [vmem:[#allocation6 + $0x1f4] sm:$0xf]
        %v464 = vld [vmem:[#allocation6 + $0x1f8] sm:$0xff]
        %v465 = vld [vmem:[#allocation6 + $0x200] sm:$0xff]
        %v466 = vld [vmem:[#allocation6 + $0x208] sm:$0xff]
        %v467 = vld [vmem:[#allocation6 + $0x210] sm:$0xff]
        %v468 = vld [vmem:[#allocation6 + $0x218] sm:$0xf]
        %v469 = vld [vmem:[#allocation6 + $0x21c] sm:$0xff]
        %v470 = vld [vmem:[#allocation6 + $0x224] sm:$0xff]
        %v471 = vld [vmem:[#allocation6 + $0x22c] sm:$0xff]
        %v472 = vld [vmem:[#allocation6 + $0x234] sm:$0xff]
        %v473 = vld [vmem:[#allocation6 + $0x23c] sm:$0xf]
        %v474 = vld [vmem:[#allocation6 + $0x240] sm:$0xff]
        %v475 = vld [vmem:[#allocation6 + $0x248] sm:$0xff]
        %v476 = vld [vmem:[#allocation6 + $0x250] sm:$0xff]
        %v477 = vld [vmem:[#allocation6 + $0x258] sm:$0xff]
        %v478 = vld [vmem:[#allocation6 + $0x260] sm:$0xf]
        %v479 = vld [vmem:[#allocation6 + $0x264] sm:$0xff]
        %v480 = vld [vmem:[#allocation6 + $0x26c] sm:$0xff]
        %v481 = vld [vmem:[#allocation6 + $0x274] sm:$0xff]
        %v482 = vld [vmem:[#allocation6 + $0x27c] sm:$0xff]
        %v483 = vld [vmem:[#allocation6 + $0x284] sm:$0xf]
        %v484 = vld [vmem:[#allocation6 + $0x288] sm:$0xff]
        %v485 = vld [vmem:[#allocation6 + $0x290] sm:$0xff]
        %v486 = vld [vmem:[#allocation6 + $0x298] sm:$0xff]
        %v487 = vld [vmem:[#allocation6 + $0x2a0] sm:$0xff]
        %v488 = vld [vmem:[#allocation6 + $0x2a8] sm:$0xf]
        %v489 = vld [vmem:[#allocation6 + $0x2ac] sm:$0xff]
        %v490 = vld [vmem:[#allocation6 + $0x2b4] sm:$0xff]
        %v491 = vld [vmem:[#allocation6 + $0x2bc] sm:$0xff]
        %v492 = vld [vmem:[#allocation6 + $0x2c4] sm:$0xff]
        %v493 = vld [vmem:[#allocation6 + $0x2cc] sm:$0xf]
        %v494 = vld [vmem:[#allocation6 + $0x2d0] sm:$0xff]
        %v495 = vld [vmem:[#allocation6 + $0x2d8] sm:$0xff]
        %v496 = vld [vmem:[#allocation6 + $0x2e0] sm:$0xff]
        %v497 = vld [vmem:[#allocation6 + $0x2e8] sm:$0xff]
        %v498 = vld [vmem:[#allocation6 + $0x2f0] sm:$0xf]
        %v499 = vld [vmem:[#allocation6 + $0x2f4] sm:$0xff]
        %v500 = vld [vmem:[#allocation6 + $0x2fc] sm:$0xff]
        %v501 = vld [vmem:[#allocation6 + $0x304] sm:$0xff]
        %v502 = vld [vmem:[#allocation6 + $0x30c] sm:$0xff]
        %v503 = vld [vmem:[#allocation6 + $0x314] sm:$0xf]
        %v504 = vld [vmem:[#allocation6 + $0x318] sm:$0xff]
        %v505 = vld [vmem:[#allocation6 + $0x320] sm:$0xff]
        %v506 = vld [vmem:[#allocation6 + $0x328] sm:$0xff]
        %v507 = vld [vmem:[#allocation6 + $0x330] sm:$0xff]
        %v508 = vld [vmem:[#allocation6 + $0x338] sm:$0xf]
        %v509 = vld [vmem:[#allocation6 + $0x33c] sm:$0xff]
        %v510 = vld [vmem:[#allocation6 + $0x344] sm:$0xff]
        %v511 = vld [vmem:[#allocation6 + $0x34c] sm:$0xff]
        %v512 = vld [vmem:[#allocation6 + $0x354] sm:$0xff]
        %v513 = vld [vmem:[#allocation6 + $0x35c] sm:$0xf]
        %v514 = vld [vmem:[#allocation6 + $0x360] sm:$0xff]
        %v515 = vld [vmem:[#allocation6 + $0x368] sm:$0xff]
        %v516 = vld [vmem:[#allocation6 + $0x370] sm:$0xff]
        %v517 = vld [vmem:[#allocation6 + $0x378] sm:$0xff]
        %v518 = vld [vmem:[#allocation6 + $0x380] sm:$0xf]
        %v519 = vld [vmem:[#allocation6 + $0x384] sm:$0xff]
        %v520 = vld [vmem:[#allocation6 + $0x38c] sm:$0xff]
        %v521 = vld [vmem:[#allocation6 + $0x394] sm:$0xff]
        %v522 = vld [vmem:[#allocation6 + $0x39c] sm:$0xff]
        %v523 = vld [vmem:[#allocation6 + $0x3a4] sm:$0xf]
        %v524 = vld [vmem:[#allocation6 + $0x3a8] sm:$0xff]
        %v525 = vld [vmem:[#allocation6 + $0x3b0] sm:$0xff]
        %v526 = vld [vmem:[#allocation6 + $0x3b8] sm:$0xff]
        %v527 = vld [vmem:[#allocation6 + $0x3c0] sm:$0xff]
        %v528 = vld [vmem:[#allocation6 + $0x3c8] sm:$0xf]
        %v529 = vld [vmem:[#allocation6 + $0x3cc] sm:$0xff]
        %v530 = vld [vmem:[#allocation6 + $0x3d4] sm:$0xff]
        %v531 = vld [vmem:[#allocation6 + $0x3dc] sm:$0xff]
        %v532 = vld [vmem:[#allocation6 + $0x3e4] sm:$0xff]
        %v533 = vld [vmem:[#allocation6 + $0x3ec] sm:$0xf]
        %v534 = vld [vmem:[#allocation6 + $0x3f0] sm:$0xff]
        %v535 = vld [vmem:[#allocation6 + $0x3f8] sm:$0xff]
        %v536 = vld [vmem:[#allocation6 + $0x400] sm:$0xff]
        %v537 = vld [vmem:[#allocation6 + $0x408] sm:$0xff]
        %v538 = vld [vmem:[#allocation6 + $0x410] sm:$0xf]
        %v539 = vld [vmem:[#allocation6 + $0x414] sm:$0xff]
        %v540 = vld [vmem:[#allocation6 + $0x41c] sm:$0xff]
        %v541 = vld [vmem:[#allocation6 + $0x424] sm:$0xff]
        %v542 = vld [vmem:[#allocation6 + $0x42c] sm:$0xff]
        %v543 = vld [vmem:[#allocation6 + $0x434] sm:$0xf]
        %v544 = vld [vmem:[#allocation6 + $0x438] sm:$0xff]
        %v545 = vld [vmem:[#allocation6 + $0x440] sm:$0xff]
        %v546 = vld [vmem:[#allocation6 + $0x448] sm:$0xff]
        %v547 = vld [vmem:[#allocation6 + $0x450] sm:$0xff]
        %v548 = vld [vmem:[#allocation6 + $0x458] sm:$0xf]
        %v549 = vld [vmem:[#allocation6 + $0x45c] sm:$0xff]
        %v550 = vld [vmem:[#allocation6 + $0x464] sm:$0xff]
        %v551 = vld [vmem:[#allocation6 + $0x46c] sm:$0xff]
        %v552 = vld [vmem:[#allocation6 + $0x474] sm:$0xff]
        %v553 = vld [vmem:[#allocation6 + $0x47c] sm:$0xf]
        %v554 = vld [vmem:[#allocation6 + $0x480] sm:$0xff]
        %v555 = vld [vmem:[#allocation6 + $0x488] sm:$0xff]
        %v556 = vld [vmem:[#allocation6 + $0x490] sm:$0xff]
        %v557 = vld [vmem:[#allocation6 + $0x498] sm:$0xff]
        %v558 = vld [vmem:[#allocation6 + $0x4a0] sm:$0xf]
        %v559 = vld [vmem:[#allocation6 + $0x4a4] sm:$0xff]
        %v560 = vld [vmem:[#allocation6 + $0x4ac] sm:$0xff]
        %v561 = vld [vmem:[#allocation6 + $0x4b4] sm:$0xff]
        %v562 = vld [vmem:[#allocation6 + $0x4bc] sm:$0xff]
        %v563 = vld [vmem:[#allocation6 + $0x4c4] sm:$0xf]
        %v564 = vld [vmem:[#allocation6 + $0x4c8] sm:$0xff]
        %v565 = vld [vmem:[#allocation6 + $0x4d0] sm:$0xff]
        %v566 = vld [vmem:[#allocation6 + $0x4d8] sm:$0xff]
        %v567 = vld [vmem:[#allocation6 + $0x4e0] sm:$0xff]
        %v568 = vld [vmem:[#allocation6 + $0x4e8] sm:$0xf]
        %v569 = vld [vmem:[#allocation6 + $0x4ec] sm:$0xff]
        %v570 = vld [vmem:[#allocation6 + $0x4f4] sm:$0xff]
        %v571 = vld [vmem:[#allocation6 + $0x4fc] sm:$0xff]
        %v572 = vld [vmem:[#allocation6 + $0x504] sm:$0xff]
        %v573 = vld [vmem:[#allocation6 + $0x50c] sm:$0xf]
        %v574 = vld [vmem:[#allocation6 + $0x510] sm:$0xff]
        %v575 = vld [vmem:[#allocation6 + $0x518] sm:$0xff]
        %v576 = vld [vmem:[#allocation6 + $0x520] sm:$0xff]
        %v577 = vld [vmem:[#allocation6 + $0x528] sm:$0xff]
        %v578 = vld [vmem:[#allocation6 + $0x530] sm:$0xf]
        %v579 = vld [vmem:[#allocation6 + $0x534] sm:$0xff]
        %v580 = vld [vmem:[#allocation6 + $0x53c] sm:$0xff]
        %v581 = vld [vmem:[#allocation6 + $0x544] sm:$0xff]
        %v582 = vld [vmem:[#allocation6 + $0x54c] sm:$0xff]
        %v583 = vld [vmem:[#allocation6 + $0x554] sm:$0xf]
        %v584 = vld [vmem:[#allocation6 + $0x558] sm:$0xff]
        %v585 = vld [vmem:[#allocation6 + $0x560] sm:$0xff]
        %v586 = vld [vmem:[#allocation6 + $0x568] sm:$0xff]
        %v587 = vld [vmem:[#allocation6 + $0x570] sm:$0xff]
        %v588 = vld [vmem:[#allocation6 + $0x578] sm:$0xf]
        %v589 = vld [vmem:[#allocation6 + $0x57c] sm:$0xff]
        %v590 = vld [vmem:[#allocation6 + $0x584] sm:$0xff]
        %v591 = vld [vmem:[#allocation6 + $0x58c] sm:$0xff]
        %v592 = vld [vmem:[#allocation6 + $0x594] sm:$0xff]
        %v593 = vld [vmem:[#allocation6 + $0x59c] sm:$0xf]
        %v594 = vld [vmem:[#allocation6 + $0x5a0] sm:$0xff]
        %v595 = vld [vmem:[#allocation6 + $0x5a8] sm:$0xff]
        %v596 = vld [vmem:[#allocation6 + $0x5b0] sm:$0xff]
        %v597 = vld [vmem:[#allocation6 + $0x5b8] sm:$0xff]
        %v598 = vld [vmem:[#allocation6 + $0x5c0] sm:$0xf]
        %v599 = vld [vmem:[#allocation6 + $0x5c4] sm:$0xff]
        %v600 = vld [vmem:[#allocation6 + $0x5cc] sm:$0xff]
        %v601 = vld [vmem:[#allocation6 + $0x5d4] sm:$0xff]
        %v602 = vld [vmem:[#allocation6 + $0x5dc] sm:$0xff]
        %v603 = vld [vmem:[#allocation6 + $0x5e4] sm:$0xf]
        %v604 = vld [vmem:[#allocation6 + $0x5e8] sm:$0xff]
        %v605 = vld [vmem:[#allocation6 + $0x5f0] sm:$0xff]
        %v606 = vld [vmem:[#allocation6 + $0x5f8] sm:$0xff]
        %v607 = vld [vmem:[#allocation6 + $0x600] sm:$0xff]
        %v608 = vld [vmem:[#allocation6 + $0x608] sm:$0xf]
        %v609 = vld [vmem:[#allocation6 + $0x60c] sm:$0xff]
        %v610 = vld [vmem:[#allocation6 + $0x614] sm:$0xff]
        %v611 = vld [vmem:[#allocation6 + $0x61c] sm:$0xff]
        %v612 = vld [vmem:[#allocation6 + $0x624] sm:$0xff]
        %v613 = vld [vmem:[#allocation6 + $0x62c] sm:$0xf]
        %v614 = vld [vmem:[#allocation6 + $0x630] sm:$0xff]
        %v615 = vld [vmem:[#allocation6 + $0x638] sm:$0xff]
        %v616 = vld [vmem:[#allocation6 + $0x640] sm:$0xff]
        %v617 = vld [vmem:[#allocation6 + $0x648] sm:$0xff]
        %v618 = vld [vmem:[#allocation6 + $0x650] sm:$0xf]
        %v619 = vld [vmem:[#allocation6 + $0x654] sm:$0xff]
        %v620 = vld [vmem:[#allocation6 + $0x65c] sm:$0xff]
        %v621 = vld [vmem:[#allocation6 + $0x664] sm:$0xff]
        %v622 = vld [vmem:[#allocation6 + $0x66c] sm:$0xff]
        %v623 = vld [vmem:[#allocation6 + $0x674] sm:$0xf]
        %v624 = vld [vmem:[#allocation6 + $0x678] sm:$0xff]
        %v625 = vld [vmem:[#allocation6 + $0x680] sm:$0xff]
        %v626 = vld [vmem:[#allocation6 + $0x688] sm:$0xff]
        %v627 = vld [vmem:[#allocation6 + $0x690] sm:$0xff]
        %v628 = vld [vmem:[#allocation6 + $0x698] sm:$0xf]
        %v629 = vld [vmem:[#allocation6 + $0x69c] sm:$0xff]
        %v630 = vld [vmem:[#allocation6 + $0x6a4] sm:$0xff]
        %v631 = vld [vmem:[#allocation6 + $0x6ac] sm:$0xff]
        %v632 = vld [vmem:[#allocation6 + $0x6b4] sm:$0xff]
        %v633 = vld [vmem:[#allocation6 + $0x6bc] sm:$0xf]
        %v874 = vunpack.c.l.b16 %v394
        %v875 = vunpack.c.h.b16 %v394
        %v876 = vunpack.c.l.b16 %v395
        %v877 = vunpack.c.h.b16 %v395
        %v878 = vunpack.c.l.b16 %v396
        %v879 = vunpack.c.h.b16 %v396
        %v880 = vunpack.c.l.b16 %v397
        %v881 = vunpack.c.h.b16 %v397
        %v882 = vunpack.c.l.b16 %v398
        %v883 = vunpack.c.l.b16 %v399
        %v884 = vunpack.c.h.b16 %v399
        %v885 = vunpack.c.l.b16 %v400
        %v886 = vunpack.c.h.b16 %v400
        %v887 = vunpack.c.l.b16 %v401
        %v888 = vunpack.c.h.b16 %v401
        %v889 = vunpack.c.l.b16 %v402
        %v890 = vunpack.c.h.b16 %v402
        %v891 = vunpack.c.l.b16 %v403
        %v892 = vunpack.c.l.b16 %v404
        %v893 = vunpack.c.h.b16 %v404
        %v894 = vunpack.c.l.b16 %v405
        %v895 = vunpack.c.h.b16 %v405
        %v896 = vunpack.c.l.b16 %v406
        %v897 = vunpack.c.h.b16 %v406
        %v898 = vunpack.c.l.b16 %v407
        %v899 = vunpack.c.h.b16 %v407
        %v900 = vunpack.c.l.b16 %v408
        %v901 = vunpack.c.l.b16 %v409
        %v902 = vunpack.c.h.b16 %v409
        %v903 = vunpack.c.l.b16 %v410
        %v904 = vunpack.c.h.b16 %v410
        %v905 = vunpack.c.l.b16 %v411
        %v906 = vunpack.c.h.b16 %v411
        %v907 = vunpack.c.l.b16 %v412
        %v908 = vunpack.c.h.b16 %v412
        %v909 = vunpack.c.l.b16 %v413
        %v910 = vunpack.c.l.b16 %v414
        %v911 = vunpack.c.h.b16 %v414
        %v912 = vunpack.c.l.b16 %v415
        %v913 = vunpack.c.h.b16 %v415
        %v914 = vunpack.c.l.b16 %v416
        %v915 = vunpack.c.h.b16 %v416
        %v916 = vunpack.c.l.b16 %v417
        %v917 = vunpack.c.h.b16 %v417
        %v918 = vunpack.c.l.b16 %v418
        %v919 = vunpack.c.l.b16 %v419
        %v920 = vunpack.c.h.b16 %v419
        %v921 = vunpack.c.l.b16 %v420
        %v922 = vunpack.c.h.b16 %v420
        %v923 = vunpack.c.l.b16 %v421
        %v924 = vunpack.c.h.b16 %v421
        %v925 = vunpack.c.l.b16 %v422
        %v926 = vunpack.c.h.b16 %v422
        %v927 = vunpack.c.l.b16 %v423
        %v928 = vunpack.c.l.b16 %v424
        %v929 = vunpack.c.h.b16 %v424
        %v930 = vunpack.c.l.b16 %v425
        %v931 = vunpack.c.h.b16 %v425
        %v932 = vunpack.c.l.b16 %v426
        %v933 = vunpack.c.h.b16 %v426
        %v934 = vunpack.c.l.b16 %v427
        %v935 = vunpack.c.h.b16 %v427
        %v936 = vunpack.c.l.b16 %v428
        %v937 = vunpack.c.l.b16 %v429
        %v938 = vunpack.c.h.b16 %v429
        %v939 = vunpack.c.l.b16 %v430
        %v940 = vunpack.c.h.b16 %v430
        %v941 = vunpack.c.l.b16 %v431
        %v942 = vunpack.c.h.b16 %v431
        %v943 = vunpack.c.l.b16 %v432
        %v944 = vunpack.c.h.b16 %v432
        %v945 = vunpack.c.l.b16 %v433
        %v946 = vunpack.c.l.b16 %v434
        %v947 = vunpack.c.h.b16 %v434
        %v948 = vunpack.c.l.b16 %v435
        %v949 = vunpack.c.h.b16 %v435
        %v950 = vunpack.c.l.b16 %v436
        %v951 = vunpack.c.h.b16 %v436
        %v952 = vunpack.c.l.b16 %v437
        %v953 = vunpack.c.h.b16 %v437
        %v954 = vunpack.c.l.b16 %v438
        %v955 = vunpack.c.l.b16 %v439
        %v956 = vunpack.c.h.b16 %v439
        %v957 = vunpack.c.l.b16 %v440
        %v958 = vunpack.c.h.b16 %v440
        %v959 = vunpack.c.l.b16 %v441
        %v960 = vunpack.c.h.b16 %v441
        %v961 = vunpack.c.l.b16 %v442
        %v962 = vunpack.c.h.b16 %v442
        %v963 = vunpack.c.l.b16 %v443
        %v964 = vunpack.c.l.b16 %v444
        %v965 = vunpack.c.h.b16 %v444
        %v966 = vunpack.c.l.b16 %v445
        %v967 = vunpack.c.h.b16 %v445
        %v968 = vunpack.c.l.b16 %v446
        %v969 = vunpack.c.h.b16 %v446
        %v970 = vunpack.c.l.b16 %v447
        %v971 = vunpack.c.h.b16 %v447
        %v972 = vunpack.c.l.b16 %v448
        %v973 = vunpack.c.l.b16 %v449
        %v974 = vunpack.c.h.b16 %v449
        %v975 = vunpack.c.l.b16 %v450
        %v976 = vunpack.c.h.b16 %v450
        %v977 = vunpack.c.l.b16 %v451
        %v978 = vunpack.c.h.b16 %v451
        %v979 = vunpack.c.l.b16 %v452
        %v980 = vunpack.c.h.b16 %v452
        %v981 = vunpack.c.l.b16 %v453
        %v982 = vunpack.c.l.b16 %v454
        %v983 = vunpack.c.h.b16 %v454
        %v984 = vunpack.c.l.b16 %v455
        %v985 = vunpack.c.h.b16 %v455
        %v986 = vunpack.c.l.b16 %v456
        %v987 = vunpack.c.h.b16 %v456
        %v988 = vunpack.c.l.b16 %v457
        %v989 = vunpack.c.h.b16 %v457
        %v990 = vunpack.c.l.b16 %v458
        %v991 = vunpack.c.l.b16 %v459
        %v992 = vunpack.c.h.b16 %v459
        %v993 = vunpack.c.l.b16 %v460
        %v994 = vunpack.c.h.b16 %v460
        %v995 = vunpack.c.l.b16 %v461
        %v996 = vunpack.c.h.b16 %v461
        %v997 = vunpack.c.l.b16 %v462
        %v998 = vunpack.c.h.b16 %v462
        %v999 = vunpack.c.l.b16 %v463
        %v1000 = vunpack.c.l.b16 %v464
        %v1001 = vunpack.c.h.b16 %v464
        %v1002 = vunpack.c.l.b16 %v465
        %v1003 = vunpack.c.h.b16 %v465
        %v1004 = vunpack.c.l.b16 %v466
        %v1005 = vunpack.c.h.b16 %v466
        %v1006 = vunpack.c.l.b16 %v467
        %v1007 = vunpack.c.h.b16 %v467
        %v1008 = vunpack.c.l.b16 %v468
        %v1009 = vunpack.c.l.b16 %v469
        %v1010 = vunpack.c.h.b16 %v469
        %v1011 = vunpack.c.l.b16 %v470
        %v1012 = vunpack.c.h.b16 %v470
        %v1013 = vunpack.c.l.b16 %v471
        %v1014 = vunpack.c.h.b16 %v471
        %v1015 = vunpack.c.l.b16 %v472
        %v1016 = vunpack.c.h.b16 %v472
        %v1017 = vunpack.c.l.b16 %v473
        %v1018 = vunpack.c.l.b16 %v474
        %v1019 = vunpack.c.h.b16 %v474
        %v1020 = vunpack.c.l.b16 %v475
        %v1021 = vunpack.c.h.b16 %v475
        %v1022 = vunpack.c.l.b16 %v476
        %v1023 = vunpack.c.h.b16 %v476
        %v1024 = vunpack.c.l.b16 %v477
        %v1025 = vunpack.c.h.b16 %v477
        %v1026 = vunpack.c.l.b16 %v478
        %v1027 = vunpack.c.l.b16 %v479
        %v1028 = vunpack.c.h.b16 %v479
        %v1029 = vunpack.c.l.b16 %v480
        %v1030 = vunpack.c.h.b16 %v480
        %v1031 = vunpack.c.l.b16 %v481
        %v1032 = vunpack.c.h.b16 %v481
        %v1033 = vunpack.c.l.b16 %v482
        %v1034 = vunpack.c.h.b16 %v482
        %v1035 = vunpack.c.l.b16 %v483
        %v1036 = vunpack.c.l.b16 %v484
        %v1037 = vunpack.c.h.b16 %v484
        %v1038 = vunpack.c.l.b16 %v485
        %v1039 = vunpack.c.h.b16 %v485
        %v1040 = vunpack.c.l.b16 %v486
        %v1041 = vunpack.c.h.b16 %v486
        %v1042 = vunpack.c.l.b16 %v487
        %v1043 = vunpack.c.h.b16 %v487
        %v1044 = vunpack.c.l.b16 %v488
        %v1045 = vunpack.c.l.b16 %v489
        %v1046 = vunpack.c.h.b16 %v489
        %v1047 = vunpack.c.l.b16 %v490
        %v1048 = vunpack.c.h.b16 %v490
        %v1049 = vunpack.c.l.b16 %v491
        %v1050 = vunpack.c.h.b16 %v491
        %v1051 = vunpack.c.l.b16 %v492
        %v1052 = vunpack.c.h.b16 %v492
        %v1053 = vunpack.c.l.b16 %v493
        %v1054 = vunpack.c.l.b16 %v494
        %v1055 = vunpack.c.h.b16 %v494
        %v1056 = vunpack.c.l.b16 %v495
        %v1057 = vunpack.c.h.b16 %v495
        %v1058 = vunpack.c.l.b16 %v496
        %v1059 = vunpack.c.h.b16 %v496
        %v1060 = vunpack.c.l.b16 %v497
        %v1061 = vunpack.c.h.b16 %v497
        %v1062 = vunpack.c.l.b16 %v498
        %v1063 = vunpack.c.l.b16 %v499
        %v1064 = vunpack.c.h.b16 %v499
        %v1065 = vunpack.c.l.b16 %v500
        %v1066 = vunpack.c.h.b16 %v500
        %v1067 = vunpack.c.l.b16 %v501
        %v1068 = vunpack.c.h.b16 %v501
        %v1069 = vunpack.c.l.b16 %v502
        %v1070 = vunpack.c.h.b16 %v502
        %v1071 = vunpack.c.l.b16 %v503
        %v1072 = vunpack.c.l.b16 %v504
        %v1073 = vunpack.c.h.b16 %v504
        %v1074 = vunpack.c.l.b16 %v505
        %v1075 = vunpack.c.h.b16 %v505
        %v1076 = vunpack.c.l.b16 %v506
        %v1077 = vunpack.c.h.b16 %v506
        %v1078 = vunpack.c.l.b16 %v507
        %v1079 = vunpack.c.h.b16 %v507
        %v1080 = vunpack.c.l.b16 %v508
        %v1081 = vunpack.c.l.b16 %v509
        %v1082 = vunpack.c.h.b16 %v509
        %v1083 = vunpack.c.l.b16 %v510
        %v1084 = vunpack.c.h.b16 %v510
        %v1085 = vunpack.c.l.b16 %v511
        %v1086 = vunpack.c.h.b16 %v511
        %v1087 = vunpack.c.l.b16 %v512
        %v1088 = vunpack.c.h.b16 %v512
        %v1089 = vunpack.c.l.b16 %v513
        %v1090 = vunpack.c.l.b16 %v514
        %v1091 = vunpack.c.h.b16 %v514
        %v1092 = vunpack.c.l.b16 %v515
        %v1093 = vunpack.c.h.b16 %v515
        %v1094 = vunpack.c.l.b16 %v516
        %v1095 = vunpack.c.h.b16 %v516
        %v1096 = vunpack.c.l.b16 %v517
        %v1097 = vunpack.c.h.b16 %v517
        %v1098 = vunpack.c.l.b16 %v518
        %v1099 = vunpack.c.l.b16 %v519
        %v1100 = vunpack.c.h.b16 %v519
        %v1101 = vunpack.c.l.b16 %v520
        %v1102 = vunpack.c.h.b16 %v520
        %v1103 = vunpack.c.l.b16 %v521
        %v1104 = vunpack.c.h.b16 %v521
        %v1105 = vunpack.c.l.b16 %v522
        %v1106 = vunpack.c.h.b16 %v522
        %v1107 = vunpack.c.l.b16 %v523
        %v1108 = vunpack.c.l.b16 %v524
        %v1109 = vunpack.c.h.b16 %v524
        %v1110 = vunpack.c.l.b16 %v525
        %v1111 = vunpack.c.h.b16 %v525
        %v1112 = vunpack.c.l.b16 %v526
        %v1113 = vunpack.c.h.b16 %v526
        %v1114 = vunpack.c.l.b16 %v527
        %v1115 = vunpack.c.h.b16 %v527
        %v1116 = vunpack.c.l.b16 %v528
        %v1117 = vunpack.c.l.b16 %v529
        %v1118 = vunpack.c.h.b16 %v529
        %v1119 = vunpack.c.l.b16 %v530
        %v1120 = vunpack.c.h.b16 %v530
        %v1121 = vunpack.c.l.b16 %v531
        %v1122 = vunpack.c.h.b16 %v531
        %v1123 = vunpack.c.l.b16 %v532
        %v1124 = vunpack.c.h.b16 %v532
        %v1125 = vunpack.c.l.b16 %v533
        %v1126 = vunpack.c.l.b16 %v534
        %v1127 = vunpack.c.h.b16 %v534
        %v1128 = vunpack.c.l.b16 %v535
        %v1129 = vunpack.c.h.b16 %v535
        %v1130 = vunpack.c.l.b16 %v536
        %v1131 = vunpack.c.h.b16 %v536
        %v1132 = vunpack.c.l.b16 %v537
        %v1133 = vunpack.c.h.b16 %v537
        %v1134 = vunpack.c.l.b16 %v538
        %v1135 = vunpack.c.l.b16 %v539
        %v1136 = vunpack.c.h.b16 %v539
        %v1137 = vunpack.c.l.b16 %v540
        %v1138 = vunpack.c.h.b16 %v540
        %v1139 = vunpack.c.l.b16 %v541
        %v1140 = vunpack.c.h.b16 %v541
        %v1141 = vunpack.c.l.b16 %v542
        %v1142 = vunpack.c.h.b16 %v542
        %v1143 = vunpack.c.l.b16 %v543
        %v1144 = vunpack.c.l.b16 %v544
        %v1145 = vunpack.c.h.b16 %v544
        %v1146 = vunpack.c.l.b16 %v545
        %v1147 = vunpack.c.h.b16 %v545
        %v1148 = vunpack.c.l.b16 %v546
        %v1149 = vunpack.c.h.b16 %v546
        %v1150 = vunpack.c.l.b16 %v547
        %v1151 = vunpack.c.h.b16 %v547
        %v1152 = vunpack.c.l.b16 %v548
        %v1153 = vunpack.c.l.b16 %v549
        %v1154 = vunpack.c.h.b16 %v549
        %v1155 = vunpack.c.l.b16 %v550
        %v1156 = vunpack.c.h.b16 %v550
        %v1157 = vunpack.c.l.b16 %v551
        %v1158 = vunpack.c.h.b16 %v551
        %v1159 = vunpack.c.l.b16 %v552
        %v1160 = vunpack.c.h.b16 %v552
        %v1161 = vunpack.c.l.b16 %v553
        %v1162 = vunpack.c.l.b16 %v554
        %v1163 = vunpack.c.h.b16 %v554
        %v1164 = vunpack.c.l.b16 %v555
        %v1165 = vunpack.c.h.b16 %v555
        %v1166 = vunpack.c.l.b16 %v556
        %v1167 = vunpack.c.h.b16 %v556
        %v1168 = vunpack.c.l.b16 %v557
        %v1169 = vunpack.c.h.b16 %v557
        %v1170 = vunpack.c.l.b16 %v558
        %v1171 = vunpack.c.l.b16 %v559
        %v1172 = vunpack.c.h.b16 %v559
        %v1173 = vunpack.c.l.b16 %v560
        %v1174 = vunpack.c.h.b16 %v560
        %v1175 = vunpack.c.l.b16 %v561
        %v1176 = vunpack.c.h.b16 %v561
        %v1177 = vunpack.c.l.b16 %v562
        %v1178 = vunpack.c.h.b16 %v562
        %v1179 = vunpack.c.l.b16 %v563
        %v1180 = vunpack.c.l.b16 %v564
        %v1181 = vunpack.c.h.b16 %v564
        %v1182 = vunpack.c.l.b16 %v565
        %v1183 = vunpack.c.h.b16 %v565
        %v1184 = vunpack.c.l.b16 %v566
        %v1185 = vunpack.c.h.b16 %v566
        %v1186 = vunpack.c.l.b16 %v567
        %v1187 = vunpack.c.h.b16 %v567
        %v1188 = vunpack.c.l.b16 %v568
        %v1189 = vunpack.c.l.b16 %v569
        %v1190 = vunpack.c.h.b16 %v569
        %v1191 = vunpack.c.l.b16 %v570
        %v1192 = vunpack.c.h.b16 %v570
        %v1193 = vunpack.c.l.b16 %v571
        %v1194 = vunpack.c.h.b16 %v571
        %v1195 = vunpack.c.l.b16 %v572
        %v1196 = vunpack.c.h.b16 %v572
        %v1197 = vunpack.c.l.b16 %v573
        %v1198 = vunpack.c.l.b16 %v574
        %v1199 = vunpack.c.h.b16 %v574
        %v1200 = vunpack.c.l.b16 %v575
        %v1201 = vunpack.c.h.b16 %v575
        %v1202 = vunpack.c.l.b16 %v576
        %v1203 = vunpack.c.h.b16 %v576
        %v1204 = vunpack.c.l.b16 %v577
        %v1205 = vunpack.c.h.b16 %v577
        %v1206 = vunpack.c.l.b16 %v578
        %v1207 = vunpack.c.l.b16 %v579
        %v1208 = vunpack.c.h.b16 %v579
        %v1209 = vunpack.c.l.b16 %v580
        %v1210 = vunpack.c.h.b16 %v580
        %v1211 = vunpack.c.l.b16 %v581
        %v1212 = vunpack.c.h.b16 %v581
        %v1213 = vunpack.c.l.b16 %v582
        %v1214 = vunpack.c.h.b16 %v582
        %v1215 = vunpack.c.l.b16 %v583
        %v1216 = vunpack.c.l.b16 %v584
        %v1217 = vunpack.c.h.b16 %v584
        %v1218 = vunpack.c.l.b16 %v585
        %v1219 = vunpack.c.h.b16 %v585
        %v1220 = vunpack.c.l.b16 %v586
        %v1221 = vunpack.c.h.b16 %v586
        %v1222 = vunpack.c.l.b16 %v587
        %v1223 = vunpack.c.h.b16 %v587
        %v1224 = vunpack.c.l.b16 %v588
        %v1225 = vunpack.c.l.b16 %v589
        %v1226 = vunpack.c.h.b16 %v589
        %v1227 = vunpack.c.l.b16 %v590
        %v1228 = vunpack.c.h.b16 %v590
        %v1229 = vunpack.c.l.b16 %v591
        %v1230 = vunpack.c.h.b16 %v591
        %v1231 = vunpack.c.l.b16 %v592
        %v1232 = vunpack.c.h.b16 %v592
        %v1233 = vunpack.c.l.b16 %v593
        %v1234 = vunpack.c.l.b16 %v594
        %v1235 = vunpack.c.h.b16 %v594
        %v1236 = vunpack.c.l.b16 %v595
        %v1237 = vunpack.c.h.b16 %v595
        %v1238 = vunpack.c.l.b16 %v596
        %v1239 = vunpack.c.h.b16 %v596
        %v1240 = vunpack.c.l.b16 %v597
        %v1241 = vunpack.c.h.b16 %v597
        %v1242 = vunpack.c.l.b16 %v598
        %v1243 = vunpack.c.l.b16 %v599
        %v1244 = vunpack.c.h.b16 %v599
        %v1245 = vunpack.c.l.b16 %v600
        %v1246 = vunpack.c.h.b16 %v600
        %v1247 = vunpack.c.l.b16 %v601
        %v1248 = vunpack.c.h.b16 %v601
        %v1249 = vunpack.c.l.b16 %v602
        %v1250 = vunpack.c.h.b16 %v602
        %v1251 = vunpack.c.l.b16 %v603
        %v1252 = vunpack.c.l.b16 %v604
        %v1253 = vunpack.c.h.b16 %v604
        %v1254 = vunpack.c.l.b16 %v605
        %v1255 = vunpack.c.h.b16 %v605
        %v1256 = vunpack.c.l.b16 %v606
        %v1257 = vunpack.c.h.b16 %v606
        %v1258 = vunpack.c.l.b16 %v607
        %v1259 = vunpack.c.h.b16 %v607
        %v1260 = vunpack.c.l.b16 %v608
        %v1261 = vunpack.c.l.b16 %v609
        %v1262 = vunpack.c.h.b16 %v609
        %v1263 = vunpack.c.l.b16 %v610
        %v1264 = vunpack.c.h.b16 %v610
        %v1265 = vunpack.c.l.b16 %v611
        %v1266 = vunpack.c.h.b16 %v611
        %v1267 = vunpack.c.l.b16 %v612
        %v1268 = vunpack.c.h.b16 %v612
        %v1269 = vunpack.c.l.b16 %v613
        %v1270 = vunpack.c.l.b16 %v614
        %v1271 = vunpack.c.h.b16 %v614
        %v1272 = vunpack.c.l.b16 %v615
        %v1273 = vunpack.c.h.b16 %v615
        %v1274 = vunpack.c.l.b16 %v616
        %v1275 = vunpack.c.h.b16 %v616
        %v1276 = vunpack.c.l.b16 %v617
        %v1277 = vunpack.c.h.b16 %v617
        %v1278 = vunpack.c.l.b16 %v618
        %v1279 = vunpack.c.l.b16 %v619
        %v1280 = vunpack.c.h.b16 %v619
        %v1281 = vunpack.c.l.b16 %v620
        %v1282 = vunpack.c.h.b16 %v620
        %v1283 = vunpack.c.l.b16 %v621
        %v1284 = vunpack.c.h.b16 %v621
        %v1285 = vunpack.c.l.b16 %v622
        %v1286 = vunpack.c.h.b16 %v622
        %v1287 = vunpack.c.l.b16 %v623
        %v1288 = vunpack.c.l.b16 %v624
        %v1289 = vunpack.c.h.b16 %v624
        %v1290 = vunpack.c.l.b16 %v625
        %v1291 = vunpack.c.h.b16 %v625
        %v1292 = vunpack.c.l.b16 %v626
        %v1293 = vunpack.c.h.b16 %v626
        %v1294 = vunpack.c.l.b16 %v627
        %v1295 = vunpack.c.h.b16 %v627
        %v1296 = vunpack.c.l.b16 %v628
        %v1297 = vunpack.c.l.b16 %v629
        %v1298 = vunpack.c.h.b16 %v629
        %v1299 = vunpack.c.l.b16 %v630
        %v1300 = vunpack.c.h.b16 %v630
        %v1301 = vunpack.c.l.b16 %v631
        %v1302 = vunpack.c.h.b16 %v631
        %v1303 = vunpack.c.l.b16 %v632
        %v1304 = vunpack.c.h.b16 %v632
        %v1305 = vunpack.c.l.b16 %v633
        %v1306 = vpack.c.b16 %v883, %v874
        %v1307 = vpack.c.b16 %v884, %v875
        %v1308 = vpack.c.b16 %v885, %v876
        %v1309 = vpack.c.b16 %v886, %v877
        %v1310 = vpack.c.b16 %v887, %v878
        %v1311 = vpack.c.b16 %v888, %v879
        %v1312 = vpack.c.b16 %v889, %v880
        %v1313 = vpack.c.b16 %v890, %v881
        %v1314 = vpack.c.b16 %v891, %v882
        %v1315 = vpack.c.b16 %v901, %v892
        %v1316 = vpack.c.b16 %v902, %v893
        %v1317 = vpack.c.b16 %v903, %v894
        %v1318 = vpack.c.b16 %v904, %v895
        %v1319 = vpack.c.b16 %v905, %v896
        %v1320 = vpack.c.b16 %v906, %v897
        %v1321 = vpack.c.b16 %v907, %v898
        %v1322 = vpack.c.b16 %v908, %v899
        %v1323 = vpack.c.b16 %v909, %v900
        %v1324 = vpack.c.b16 %v919, %v910
        %v1325 = vpack.c.b16 %v920, %v911
        %v1326 = vpack.c.b16 %v921, %v912
        %v1327 = vpack.c.b16 %v922, %v913
        %v1328 = vpack.c.b16 %v923, %v914
        %v1329 = vpack.c.b16 %v924, %v915
        %v1330 = vpack.c.b16 %v925, %v916
        %v1331 = vpack.c.b16 %v926, %v917
        %v1332 = vpack.c.b16 %v927, %v918
        %v1333 = vpack.c.b16 %v937, %v928
        %v1334 = vpack.c.b16 %v938, %v929
        %v1335 = vpack.c.b16 %v939, %v930
        %v1336 = vpack.c.b16 %v940, %v931
        %v1337 = vpack.c.b16 %v941, %v932
        %v1338 = vpack.c.b16 %v942, %v933
        %v1339 = vpack.c.b16 %v943, %v934
        %v1340 = vpack.c.b16 %v944, %v935
        %v1341 = vpack.c.b16 %v945, %v936
        %v1342 = vpack.c.b16 %v955, %v946
        %v1343 = vpack.c.b16 %v956, %v947
        %v1344 = vpack.c.b16 %v957, %v948
        %v1345 = vpack.c.b16 %v958, %v949
        %v1346 = vpack.c.b16 %v959, %v950
        %v1347 = vpack.c.b16 %v960, %v951
        %v1348 = vpack.c.b16 %v961, %v952
        %v1349 = vpack.c.b16 %v962, %v953
        %v1350 = vpack.c.b16 %v963, %v954
        %v1351 = vpack.c.b16 %v973, %v964
        %v1352 = vpack.c.b16 %v974, %v965
        %v1353 = vpack.c.b16 %v975, %v966
        %v1354 = vpack.c.b16 %v976, %v967
        %v1355 = vpack.c.b16 %v977, %v968
        %v1356 = vpack.c.b16 %v978, %v969
        %v1357 = vpack.c.b16 %v979, %v970
        %v1358 = vpack.c.b16 %v980, %v971
        %v1359 = vpack.c.b16 %v981, %v972
        %v1360 = vpack.c.b16 %v991, %v982
        %v1361 = vpack.c.b16 %v992, %v983
        %v1362 = vpack.c.b16 %v993, %v984
        %v1363 = vpack.c.b16 %v994, %v985
        %v1364 = vpack.c.b16 %v995, %v986
        %v1365 = vpack.c.b16 %v996, %v987
        %v1366 = vpack.c.b16 %v997, %v988
        %v1367 = vpack.c.b16 %v998, %v989
        %v1368 = vpack.c.b16 %v999, %v990
        %v1369 = vpack.c.b16 %v1009, %v1000
        %v1370 = vpack.c.b16 %v1010, %v1001
        %v1371 = vpack.c.b16 %v1011, %v1002
        %v1372 = vpack.c.b16 %v1012, %v1003
        %v1373 = vpack.c.b16 %v1013, %v1004
        %v1374 = vpack.c.b16 %v1014, %v1005
        %v1375 = vpack.c.b16 %v1015, %v1006
        %v1376 = vpack.c.b16 %v1016, %v1007
        %v1377 = vpack.c.b16 %v1017, %v1008
        %v1378 = vpack.c.b16 %v1027, %v1018
        %v1379 = vpack.c.b16 %v1028, %v1019
        %v1380 = vpack.c.b16 %v1029, %v1020
        %v1381 = vpack.c.b16 %v1030, %v1021
        %v1382 = vpack.c.b16 %v1031, %v1022
        %v1383 = vpack.c.b16 %v1032, %v1023
        %v1384 = vpack.c.b16 %v1033, %v1024
        %v1385 = vpack.c.b16 %v1034, %v1025
        %v1386 = vpack.c.b16 %v1035, %v1026
        %v1387 = vpack.c.b16 %v1045, %v1036
        %v1388 = vpack.c.b16 %v1046, %v1037
        %v1389 = vpack.c.b16 %v1047, %v1038
        %v1390 = vpack.c.b16 %v1048, %v1039
        %v1391 = vpack.c.b16 %v1049, %v1040
        %v1392 = vpack.c.b16 %v1050, %v1041
        %v1393 = vpack.c.b16 %v1051, %v1042
        %v1394 = vpack.c.b16 %v1052, %v1043
        %v1395 = vpack.c.b16 %v1053, %v1044
        %v1396 = vpack.c.b16 %v1063, %v1054
        %v1397 = vpack.c.b16 %v1064, %v1055
        %v1398 = vpack.c.b16 %v1065, %v1056
        %v1399 = vpack.c.b16 %v1066, %v1057
        %v1400 = vpack.c.b16 %v1067, %v1058
        %v1401 = vpack.c.b16 %v1068, %v1059
        %v1402 = vpack.c.b16 %v1069, %v1060
        %v1403 = vpack.c.b16 %v1070, %v1061
        %v1404 = vpack.c.b16 %v1071, %v1062
        %v1405 = vpack.c.b16 %v1081, %v1072
        %v1406 = vpack.c.b16 %v1082, %v1073
        %v1407 = vpack.c.b16 %v1083, %v1074
        %v1408 = vpack.c.b16 %v1084, %v1075
        %v1409 = vpack.c.b16 %v1085, %v1076
        %v1410 = vpack.c.b16 %v1086, %v1077
        %v1411 = vpack.c.b16 %v1087, %v1078
        %v1412 = vpack.c.b16 %v1088, %v1079
        %v1413 = vpack.c.b16 %v1089, %v1080
        %v1414 = vpack.c.b16 %v1099, %v1090
        %v1415 = vpack.c.b16 %v1100, %v1091
        %v1416 = vpack.c.b16 %v1101, %v1092
        %v1417 = vpack.c.b16 %v1102, %v1093
        %v1418 = vpack.c.b16 %v1103, %v1094
        %v1419 = vpack.c.b16 %v1104, %v1095
        %v1420 = vpack.c.b16 %v1105, %v1096
        %v1421 = vpack.c.b16 %v1106, %v1097
        %v1422 = vpack.c.b16 %v1107, %v1098
        %v1423 = vpack.c.b16 %v1117, %v1108
        %v1424 = vpack.c.b16 %v1118, %v1109
        %v1425 = vpack.c.b16 %v1119, %v1110
        %v1426 = vpack.c.b16 %v1120, %v1111
        %v1427 = vpack.c.b16 %v1121, %v1112
        %v1428 = vpack.c.b16 %v1122, %v1113
        %v1429 = vpack.c.b16 %v1123, %v1114
        %v1430 = vpack.c.b16 %v1124, %v1115
        %v1431 = vpack.c.b16 %v1125, %v1116
        %v1432 = vpack.c.b16 %v1135, %v1126
        %v1433 = vpack.c.b16 %v1136, %v1127
        %v1434 = vpack.c.b16 %v1137, %v1128
        %v1435 = vpack.c.b16 %v1138, %v1129
        %v1436 = vpack.c.b16 %v1139, %v1130
        %v1437 = vpack.c.b16 %v1140, %v1131
        %v1438 = vpack.c.b16 %v1141, %v1132
        %v1439 = vpack.c.b16 %v1142, %v1133
        %v1440 = vpack.c.b16 %v1143, %v1134
        %v1441 = vpack.c.b16 %v1153, %v1144
        %v1442 = vpack.c.b16 %v1154, %v1145
        %v1443 = vpack.c.b16 %v1155, %v1146
        %v1444 = vpack.c.b16 %v1156, %v1147
        %v1445 = vpack.c.b16 %v1157, %v1148
        %v1446 = vpack.c.b16 %v1158, %v1149
        %v1447 = vpack.c.b16 %v1159, %v1150
        %v1448 = vpack.c.b16 %v1160, %v1151
        %v1449 = vpack.c.b16 %v1161, %v1152
        %v1450 = vpack.c.b16 %v1171, %v1162
        %v1451 = vpack.c.b16 %v1172, %v1163
        %v1452 = vpack.c.b16 %v1173, %v1164
        %v1453 = vpack.c.b16 %v1174, %v1165
        %v1454 = vpack.c.b16 %v1175, %v1166
        %v1455 = vpack.c.b16 %v1176, %v1167
        %v1456 = vpack.c.b16 %v1177, %v1168
        %v1457 = vpack.c.b16 %v1178, %v1169
        %v1458 = vpack.c.b16 %v1179, %v1170
        %v1459 = vpack.c.b16 %v1189, %v1180
        %v1460 = vpack.c.b16 %v1190, %v1181
        %v1461 = vpack.c.b16 %v1191, %v1182
        %v1462 = vpack.c.b16 %v1192, %v1183
        %v1463 = vpack.c.b16 %v1193, %v1184
        %v1464 = vpack.c.b16 %v1194, %v1185
        %v1465 = vpack.c.b16 %v1195, %v1186
        %v1466 = vpack.c.b16 %v1196, %v1187
        %v1467 = vpack.c.b16 %v1197, %v1188
        %v1468 = vpack.c.b16 %v1207, %v1198
        %v1469 = vpack.c.b16 %v1208, %v1199
        %v1470 = vpack.c.b16 %v1209, %v1200
        %v1471 = vpack.c.b16 %v1210, %v1201
        %v1472 = vpack.c.b16 %v1211, %v1202
        %v1473 = vpack.c.b16 %v1212, %v1203
        %v1474 = vpack.c.b16 %v1213, %v1204
        %v1475 = vpack.c.b16 %v1214, %v1205
        %v1476 = vpack.c.b16 %v1215, %v1206
        %v1477 = vpack.c.b16 %v1225, %v1216
        %v1478 = vpack.c.b16 %v1226, %v1217
        %v1479 = vpack.c.b16 %v1227, %v1218
        %v1480 = vpack.c.b16 %v1228, %v1219
        %v1481 = vpack.c.b16 %v1229, %v1220
        %v1482 = vpack.c.b16 %v1230, %v1221
        %v1483 = vpack.c.b16 %v1231, %v1222
        %v1484 = vpack.c.b16 %v1232, %v1223
        %v1485 = vpack.c.b16 %v1233, %v1224
        %v1486 = vpack.c.b16 %v1243, %v1234
        %v1487 = vpack.c.b16 %v1244, %v1235
        %v1488 = vpack.c.b16 %v1245, %v1236
        %v1489 = vpack.c.b16 %v1246, %v1237
        %v1490 = vpack.c.b16 %v1247, %v1238
        %v1491 = vpack.c.b16 %v1248, %v1239
        %v1492 = vpack.c.b16 %v1249, %v1240
        %v1493 = vpack.c.b16 %v1250, %v1241
        %v1494 = vpack.c.b16 %v1251, %v1242
        %v1495 = vpack.c.b16 %v1261, %v1252
        %v1496 = vpack.c.b16 %v1262, %v1253
        %v1497 = vpack.c.b16 %v1263, %v1254
        %v1498 = vpack.c.b16 %v1264, %v1255
        %v1499 = vpack.c.b16 %v1265, %v1256
        %v1500 = vpack.c.b16 %v1266, %v1257
        %v1501 = vpack.c.b16 %v1267, %v1258
        %v1502 = vpack.c.b16 %v1268, %v1259
        %v1503 = vpack.c.b16 %v1269, %v1260
        %v1504 = vpack.c.b16 %v1279, %v1270
        %v1505 = vpack.c.b16 %v1280, %v1271
        %v1506 = vpack.c.b16 %v1281, %v1272
        %v1507 = vpack.c.b16 %v1282, %v1273
        %v1508 = vpack.c.b16 %v1283, %v1274
        %v1509 = vpack.c.b16 %v1284, %v1275
        %v1510 = vpack.c.b16 %v1285, %v1276
        %v1511 = vpack.c.b16 %v1286, %v1277
        %v1512 = vpack.c.b16 %v1287, %v1278
        %v1513 = vpack.c.b16 %v1297, %v1288
        %v1514 = vpack.c.b16 %v1298, %v1289
        %v1515 = vpack.c.b16 %v1299, %v1290
        %v1516 = vpack.c.b16 %v1300, %v1291
        %v1517 = vpack.c.b16 %v1301, %v1292
        %v1518 = vpack.c.b16 %v1302, %v1293
        %v1519 = vpack.c.b16 %v1303, %v1294
        %v1520 = vpack.c.b16 %v1304, %v1295
        %v1521 = vpack.c.b16 %v1305, %v1296
        %1738 = vmatprep.subr.bf16.mxu0 %v1370
        %1739 = vmatpush1.bf16.msra.mxu0 %v1369
        %1740 = vmatprep.subr.bf16.mxu0 %v1361
        %1741 = vmatpush1.bf16.msra.mxu0 %v1360
        %1742 = vmatprep.subr.bf16.mxu0 %v1352
        %1743 = vmatpush1.bf16.msra.mxu0 %v1351
        %1744 = vmatprep.subr.bf16.mxu0 %v1343
        %1745 = vmatpush1.bf16.msra.mxu0 %v1342
        %1746 = vmatprep.subr.bf16.mxu0 %v1334
        %1747 = vmatpush1.bf16.msra.mxu0 %v1333
        %1748 = vmatprep.subr.bf16.mxu0 %v1325
        %1749 = vmatpush1.bf16.msra.mxu0 %v1324
        %1750 = vmatprep.subr.bf16.mxu0 %v1316
        %1751 = vmatpush1.bf16.msra.mxu0 %v1315
        %1752 = vmatprep.subr.bf16.mxu0 %v1307
        %1753 = vmatpush1.bf16.msra.mxu0 %v1306
        %1754 = vmatprep.subr.bf16.mxu0 %v1442
        %1755 = vmatpush2.bf16.msra.mxu0 %v1441
        %1756 = vmatprep.subr.bf16.mxu0 %v1433
        %1757 = vmatpush2.bf16.msra.mxu0 %v1432
        %1758 = vmatprep.subr.bf16.mxu0 %v1424
        %1759 = vmatpush2.bf16.msra.mxu0 %v1423
        %1760 = vmatprep.subr.bf16.mxu0 %v1415
        %1761 = vmatpush2.bf16.msra.mxu0 %v1414
        %1762 = vmatprep.subr.bf16.mxu0 %v1406
        %1763 = vmatpush2.bf16.msra.mxu0 %v1405
        %1764 = vmatprep.subr.bf16.mxu0 %v1397
        %1765 = vmatpush2.bf16.msra.mxu0 %v1396
        %1766 = vmatprep.subr.bf16.mxu0 %v1388
        %1767 = vmatpush2.bf16.msra.mxu0 %v1387
        %1768 = vmatprep.subr.bf16.mxu0 %v1379
        %1769 = vmatpush2.bf16.msra.mxu0 %v1378
        %1770 = vmatprep.mubr.bf16.mxu0 %v347
        %1771 = vmatmul.mubr.bf16.gmra.mxu0 %v346
        %v1772 = vpop.f32.mrf.mxu0
        %v1773 = vadd.f32 0.0, %v1772
        %v1774 = vpop.f32.mrf.mxu0
        %v1775 = vadd.f32 0.0, %v1774
        %v1776 = vpop.f32.mrf.mxu0
        %v1777 = vadd.f32 0.0, %v1776
        %v1778 = vpop.f32.mrf.mxu0
        %v1779 = vadd.f32 0.0, %v1778
        %1780 = vmatprep.mubr.bf16.mxu0 %v350
        %1781 = vmatmul.mubr.bf16.gmra.mxu0 %v349
        %v1782 = vpop.f32.mrf.mxu0
        %v1783 = vadd.f32 0.0, %v1782
        %v1784 = vpop.f32.mrf.mxu0
        %v1785 = vadd.f32 0.0, %v1784
        %v1786 = vpop.f32.mrf.mxu0
        %v1787 = vadd.f32 0.0, %v1786
        %v1788 = vpop.f32.mrf.mxu0
        %v1789 = vadd.f32 0.0, %v1788
        %1790 = vmatprep.mubr.bf16.mxu0 %v353
        %1791 = vmatmul.mubr.bf16.gmra.mxu0 %v352
        %v1792 = vpop.f32.mrf.mxu0
        %v1793 = vadd.f32 0.0, %v1792
        %v1794 = vpop.f32.mrf.mxu0
        %v1795 = vadd.f32 0.0, %v1794
        %v1796 = vpop.f32.mrf.mxu0
        %v1797 = vadd.f32 0.0, %v1796
        %v1798 = vpop.f32.mrf.mxu0
        %v1799 = vadd.f32 0.0, %v1798
        %1800 = vmatprep.mubr.bf16.mxu0 %v356
        %1801 = vmatmul.mubr.bf16.gmra.mxu0 %v355
        %v1802 = vpop.f32.mrf.mxu0
        %v1803 = vadd.f32 0.0, %v1802
        %v1804 = vpop.f32.mrf.mxu0
        %v1805 = vadd.f32 0.0, %v1804
        %v1806 = vpop.f32.mrf.mxu0
        %v1807 = vadd.f32 0.0, %v1806
        %v1808 = vpop.f32.mrf.mxu0
        %v1809 = vadd.f32 0.0, %v1808
        %1810 = vmatprep.mubr.bf16.mxu0 %v359
        %1811 = vmatmul.mubr.bf16.gmra.mxu0 %v358
        %v1812 = vpop.f32.mrf.mxu0
        %v1813 = vadd.f32 0.0, %v1812
        %v1814 = vpop.f32.mrf.mxu0
        %v1815 = vadd.f32 0.0, %v1814
        %v1816 = vpop.f32.mrf.mxu0
        %v1817 = vadd.f32 0.0, %v1816
        %v1818 = vpop.f32.mrf.mxu0
        %v1819 = vadd.f32 0.0, %v1818
        %1820 = vmatprep.mubr.bf16.mxu0 %v362
        %1821 = vmatmul.mubr.bf16.gmra.mxu0 %v361
        %v1822 = vpop.f32.mrf.mxu0
        %v1823 = vadd.f32 0.0, %v1822
        %v1824 = vpop.f32.mrf.mxu0
        %v1825 = vadd.f32 0.0, %v1824
        %v1826 = vpop.f32.mrf.mxu0
        %v1827 = vadd.f32 0.0, %v1826
        %v1828 = vpop.f32.mrf.mxu0
        %v1829 = vadd.f32 0.0, %v1828
        %1830 = vmatprep.mubr.bf16.mxu0 %v365
        %1831 = vmatmul.mubr.bf16.gmra.mxu0 %v364
        %v1832 = vpop.f32.mrf.mxu0
        %v1833 = vadd.f32 0.0, %v1832
        %v1834 = vpop.f32.mrf.mxu0
        %v1835 = vadd.f32 0.0, %v1834
        %v1836 = vpop.f32.mrf.mxu0
        %v1837 = vadd.f32 0.0, %v1836
        %v1838 = vpop.f32.mrf.mxu0
        %v1839 = vadd.f32 0.0, %v1838
        %1840 = vmatprep.mubr.bf16.mxu0 %v368
        %1841 = vmatmul.mubr.bf16.gmra.mxu0 %v367
        %v1842 = vpop.f32.mrf.mxu0
        %v1843 = vadd.f32 0.0, %v1842
        %v1844 = vpop.f32.mrf.mxu0
        %v1845 = vadd.f32 0.0, %v1844
        %v1846 = vpop.f32.mrf.mxu0
        %v1847 = vadd.f32 0.0, %v1846
        %v1848 = vpop.f32.mrf.mxu0
        %v1849 = vadd.f32 0.0, %v1848
        %1850 = vmatprep.mubr.bf16.mxu0 %v371
        %1851 = vmatmul.mubr.bf16.gmra.mxu0 %v370
        %v1852 = vpop.f32.mrf.mxu0
        %v1853 = vadd.f32 0.0, %v1852
        %v1854 = vpop.f32.mrf.mxu0
        %v1855 = vadd.f32 0.0, %v1854
        %v1856 = vpop.f32.mrf.mxu0
        %v1857 = vadd.f32 0.0, %v1856
        %v1858 = vpop.f32.mrf.mxu0
        %v1859 = vadd.f32 0.0, %v1858
        %1860 = vmatprep.mubr.bf16.mxu0 %v374
        %1861 = vmatmul.mubr.bf16.gmra.mxu0 %v373
        %v1862 = vpop.f32.mrf.mxu0
        %v1863 = vadd.f32 0.0, %v1862
        %v1864 = vpop.f32.mrf.mxu0
        %v1865 = vadd.f32 0.0, %v1864
        %v1866 = vpop.f32.mrf.mxu0
        %v1867 = vadd.f32 0.0, %v1866
        %v1868 = vpop.f32.mrf.mxu0
        %v1869 = vadd.f32 0.0, %v1868
        %1870 = vmatprep.mubr.bf16.mxu0 %v377
        %1871 = vmatmul.mubr.bf16.gmra.mxu0 %v376
        %v1872 = vpop.f32.mrf.mxu0
        %v1873 = vadd.f32 0.0, %v1872
        %v1874 = vpop.f32.mrf.mxu0
        %v1875 = vadd.f32 0.0, %v1874
        %v1876 = vpop.f32.mrf.mxu0
        %v1877 = vadd.f32 0.0, %v1876
        %v1878 = vpop.f32.mrf.mxu0
        %v1879 = vadd.f32 0.0, %v1878
        %1880 = vmatprep.mubr.bf16.mxu0 %v380
        %1881 = vmatmul.mubr.bf16.gmra.mxu0 %v379
        %v1882 = vpop.f32.mrf.mxu0
        %v1883 = vadd.f32 0.0, %v1882
        %v1884 = vpop.f32.mrf.mxu0
        %v1885 = vadd.f32 0.0, %v1884
        %v1886 = vpop.f32.mrf.mxu0
        %v1887 = vadd.f32 0.0, %v1886
        %v1888 = vpop.f32.mrf.mxu0
        %v1889 = vadd.f32 0.0, %v1888
        %1890 = vmatprep.mubr.bf16.mxu0 %v383
        %1891 = vmatmul.mubr.bf16.gmra.mxu0 %v382
        %v1892 = vpop.f32.mrf.mxu0
        %v1893 = vadd.f32 0.0, %v1892
        %v1894 = vpop.f32.mrf.mxu0
        %v1895 = vadd.f32 0.0, %v1894
        %v1896 = vpop.f32.mrf.mxu0
        %v1897 = vadd.f32 0.0, %v1896
        %v1898 = vpop.f32.mrf.mxu0
        %v1899 = vadd.f32 0.0, %v1898
        %1900 = vmatprep.mubr.bf16.mxu0 %v386
        %1901 = vmatmul.mubr.bf16.gmra.mxu0 %v385
        %v1902 = vpop.f32.mrf.mxu0
        %v1903 = vadd.f32 0.0, %v1902
        %v1904 = vpop.f32.mrf.mxu0
        %v1905 = vadd.f32 0.0, %v1904
        %v1906 = vpop.f32.mrf.mxu0
        %v1907 = vadd.f32 0.0, %v1906
        %v1908 = vpop.f32.mrf.mxu0
        %v1909 = vadd.f32 0.0, %v1908
        %1910 = vmatprep.mubr.bf16.mxu0 %v389
        %1911 = vmatmul.mubr.bf16.gmra.mxu0 %v388
        %v1912 = vpop.f32.mrf.mxu0
        %v1913 = vadd.f32 0.0, %v1912
        %v1914 = vpop.f32.mrf.mxu0
        %v1915 = vadd.f32 0.0, %v1914
        %v1916 = vpop.f32.mrf.mxu0
        %v1917 = vadd.f32 0.0, %v1916
        %v1918 = vpop.f32.mrf.mxu0
        %v1919 = vadd.f32 0.0, %v1918
        %1920 = vmatprep.mubr.bf16.mxu0 %v392
        %1921 = vmatmul.mubr.bf16.gmra.mxu0 %v391
        %v1922 = vpop.f32.mrf.mxu0
        %v1923 = vadd.f32 0.0, %v1922
        %v1924 = vpop.f32.mrf.mxu0
        %v1925 = vadd.f32 0.0, %v1924
        %v1926 = vpop.f32.mrf.mxu0
        %v1927 = vadd.f32 0.0, %v1926
        %v1928 = vpop.f32.mrf.mxu0
        %v1929 = vadd.f32 0.0, %v1928
        %1930 = vdwg.mxu0
        %1931 = vmatprep.subr.bf16.mxu0 %v1514
        %1932 = vmatpush1.bf16.msra.mxu0 %v1513
        %1933 = vmatprep.subr.bf16.mxu0 %v1505
        %1934 = vmatpush1.bf16.msra.mxu0 %v1504
        %1935 = vmatprep.subr.bf16.mxu0 %v1496
        %1936 = vmatpush1.bf16.msra.mxu0 %v1495
        %1937 = vmatprep.subr.bf16.mxu0 %v1487
        %1938 = vmatpush1.bf16.msra.mxu0 %v1486
        %1939 = vmatprep.subr.bf16.mxu0 %v1478
        %1940 = vmatpush1.bf16.msra.mxu0 %v1477
        %1941 = vmatprep.subr.bf16.mxu0 %v1469
        %1942 = vmatpush1.bf16.msra.mxu0 %v1468
        %1943 = vmatprep.subr.bf16.mxu0 %v1460
        %1944 = vmatpush1.bf16.msra.mxu0 %v1459
        %1945 = vmatprep.subr.bf16.mxu0 %v1451
        %1946 = vmatpush1.bf16.msra.mxu0 %v1450
        %1947 = vmatprep.subr.bf16.mxu0 0
        %1948 = vmatpush2.bf16.msra.mxu0 0
        %1949 = vmatprep.subr.bf16.mxu0 0
        %1950 = vmatpush2.bf16.msra.mxu0 0
        %1951 = vmatprep.subr.bf16.mxu0 0
        %1952 = vmatpush2.bf16.msra.mxu0 0
        %1953 = vmatprep.subr.bf16.mxu0 0
        %1954 = vmatpush2.bf16.msra.mxu0 0
        %1955 = vmatprep.subr.bf16.mxu0 0
        %1956 = vmatpush2.bf16.msra.mxu0 0
        %1957 = vmatprep.subr.bf16.mxu0 0
        %1958 = vmatpush2.bf16.msra.mxu0 0
        %1959 = vmatprep.subr.bf16.mxu0 0
        %1960 = vmatpush2.bf16.msra.mxu0 0
        %1961 = vmatprep.subr.bf16.mxu0 0
        %1962 = vmatpush2.bf16.msra.mxu0 0
        %1963 = vmatprep.mubr.bf16.mxu0 0
        %1964 = vmatmul.mubr.bf16.gmra.mxu0 %v348
        %v1965 = vpop.f32.mrf.mxu0
        %v1966 = vadd.f32 %v1773, %v1965
        %v1967 = vpop.f32.mrf.mxu0
        %v1968 = vadd.f32 %v1775, %v1967
        %v1969 = vpop.f32.mrf.mxu0
        %v1970 = vadd.f32 %v1777, %v1969
        %v1971 = vpop.f32.mrf.mxu0
        %v1972 = vadd.f32 %v1779, %v1971
        %1973 = vmatprep.mubr.bf16.mxu0 0
        %1974 = vmatmul.mubr.bf16.gmra.mxu0 %v351
        %v1975 = vpop.f32.mrf.mxu0
        %v1976 = vadd.f32 %v1783, %v1975
        %v1977 = vpop.f32.mrf.mxu0
        %v1978 = vadd.f32 %v1785, %v1977
        %v1979 = vpop.f32.mrf.mxu0
        %v1980 = vadd.f32 %v1787, %v1979
        %v1981 = vpop.f32.mrf.mxu0
        %v1982 = vadd.f32 %v1789, %v1981
        %1983 = vmatprep.mubr.bf16.mxu0 0
        %1984 = vmatmul.mubr.bf16.gmra.mxu0 %v354
        %v1985 = vpop.f32.mrf.mxu0
        %v1986 = vadd.f32 %v1793, %v1985
        %v1987 = vpop.f32.mrf.mxu0
        %v1988 = vadd.f32 %v1795, %v1987
        %v1989 = vpop.f32.mrf.mxu0
        %v1990 = vadd.f32 %v1797, %v1989
        %v1991 = vpop.f32.mrf.mxu0
        %v1992 = vadd.f32 %v1799, %v1991
        %1993 = vmatprep.mubr.bf16.mxu0 0
        %1994 = vmatmul.mubr.bf16.gmra.mxu0 %v357
        %v1995 = vpop.f32.mrf.mxu0
        %v1996 = vadd.f32 %v1803, %v1995
        %v1997 = vpop.f32.mrf.mxu0
        %v1998 = vadd.f32 %v1805, %v1997
        %v1999 = vpop.f32.mrf.mxu0
        %v2000 = vadd.f32 %v1807, %v1999
        %v2001 = vpop.f32.mrf.mxu0
        %v2002 = vadd.f32 %v1809, %v2001
        %2003 = vmatprep.mubr.bf16.mxu0 0
        %2004 = vmatmul.mubr.bf16.gmra.mxu0 %v360
        %v2005 = vpop.f32.mrf.mxu0
        %v2006 = vadd.f32 %v1813, %v2005
        %v2007 = vpop.f32.mrf.mxu0
        %v2008 = vadd.f32 %v1815, %v2007
        %v2009 = vpop.f32.mrf.mxu0
        %v2010 = vadd.f32 %v1817, %v2009
        %v2011 = vpop.f32.mrf.mxu0
        %v2012 = vadd.f32 %v1819, %v2011
        %2013 = vmatprep.mubr.bf16.mxu0 0
        %2014 = vmatmul.mubr.bf16.gmra.mxu0 %v363
        %v2015 = vpop.f32.mrf.mxu0
        %v2016 = vadd.f32 %v1823, %v2015
        %v2017 = vpop.f32.mrf.mxu0
        %v2018 = vadd.f32 %v1825, %v2017
        %v2019 = vpop.f32.mrf.mxu0
        %v2020 = vadd.f32 %v1827, %v2019
        %v2021 = vpop.f32.mrf.mxu0
        %v2022 = vadd.f32 %v1829, %v2021
        %2023 = vmatprep.mubr.bf16.mxu0 0
        %2024 = vmatmul.mubr.bf16.gmra.mxu0 %v366
        %v2025 = vpop.f32.mrf.mxu0
        %v2026 = vadd.f32 %v1833, %v2025
        %v2027 = vpop.f32.mrf.mxu0
        %v2028 = vadd.f32 %v1835, %v2027
        %v2029 = vpop.f32.mrf.mxu0
        %v2030 = vadd.f32 %v1837, %v2029
        %v2031 = vpop.f32.mrf.mxu0
        %v2032 = vadd.f32 %v1839, %v2031
        %2033 = vmatprep.mubr.bf16.mxu0 0
        %2034 = vmatmul.mubr.bf16.gmra.mxu0 %v369
        %v2035 = vpop.f32.mrf.mxu0
        %v2036 = vadd.f32 %v1843, %v2035
        %v2037 = vpop.f32.mrf.mxu0
        %v2038 = vadd.f32 %v1845, %v2037
        %v2039 = vpop.f32.mrf.mxu0
        %v2040 = vadd.f32 %v1847, %v2039
        %v2041 = vpop.f32.mrf.mxu0
        %v2042 = vadd.f32 %v1849, %v2041
        %2043 = vmatprep.mubr.bf16.mxu0 0
        %2044 = vmatmul.mubr.bf16.gmra.mxu0 %v372
        %v2045 = vpop.f32.mrf.mxu0
        %v2046 = vadd.f32 %v1853, %v2045
        %v2047 = vpop.f32.mrf.mxu0
        %v2048 = vadd.f32 %v1855, %v2047
        %v2049 = vpop.f32.mrf.mxu0
        %v2050 = vadd.f32 %v1857, %v2049
        %v2051 = vpop.f32.mrf.mxu0
        %v2052 = vadd.f32 %v1859, %v2051
        %2053 = vmatprep.mubr.bf16.mxu0 0
        %2054 = vmatmul.mubr.bf16.gmra.mxu0 %v375
        %v2055 = vpop.f32.mrf.mxu0
        %v2056 = vadd.f32 %v1863, %v2055
        %v2057 = vpop.f32.mrf.mxu0
        %v2058 = vadd.f32 %v1865, %v2057
        %v2059 = vpop.f32.mrf.mxu0
        %v2060 = vadd.f32 %v1867, %v2059
        %v2061 = vpop.f32.mrf.mxu0
        %v2062 = vadd.f32 %v1869, %v2061
        %2063 = vmatprep.mubr.bf16.mxu0 0
        %2064 = vmatmul.mubr.bf16.gmra.mxu0 %v378
        %v2065 = vpop.f32.mrf.mxu0
        %v2066 = vadd.f32 %v1873, %v2065
        %v2067 = vpop.f32.mrf.mxu0
        %v2068 = vadd.f32 %v1875, %v2067
        %v2069 = vpop.f32.mrf.mxu0
        %v2070 = vadd.f32 %v1877, %v2069
        %v2071 = vpop.f32.mrf.mxu0
        %v2072 = vadd.f32 %v1879, %v2071
        %2073 = vmatprep.mubr.bf16.mxu0 0
        %2074 = vmatmul.mubr.bf16.gmra.mxu0 %v381
        %v2075 = vpop.f32.mrf.mxu0
        %v2076 = vadd.f32 %v1883, %v2075
        %v2077 = vpop.f32.mrf.mxu0
        %v2078 = vadd.f32 %v1885, %v2077
        %v2079 = vpop.f32.mrf.mxu0
        %v2080 = vadd.f32 %v1887, %v2079
        %v2081 = vpop.f32.mrf.mxu0
        %v2082 = vadd.f32 %v1889, %v2081
        %2083 = vmatprep.mubr.bf16.mxu0 0
        %2084 = vmatmul.mubr.bf16.gmra.mxu0 %v384
        %v2085 = vpop.f32.mrf.mxu0
        %v2086 = vadd.f32 %v1893, %v2085
        %v2087 = vpop.f32.mrf.mxu0
        %v2088 = vadd.f32 %v1895, %v2087
        %v2089 = vpop.f32.mrf.mxu0
        %v2090 = vadd.f32 %v1897, %v2089
        %v2091 = vpop.f32.mrf.mxu0
        %v2092 = vadd.f32 %v1899, %v2091
        %2093 = vmatprep.mubr.bf16.mxu0 0
        %2094 = vmatmul.mubr.bf16.gmra.mxu0 %v387
        %v2095 = vpop.f32.mrf.mxu0
        %v2096 = vadd.f32 %v1903, %v2095
        %v2097 = vpop.f32.mrf.mxu0
        %v2098 = vadd.f32 %v1905, %v2097
        %v2099 = vpop.f32.mrf.mxu0
        %v2100 = vadd.f32 %v1907, %v2099
        %v2101 = vpop.f32.mrf.mxu0
        %v2102 = vadd.f32 %v1909, %v2101
        %2103 = vmatprep.mubr.bf16.mxu0 0
        %2104 = vmatmul.mubr.bf16.gmra.mxu0 %v390
        %v2105 = vpop.f32.mrf.mxu0
        %v2106 = vadd.f32 %v1913, %v2105
        %v2107 = vpop.f32.mrf.mxu0
        %v2108 = vadd.f32 %v1915, %v2107
        %v2109 = vpop.f32.mrf.mxu0
        %v2110 = vadd.f32 %v1917, %v2109
        %v2111 = vpop.f32.mrf.mxu0
        %v2112 = vadd.f32 %v1919, %v2111
        %2113 = vmatprep.mubr.bf16.mxu0 0
        %2114 = vmatmul.mubr.bf16.gmra.mxu0 %v393
        %v2115 = vpop.f32.mrf.mxu0
        %v2116 = vadd.f32 %v1923, %v2115
        %v2117 = vpop.f32.mrf.mxu0
        %v2118 = vadd.f32 %v1925, %v2117
        %v2119 = vpop.f32.mrf.mxu0
        %v2120 = vadd.f32 %v1927, %v2119
        %v2121 = vpop.f32.mrf.mxu0
        %v2122 = vadd.f32 %v1929, %v2121
        %2123 = vdwg.mxu0
        %2124 = vmatprep.subr.bf16.mxu0 %v1372
        %2125 = vmatpush1.bf16.msra.mxu0 %v1371
        %2126 = vmatprep.subr.bf16.mxu0 %v1363
        %2127 = vmatpush1.bf16.msra.mxu0 %v1362
        %2128 = vmatprep.subr.bf16.mxu0 %v1354
        %2129 = vmatpush1.bf16.msra.mxu0 %v1353
        %2130 = vmatprep.subr.bf16.mxu0 %v1345
        %2131 = vmatpush1.bf16.msra.mxu0 %v1344
        %2132 = vmatprep.subr.bf16.mxu0 %v1336
        %2133 = vmatpush1.bf16.msra.mxu0 %v1335
        %2134 = vmatprep.subr.bf16.mxu0 %v1327
        %2135 = vmatpush1.bf16.msra.mxu0 %v1326
        %2136 = vmatprep.subr.bf16.mxu0 %v1318
        %2137 = vmatpush1.bf16.msra.mxu0 %v1317
        %2138 = vmatprep.subr.bf16.mxu0 %v1309
        %2139 = vmatpush1.bf16.msra.mxu0 %v1308
        %2140 = vmatprep.subr.bf16.mxu0 %v1444
        %2141 = vmatpush2.bf16.msra.mxu0 %v1443
        %2142 = vmatprep.subr.bf16.mxu0 %v1435
        %2143 = vmatpush2.bf16.msra.mxu0 %v1434
        %2144 = vmatprep.subr.bf16.mxu0 %v1426
        %2145 = vmatpush2.bf16.msra.mxu0 %v1425
        %2146 = vmatprep.subr.bf16.mxu0 %v1417
        %2147 = vmatpush2.bf16.msra.mxu0 %v1416
        %2148 = vmatprep.subr.bf16.mxu0 %v1408
        %2149 = vmatpush2.bf16.msra.mxu0 %v1407
        %2150 = vmatprep.subr.bf16.mxu0 %v1399
        %2151 = vmatpush2.bf16.msra.mxu0 %v1398
        %2152 = vmatprep.subr.bf16.mxu0 %v1390
        %2153 = vmatpush2.bf16.msra.mxu0 %v1389
        %2154 = vmatprep.subr.bf16.mxu0 %v1381
        %2155 = vmatpush2.bf16.msra.mxu0 %v1380
        %2156 = vmatprep.mubr.bf16.mxu0 %v347
        %2157 = vmatmul.mubr.bf16.gmra.mxu0 %v346
        %v2158 = vpop.f32.mrf.mxu0
        %v2159 = vadd.f32 0.0, %v2158
        %v2160 = vpop.f32.mrf.mxu0
        %v2161 = vadd.f32 0.0, %v2160
        %v2162 = vpop.f32.mrf.mxu0
        %v2163 = vadd.f32 0.0, %v2162
        %v2164 = vpop.f32.mrf.mxu0
        %v2165 = vadd.f32 0.0, %v2164
        %2166 = vmatprep.mubr.bf16.mxu0 %v350
        %2167 = vmatmul.mubr.bf16.gmra.mxu0 %v349
        %v2168 = vpop.f32.mrf.mxu0
        %v2169 = vadd.f32 0.0, %v2168
        %v2170 = vpop.f32.mrf.mxu0
        %v2171 = vadd.f32 0.0, %v2170
        %v2172 = vpop.f32.mrf.mxu0
        %v2173 = vadd.f32 0.0, %v2172
        %v2174 = vpop.f32.mrf.mxu0
        %v2175 = vadd.f32 0.0, %v2174
        %2176 = vmatprep.mubr.bf16.mxu0 %v353
        %2177 = vmatmul.mubr.bf16.gmra.mxu0 %v352
        %v2178 = vpop.f32.mrf.mxu0
        %v2179 = vadd.f32 0.0, %v2178
        %v2180 = vpop.f32.mrf.mxu0
        %v2181 = vadd.f32 0.0, %v2180
        %v2182 = vpop.f32.mrf.mxu0
        %v2183 = vadd.f32 0.0, %v2182
        %v2184 = vpop.f32.mrf.mxu0
        %v2185 = vadd.f32 0.0, %v2184
        %2186 = vmatprep.mubr.bf16.mxu0 %v356
        %2187 = vmatmul.mubr.bf16.gmra.mxu0 %v355
        %v2188 = vpop.f32.mrf.mxu0
        %v2189 = vadd.f32 0.0, %v2188
        %v2190 = vpop.f32.mrf.mxu0
        %v2191 = vadd.f32 0.0, %v2190
        %v2192 = vpop.f32.mrf.mxu0
        %v2193 = vadd.f32 0.0, %v2192
        %v2194 = vpop.f32.mrf.mxu0
        %v2195 = vadd.f32 0.0, %v2194
        %2196 = vmatprep.mubr.bf16.mxu0 %v359
        %2197 = vmatmul.mubr.bf16.gmra.mxu0 %v358
        %v2198 = vpop.f32.mrf.mxu0
        %v2199 = vadd.f32 0.0, %v2198
        %v2200 = vpop.f32.mrf.mxu0
        %v2201 = vadd.f32 0.0, %v2200
        %v2202 = vpop.f32.mrf.mxu0
        %v2203 = vadd.f32 0.0, %v2202
        %v2204 = vpop.f32.mrf.mxu0
        %v2205 = vadd.f32 0.0, %v2204
        %2206 = vmatprep.mubr.bf16.mxu0 %v362
        %2207 = vmatmul.mubr.bf16.gmra.mxu0 %v361
        %v2208 = vpop.f32.mrf.mxu0
        %v2209 = vadd.f32 0.0, %v2208
        %v2210 = vpop.f32.mrf.mxu0
        %v2211 = vadd.f32 0.0, %v2210
        %v2212 = vpop.f32.mrf.mxu0
        %v2213 = vadd.f32 0.0, %v2212
        %v2214 = vpop.f32.mrf.mxu0
        %v2215 = vadd.f32 0.0, %v2214
        %2216 = vmatprep.mubr.bf16.mxu0 %v365
        %2217 = vmatmul.mubr.bf16.gmra.mxu0 %v364
        %v2218 = vpop.f32.mrf.mxu0
        %v2219 = vadd.f32 0.0, %v2218
        %v2220 = vpop.f32.mrf.mxu0
        %v2221 = vadd.f32 0.0, %v2220
        %v2222 = vpop.f32.mrf.mxu0
        %v2223 = vadd.f32 0.0, %v2222
        %v2224 = vpop.f32.mrf.mxu0
        %v2225 = vadd.f32 0.0, %v2224
        %2226 = vmatprep.mubr.bf16.mxu0 %v368
        %2227 = vmatmul.mubr.bf16.gmra.mxu0 %v367
        %v2228 = vpop.f32.mrf.mxu0
        %v2229 = vadd.f32 0.0, %v2228
        %v2230 = vpop.f32.mrf.mxu0
        %v2231 = vadd.f32 0.0, %v2230
        %v2232 = vpop.f32.mrf.mxu0
        %v2233 = vadd.f32 0.0, %v2232
        %v2234 = vpop.f32.mrf.mxu0
        %v2235 = vadd.f32 0.0, %v2234
        %2236 = vmatprep.mubr.bf16.mxu0 %v371
        %2237 = vmatmul.mubr.bf16.gmra.mxu0 %v370
        %v2238 = vpop.f32.mrf.mxu0
        %v2239 = vadd.f32 0.0, %v2238
        %v2240 = vpop.f32.mrf.mxu0
        %v2241 = vadd.f32 0.0, %v2240
        %v2242 = vpop.f32.mrf.mxu0
        %v2243 = vadd.f32 0.0, %v2242
        %v2244 = vpop.f32.mrf.mxu0
        %v2245 = vadd.f32 0.0, %v2244
        %2246 = vmatprep.mubr.bf16.mxu0 %v374
        %2247 = vmatmul.mubr.bf16.gmra.mxu0 %v373
        %v2248 = vpop.f32.mrf.mxu0
        %v2249 = vadd.f32 0.0, %v2248
        %v2250 = vpop.f32.mrf.mxu0
        %v2251 = vadd.f32 0.0, %v2250
        %v2252 = vpop.f32.mrf.mxu0
        %v2253 = vadd.f32 0.0, %v2252
        %v2254 = vpop.f32.mrf.mxu0
        %v2255 = vadd.f32 0.0, %v2254
        %2256 = vmatprep.mubr.bf16.mxu0 %v377
        %2257 = vmatmul.mubr.bf16.gmra.mxu0 %v376
        %v2258 = vpop.f32.mrf.mxu0
        %v2259 = vadd.f32 0.0, %v2258
        %v2260 = vpop.f32.mrf.mxu0
        %v2261 = vadd.f32 0.0, %v2260
        %v2262 = vpop.f32.mrf.mxu0
        %v2263 = vadd.f32 0.0, %v2262
        %v2264 = vpop.f32.mrf.mxu0
        %v2265 = vadd.f32 0.0, %v2264
        %2266 = vmatprep.mubr.bf16.mxu0 %v380
        %2267 = vmatmul.mubr.bf16.gmra.mxu0 %v379
        %v2268 = vpop.f32.mrf.mxu0
        %v2269 = vadd.f32 0.0, %v2268
        %v2270 = vpop.f32.mrf.mxu0
        %v2271 = vadd.f32 0.0, %v2270
        %v2272 = vpop.f32.mrf.mxu0
        %v2273 = vadd.f32 0.0, %v2272
        %v2274 = vpop.f32.mrf.mxu0
        %v2275 = vadd.f32 0.0, %v2274
        %2276 = vmatprep.mubr.bf16.mxu0 %v383
        %2277 = vmatmul.mubr.bf16.gmra.mxu0 %v382
        %v2278 = vpop.f32.mrf.mxu0
        %v2279 = vadd.f32 0.0, %v2278
        %v2280 = vpop.f32.mrf.mxu0
        %v2281 = vadd.f32 0.0, %v2280
        %v2282 = vpop.f32.mrf.mxu0
        %v2283 = vadd.f32 0.0, %v2282
        %v2284 = vpop.f32.mrf.mxu0
        %v2285 = vadd.f32 0.0, %v2284
        %2286 = vmatprep.mubr.bf16.mxu0 %v386
        %2287 = vmatmul.mubr.bf16.gmra.mxu0 %v385
        %v2288 = vpop.f32.mrf.mxu0
        %v2289 = vadd.f32 0.0, %v2288
        %v2290 = vpop.f32.mrf.mxu0
        %v2291 = vadd.f32 0.0, %v2290
        %v2292 = vpop.f32.mrf.mxu0
        %v2293 = vadd.f32 0.0, %v2292
        %v2294 = vpop.f32.mrf.mxu0
        %v2295 = vadd.f32 0.0, %v2294
        %2296 = vmatprep.mubr.bf16.mxu0 %v389
        %2297 = vmatmul.mubr.bf16.gmra.mxu0 %v388
        %v2298 = vpop.f32.mrf.mxu0
        %v2299 = vadd.f32 0.0, %v2298
        %v2300 = vpop.f32.mrf.mxu0
        %v2301 = vadd.f32 0.0, %v2300
        %v2302 = vpop.f32.mrf.mxu0
        %v2303 = vadd.f32 0.0, %v2302
        %v2304 = vpop.f32.mrf.mxu0
        %v2305 = vadd.f32 0.0, %v2304
        %2306 = vmatprep.mubr.bf16.mxu0 %v392
        %2307 = vmatmul.mubr.bf16.gmra.mxu0 %v391
        %v2308 = vpop.f32.mrf.mxu0
        %v2309 = vadd.f32 0.0, %v2308
        %v2310 = vpop.f32.mrf.mxu0
        %v2311 = vadd.f32 0.0, %v2310
        %v2312 = vpop.f32.mrf.mxu0
        %v2313 = vadd.f32 0.0, %v2312
        %v2314 = vpop.f32.mrf.mxu0
        %v2315 = vadd.f32 0.0, %v2314
        %2316 = vdwg.mxu0
        %2317 = vmatprep.subr.bf16.mxu0 %v1516
        %2318 = vmatpush1.bf16.msra.mxu0 %v1515
        %2319 = vmatprep.subr.bf16.mxu0 %v1507
        %2320 = vmatpush1.bf16.msra.mxu0 %v1506
        %2321 = vmatprep.subr.bf16.mxu0 %v1498
        %2322 = vmatpush1.bf16.msra.mxu0 %v1497
        %2323 = vmatprep.subr.bf16.mxu0 %v1489
        %2324 = vmatpush1.bf16.msra.mxu0 %v1488
        %2325 = vmatprep.subr.bf16.mxu0 %v1480
        %2326 = vmatpush1.bf16.msra.mxu0 %v1479
        %2327 = vmatprep.subr.bf16.mxu0 %v1471
        %2328 = vmatpush1.bf16.msra.mxu0 %v1470
        %2329 = vmatprep.subr.bf16.mxu0 %v1462
        %2330 = vmatpush1.bf16.msra.mxu0 %v1461
        %2331 = vmatprep.subr.bf16.mxu0 %v1453
        %2332 = vmatpush1.bf16.msra.mxu0 %v1452
        %2333 = vmatprep.subr.bf16.mxu0 0
        %2334 = vmatpush2.bf16.msra.mxu0 0
        %2335 = vmatprep.subr.bf16.mxu0 0
        %2336 = vmatpush2.bf16.msra.mxu0 0
        %2337 = vmatprep.subr.bf16.mxu0 0
        %2338 = vmatpush2.bf16.msra.mxu0 0
        %2339 = vmatprep.subr.bf16.mxu0 0
        %2340 = vmatpush2.bf16.msra.mxu0 0
        %2341 = vmatprep.subr.bf16.mxu0 0
        %2342 = vmatpush2.bf16.msra.mxu0 0
        %2343 = vmatprep.subr.bf16.mxu0 0
        %2344 = vmatpush2.bf16.msra.mxu0 0
        %2345 = vmatprep.subr.bf16.mxu0 0
        %2346 = vmatpush2.bf16.msra.mxu0 0
        %2347 = vmatprep.subr.bf16.mxu0 0
        %2348 = vmatpush2.bf16.msra.mxu0 0
        %2349 = vmatprep.mubr.bf16.mxu0 0
        %2350 = vmatmul.mubr.bf16.gmra.mxu0 %v348
        %v2351 = vpop.f32.mrf.mxu0
        %v2352 = vadd.f32 %v2159, %v2351
        %v2353 = vpop.f32.mrf.mxu0
        %v2354 = vadd.f32 %v2161, %v2353
        %v2355 = vpop.f32.mrf.mxu0
        %v2356 = vadd.f32 %v2163, %v2355
        %v2357 = vpop.f32.mrf.mxu0
        %v2358 = vadd.f32 %v2165, %v2357
        %2359 = vmatprep.mubr.bf16.mxu0 0
        %2360 = vmatmul.mubr.bf16.gmra.mxu0 %v351
        %v2361 = vpop.f32.mrf.mxu0
        %v2362 = vadd.f32 %v2169, %v2361
        %v2363 = vpop.f32.mrf.mxu0
        %v2364 = vadd.f32 %v2171, %v2363
        %v2365 = vpop.f32.mrf.mxu0
        %v2366 = vadd.f32 %v2173, %v2365
        %v2367 = vpop.f32.mrf.mxu0
        %v2368 = vadd.f32 %v2175, %v2367
        %2369 = vmatprep.mubr.bf16.mxu0 0
        %2370 = vmatmul.mubr.bf16.gmra.mxu0 %v354
        %v2371 = vpop.f32.mrf.mxu0
        %v2372 = vadd.f32 %v2179, %v2371
        %v2373 = vpop.f32.mrf.mxu0
        %v2374 = vadd.f32 %v2181, %v2373
        %v2375 = vpop.f32.mrf.mxu0
        %v2376 = vadd.f32 %v2183, %v2375
        %v2377 = vpop.f32.mrf.mxu0
        %v2378 = vadd.f32 %v2185, %v2377
        %2379 = vmatprep.mubr.bf16.mxu0 0
        %2380 = vmatmul.mubr.bf16.gmra.mxu0 %v357
        %v2381 = vpop.f32.mrf.mxu0
        %v2382 = vadd.f32 %v2189, %v2381
        %v2383 = vpop.f32.mrf.mxu0
        %v2384 = vadd.f32 %v2191, %v2383
        %v2385 = vpop.f32.mrf.mxu0
        %v2386 = vadd.f32 %v2193, %v2385
        %v2387 = vpop.f32.mrf.mxu0
        %v2388 = vadd.f32 %v2195, %v2387
        %2389 = vmatprep.mubr.bf16.mxu0 0
        %2390 = vmatmul.mubr.bf16.gmra.mxu0 %v360
        %v2391 = vpop.f32.mrf.mxu0
        %v2392 = vadd.f32 %v2199, %v2391
        %v2393 = vpop.f32.mrf.mxu0
        %v2394 = vadd.f32 %v2201, %v2393
        %v2395 = vpop.f32.mrf.mxu0
        %v2396 = vadd.f32 %v2203, %v2395
        %v2397 = vpop.f32.mrf.mxu0
        %v2398 = vadd.f32 %v2205, %v2397
        %2399 = vmatprep.mubr.bf16.mxu0 0
        %2400 = vmatmul.mubr.bf16.gmra.mxu0 %v363
        %v2401 = vpop.f32.mrf.mxu0
        %v2402 = vadd.f32 %v2209, %v2401
        %v2403 = vpop.f32.mrf.mxu0
        %v2404 = vadd.f32 %v2211, %v2403
        %v2405 = vpop.f32.mrf.mxu0
        %v2406 = vadd.f32 %v2213, %v2405
        %v2407 = vpop.f32.mrf.mxu0
        %v2408 = vadd.f32 %v2215, %v2407
        %2409 = vmatprep.mubr.bf16.mxu0 0
        %2410 = vmatmul.mubr.bf16.gmra.mxu0 %v366
        %v2411 = vpop.f32.mrf.mxu0
        %v2412 = vadd.f32 %v2219, %v2411
        %v2413 = vpop.f32.mrf.mxu0
        %v2414 = vadd.f32 %v2221, %v2413
        %v2415 = vpop.f32.mrf.mxu0
        %v2416 = vadd.f32 %v2223, %v2415
        %v2417 = vpop.f32.mrf.mxu0
        %v2418 = vadd.f32 %v2225, %v2417
        %2419 = vmatprep.mubr.bf16.mxu0 0
        %2420 = vmatmul.mubr.bf16.gmra.mxu0 %v369
        %v2421 = vpop.f32.mrf.mxu0
        %v2422 = vadd.f32 %v2229, %v2421
        %v2423 = vpop.f32.mrf.mxu0
        %v2424 = vadd.f32 %v2231, %v2423
        %v2425 = vpop.f32.mrf.mxu0
        %v2426 = vadd.f32 %v2233, %v2425
        %v2427 = vpop.f32.mrf.mxu0
        %v2428 = vadd.f32 %v2235, %v2427
        %2429 = vmatprep.mubr.bf16.mxu0 0
        %2430 = vmatmul.mubr.bf16.gmra.mxu0 %v372
        %v2431 = vpop.f32.mrf.mxu0
        %v2432 = vadd.f32 %v2239, %v2431
        %v2433 = vpop.f32.mrf.mxu0
        %v2434 = vadd.f32 %v2241, %v2433
        %v2435 = vpop.f32.mrf.mxu0
        %v2436 = vadd.f32 %v2243, %v2435
        %v2437 = vpop.f32.mrf.mxu0
        %v2438 = vadd.f32 %v2245, %v2437
        %2439 = vmatprep.mubr.bf16.mxu0 0
        %2440 = vmatmul.mubr.bf16.gmra.mxu0 %v375
        %v2441 = vpop.f32.mrf.mxu0
        %v2442 = vadd.f32 %v2249, %v2441
        %v2443 = vpop.f32.mrf.mxu0
        %v2444 = vadd.f32 %v2251, %v2443
        %v2445 = vpop.f32.mrf.mxu0
        %v2446 = vadd.f32 %v2253, %v2445
        %v2447 = vpop.f32.mrf.mxu0
        %v2448 = vadd.f32 %v2255, %v2447
        %2449 = vmatprep.mubr.bf16.mxu0 0
        %2450 = vmatmul.mubr.bf16.gmra.mxu0 %v378
        %v2451 = vpop.f32.mrf.mxu0
        %v2452 = vadd.f32 %v2259, %v2451
        %v2453 = vpop.f32.mrf.mxu0
        %v2454 = vadd.f32 %v2261, %v2453
        %v2455 = vpop.f32.mrf.mxu0
        %v2456 = vadd.f32 %v2263, %v2455
        %v2457 = vpop.f32.mrf.mxu0
        %v2458 = vadd.f32 %v2265, %v2457
        %2459 = vmatprep.mubr.bf16.mxu0 0
        %2460 = vmatmul.mubr.bf16.gmra.mxu0 %v381
        %v2461 = vpop.f32.mrf.mxu0
        %v2462 = vadd.f32 %v2269, %v2461
        %v2463 = vpop.f32.mrf.mxu0
        %v2464 = vadd.f32 %v2271, %v2463
        %v2465 = vpop.f32.mrf.mxu0
        %v2466 = vadd.f32 %v2273, %v2465
        %v2467 = vpop.f32.mrf.mxu0
        %v2468 = vadd.f32 %v2275, %v2467
        %2469 = vmatprep.mubr.bf16.mxu0 0
        %2470 = vmatmul.mubr.bf16.gmra.mxu0 %v384
        %v2471 = vpop.f32.mrf.mxu0
        %v2472 = vadd.f32 %v2279, %v2471
        %v2473 = vpop.f32.mrf.mxu0
        %v2474 = vadd.f32 %v2281, %v2473
        %v2475 = vpop.f32.mrf.mxu0
        %v2476 = vadd.f32 %v2283, %v2475
        %v2477 = vpop.f32.mrf.mxu0
        %v2478 = vadd.f32 %v2285, %v2477
        %2479 = vmatprep.mubr.bf16.mxu0 0
        %2480 = vmatmul.mubr.bf16.gmra.mxu0 %v387
        %v2481 = vpop.f32.mrf.mxu0
        %v2482 = vadd.f32 %v2289, %v2481
        %v2483 = vpop.f32.mrf.mxu0
        %v2484 = vadd.f32 %v2291, %v2483
        %v2485 = vpop.f32.mrf.mxu0
        %v2486 = vadd.f32 %v2293, %v2485
        %v2487 = vpop.f32.mrf.mxu0
        %v2488 = vadd.f32 %v2295, %v2487
        %2489 = vmatprep.mubr.bf16.mxu0 0
        %2490 = vmatmul.mubr.bf16.gmra.mxu0 %v390
        %v2491 = vpop.f32.mrf.mxu0
        %v2492 = vadd.f32 %v2299, %v2491
        %v2493 = vpop.f32.mrf.mxu0
        %v2494 = vadd.f32 %v2301, %v2493
        %v2495 = vpop.f32.mrf.mxu0
        %v2496 = vadd.f32 %v2303, %v2495
        %v2497 = vpop.f32.mrf.mxu0
        %v2498 = vadd.f32 %v2305, %v2497
        %2499 = vmatprep.mubr.bf16.mxu0 0
        %2500 = vmatmul.mubr.bf16.gmra.mxu0 %v393
        %v2501 = vpop.f32.mrf.mxu0
        %v2502 = vadd.f32 %v2309, %v2501
        %v2503 = vpop.f32.mrf.mxu0
        %v2504 = vadd.f32 %v2311, %v2503
        %v2505 = vpop.f32.mrf.mxu0
        %v2506 = vadd.f32 %v2313, %v2505
        %v2507 = vpop.f32.mrf.mxu0
        %v2508 = vadd.f32 %v2315, %v2507
        %2509 = vdwg.mxu0
        %2510 = vmatprep.subr.bf16.mxu0 %v1374
        %2511 = vmatpush1.bf16.msra.mxu0 %v1373
        %2512 = vmatprep.subr.bf16.mxu0 %v1365
        %2513 = vmatpush1.bf16.msra.mxu0 %v1364
        %2514 = vmatprep.subr.bf16.mxu0 %v1356
        %2515 = vmatpush1.bf16.msra.mxu0 %v1355
        %2516 = vmatprep.subr.bf16.mxu0 %v1347
        %2517 = vmatpush1.bf16.msra.mxu0 %v1346
        %2518 = vmatprep.subr.bf16.mxu0 %v1338
        %2519 = vmatpush1.bf16.msra.mxu0 %v1337
        %2520 = vmatprep.subr.bf16.mxu0 %v1329
        %2521 = vmatpush1.bf16.msra.mxu0 %v1328
        %2522 = vmatprep.subr.bf16.mxu0 %v1320
        %2523 = vmatpush1.bf16.msra.mxu0 %v1319
        %2524 = vmatprep.subr.bf16.mxu0 %v1311
        %2525 = vmatpush1.bf16.msra.mxu0 %v1310
        %2526 = vmatprep.subr.bf16.mxu0 %v1446
        %2527 = vmatpush2.bf16.msra.mxu0 %v1445
        %2528 = vmatprep.subr.bf16.mxu0 %v1437
        %2529 = vmatpush2.bf16.msra.mxu0 %v1436
        %2530 = vmatprep.subr.bf16.mxu0 %v1428
        %2531 = vmatpush2.bf16.msra.mxu0 %v1427
        %2532 = vmatprep.subr.bf16.mxu0 %v1419
        %2533 = vmatpush2.bf16.msra.mxu0 %v1418
        %2534 = vmatprep.subr.bf16.mxu0 %v1410
        %2535 = vmatpush2.bf16.msra.mxu0 %v1409
        %2536 = vmatprep.subr.bf16.mxu0 %v1401
        %2537 = vmatpush2.bf16.msra.mxu0 %v1400
        %2538 = vmatprep.subr.bf16.mxu0 %v1392
        %2539 = vmatpush2.bf16.msra.mxu0 %v1391
        %2540 = vmatprep.subr.bf16.mxu0 %v1383
        %2541 = vmatpush2.bf16.msra.mxu0 %v1382
        %2542 = vmatprep.mubr.bf16.mxu0 %v347
        %2543 = vmatmul.mubr.bf16.gmra.mxu0 %v346
        %v2544 = vpop.f32.mrf.mxu0
        %v2545 = vadd.f32 0.0, %v2544
        %v2546 = vpop.f32.mrf.mxu0
        %v2547 = vadd.f32 0.0, %v2546
        %v2548 = vpop.f32.mrf.mxu0
        %v2549 = vadd.f32 0.0, %v2548
        %v2550 = vpop.f32.mrf.mxu0
        %v2551 = vadd.f32 0.0, %v2550
        %2552 = vmatprep.mubr.bf16.mxu0 %v350
        %2553 = vmatmul.mubr.bf16.gmra.mxu0 %v349
        %v2554 = vpop.f32.mrf.mxu0
        %v2555 = vadd.f32 0.0, %v2554
        %v2556 = vpop.f32.mrf.mxu0
        %v2557 = vadd.f32 0.0, %v2556
        %v2558 = vpop.f32.mrf.mxu0
        %v2559 = vadd.f32 0.0, %v2558
        %v2560 = vpop.f32.mrf.mxu0
        %v2561 = vadd.f32 0.0, %v2560
        %2562 = vmatprep.mubr.bf16.mxu0 %v353
        %2563 = vmatmul.mubr.bf16.gmra.mxu0 %v352
        %v2564 = vpop.f32.mrf.mxu0
        %v2565 = vadd.f32 0.0, %v2564
        %v2566 = vpop.f32.mrf.mxu0
        %v2567 = vadd.f32 0.0, %v2566
        %v2568 = vpop.f32.mrf.mxu0
        %v2569 = vadd.f32 0.0, %v2568
        %v2570 = vpop.f32.mrf.mxu0
        %v2571 = vadd.f32 0.0, %v2570
        %2572 = vmatprep.mubr.bf16.mxu0 %v356
        %2573 = vmatmul.mubr.bf16.gmra.mxu0 %v355
        %v2574 = vpop.f32.mrf.mxu0
        %v2575 = vadd.f32 0.0, %v2574
        %v2576 = vpop.f32.mrf.mxu0
        %v2577 = vadd.f32 0.0, %v2576
        %v2578 = vpop.f32.mrf.mxu0
        %v2579 = vadd.f32 0.0, %v2578
        %v2580 = vpop.f32.mrf.mxu0
        %v2581 = vadd.f32 0.0, %v2580
        %2582 = vmatprep.mubr.bf16.mxu0 %v359
        %2583 = vmatmul.mubr.bf16.gmra.mxu0 %v358
        %v2584 = vpop.f32.mrf.mxu0
        %v2585 = vadd.f32 0.0, %v2584
        %v2586 = vpop.f32.mrf.mxu0
        %v2587 = vadd.f32 0.0, %v2586
        %v2588 = vpop.f32.mrf.mxu0
        %v2589 = vadd.f32 0.0, %v2588
        %v2590 = vpop.f32.mrf.mxu0
        %v2591 = vadd.f32 0.0, %v2590
        %2592 = vmatprep.mubr.bf16.mxu0 %v362
        %2593 = vmatmul.mubr.bf16.gmra.mxu0 %v361
        %v2594 = vpop.f32.mrf.mxu0
        %v2595 = vadd.f32 0.0, %v2594
        %v2596 = vpop.f32.mrf.mxu0
        %v2597 = vadd.f32 0.0, %v2596
        %v2598 = vpop.f32.mrf.mxu0
        %v2599 = vadd.f32 0.0, %v2598
        %v2600 = vpop.f32.mrf.mxu0
        %v2601 = vadd.f32 0.0, %v2600
        %2602 = vmatprep.mubr.bf16.mxu0 %v365
        %2603 = vmatmul.mubr.bf16.gmra.mxu0 %v364
        %v2604 = vpop.f32.mrf.mxu0
        %v2605 = vadd.f32 0.0, %v2604
        %v2606 = vpop.f32.mrf.mxu0
        %v2607 = vadd.f32 0.0, %v2606
        %v2608 = vpop.f32.mrf.mxu0
        %v2609 = vadd.f32 0.0, %v2608
        %v2610 = vpop.f32.mrf.mxu0
        %v2611 = vadd.f32 0.0, %v2610
        %2612 = vmatprep.mubr.bf16.mxu0 %v368
        %2613 = vmatmul.mubr.bf16.gmra.mxu0 %v367
        %v2614 = vpop.f32.mrf.mxu0
        %v2615 = vadd.f32 0.0, %v2614
        %v2616 = vpop.f32.mrf.mxu0
        %v2617 = vadd.f32 0.0, %v2616
        %v2618 = vpop.f32.mrf.mxu0
        %v2619 = vadd.f32 0.0, %v2618
        %v2620 = vpop.f32.mrf.mxu0
        %v2621 = vadd.f32 0.0, %v2620
        %2622 = vmatprep.mubr.bf16.mxu0 %v371
        %2623 = vmatmul.mubr.bf16.gmra.mxu0 %v370
        %v2624 = vpop.f32.mrf.mxu0
        %v2625 = vadd.f32 0.0, %v2624
        %v2626 = vpop.f32.mrf.mxu0
        %v2627 = vadd.f32 0.0, %v2626
        %v2628 = vpop.f32.mrf.mxu0
        %v2629 = vadd.f32 0.0, %v2628
        %v2630 = vpop.f32.mrf.mxu0
        %v2631 = vadd.f32 0.0, %v2630
        %2632 = vmatprep.mubr.bf16.mxu0 %v374
        %2633 = vmatmul.mubr.bf16.gmra.mxu0 %v373
        %v2634 = vpop.f32.mrf.mxu0
        %v2635 = vadd.f32 0.0, %v2634
        %v2636 = vpop.f32.mrf.mxu0
        %v2637 = vadd.f32 0.0, %v2636
        %v2638 = vpop.f32.mrf.mxu0
        %v2639 = vadd.f32 0.0, %v2638
        %v2640 = vpop.f32.mrf.mxu0
        %v2641 = vadd.f32 0.0, %v2640
        %2642 = vmatprep.mubr.bf16.mxu0 %v377
        %2643 = vmatmul.mubr.bf16.gmra.mxu0 %v376
        %v2644 = vpop.f32.mrf.mxu0
        %v2645 = vadd.f32 0.0, %v2644
        %v2646 = vpop.f32.mrf.mxu0
        %v2647 = vadd.f32 0.0, %v2646
        %v2648 = vpop.f32.mrf.mxu0
        %v2649 = vadd.f32 0.0, %v2648
        %v2650 = vpop.f32.mrf.mxu0
        %v2651 = vadd.f32 0.0, %v2650
        %2652 = vmatprep.mubr.bf16.mxu0 %v380
        %2653 = vmatmul.mubr.bf16.gmra.mxu0 %v379
        %v2654 = vpop.f32.mrf.mxu0
        %v2655 = vadd.f32 0.0, %v2654
        %v2656 = vpop.f32.mrf.mxu0
        %v2657 = vadd.f32 0.0, %v2656
        %v2658 = vpop.f32.mrf.mxu0
        %v2659 = vadd.f32 0.0, %v2658
        %v2660 = vpop.f32.mrf.mxu0
        %v2661 = vadd.f32 0.0, %v2660
        %2662 = vmatprep.mubr.bf16.mxu0 %v383
        %2663 = vmatmul.mubr.bf16.gmra.mxu0 %v382
        %v2664 = vpop.f32.mrf.mxu0
        %v2665 = vadd.f32 0.0, %v2664
        %v2666 = vpop.f32.mrf.mxu0
        %v2667 = vadd.f32 0.0, %v2666
        %v2668 = vpop.f32.mrf.mxu0
        %v2669 = vadd.f32 0.0, %v2668
        %v2670 = vpop.f32.mrf.mxu0
        %v2671 = vadd.f32 0.0, %v2670
        %2672 = vmatprep.mubr.bf16.mxu0 %v386
        %2673 = vmatmul.mubr.bf16.gmra.mxu0 %v385
        %v2674 = vpop.f32.mrf.mxu0
        %v2675 = vadd.f32 0.0, %v2674
        %v2676 = vpop.f32.mrf.mxu0
        %v2677 = vadd.f32 0.0, %v2676
        %v2678 = vpop.f32.mrf.mxu0
        %v2679 = vadd.f32 0.0, %v2678
        %v2680 = vpop.f32.mrf.mxu0
        %v2681 = vadd.f32 0.0, %v2680
        %2682 = vmatprep.mubr.bf16.mxu0 %v389
        %2683 = vmatmul.mubr.bf16.gmra.mxu0 %v388
        %v2684 = vpop.f32.mrf.mxu0
        %v2685 = vadd.f32 0.0, %v2684
        %v2686 = vpop.f32.mrf.mxu0
        %v2687 = vadd.f32 0.0, %v2686
        %v2688 = vpop.f32.mrf.mxu0
        %v2689 = vadd.f32 0.0, %v2688
        %v2690 = vpop.f32.mrf.mxu0
        %v2691 = vadd.f32 0.0, %v2690
        %2692 = vmatprep.mubr.bf16.mxu0 %v392
        %2693 = vmatmul.mubr.bf16.gmra.mxu0 %v391
        %v2694 = vpop.f32.mrf.mxu0
        %v2695 = vadd.f32 0.0, %v2694
        %v2696 = vpop.f32.mrf.mxu0
        %v2697 = vadd.f32 0.0, %v2696
        %v2698 = vpop.f32.mrf.mxu0
        %v2699 = vadd.f32 0.0, %v2698
        %v2700 = vpop.f32.mrf.mxu0
        %v2701 = vadd.f32 0.0, %v2700
        %2702 = vdwg.mxu0
        %2703 = vmatprep.subr.bf16.mxu0 %v1518
        %2704 = vmatpush1.bf16.msra.mxu0 %v1517
        %2705 = vmatprep.subr.bf16.mxu0 %v1509
        %2706 = vmatpush1.bf16.msra.mxu0 %v1508
        %2707 = vmatprep.subr.bf16.mxu0 %v1500
        %2708 = vmatpush1.bf16.msra.mxu0 %v1499
        %2709 = vmatprep.subr.bf16.mxu0 %v1491
        %2710 = vmatpush1.bf16.msra.mxu0 %v1490
        %2711 = vmatprep.subr.bf16.mxu0 %v1482
        %2712 = vmatpush1.bf16.msra.mxu0 %v1481
        %2713 = vmatprep.subr.bf16.mxu0 %v1473
        %2714 = vmatpush1.bf16.msra.mxu0 %v1472
        %2715 = vmatprep.subr.bf16.mxu0 %v1464
        %2716 = vmatpush1.bf16.msra.mxu0 %v1463
        %2717 = vmatprep.subr.bf16.mxu0 %v1455
        %2718 = vmatpush1.bf16.msra.mxu0 %v1454
        %2719 = vmatprep.subr.bf16.mxu0 0
        %2720 = vmatpush2.bf16.msra.mxu0 0
        %2721 = vmatprep.subr.bf16.mxu0 0
        %2722 = vmatpush2.bf16.msra.mxu0 0
        %2723 = vmatprep.subr.bf16.mxu0 0
        %2724 = vmatpush2.bf16.msra.mxu0 0
        %2725 = vmatprep.subr.bf16.mxu0 0
        %2726 = vmatpush2.bf16.msra.mxu0 0
        %2727 = vmatprep.subr.bf16.mxu0 0
        %2728 = vmatpush2.bf16.msra.mxu0 0
        %2729 = vmatprep.subr.bf16.mxu0 0
        %2730 = vmatpush2.bf16.msra.mxu0 0
        %2731 = vmatprep.subr.bf16.mxu0 0
        %2732 = vmatpush2.bf16.msra.mxu0 0
        %2733 = vmatprep.subr.bf16.mxu0 0
        %2734 = vmatpush2.bf16.msra.mxu0 0
        %2735 = vmatprep.mubr.bf16.mxu0 0
        %2736 = vmatmul.mubr.bf16.gmra.mxu0 %v348
        %v2737 = vpop.f32.mrf.mxu0
        %v2738 = vadd.f32 %v2545, %v2737
        %v2739 = vpop.f32.mrf.mxu0
        %v2740 = vadd.f32 %v2547, %v2739
        %v2741 = vpop.f32.mrf.mxu0
        %v2742 = vadd.f32 %v2549, %v2741
        %v2743 = vpop.f32.mrf.mxu0
        %v2744 = vadd.f32 %v2551, %v2743
        %2745 = vmatprep.mubr.bf16.mxu0 0
        %2746 = vmatmul.mubr.bf16.gmra.mxu0 %v351
        %v2747 = vpop.f32.mrf.mxu0
        %v2748 = vadd.f32 %v2555, %v2747
        %v2749 = vpop.f32.mrf.mxu0
        %v2750 = vadd.f32 %v2557, %v2749
        %v2751 = vpop.f32.mrf.mxu0
        %v2752 = vadd.f32 %v2559, %v2751
        %v2753 = vpop.f32.mrf.mxu0
        %v2754 = vadd.f32 %v2561, %v2753
        %2755 = vmatprep.mubr.bf16.mxu0 0
        %2756 = vmatmul.mubr.bf16.gmra.mxu0 %v354
        %v2757 = vpop.f32.mrf.mxu0
        %v2758 = vadd.f32 %v2565, %v2757
        %v2759 = vpop.f32.mrf.mxu0
        %v2760 = vadd.f32 %v2567, %v2759
        %v2761 = vpop.f32.mrf.mxu0
        %v2762 = vadd.f32 %v2569, %v2761
        %v2763 = vpop.f32.mrf.mxu0
        %v2764 = vadd.f32 %v2571, %v2763
        %2765 = vmatprep.mubr.bf16.mxu0 0
        %2766 = vmatmul.mubr.bf16.gmra.mxu0 %v357
        %v2767 = vpop.f32.mrf.mxu0
        %v2768 = vadd.f32 %v2575, %v2767
        %v2769 = vpop.f32.mrf.mxu0
        %v2770 = vadd.f32 %v2577, %v2769
        %v2771 = vpop.f32.mrf.mxu0
        %v2772 = vadd.f32 %v2579, %v2771
        %v2773 = vpop.f32.mrf.mxu0
        %v2774 = vadd.f32 %v2581, %v2773
        %2775 = vmatprep.mubr.bf16.mxu0 0
        %2776 = vmatmul.mubr.bf16.gmra.mxu0 %v360
        %v2777 = vpop.f32.mrf.mxu0
        %v2778 = vadd.f32 %v2585, %v2777
        %v2779 = vpop.f32.mrf.mxu0
        %v2780 = vadd.f32 %v2587, %v2779
        %v2781 = vpop.f32.mrf.mxu0
        %v2782 = vadd.f32 %v2589, %v2781
        %v2783 = vpop.f32.mrf.mxu0
        %v2784 = vadd.f32 %v2591, %v2783
        %2785 = vmatprep.mubr.bf16.mxu0 0
        %2786 = vmatmul.mubr.bf16.gmra.mxu0 %v363
        %v2787 = vpop.f32.mrf.mxu0
        %v2788 = vadd.f32 %v2595, %v2787
        %v2789 = vpop.f32.mrf.mxu0
        %v2790 = vadd.f32 %v2597, %v2789
        %v2791 = vpop.f32.mrf.mxu0
        %v2792 = vadd.f32 %v2599, %v2791
        %v2793 = vpop.f32.mrf.mxu0
        %v2794 = vadd.f32 %v2601, %v2793
        %2795 = vmatprep.mubr.bf16.mxu0 0
        %2796 = vmatmul.mubr.bf16.gmra.mxu0 %v366
        %v2797 = vpop.f32.mrf.mxu0
        %v2798 = vadd.f32 %v2605, %v2797
        %v2799 = vpop.f32.mrf.mxu0
        %v2800 = vadd.f32 %v2607, %v2799
        %v2801 = vpop.f32.mrf.mxu0
        %v2802 = vadd.f32 %v2609, %v2801
        %v2803 = vpop.f32.mrf.mxu0
        %v2804 = vadd.f32 %v2611, %v2803
        %2805 = vmatprep.mubr.bf16.mxu0 0
        %2806 = vmatmul.mubr.bf16.gmra.mxu0 %v369
        %v2807 = vpop.f32.mrf.mxu0
        %v2808 = vadd.f32 %v2615, %v2807
        %v2809 = vpop.f32.mrf.mxu0
        %v2810 = vadd.f32 %v2617, %v2809
        %v2811 = vpop.f32.mrf.mxu0
        %v2812 = vadd.f32 %v2619, %v2811
        %v2813 = vpop.f32.mrf.mxu0
        %v2814 = vadd.f32 %v2621, %v2813
        %2815 = vmatprep.mubr.bf16.mxu0 0
        %2816 = vmatmul.mubr.bf16.gmra.mxu0 %v372
        %v2817 = vpop.f32.mrf.mxu0
        %v2818 = vadd.f32 %v2625, %v2817
        %v2819 = vpop.f32.mrf.mxu0
        %v2820 = vadd.f32 %v2627, %v2819
        %v2821 = vpop.f32.mrf.mxu0
        %v2822 = vadd.f32 %v2629, %v2821
        %v2823 = vpop.f32.mrf.mxu0
        %v2824 = vadd.f32 %v2631, %v2823
        %2825 = vmatprep.mubr.bf16.mxu0 0
        %2826 = vmatmul.mubr.bf16.gmra.mxu0 %v375
        %v2827 = vpop.f32.mrf.mxu0
        %v2828 = vadd.f32 %v2635, %v2827
        %v2829 = vpop.f32.mrf.mxu0
        %v2830 = vadd.f32 %v2637, %v2829
        %v2831 = vpop.f32.mrf.mxu0
        %v2832 = vadd.f32 %v2639, %v2831
        %v2833 = vpop.f32.mrf.mxu0
        %v2834 = vadd.f32 %v2641, %v2833
        %2835 = vmatprep.mubr.bf16.mxu0 0
        %2836 = vmatmul.mubr.bf16.gmra.mxu0 %v378
        %v2837 = vpop.f32.mrf.mxu0
        %v2838 = vadd.f32 %v2645, %v2837
        %v2839 = vpop.f32.mrf.mxu0
        %v2840 = vadd.f32 %v2647, %v2839
        %v2841 = vpop.f32.mrf.mxu0
        %v2842 = vadd.f32 %v2649, %v2841
        %v2843 = vpop.f32.mrf.mxu0
        %v2844 = vadd.f32 %v2651, %v2843
        %2845 = vmatprep.mubr.bf16.mxu0 0
        %2846 = vmatmul.mubr.bf16.gmra.mxu0 %v381
        %v2847 = vpop.f32.mrf.mxu0
        %v2848 = vadd.f32 %v2655, %v2847
        %v2849 = vpop.f32.mrf.mxu0
        %v2850 = vadd.f32 %v2657, %v2849
        %v2851 = vpop.f32.mrf.mxu0
        %v2852 = vadd.f32 %v2659, %v2851
        %v2853 = vpop.f32.mrf.mxu0
        %v2854 = vadd.f32 %v2661, %v2853
        %2855 = vmatprep.mubr.bf16.mxu0 0
        %2856 = vmatmul.mubr.bf16.gmra.mxu0 %v384
        %v2857 = vpop.f32.mrf.mxu0
        %v2858 = vadd.f32 %v2665, %v2857
        %v2859 = vpop.f32.mrf.mxu0
        %v2860 = vadd.f32 %v2667, %v2859
        %v2861 = vpop.f32.mrf.mxu0
        %v2862 = vadd.f32 %v2669, %v2861
        %v2863 = vpop.f32.mrf.mxu0
        %v2864 = vadd.f32 %v2671, %v2863
        %2865 = vmatprep.mubr.bf16.mxu0 0
        %2866 = vmatmul.mubr.bf16.gmra.mxu0 %v387
        %v2867 = vpop.f32.mrf.mxu0
        %v2868 = vadd.f32 %v2675, %v2867
        %v2869 = vpop.f32.mrf.mxu0
        %v2870 = vadd.f32 %v2677, %v2869
        %v2871 = vpop.f32.mrf.mxu0
        %v2872 = vadd.f32 %v2679, %v2871
        %v2873 = vpop.f32.mrf.mxu0
        %v2874 = vadd.f32 %v2681, %v2873
        %2875 = vmatprep.mubr.bf16.mxu0 0
        %2876 = vmatmul.mubr.bf16.gmra.mxu0 %v390
        %v2877 = vpop.f32.mrf.mxu0
        %v2878 = vadd.f32 %v2685, %v2877
        %v2879 = vpop.f32.mrf.mxu0
        %v2880 = vadd.f32 %v2687, %v2879
        %v2881 = vpop.f32.mrf.mxu0
        %v2882 = vadd.f32 %v2689, %v2881
        %v2883 = vpop.f32.mrf.mxu0
        %v2884 = vadd.f32 %v2691, %v2883
        %2885 = vmatprep.mubr.bf16.mxu0 0
        %2886 = vmatmul.mubr.bf16.gmra.mxu0 %v393
        %v2887 = vpop.f32.mrf.mxu0
        %v2888 = vadd.f32 %v2695, %v2887
        %v2889 = vpop.f32.mrf.mxu0
        %v2890 = vadd.f32 %v2697, %v2889
        %v2891 = vpop.f32.mrf.mxu0
        %v2892 = vadd.f32 %v2699, %v2891
        %v2893 = vpop.f32.mrf.mxu0
        %v2894 = vadd.f32 %v2701, %v2893
        %2895 = vdwg.mxu0
        %2896 = vmatprep.subr.bf16.mxu0 %v1376
        %2897 = vmatpush1.bf16.msra.mxu0 %v1375
        %2898 = vmatprep.subr.bf16.mxu0 %v1367
        %2899 = vmatpush1.bf16.msra.mxu0 %v1366
        %2900 = vmatprep.subr.bf16.mxu0 %v1358
        %2901 = vmatpush1.bf16.msra.mxu0 %v1357
        %2902 = vmatprep.subr.bf16.mxu0 %v1349
        %2903 = vmatpush1.bf16.msra.mxu0 %v1348
        %2904 = vmatprep.subr.bf16.mxu0 %v1340
        %2905 = vmatpush1.bf16.msra.mxu0 %v1339
        %2906 = vmatprep.subr.bf16.mxu0 %v1331
        %2907 = vmatpush1.bf16.msra.mxu0 %v1330
        %2908 = vmatprep.subr.bf16.mxu0 %v1322
        %2909 = vmatpush1.bf16.msra.mxu0 %v1321
        %2910 = vmatprep.subr.bf16.mxu0 %v1313
        %2911 = vmatpush1.bf16.msra.mxu0 %v1312
        %2912 = vmatprep.subr.bf16.mxu0 %v1448
        %2913 = vmatpush2.bf16.msra.mxu0 %v1447
        %2914 = vmatprep.subr.bf16.mxu0 %v1439
        %2915 = vmatpush2.bf16.msra.mxu0 %v1438
        %2916 = vmatprep.subr.bf16.mxu0 %v1430
        %2917 = vmatpush2.bf16.msra.mxu0 %v1429
        %2918 = vmatprep.subr.bf16.mxu0 %v1421
        %2919 = vmatpush2.bf16.msra.mxu0 %v1420
        %2920 = vmatprep.subr.bf16.mxu0 %v1412
        %2921 = vmatpush2.bf16.msra.mxu0 %v1411
        %2922 = vmatprep.subr.bf16.mxu0 %v1403
        %2923 = vmatpush2.bf16.msra.mxu0 %v1402
        %2924 = vmatprep.subr.bf16.mxu0 %v1394
        %2925 = vmatpush2.bf16.msra.mxu0 %v1393
        %2926 = vmatprep.subr.bf16.mxu0 %v1385
        %2927 = vmatpush2.bf16.msra.mxu0 %v1384
        %2928 = vmatprep.mubr.bf16.mxu0 %v347
        %2929 = vmatmul.mubr.bf16.gmra.mxu0 %v346
        %v2930 = vpop.f32.mrf.mxu0
        %v2931 = vadd.f32 0.0, %v2930
        %v2932 = vpop.f32.mrf.mxu0
        %v2933 = vadd.f32 0.0, %v2932
        %v2934 = vpop.f32.mrf.mxu0
        %v2935 = vadd.f32 0.0, %v2934
        %v2936 = vpop.f32.mrf.mxu0
        %v2937 = vadd.f32 0.0, %v2936
        %2938 = vmatprep.mubr.bf16.mxu0 %v350
        %2939 = vmatmul.mubr.bf16.gmra.mxu0 %v349
        %v2940 = vpop.f32.mrf.mxu0
        %v2941 = vadd.f32 0.0, %v2940
        %v2942 = vpop.f32.mrf.mxu0
        %v2943 = vadd.f32 0.0, %v2942
        %v2944 = vpop.f32.mrf.mxu0
        %v2945 = vadd.f32 0.0, %v2944
        %v2946 = vpop.f32.mrf.mxu0
        %v2947 = vadd.f32 0.0, %v2946
        %2948 = vmatprep.mubr.bf16.mxu0 %v353
        %2949 = vmatmul.mubr.bf16.gmra.mxu0 %v352
        %v2950 = vpop.f32.mrf.mxu0
        %v2951 = vadd.f32 0.0, %v2950
        %v2952 = vpop.f32.mrf.mxu0
        %v2953 = vadd.f32 0.0, %v2952
        %v2954 = vpop.f32.mrf.mxu0
        %v2955 = vadd.f32 0.0, %v2954
        %v2956 = vpop.f32.mrf.mxu0
        %v2957 = vadd.f32 0.0, %v2956
        %2958 = vmatprep.mubr.bf16.mxu0 %v356
        %2959 = vmatmul.mubr.bf16.gmra.mxu0 %v355
        %v2960 = vpop.f32.mrf.mxu0
        %v2961 = vadd.f32 0.0, %v2960
        %v2962 = vpop.f32.mrf.mxu0
        %v2963 = vadd.f32 0.0, %v2962
        %v2964 = vpop.f32.mrf.mxu0
        %v2965 = vadd.f32 0.0, %v2964
        %v2966 = vpop.f32.mrf.mxu0
        %v2967 = vadd.f32 0.0, %v2966
        %2968 = vmatprep.mubr.bf16.mxu0 %v359
        %2969 = vmatmul.mubr.bf16.gmra.mxu0 %v358
        %v2970 = vpop.f32.mrf.mxu0
        %v2971 = vadd.f32 0.0, %v2970
        %v2972 = vpop.f32.mrf.mxu0
        %v2973 = vadd.f32 0.0, %v2972
        %v2974 = vpop.f32.mrf.mxu0
        %v2975 = vadd.f32 0.0, %v2974
        %v2976 = vpop.f32.mrf.mxu0
        %v2977 = vadd.f32 0.0, %v2976
        %2978 = vmatprep.mubr.bf16.mxu0 %v362
        %2979 = vmatmul.mubr.bf16.gmra.mxu0 %v361
        %v2980 = vpop.f32.mrf.mxu0
        %v2981 = vadd.f32 0.0, %v2980
        %v2982 = vpop.f32.mrf.mxu0
        %v2983 = vadd.f32 0.0, %v2982
        %v2984 = vpop.f32.mrf.mxu0
        %v2985 = vadd.f32 0.0, %v2984
        %v2986 = vpop.f32.mrf.mxu0
        %v2987 = vadd.f32 0.0, %v2986
        %2988 = vmatprep.mubr.bf16.mxu0 %v365
        %2989 = vmatmul.mubr.bf16.gmra.mxu0 %v364
        %v2990 = vpop.f32.mrf.mxu0
        %v2991 = vadd.f32 0.0, %v2990
        %v2992 = vpop.f32.mrf.mxu0
        %v2993 = vadd.f32 0.0, %v2992
        %v2994 = vpop.f32.mrf.mxu0
        %v2995 = vadd.f32 0.0, %v2994
        %v2996 = vpop.f32.mrf.mxu0
        %v2997 = vadd.f32 0.0, %v2996
        %2998 = vmatprep.mubr.bf16.mxu0 %v368
        %2999 = vmatmul.mubr.bf16.gmra.mxu0 %v367
        %v3000 = vpop.f32.mrf.mxu0
        %v3001 = vadd.f32 0.0, %v3000
        %v3002 = vpop.f32.mrf.mxu0
        %v3003 = vadd.f32 0.0, %v3002
        %v3004 = vpop.f32.mrf.mxu0
        %v3005 = vadd.f32 0.0, %v3004
        %v3006 = vpop.f32.mrf.mxu0
        %v3007 = vadd.f32 0.0, %v3006
        %3008 = vmatprep.mubr.bf16.mxu0 %v371
        %3009 = vmatmul.mubr.bf16.gmra.mxu0 %v370
        %v3010 = vpop.f32.mrf.mxu0
        %v3011 = vadd.f32 0.0, %v3010
        %v3012 = vpop.f32.mrf.mxu0
        %v3013 = vadd.f32 0.0, %v3012
        %v3014 = vpop.f32.mrf.mxu0
        %v3015 = vadd.f32 0.0, %v3014
        %v3016 = vpop.f32.mrf.mxu0
        %v3017 = vadd.f32 0.0, %v3016
        %3018 = vmatprep.mubr.bf16.mxu0 %v374
        %3019 = vmatmul.mubr.bf16.gmra.mxu0 %v373
        %v3020 = vpop.f32.mrf.mxu0
        %v3021 = vadd.f32 0.0, %v3020
        %v3022 = vpop.f32.mrf.mxu0
        %v3023 = vadd.f32 0.0, %v3022
        %v3024 = vpop.f32.mrf.mxu0
        %v3025 = vadd.f32 0.0, %v3024
        %v3026 = vpop.f32.mrf.mxu0
        %v3027 = vadd.f32 0.0, %v3026
        %3028 = vmatprep.mubr.bf16.mxu0 %v377
        %3029 = vmatmul.mubr.bf16.gmra.mxu0 %v376
        %v3030 = vpop.f32.mrf.mxu0
        %v3031 = vadd.f32 0.0, %v3030
        %v3032 = vpop.f32.mrf.mxu0
        %v3033 = vadd.f32 0.0, %v3032
        %v3034 = vpop.f32.mrf.mxu0
        %v3035 = vadd.f32 0.0, %v3034
        %v3036 = vpop.f32.mrf.mxu0
        %v3037 = vadd.f32 0.0, %v3036
        %3038 = vmatprep.mubr.bf16.mxu0 %v380
        %3039 = vmatmul.mubr.bf16.gmra.mxu0 %v379
        %v3040 = vpop.f32.mrf.mxu0
        %v3041 = vadd.f32 0.0, %v3040
        %v3042 = vpop.f32.mrf.mxu0
        %v3043 = vadd.f32 0.0, %v3042
        %v3044 = vpop.f32.mrf.mxu0
        %v3045 = vadd.f32 0.0, %v3044
        %v3046 = vpop.f32.mrf.mxu0
        %v3047 = vadd.f32 0.0, %v3046
        %3048 = vmatprep.mubr.bf16.mxu0 %v383
        %3049 = vmatmul.mubr.bf16.gmra.mxu0 %v382
        %v3050 = vpop.f32.mrf.mxu0
        %v3051 = vadd.f32 0.0, %v3050
        %v3052 = vpop.f32.mrf.mxu0
        %v3053 = vadd.f32 0.0, %v3052
        %v3054 = vpop.f32.mrf.mxu0
        %v3055 = vadd.f32 0.0, %v3054
        %v3056 = vpop.f32.mrf.mxu0
        %v3057 = vadd.f32 0.0, %v3056
        %3058 = vmatprep.mubr.bf16.mxu0 %v386
        %3059 = vmatmul.mubr.bf16.gmra.mxu0 %v385
        %v3060 = vpop.f32.mrf.mxu0
        %v3061 = vadd.f32 0.0, %v3060
        %v3062 = vpop.f32.mrf.mxu0
        %v3063 = vadd.f32 0.0, %v3062
        %v3064 = vpop.f32.mrf.mxu0
        %v3065 = vadd.f32 0.0, %v3064
        %v3066 = vpop.f32.mrf.mxu0
        %v3067 = vadd.f32 0.0, %v3066
        %3068 = vmatprep.mubr.bf16.mxu0 %v389
        %3069 = vmatmul.mubr.bf16.gmra.mxu0 %v388
        %v3070 = vpop.f32.mrf.mxu0
        %v3071 = vadd.f32 0.0, %v3070
        %v3072 = vpop.f32.mrf.mxu0
        %v3073 = vadd.f32 0.0, %v3072
        %v3074 = vpop.f32.mrf.mxu0
        %v3075 = vadd.f32 0.0, %v3074
        %v3076 = vpop.f32.mrf.mxu0
        %v3077 = vadd.f32 0.0, %v3076
        %3078 = vmatprep.mubr.bf16.mxu0 %v392
        %3079 = vmatmul.mubr.bf16.gmra.mxu0 %v391
        %v3080 = vpop.f32.mrf.mxu0
        %v3081 = vadd.f32 0.0, %v3080
        %v3082 = vpop.f32.mrf.mxu0
        %v3083 = vadd.f32 0.0, %v3082
        %v3084 = vpop.f32.mrf.mxu0
        %v3085 = vadd.f32 0.0, %v3084
        %v3086 = vpop.f32.mrf.mxu0
        %v3087 = vadd.f32 0.0, %v3086
        %3088 = vdwg.mxu0
        %3089 = vmatprep.subr.bf16.mxu0 %v1520
        %3090 = vmatpush1.bf16.msra.mxu0 %v1519
        %3091 = vmatprep.subr.bf16.mxu0 %v1511
        %3092 = vmatpush1.bf16.msra.mxu0 %v1510
        %3093 = vmatprep.subr.bf16.mxu0 %v1502
        %3094 = vmatpush1.bf16.msra.mxu0 %v1501
        %3095 = vmatprep.subr.bf16.mxu0 %v1493
        %3096 = vmatpush1.bf16.msra.mxu0 %v1492
        %3097 = vmatprep.subr.bf16.mxu0 %v1484
        %3098 = vmatpush1.bf16.msra.mxu0 %v1483
        %3099 = vmatprep.subr.bf16.mxu0 %v1475
        %3100 = vmatpush1.bf16.msra.mxu0 %v1474
        %3101 = vmatprep.subr.bf16.mxu0 %v1466
        %3102 = vmatpush1.bf16.msra.mxu0 %v1465
        %3103 = vmatprep.subr.bf16.mxu0 %v1457
        %3104 = vmatpush1.bf16.msra.mxu0 %v1456
        %3105 = vmatprep.subr.bf16.mxu0 0
        %3106 = vmatpush2.bf16.msra.mxu0 0
        %3107 = vmatprep.subr.bf16.mxu0 0
        %3108 = vmatpush2.bf16.msra.mxu0 0
        %3109 = vmatprep.subr.bf16.mxu0 0
        %3110 = vmatpush2.bf16.msra.mxu0 0
        %3111 = vmatprep.subr.bf16.mxu0 0
        %3112 = vmatpush2.bf16.msra.mxu0 0
        %3113 = vmatprep.subr.bf16.mxu0 0
        %3114 = vmatpush2.bf16.msra.mxu0 0
        %3115 = vmatprep.subr.bf16.mxu0 0
        %3116 = vmatpush2.bf16.msra.mxu0 0
        %3117 = vmatprep.subr.bf16.mxu0 0
        %3118 = vmatpush2.bf16.msra.mxu0 0
        %3119 = vmatprep.subr.bf16.mxu0 0
        %3120 = vmatpush2.bf16.msra.mxu0 0
        %3121 = vmatprep.mubr.bf16.mxu0 0
        %3122 = vmatmul.mubr.bf16.gmra.mxu0 %v348
        %v3123 = vpop.f32.mrf.mxu0
        %v3124 = vadd.f32 %v2931, %v3123
        %v3125 = vpop.f32.mrf.mxu0
        %v3126 = vadd.f32 %v2933, %v3125
        %v3127 = vpop.f32.mrf.mxu0
        %v3128 = vadd.f32 %v2935, %v3127
        %v3129 = vpop.f32.mrf.mxu0
        %v3130 = vadd.f32 %v2937, %v3129
        %3131 = vmatprep.mubr.bf16.mxu0 0
        %3132 = vmatmul.mubr.bf16.gmra.mxu0 %v351
        %v3133 = vpop.f32.mrf.mxu0
        %v3134 = vadd.f32 %v2941, %v3133
        %v3135 = vpop.f32.mrf.mxu0
        %v3136 = vadd.f32 %v2943, %v3135
        %v3137 = vpop.f32.mrf.mxu0
        %v3138 = vadd.f32 %v2945, %v3137
        %v3139 = vpop.f32.mrf.mxu0
        %v3140 = vadd.f32 %v2947, %v3139
        %3141 = vmatprep.mubr.bf16.mxu0 0
        %3142 = vmatmul.mubr.bf16.gmra.mxu0 %v354
        %v3143 = vpop.f32.mrf.mxu0
        %v3144 = vadd.f32 %v2951, %v3143
        %v3145 = vpop.f32.mrf.mxu0
        %v3146 = vadd.f32 %v2953, %v3145
        %v3147 = vpop.f32.mrf.mxu0
        %v3148 = vadd.f32 %v2955, %v3147
        %v3149 = vpop.f32.mrf.mxu0
        %v3150 = vadd.f32 %v2957, %v3149
        %3151 = vmatprep.mubr.bf16.mxu0 0
        %3152 = vmatmul.mubr.bf16.gmra.mxu0 %v357
        %v3153 = vpop.f32.mrf.mxu0
        %v3154 = vadd.f32 %v2961, %v3153
        %v3155 = vpop.f32.mrf.mxu0
        %v3156 = vadd.f32 %v2963, %v3155
        %v3157 = vpop.f32.mrf.mxu0
        %v3158 = vadd.f32 %v2965, %v3157
        %v3159 = vpop.f32.mrf.mxu0
        %v3160 = vadd.f32 %v2967, %v3159
        %3161 = vmatprep.mubr.bf16.mxu0 0
        %3162 = vmatmul.mubr.bf16.gmra.mxu0 %v360
        %v3163 = vpop.f32.mrf.mxu0
        %v3164 = vadd.f32 %v2971, %v3163
        %v3165 = vpop.f32.mrf.mxu0
        %v3166 = vadd.f32 %v2973, %v3165
        %v3167 = vpop.f32.mrf.mxu0
        %v3168 = vadd.f32 %v2975, %v3167
        %v3169 = vpop.f32.mrf.mxu0
        %v3170 = vadd.f32 %v2977, %v3169
        %3171 = vmatprep.mubr.bf16.mxu0 0
        %3172 = vmatmul.mubr.bf16.gmra.mxu0 %v363
        %v3173 = vpop.f32.mrf.mxu0
        %v3174 = vadd.f32 %v2981, %v3173
        %v3175 = vpop.f32.mrf.mxu0
        %v3176 = vadd.f32 %v2983, %v3175
        %v3177 = vpop.f32.mrf.mxu0
        %v3178 = vadd.f32 %v2985, %v3177
        %v3179 = vpop.f32.mrf.mxu0
        %v3180 = vadd.f32 %v2987, %v3179
        %3181 = vmatprep.mubr.bf16.mxu0 0
        %3182 = vmatmul.mubr.bf16.gmra.mxu0 %v366
        %v3183 = vpop.f32.mrf.mxu0
        %v3184 = vadd.f32 %v2991, %v3183
        %v3185 = vpop.f32.mrf.mxu0
        %v3186 = vadd.f32 %v2993, %v3185
        %v3187 = vpop.f32.mrf.mxu0
        %v3188 = vadd.f32 %v2995, %v3187
        %v3189 = vpop.f32.mrf.mxu0
        %v3190 = vadd.f32 %v2997, %v3189
        %3191 = vmatprep.mubr.bf16.mxu0 0
        %3192 = vmatmul.mubr.bf16.gmra.mxu0 %v369
        %v3193 = vpop.f32.mrf.mxu0
        %v3194 = vadd.f32 %v3001, %v3193
        %v3195 = vpop.f32.mrf.mxu0
        %v3196 = vadd.f32 %v3003, %v3195
        %v3197 = vpop.f32.mrf.mxu0
        %v3198 = vadd.f32 %v3005, %v3197
        %v3199 = vpop.f32.mrf.mxu0
        %v3200 = vadd.f32 %v3007, %v3199
        %3201 = vmatprep.mubr.bf16.mxu0 0
        %3202 = vmatmul.mubr.bf16.gmra.mxu0 %v372
        %v3203 = vpop.f32.mrf.mxu0
        %v3204 = vadd.f32 %v3011, %v3203
        %v3205 = vpop.f32.mrf.mxu0
        %v3206 = vadd.f32 %v3013, %v3205
        %v3207 = vpop.f32.mrf.mxu0
        %v3208 = vadd.f32 %v3015, %v3207
        %v3209 = vpop.f32.mrf.mxu0
        %v3210 = vadd.f32 %v3017, %v3209
        %3211 = vmatprep.mubr.bf16.mxu0 0
        %3212 = vmatmul.mubr.bf16.gmra.mxu0 %v375
        %v3213 = vpop.f32.mrf.mxu0
        %v3214 = vadd.f32 %v3021, %v3213
        %v3215 = vpop.f32.mrf.mxu0
        %v3216 = vadd.f32 %v3023, %v3215
        %v3217 = vpop.f32.mrf.mxu0
        %v3218 = vadd.f32 %v3025, %v3217
        %v3219 = vpop.f32.mrf.mxu0
        %v3220 = vadd.f32 %v3027, %v3219
        %3221 = vmatprep.mubr.bf16.mxu0 0
        %3222 = vmatmul.mubr.bf16.gmra.mxu0 %v378
        %v3223 = vpop.f32.mrf.mxu0
        %v3224 = vadd.f32 %v3031, %v3223
        %v3225 = vpop.f32.mrf.mxu0
        %v3226 = vadd.f32 %v3033, %v3225
        %v3227 = vpop.f32.mrf.mxu0
        %v3228 = vadd.f32 %v3035, %v3227
        %v3229 = vpop.f32.mrf.mxu0
        %v3230 = vadd.f32 %v3037, %v3229
        %3231 = vmatprep.mubr.bf16.mxu0 0
        %3232 = vmatmul.mubr.bf16.gmra.mxu0 %v381
        %v3233 = vpop.f32.mrf.mxu0
        %v3234 = vadd.f32 %v3041, %v3233
        %v3235 = vpop.f32.mrf.mxu0
        %v3236 = vadd.f32 %v3043, %v3235
        %v3237 = vpop.f32.mrf.mxu0
        %v3238 = vadd.f32 %v3045, %v3237
        %v3239 = vpop.f32.mrf.mxu0
        %v3240 = vadd.f32 %v3047, %v3239
        %3241 = vmatprep.mubr.bf16.mxu0 0
        %3242 = vmatmul.mubr.bf16.gmra.mxu0 %v384
        %v3243 = vpop.f32.mrf.mxu0
        %v3244 = vadd.f32 %v3051, %v3243
        %v3245 = vpop.f32.mrf.mxu0
        %v3246 = vadd.f32 %v3053, %v3245
        %v3247 = vpop.f32.mrf.mxu0
        %v3248 = vadd.f32 %v3055, %v3247
        %v3249 = vpop.f32.mrf.mxu0
        %v3250 = vadd.f32 %v3057, %v3249
        %3251 = vmatprep.mubr.bf16.mxu0 0
        %3252 = vmatmul.mubr.bf16.gmra.mxu0 %v387
        %v3253 = vpop.f32.mrf.mxu0
        %v3254 = vadd.f32 %v3061, %v3253
        %v3255 = vpop.f32.mrf.mxu0
        %v3256 = vadd.f32 %v3063, %v3255
        %v3257 = vpop.f32.mrf.mxu0
        %v3258 = vadd.f32 %v3065, %v3257
        %v3259 = vpop.f32.mrf.mxu0
        %v3260 = vadd.f32 %v3067, %v3259
        %3261 = vmatprep.mubr.bf16.mxu0 0
        %3262 = vmatmul.mubr.bf16.gmra.mxu0 %v390
        %v3263 = vpop.f32.mrf.mxu0
        %v3264 = vadd.f32 %v3071, %v3263
        %v3265 = vpop.f32.mrf.mxu0
        %v3266 = vadd.f32 %v3073, %v3265
        %v3267 = vpop.f32.mrf.mxu0
        %v3268 = vadd.f32 %v3075, %v3267
        %v3269 = vpop.f32.mrf.mxu0
        %v3270 = vadd.f32 %v3077, %v3269
        %3271 = vmatprep.mubr.bf16.mxu0 0
        %3272 = vmatmul.mubr.bf16.gmra.mxu0 %v393
        %v3273 = vpop.f32.mrf.mxu0
        %v3274 = vadd.f32 %v3081, %v3273
        %v3275 = vpop.f32.mrf.mxu0
        %v3276 = vadd.f32 %v3083, %v3275
        %v3277 = vpop.f32.mrf.mxu0
        %v3278 = vadd.f32 %v3085, %v3277
        %v3279 = vpop.f32.mrf.mxu0
        %v3280 = vadd.f32 %v3087, %v3279
        %3281 = vdwg.mxu0
        %3282 = vmatprep.subr.bf16.mxu0 0
        %3283 = vmatpush1.bf16.msra.mxu0 %v1377
        %3284 = vmatprep.subr.bf16.mxu0 0
        %3285 = vmatpush1.bf16.msra.mxu0 %v1368
        %3286 = vmatprep.subr.bf16.mxu0 0
        %3287 = vmatpush1.bf16.msra.mxu0 %v1359
        %3288 = vmatprep.subr.bf16.mxu0 0
        %3289 = vmatpush1.bf16.msra.mxu0 %v1350
        %3290 = vmatprep.subr.bf16.mxu0 0
        %3291 = vmatpush1.bf16.msra.mxu0 %v1341
        %3292 = vmatprep.subr.bf16.mxu0 0
        %3293 = vmatpush1.bf16.msra.mxu0 %v1332
        %3294 = vmatprep.subr.bf16.mxu0 0
        %3295 = vmatpush1.bf16.msra.mxu0 %v1323
        %3296 = vmatprep.subr.bf16.mxu0 0
        %3297 = vmatpush1.bf16.msra.mxu0 %v1314
        %3298 = vmatprep.subr.bf16.mxu0 0
        %3299 = vmatpush2.bf16.msra.mxu0 %v1449
        %3300 = vmatprep.subr.bf16.mxu0 0
        %3301 = vmatpush2.bf16.msra.mxu0 %v1440
        %3302 = vmatprep.subr.bf16.mxu0 0
        %3303 = vmatpush2.bf16.msra.mxu0 %v1431
        %3304 = vmatprep.subr.bf16.mxu0 0
        %3305 = vmatpush2.bf16.msra.mxu0 %v1422
        %3306 = vmatprep.subr.bf16.mxu0 0
        %3307 = vmatpush2.bf16.msra.mxu0 %v1413
        %3308 = vmatprep.subr.bf16.mxu0 0
        %3309 = vmatpush2.bf16.msra.mxu0 %v1404
        %3310 = vmatprep.subr.bf16.mxu0 0
        %3311 = vmatpush2.bf16.msra.mxu0 %v1395
        %3312 = vmatprep.subr.bf16.mxu0 0
        %3313 = vmatpush2.bf16.msra.mxu0 %v1386
        %3314 = vmatprep.mubr.bf16.mxu0 %v347
        %3315 = vmatmul.mubr.bf16.gmra.mxu0 %v346
        %v3316 = vpop.f32.mrf.mxu0
        %v3317 = vadd.f32 0.0, %v3316
        %v3318 = vpop.f32.mrf.mxu0
        %v3319 = vpop.f32.mrf.mxu0
        %v3320 = vadd.f32 0.0, %v3319
        %v3321 = vpop.f32.mrf.mxu0
        %3322 = vmatprep.mubr.bf16.mxu0 %v350
        %3323 = vmatmul.mubr.bf16.gmra.mxu0 %v349
        %v3324 = vpop.f32.mrf.mxu0
        %v3325 = vadd.f32 0.0, %v3324
        %v3326 = vpop.f32.mrf.mxu0
        %v3327 = vpop.f32.mrf.mxu0
        %v3328 = vadd.f32 0.0, %v3327
        %v3329 = vpop.f32.mrf.mxu0
        %3330 = vmatprep.mubr.bf16.mxu0 %v353
        %3331 = vmatmul.mubr.bf16.gmra.mxu0 %v352
        %v3332 = vpop.f32.mrf.mxu0
        %v3333 = vadd.f32 0.0, %v3332
        %v3334 = vpop.f32.mrf.mxu0
        %v3335 = vpop.f32.mrf.mxu0
        %v3336 = vadd.f32 0.0, %v3335
        %v3337 = vpop.f32.mrf.mxu0
        %3338 = vmatprep.mubr.bf16.mxu0 %v356
        %3339 = vmatmul.mubr.bf16.gmra.mxu0 %v355
        %v3340 = vpop.f32.mrf.mxu0
        %v3341 = vadd.f32 0.0, %v3340
        %v3342 = vpop.f32.mrf.mxu0
        %v3343 = vpop.f32.mrf.mxu0
        %v3344 = vadd.f32 0.0, %v3343
        %v3345 = vpop.f32.mrf.mxu0
        %3346 = vmatprep.mubr.bf16.mxu0 %v359
        %3347 = vmatmul.mubr.bf16.gmra.mxu0 %v358
        %v3348 = vpop.f32.mrf.mxu0
        %v3349 = vadd.f32 0.0, %v3348
        %v3350 = vpop.f32.mrf.mxu0
        %v3351 = vpop.f32.mrf.mxu0
        %v3352 = vadd.f32 0.0, %v3351
        %v3353 = vpop.f32.mrf.mxu0
        %3354 = vmatprep.mubr.bf16.mxu0 %v362
        %3355 = vmatmul.mubr.bf16.gmra.mxu0 %v361
        %v3356 = vpop.f32.mrf.mxu0
        %v3357 = vadd.f32 0.0, %v3356
        %v3358 = vpop.f32.mrf.mxu0
        %v3359 = vpop.f32.mrf.mxu0
        %v3360 = vadd.f32 0.0, %v3359
        %v3361 = vpop.f32.mrf.mxu0
        %3362 = vmatprep.mubr.bf16.mxu0 %v365
        %3363 = vmatmul.mubr.bf16.gmra.mxu0 %v364
        %v3364 = vpop.f32.mrf.mxu0
        %v3365 = vadd.f32 0.0, %v3364
        %v3366 = vpop.f32.mrf.mxu0
        %v3367 = vpop.f32.mrf.mxu0
        %v3368 = vadd.f32 0.0, %v3367
        %v3369 = vpop.f32.mrf.mxu0
        %3370 = vmatprep.mubr.bf16.mxu0 %v368
        %3371 = vmatmul.mubr.bf16.gmra.mxu0 %v367
        %v3372 = vpop.f32.mrf.mxu0
        %v3373 = vadd.f32 0.0, %v3372
        %v3374 = vpop.f32.mrf.mxu0
        %v3375 = vpop.f32.mrf.mxu0
        %v3376 = vadd.f32 0.0, %v3375
        %v3377 = vpop.f32.mrf.mxu0
        %3378 = vmatprep.mubr.bf16.mxu0 %v371
        %3379 = vmatmul.mubr.bf16.gmra.mxu0 %v370
        %v3380 = vpop.f32.mrf.mxu0
        %v3381 = vadd.f32 0.0, %v3380
        %v3382 = vpop.f32.mrf.mxu0
        %v3383 = vpop.f32.mrf.mxu0
        %v3384 = vadd.f32 0.0, %v3383
        %v3385 = vpop.f32.mrf.mxu0
        %3386 = vmatprep.mubr.bf16.mxu0 %v374
        %3387 = vmatmul.mubr.bf16.gmra.mxu0 %v373
        %v3388 = vpop.f32.mrf.mxu0
        %v3389 = vadd.f32 0.0, %v3388
        %v3390 = vpop.f32.mrf.mxu0
        %v3391 = vpop.f32.mrf.mxu0
        %v3392 = vadd.f32 0.0, %v3391
        %v3393 = vpop.f32.mrf.mxu0
        %3394 = vmatprep.mubr.bf16.mxu0 %v377
        %3395 = vmatmul.mubr.bf16.gmra.mxu0 %v376
        %v3396 = vpop.f32.mrf.mxu0
        %v3397 = vadd.f32 0.0, %v3396
        %v3398 = vpop.f32.mrf.mxu0
        %v3399 = vpop.f32.mrf.mxu0
        %v3400 = vadd.f32 0.0, %v3399
        %v3401 = vpop.f32.mrf.mxu0
        %3402 = vmatprep.mubr.bf16.mxu0 %v380
        %3403 = vmatmul.mubr.bf16.gmra.mxu0 %v379
        %v3404 = vpop.f32.mrf.mxu0
        %v3405 = vadd.f32 0.0, %v3404
        %v3406 = vpop.f32.mrf.mxu0
        %v3407 = vpop.f32.mrf.mxu0
        %v3408 = vadd.f32 0.0, %v3407
        %v3409 = vpop.f32.mrf.mxu0
        %3410 = vmatprep.mubr.bf16.mxu0 %v383
        %3411 = vmatmul.mubr.bf16.gmra.mxu0 %v382
        %v3412 = vpop.f32.mrf.mxu0
        %v3413 = vadd.f32 0.0, %v3412
        %v3414 = vpop.f32.mrf.mxu0
        %v3415 = vpop.f32.mrf.mxu0
        %v3416 = vadd.f32 0.0, %v3415
        %v3417 = vpop.f32.mrf.mxu0
        %3418 = vmatprep.mubr.bf16.mxu0 %v386
        %3419 = vmatmul.mubr.bf16.gmra.mxu0 %v385
        %v3420 = vpop.f32.mrf.mxu0
        %v3421 = vadd.f32 0.0, %v3420
        %v3422 = vpop.f32.mrf.mxu0
        %v3423 = vpop.f32.mrf.mxu0
        %v3424 = vadd.f32 0.0, %v3423
        %v3425 = vpop.f32.mrf.mxu0
        %3426 = vmatprep.mubr.bf16.mxu0 %v389
        %3427 = vmatmul.mubr.bf16.gmra.mxu0 %v388
        %v3428 = vpop.f32.mrf.mxu0
        %v3429 = vadd.f32 0.0, %v3428
        %v3430 = vpop.f32.mrf.mxu0
        %v3431 = vpop.f32.mrf.mxu0
        %v3432 = vadd.f32 0.0, %v3431
        %v3433 = vpop.f32.mrf.mxu0
        %3434 = vmatprep.mubr.bf16.mxu0 %v392
        %3435 = vmatmul.mubr.bf16.gmra.mxu0 %v391
        %v3436 = vpop.f32.mrf.mxu0
        %v3437 = vadd.f32 0.0, %v3436
        %v3438 = vpop.f32.mrf.mxu0
        %v3439 = vpop.f32.mrf.mxu0
        %v3440 = vadd.f32 0.0, %v3439
        %v3441 = vpop.f32.mrf.mxu0
        %3442 = vdwg.mxu0
        %3443 = vmatprep.subr.bf16.mxu0 0
        %3444 = vmatpush1.bf16.msra.mxu0 %v1521
        %3445 = vmatprep.subr.bf16.mxu0 0
        %3446 = vmatpush1.bf16.msra.mxu0 %v1512
        %3447 = vmatprep.subr.bf16.mxu0 0
        %3448 = vmatpush1.bf16.msra.mxu0 %v1503
        %3449 = vmatprep.subr.bf16.mxu0 0
        %3450 = vmatpush1.bf16.msra.mxu0 %v1494
        %3451 = vmatprep.subr.bf16.mxu0 0
        %3452 = vmatpush1.bf16.msra.mxu0 %v1485
        %3453 = vmatprep.subr.bf16.mxu0 0
        %3454 = vmatpush1.bf16.msra.mxu0 %v1476
        %3455 = vmatprep.subr.bf16.mxu0 0
        %3456 = vmatpush1.bf16.msra.mxu0 %v1467
        %3457 = vmatprep.subr.bf16.mxu0 0
        %3458 = vmatpush1.bf16.msra.mxu0 %v1458
        %3459 = vmatprep.subr.bf16.mxu0 0
        %3460 = vmatpush2.bf16.msra.mxu0 0
        %3461 = vmatprep.subr.bf16.mxu0 0
        %3462 = vmatpush2.bf16.msra.mxu0 0
        %3463 = vmatprep.subr.bf16.mxu0 0
        %3464 = vmatpush2.bf16.msra.mxu0 0
        %3465 = vmatprep.subr.bf16.mxu0 0
        %3466 = vmatpush2.bf16.msra.mxu0 0
        %3467 = vmatprep.subr.bf16.mxu0 0
        %3468 = vmatpush2.bf16.msra.mxu0 0
        %3469 = vmatprep.subr.bf16.mxu0 0
        %3470 = vmatpush2.bf16.msra.mxu0 0
        %3471 = vmatprep.subr.bf16.mxu0 0
        %3472 = vmatpush2.bf16.msra.mxu0 0
        %3473 = vmatprep.subr.bf16.mxu0 0
        %3474 = vmatpush2.bf16.msra.mxu0 0
        %3475 = vmatprep.mubr.bf16.mxu0 0
        %3476 = vmatmul.mubr.bf16.gmra.mxu0 %v348
        %v3477 = vpop.f32.mrf.mxu0
        %v3478 = vadd.f32 %v3317, %v3477
        %v3479 = vpop.f32.mrf.mxu0
        %v3480 = vpop.f32.mrf.mxu0
        %v3481 = vadd.f32 %v3320, %v3480
        %v3482 = vpop.f32.mrf.mxu0
        %3483 = vmatprep.mubr.bf16.mxu0 0
        %3484 = vmatmul.mubr.bf16.gmra.mxu0 %v351
        %v3485 = vpop.f32.mrf.mxu0
        %v3486 = vadd.f32 %v3325, %v3485
        %v3487 = vpop.f32.mrf.mxu0
        %v3488 = vpop.f32.mrf.mxu0
        %v3489 = vadd.f32 %v3328, %v3488
        %v3490 = vpop.f32.mrf.mxu0
        %3491 = vmatprep.mubr.bf16.mxu0 0
        %3492 = vmatmul.mubr.bf16.gmra.mxu0 %v354
        %v3493 = vpop.f32.mrf.mxu0
        %v3494 = vadd.f32 %v3333, %v3493
        %v3495 = vpop.f32.mrf.mxu0
        %v3496 = vpop.f32.mrf.mxu0
        %v3497 = vadd.f32 %v3336, %v3496
        %v3498 = vpop.f32.mrf.mxu0
        %3499 = vmatprep.mubr.bf16.mxu0 0
        %3500 = vmatmul.mubr.bf16.gmra.mxu0 %v357
        %v3501 = vpop.f32.mrf.mxu0
        %v3502 = vadd.f32 %v3341, %v3501
        %v3503 = vpop.f32.mrf.mxu0
        %v3504 = vpop.f32.mrf.mxu0
        %v3505 = vadd.f32 %v3344, %v3504
        %v3506 = vpop.f32.mrf.mxu0
        %3507 = vmatprep.mubr.bf16.mxu0 0
        %3508 = vmatmul.mubr.bf16.gmra.mxu0 %v360
        %v3509 = vpop.f32.mrf.mxu0
        %v3510 = vadd.f32 %v3349, %v3509
        %v3511 = vpop.f32.mrf.mxu0
        %v3512 = vpop.f32.mrf.mxu0
        %v3513 = vadd.f32 %v3352, %v3512
        %v3514 = vpop.f32.mrf.mxu0
        %3515 = vmatprep.mubr.bf16.mxu0 0
        %3516 = vmatmul.mubr.bf16.gmra.mxu0 %v363
        %v3517 = vpop.f32.mrf.mxu0
        %v3518 = vadd.f32 %v3357, %v3517
        %v3519 = vpop.f32.mrf.mxu0
        %v3520 = vpop.f32.mrf.mxu0
        %v3521 = vadd.f32 %v3360, %v3520
        %v3522 = vpop.f32.mrf.mxu0
        %3523 = vmatprep.mubr.bf16.mxu0 0
        %3524 = vmatmul.mubr.bf16.gmra.mxu0 %v366
        %v3525 = vpop.f32.mrf.mxu0
        %v3526 = vadd.f32 %v3365, %v3525
        %v3527 = vpop.f32.mrf.mxu0
        %v3528 = vpop.f32.mrf.mxu0
        %v3529 = vadd.f32 %v3368, %v3528
        %v3530 = vpop.f32.mrf.mxu0
        %3531 = vmatprep.mubr.bf16.mxu0 0
        %3532 = vmatmul.mubr.bf16.gmra.mxu0 %v369
        %v3533 = vpop.f32.mrf.mxu0
        %v3534 = vadd.f32 %v3373, %v3533
        %v3535 = vpop.f32.mrf.mxu0
        %v3536 = vpop.f32.mrf.mxu0
        %v3537 = vadd.f32 %v3376, %v3536
        %v3538 = vpop.f32.mrf.mxu0
        %3539 = vmatprep.mubr.bf16.mxu0 0
        %3540 = vmatmul.mubr.bf16.gmra.mxu0 %v372
        %v3541 = vpop.f32.mrf.mxu0
        %v3542 = vadd.f32 %v3381, %v3541
        %v3543 = vpop.f32.mrf.mxu0
        %v3544 = vpop.f32.mrf.mxu0
        %v3545 = vadd.f32 %v3384, %v3544
        %v3546 = vpop.f32.mrf.mxu0
        %3547 = vmatprep.mubr.bf16.mxu0 0
        %3548 = vmatmul.mubr.bf16.gmra.mxu0 %v375
        %v3549 = vpop.f32.mrf.mxu0
        %v3550 = vadd.f32 %v3389, %v3549
        %v3551 = vpop.f32.mrf.mxu0
        %v3552 = vpop.f32.mrf.mxu0
        %v3553 = vadd.f32 %v3392, %v3552
        %v3554 = vpop.f32.mrf.mxu0
        %3555 = vmatprep.mubr.bf16.mxu0 0
        %3556 = vmatmul.mubr.bf16.gmra.mxu0 %v378
        %v3557 = vpop.f32.mrf.mxu0
        %v3558 = vadd.f32 %v3397, %v3557
        %v3559 = vpop.f32.mrf.mxu0
        %v3560 = vpop.f32.mrf.mxu0
        %v3561 = vadd.f32 %v3400, %v3560
        %v3562 = vpop.f32.mrf.mxu0
        %3563 = vmatprep.mubr.bf16.mxu0 0
        %3564 = vmatmul.mubr.bf16.gmra.mxu0 %v381
        %v3565 = vpop.f32.mrf.mxu0
        %v3566 = vadd.f32 %v3405, %v3565
        %v3567 = vpop.f32.mrf.mxu0
        %v3568 = vpop.f32.mrf.mxu0
        %v3569 = vadd.f32 %v3408, %v3568
        %v3570 = vpop.f32.mrf.mxu0
        %3571 = vmatprep.mubr.bf16.mxu0 0
        %3572 = vmatmul.mubr.bf16.gmra.mxu0 %v384
        %v3573 = vpop.f32.mrf.mxu0
        %v3574 = vadd.f32 %v3413, %v3573
        %v3575 = vpop.f32.mrf.mxu0
        %v3576 = vpop.f32.mrf.mxu0
        %v3577 = vadd.f32 %v3416, %v3576
        %v3578 = vpop.f32.mrf.mxu0
        %3579 = vmatprep.mubr.bf16.mxu0 0
        %3580 = vmatmul.mubr.bf16.gmra.mxu0 %v387
        %v3581 = vpop.f32.mrf.mxu0
        %v3582 = vadd.f32 %v3421, %v3581
        %v3583 = vpop.f32.mrf.mxu0
        %v3584 = vpop.f32.mrf.mxu0
        %v3585 = vadd.f32 %v3424, %v3584
        %v3586 = vpop.f32.mrf.mxu0
        %3587 = vmatprep.mubr.bf16.mxu0 0
        %3588 = vmatmul.mubr.bf16.gmra.mxu0 %v390
        %v3589 = vpop.f32.mrf.mxu0
        %v3590 = vadd.f32 %v3429, %v3589
        %v3591 = vpop.f32.mrf.mxu0
        %v3592 = vpop.f32.mrf.mxu0
        %v3593 = vadd.f32 %v3432, %v3592
        %v3594 = vpop.f32.mrf.mxu0
        %3595 = vmatprep.mubr.bf16.mxu0 0
        %3596 = vmatmul.mubr.bf16.gmra.mxu0 %v393
        %v3597 = vpop.f32.mrf.mxu0
        %v3598 = vadd.f32 %v3437, %v3597
        %v3599 = vpop.f32.mrf.mxu0
        %v3600 = vpop.f32.mrf.mxu0
        %v3601 = vadd.f32 %v3440, %v3600
        %v3602 = vpop.f32.mrf.mxu0
        %3603 = vdwg.mxu0
        %v3604 = vlaneseq
        %v3605 = vshrl.u32 %v3604, 7
        %v3606 = vadd.s32 %v3605, 8
        %v3607 = vadd.s32 %v3605, 16
        %v3608 = vadd.s32 %v3605, 24
        %v3609 = vadd.s32 %v3605, 32
        %v3610 = vadd.s32 %v3605, 40
        %v3611 = vadd.s32 %v3605, 48
        %v3612 = vadd.s32 %v3605, 56
        %v3613 = vadd.s32 %v3605, 64
        %v3614 = vadd.s32 %v3605, 72
        %v3615 = vadd.s32 %v3605, 80
        %v3616 = vadd.s32 %v3605, 88
        %v3617 = vadd.s32 %v3605, 96
        %v3618 = vadd.s32 %v3605, 104
        %v3619 = vadd.s32 %v3605, 112
        %v3620 = vadd.s32 %v3605, 120
        %v3621 = vlaneseq
        %v3622 = vand.u32 %v3621, 127
        %vm3623 = vcmp.le.s32.totalorder %v3622, %v3605
        %vm3624 = vcmp.le.s32.totalorder %v3622, %v3606
        %vm3625 = vcmp.le.s32.totalorder %v3622, %v3607
        %vm3626 = vcmp.le.s32.totalorder %v3622, %v3608
        %vm3627 = vcmp.le.s32.totalorder %v3622, %v3609
        %vm3628 = vcmp.le.s32.totalorder %v3622, %v3610
        %vm3629 = vcmp.le.s32.totalorder %v3622, %v3611
        %vm3630 = vcmp.le.s32.totalorder %v3622, %v3612
        %vm3631 = vcmp.le.s32.totalorder %v3622, %v3613
        %vm3632 = vcmp.le.s32.totalorder %v3622, %v3614
        %vm3633 = vcmp.le.s32.totalorder %v3622, %v3615
        %vm3634 = vcmp.le.s32.totalorder %v3622, %v3616
        %vm3635 = vcmp.le.s32.totalorder %v3622, %v3617
        %vm3636 = vcmp.le.s32.totalorder %v3622, %v3618
        %vm3637 = vcmp.le.s32.totalorder %v3622, %v3619
        %vm3638 = vcmp.le.s32.totalorder %v3622, %v3620
        %v3639 = vpack.c.bf16 %v1970, %v1966
        %v3640 = vpack.c.bf16 %v1980, %v1976
        %v3641 = vpack.c.bf16 %v1990, %v1986
        %v3642 = vpack.c.bf16 %v2000, %v1996
        %v3643 = vpack.c.bf16 %v2010, %v2006
        %v3644 = vpack.c.bf16 %v2020, %v2016
        %v3645 = vpack.c.bf16 %v2030, %v2026
        %v3646 = vpack.c.bf16 %v2040, %v2036
        %v3647 = vpack.c.bf16 %v2050, %v2046
        %v3648 = vpack.c.bf16 %v2060, %v2056
        %v3649 = vpack.c.bf16 %v2070, %v2066
        %v3650 = vpack.c.bf16 %v2080, %v2076
        %v3651 = vpack.c.bf16 %v2090, %v2086
        %v3652 = vpack.c.bf16 %v2100, %v2096
        %v3653 = vpack.c.bf16 %v2110, %v2106
        %v3654 = vpack.c.bf16 %v2120, %v2116
        %v3655 = vmul.bf16 %v3639, 1040203264
        %v3656 = vmul.bf16 %v3640, 1040203264
        %v3657 = vmul.bf16 %v3641, 1040203264
        %v3658 = vmul.bf16 %v3642, 1040203264
        %v3659 = vmul.bf16 %v3643, 1040203264
        %v3660 = vmul.bf16 %v3644, 1040203264
        %v3661 = vmul.bf16 %v3645, 1040203264
        %v3662 = vmul.bf16 %v3646, 1040203264
        %v3663 = vmul.bf16 %v3647, 1040203264
        %v3664 = vmul.bf16 %v3648, 1040203264
        %v3665 = vmul.bf16 %v3649, 1040203264
        %v3666 = vmul.bf16 %v3650, 1040203264
        %v3667 = vmul.bf16 %v3651, 1040203264
        %v3668 = vmul.bf16 %v3652, 1040203264
        %v3669 = vmul.bf16 %v3653, 1040203264
        %v3670 = vmul.bf16 %v3654, 1040203264
        %v3671 = vpack.c.bf16 %v2358, %v2354
        %v3672 = vpack.c.bf16 %v2368, %v2364
        %v3673 = vpack.c.bf16 %v2378, %v2374
        %v3674 = vpack.c.bf16 %v2388, %v2384
        %v3675 = vpack.c.bf16 %v2398, %v2394
        %v3676 = vpack.c.bf16 %v2408, %v2404
        %v3677 = vpack.c.bf16 %v2418, %v2414
        %v3678 = vpack.c.bf16 %v2428, %v2424
        %v3679 = vpack.c.bf16 %v2438, %v2434
        %v3680 = vpack.c.bf16 %v2448, %v2444
        %v3681 = vpack.c.bf16 %v2458, %v2454
        %v3682 = vpack.c.bf16 %v2468, %v2464
        %v3683 = vpack.c.bf16 %v2478, %v2474
        %v3684 = vpack.c.bf16 %v2488, %v2484
        %v3685 = vpack.c.bf16 %v2498, %v2494
        %v3686 = vpack.c.bf16 %v2508, %v2504
        %v3687 = vpack.c.bf16 %v3128, %v3124
        %v3688 = vpack.c.bf16 %v3138, %v3134
        %v3689 = vpack.c.bf16 %v3148, %v3144
        %v3690 = vpack.c.bf16 %v3158, %v3154
        %v3691 = vpack.c.bf16 %v3168, %v3164
        %v3692 = vpack.c.bf16 %v3178, %v3174
        %v3693 = vpack.c.bf16 %v3188, %v3184
        %v3694 = vpack.c.bf16 %v3198, %v3194
        %v3695 = vpack.c.bf16 %v3208, %v3204
        %v3696 = vpack.c.bf16 %v3218, %v3214
        %v3697 = vpack.c.bf16 %v3228, %v3224
        %v3698 = vpack.c.bf16 %v3238, %v3234
        %v3699 = vpack.c.bf16 %v3248, %v3244
        %v3700 = vpack.c.bf16 %v3258, %v3254
        %v3701 = vpack.c.bf16 %v3268, %v3264
        %v3702 = vpack.c.bf16 %v3278, %v3274
        %vm3703 = vcmask 523264
        %v3705 = vsel %vm3703, %v3655, 0
        %v3708 = vsel %vm3703, %v3656, 0
        %v3711 = vsel %vm3703, %v3657, 0
        %v3714 = vsel %vm3703, %v3658, 0
        %v3717 = vsel %vm3703, %v3659, 0
        %v3720 = vsel %vm3703, %v3660, 0
        %v3723 = vsel %vm3703, %v3661, 0
        %v3726 = vsel %vm3703, %v3662, 0
        %v3729 = vsel %vm3703, %v3671, 0
        %v3732 = vsel %vm3703, %v3672, 0
        %v3735 = vsel %vm3703, %v3673, 0
        %v3738 = vsel %vm3703, %v3674, 0
        %v3741 = vsel %vm3703, %v3675, 0
        %v3744 = vsel %vm3703, %v3676, 0
        %v3747 = vsel %vm3703, %v3677, 0
        %v3750 = vsel %vm3703, %v3678, 0
        %3752 = vmatprep.subr.bf16.mxu0 0
        %3753 = vmatpush1.bf16.xpose.msra.mxu0 %v3750
        %3754 = vmatprep.subr.bf16.mxu0 0
        %3755 = vmatpush1.bf16.xpose.msra.mxu0 %v3747
        %3756 = vmatprep.subr.bf16.mxu0 0
        %3757 = vmatpush1.bf16.xpose.msra.mxu0 %v3744
        %3758 = vmatprep.subr.bf16.mxu0 0
        %3759 = vmatpush1.bf16.xpose.msra.mxu0 %v3741
        %3760 = vmatprep.subr.bf16.mxu0 0
        %3761 = vmatpush1.bf16.xpose.msra.mxu0 %v3738
        %3762 = vmatprep.subr.bf16.mxu0 0
        %3763 = vmatpush1.bf16.xpose.msra.mxu0 %v3735
        %3764 = vmatprep.subr.bf16.mxu0 0
        %3765 = vmatpush1.bf16.xpose.msra.mxu0 %v3732
        %3766 = vmatprep.subr.bf16.mxu0 0
        %3767 = vmatpush1.bf16.xpose.msra.mxu0 %v3729
        %3768 = vmatprep.subr.bf16.mxu0 0
        %3769 = vmatpush2.bf16.xpose.msra.mxu0 0
        %3770 = vmatprep.subr.bf16.mxu0 0
        %3771 = vmatpush2.bf16.xpose.msra.mxu0 0
        %3772 = vmatprep.subr.bf16.mxu0 0
        %3773 = vmatpush2.bf16.xpose.msra.mxu0 0
        %3774 = vmatprep.subr.bf16.mxu0 0
        %3775 = vmatpush2.bf16.xpose.msra.mxu0 0
        %3776 = vmatprep.subr.bf16.mxu0 0
        %3777 = vmatpush2.bf16.xpose.msra.mxu0 0
        %3778 = vmatprep.subr.bf16.mxu0 0
        %3779 = vmatpush2.bf16.xpose.msra.mxu0 0
        %3780 = vmatprep.subr.bf16.mxu0 0
        %3781 = vmatpush2.bf16.xpose.msra.mxu0 0
        %3782 = vmatprep.subr.bf16.mxu0 0
        %3783 = vmatpush2.bf16.xpose.msra.mxu0 0
        %3784 = vmatprep.mubr.bf16.mxu0 0
        %3785 = vmatmul.mubr.bf16.gmra.mxu0 %v3705
        %v3786 = vpop.f32.mrf.mxu0
        %v3787 = vadd.f32 0.0, %v3786
        %v3788 = vpop.f32.mrf.mxu0
        %v3789 = vpop.f32.mrf.mxu0
        %v3790 = vadd.f32 0.0, %v3789
        %v3791 = vpop.f32.mrf.mxu0
        %3792 = vmatprep.mubr.bf16.mxu0 0
        %3793 = vmatmul.mubr.bf16.gmra.mxu0 %v3708
        %v3794 = vpop.f32.mrf.mxu0
        %v3795 = vadd.f32 0.0, %v3794
        %v3796 = vpop.f32.mrf.mxu0
        %v3797 = vpop.f32.mrf.mxu0
        %v3798 = vadd.f32 0.0, %v3797
        %v3799 = vpop.f32.mrf.mxu0
        %3800 = vmatprep.mubr.bf16.mxu0 0
        %3801 = vmatmul.mubr.bf16.gmra.mxu0 %v3711
        %v3802 = vpop.f32.mrf.mxu0
        %v3803 = vadd.f32 0.0, %v3802
        %v3804 = vpop.f32.mrf.mxu0
        %v3805 = vpop.f32.mrf.mxu0
        %v3806 = vadd.f32 0.0, %v3805
        %v3807 = vpop.f32.mrf.mxu0
        %3808 = vmatprep.mubr.bf16.mxu0 0
        %3809 = vmatmul.mubr.bf16.gmra.mxu0 %v3714
        %v3810 = vpop.f32.mrf.mxu0
        %v3811 = vadd.f32 0.0, %v3810
        %v3812 = vpop.f32.mrf.mxu0
        %v3813 = vpop.f32.mrf.mxu0
        %v3814 = vadd.f32 0.0, %v3813
        %v3815 = vpop.f32.mrf.mxu0
        %3816 = vmatprep.mubr.bf16.mxu0 0
        %3817 = vmatmul.mubr.bf16.gmra.mxu0 %v3717
        %v3818 = vpop.f32.mrf.mxu0
        %v3819 = vadd.f32 0.0, %v3818
        %v3820 = vpop.f32.mrf.mxu0
        %v3821 = vpop.f32.mrf.mxu0
        %v3822 = vadd.f32 0.0, %v3821
        %v3823 = vpop.f32.mrf.mxu0
        %3824 = vmatprep.mubr.bf16.mxu0 0
        %3825 = vmatmul.mubr.bf16.gmra.mxu0 %v3720
        %v3826 = vpop.f32.mrf.mxu0
        %v3827 = vadd.f32 0.0, %v3826
        %v3828 = vpop.f32.mrf.mxu0
        %v3829 = vpop.f32.mrf.mxu0
        %v3830 = vadd.f32 0.0, %v3829
        %v3831 = vpop.f32.mrf.mxu0
        %3832 = vmatprep.mubr.bf16.mxu0 0
        %3833 = vmatmul.mubr.bf16.gmra.mxu0 %v3723
        %v3834 = vpop.f32.mrf.mxu0
        %v3835 = vadd.f32 0.0, %v3834
        %v3836 = vpop.f32.mrf.mxu0
        %v3837 = vpop.f32.mrf.mxu0
        %v3838 = vadd.f32 0.0, %v3837
        %v3839 = vpop.f32.mrf.mxu0
        %3840 = vmatprep.mubr.bf16.mxu0 0
        %3841 = vmatmul.mubr.bf16.gmra.mxu0 %v3726
        %v3842 = vpop.f32.mrf.mxu0
        %v3843 = vadd.f32 0.0, %v3842
        %v3844 = vpop.f32.mrf.mxu0
        %v3845 = vpop.f32.mrf.mxu0
        %v3846 = vadd.f32 0.0, %v3845
        %v3847 = vpop.f32.mrf.mxu0
        %3848 = vdwg.mxu0
        %v3850 = vsel %vm3703, %v3663, 0
        %v3853 = vsel %vm3703, %v3664, 0
        %v3856 = vsel %vm3703, %v3665, 0
        %v3859 = vsel %vm3703, %v3666, 0
        %v3862 = vsel %vm3703, %v3667, 0
        %v3865 = vsel %vm3703, %v3668, 0
        %v3868 = vsel %vm3703, %v3669, 0
        %v3871 = vsel %vm3703, %v3670, 0
        %v3874 = vsel %vm3703, %v3679, 0
        %v3877 = vsel %vm3703, %v3680, 0
        %v3880 = vsel %vm3703, %v3681, 0
        %v3883 = vsel %vm3703, %v3682, 0
        %v3886 = vsel %vm3703, %v3683, 0
        %v3889 = vsel %vm3703, %v3684, 0
        %v3892 = vsel %vm3703, %v3685, 0
        %v3895 = vsel %vm3703, %v3686, 0
        %3897 = vmatprep.subr.bf16.mxu0 0
        %3898 = vmatpush1.bf16.xpose.msra.mxu0 %v3895
        %3899 = vmatprep.subr.bf16.mxu0 0
        %3900 = vmatpush1.bf16.xpose.msra.mxu0 %v3892
        %3901 = vmatprep.subr.bf16.mxu0 0
        %3902 = vmatpush1.bf16.xpose.msra.mxu0 %v3889
        %3903 = vmatprep.subr.bf16.mxu0 0
        %3904 = vmatpush1.bf16.xpose.msra.mxu0 %v3886
        %3905 = vmatprep.subr.bf16.mxu0 0
        %3906 = vmatpush1.bf16.xpose.msra.mxu0 %v3883
        %3907 = vmatprep.subr.bf16.mxu0 0
        %3908 = vmatpush1.bf16.xpose.msra.mxu0 %v3880
        %3909 = vmatprep.subr.bf16.mxu0 0
        %3910 = vmatpush1.bf16.xpose.msra.mxu0 %v3877
        %3911 = vmatprep.subr.bf16.mxu0 0
        %3912 = vmatpush1.bf16.xpose.msra.mxu0 %v3874
        %3913 = vmatprep.subr.bf16.mxu0 0
        %3914 = vmatpush2.bf16.xpose.msra.mxu0 0
        %3915 = vmatprep.subr.bf16.mxu0 0
        %3916 = vmatpush2.bf16.xpose.msra.mxu0 0
        %3917 = vmatprep.subr.bf16.mxu0 0
        %3918 = vmatpush2.bf16.xpose.msra.mxu0 0
        %3919 = vmatprep.subr.bf16.mxu0 0
        %3920 = vmatpush2.bf16.xpose.msra.mxu0 0
        %3921 = vmatprep.subr.bf16.mxu0 0
        %3922 = vmatpush2.bf16.xpose.msra.mxu0 0
        %3923 = vmatprep.subr.bf16.mxu0 0
        %3924 = vmatpush2.bf16.xpose.msra.mxu0 0
        %3925 = vmatprep.subr.bf16.mxu0 0
        %3926 = vmatpush2.bf16.xpose.msra.mxu0 0
        %3927 = vmatprep.subr.bf16.mxu0 0
        %3928 = vmatpush2.bf16.xpose.msra.mxu0 0
        %3929 = vmatprep.mubr.bf16.mxu0 0
        %3930 = vmatmul.mubr.bf16.gmra.mxu0 %v3850
        %v3931 = vpop.f32.mrf.mxu0
        %v3932 = vadd.f32 0.0, %v3931
        %v3933 = vpop.f32.mrf.mxu0
        %v3934 = vpop.f32.mrf.mxu0
        %v3935 = vadd.f32 0.0, %v3934
        %v3936 = vpop.f32.mrf.mxu0
        %3937 = vmatprep.mubr.bf16.mxu0 0
        %3938 = vmatmul.mubr.bf16.gmra.mxu0 %v3853
        %v3939 = vpop.f32.mrf.mxu0
        %v3940 = vadd.f32 0.0, %v3939
        %v3941 = vpop.f32.mrf.mxu0
        %v3942 = vpop.f32.mrf.mxu0
        %v3943 = vadd.f32 0.0, %v3942
        %v3944 = vpop.f32.mrf.mxu0
        %3945 = vmatprep.mubr.bf16.mxu0 0
        %3946 = vmatmul.mubr.bf16.gmra.mxu0 %v3856
        %v3947 = vpop.f32.mrf.mxu0
        %v3948 = vadd.f32 0.0, %v3947
        %v3949 = vpop.f32.mrf.mxu0
        %v3950 = vpop.f32.mrf.mxu0
        %v3951 = vadd.f32 0.0, %v3950
        %v3952 = vpop.f32.mrf.mxu0
        %3953 = vmatprep.mubr.bf16.mxu0 0
        %3954 = vmatmul.mubr.bf16.gmra.mxu0 %v3859
        %v3955 = vpop.f32.mrf.mxu0
        %v3956 = vadd.f32 0.0, %v3955
        %v3957 = vpop.f32.mrf.mxu0
        %v3958 = vpop.f32.mrf.mxu0
        %v3959 = vadd.f32 0.0, %v3958
        %v3960 = vpop.f32.mrf.mxu0
        %3961 = vmatprep.mubr.bf16.mxu0 0
        %3962 = vmatmul.mubr.bf16.gmra.mxu0 %v3862
        %v3963 = vpop.f32.mrf.mxu0
        %v3964 = vadd.f32 0.0, %v3963
        %v3965 = vpop.f32.mrf.mxu0
        %v3966 = vpop.f32.mrf.mxu0
        %v3967 = vadd.f32 0.0, %v3966
        %v3968 = vpop.f32.mrf.mxu0
        %3969 = vmatprep.mubr.bf16.mxu0 0
        %3970 = vmatmul.mubr.bf16.gmra.mxu0 %v3865
        %v3971 = vpop.f32.mrf.mxu0
        %v3972 = vadd.f32 0.0, %v3971
        %v3973 = vpop.f32.mrf.mxu0
        %v3974 = vpop.f32.mrf.mxu0
        %v3975 = vadd.f32 0.0, %v3974
        %v3976 = vpop.f32.mrf.mxu0
        %3977 = vmatprep.mubr.bf16.mxu0 0
        %3978 = vmatmul.mubr.bf16.gmra.mxu0 %v3868
        %v3979 = vpop.f32.mrf.mxu0
        %v3980 = vadd.f32 0.0, %v3979
        %v3981 = vpop.f32.mrf.mxu0
        %v3982 = vpop.f32.mrf.mxu0
        %v3983 = vadd.f32 0.0, %v3982
        %v3984 = vpop.f32.mrf.mxu0
        %3985 = vmatprep.mubr.bf16.mxu0 0
        %3986 = vmatmul.mubr.bf16.gmra.mxu0 %v3871
        %v3987 = vpop.f32.mrf.mxu0
        %v3988 = vadd.f32 0.0, %v3987
        %v3989 = vpop.f32.mrf.mxu0
        %v3990 = vpop.f32.mrf.mxu0
        %v3991 = vadd.f32 0.0, %v3990
        %v3992 = vpop.f32.mrf.mxu0
        %3993 = vdwg.mxu0
        %v3994 = vsel %vm3623, 1, 0
        %v3995 = vsel %vm3624, 1, 0
        %v3996 = vsel %vm3625, 1, 0
        %v3997 = vsel %vm3626, 1, 0
        %v3998 = vsel %vm3627, 1, 0
        %v3999 = vsel %vm3628, 1, 0
        %v4000 = vsel %vm3629, 1, 0
        %v4001 = vsel %vm3630, 1, 0
        %v4002 = vsel %vm3631, 1, 0
        %v4003 = vsel %vm3632, 1, 0
        %v4004 = vsel %vm3633, 1, 0
        %v4005 = vsel %vm3634, 1, 0
        %v4006 = vsel %vm3635, 1, 0
        %v4007 = vsel %vm3636, 1, 0
        %v4008 = vsel %vm3637, 1, 0
        %v4009 = vsel %vm3638, 1, 0
        %vm4010 = vcmp.eq.s32.totalorder %v3994, 1
        %vm4011 = vcmp.eq.s32.totalorder %v3995, 1
        %vm4012 = vcmp.eq.s32.totalorder %v3996, 1
        %vm4013 = vcmp.eq.s32.totalorder %v3997, 1
        %vm4014 = vcmp.eq.s32.totalorder %v3998, 1
        %vm4015 = vcmp.eq.s32.totalorder %v3999, 1
        %vm4016 = vcmp.eq.s32.totalorder %v4000, 1
        %vm4017 = vcmp.eq.s32.totalorder %v4001, 1
        %vm4018 = vcmp.eq.s32.totalorder %v4002, 1
        %vm4019 = vcmp.eq.s32.totalorder %v4003, 1
        %vm4020 = vcmp.eq.s32.totalorder %v4004, 1
        %vm4021 = vcmp.eq.s32.totalorder %v4005, 1
        %vm4022 = vcmp.eq.s32.totalorder %v4006, 1
        %vm4023 = vcmp.eq.s32.totalorder %v4007, 1
        %vm4024 = vcmp.eq.s32.totalorder %v4008, 1
        %vm4025 = vcmp.eq.s32.totalorder %v4009, 1
        %v4026 = vsel %vm4010, %v3787, -inf
        %v4027 = vsel %vm4011, %v3790, -inf
        %v4028 = vsel %vm4012, %v3795, -inf
        %v4029 = vsel %vm4013, %v3798, -inf
        %v4030 = vsel %vm4014, %v3803, -inf
        %v4031 = vsel %vm4015, %v3806, -inf
        %v4032 = vsel %vm4016, %v3811, -inf
        %v4033 = vsel %vm4017, %v3814, -inf
        %v4034 = vsel %vm4018, %v3819, -inf
        %v4035 = vsel %vm4019, %v3822, -inf
        %v4036 = vsel %vm4020, %v3827, -inf
        %v4037 = vsel %vm4021, %v3830, -inf
        %v4038 = vsel %vm4022, %v3835, -inf
        %v4039 = vsel %vm4023, %v3838, -inf
        %v4040 = vsel %vm4024, %v3843, -inf
        %v4041 = vsel %vm4025, %v3846, -inf
        %v4042 = vsel %vm4010, %v3932, -inf
        %v4043 = vsel %vm4011, %v3935, -inf
        %v4044 = vsel %vm4012, %v3940, -inf
        %v4045 = vsel %vm4013, %v3943, -inf
        %v4046 = vsel %vm4014, %v3948, -inf
        %v4047 = vsel %vm4015, %v3951, -inf
        %v4048 = vsel %vm4016, %v3956, -inf
        %v4049 = vsel %vm4017, %v3959, -inf
        %v4050 = vsel %vm4018, %v3964, -inf
        %v4051 = vsel %vm4019, %v3967, -inf
        %v4052 = vsel %vm4020, %v3972, -inf
        %v4053 = vsel %vm4021, %v3975, -inf
        %v4054 = vsel %vm4022, %v3980, -inf
        %v4055 = vsel %vm4023, %v3983, -inf
        %v4056 = vsel %vm4024, %v3988, -inf
        %v4057 = vsel %vm4025, %v3991, -inf
        %4058 = vmax.xlane.f32.xlu0 %v4026
        %v4059 = vpop.xlane.xlu0 %4058
        %4060 = vmax.xlane.f32.xlu0 %v4027
        %v4061 = vpop.xlane.xlu0 %4060
        %4062 = vmax.xlane.f32.xlu0 %v4028
        %v4063 = vpop.xlane.xlu0 %4062
        %4064 = vmax.xlane.f32.xlu0 %v4029
        %v4065 = vpop.xlane.xlu0 %4064
        %4066 = vmax.xlane.f32.xlu0 %v4030
        %v4067 = vpop.xlane.xlu0 %4066
        %4068 = vmax.xlane.f32.xlu0 %v4031
        %v4069 = vpop.xlane.xlu0 %4068
        %4070 = vmax.xlane.f32.xlu0 %v4032
        %v4071 = vpop.xlane.xlu0 %4070
        %4072 = vmax.xlane.f32.xlu0 %v4033
        %v4073 = vpop.xlane.xlu0 %4072
        %4074 = vmax.xlane.f32.xlu0 %v4034
        %v4075 = vpop.xlane.xlu0 %4074
        %4076 = vmax.xlane.f32.xlu0 %v4035
        %v4077 = vpop.xlane.xlu0 %4076
        %4078 = vmax.xlane.f32.xlu0 %v4036
        %v4079 = vpop.xlane.xlu0 %4078
        %4080 = vmax.xlane.f32.xlu0 %v4037
        %v4081 = vpop.xlane.xlu0 %4080
        %4082 = vmax.xlane.f32.xlu0 %v4038
        %v4083 = vpop.xlane.xlu0 %4082
        %4084 = vmax.xlane.f32.xlu0 %v4039
        %v4085 = vpop.xlane.xlu0 %4084
        %4086 = vmax.xlane.f32.xlu0 %v4040
        %v4087 = vpop.xlane.xlu0 %4086
        %4088 = vmax.xlane.f32.xlu0 %v4041
        %v4089 = vpop.xlane.xlu0 %4088
        %4090 = vmax.xlane.f32.xlu0 %v4042
        %v4091 = vpop.xlane.xlu0 %4090
        %4092 = vmax.xlane.f32.xlu0 %v4043
        %v4093 = vpop.xlane.xlu0 %4092
        %4094 = vmax.xlane.f32.xlu0 %v4044
        %v4095 = vpop.xlane.xlu0 %4094
        %4096 = vmax.xlane.f32.xlu0 %v4045
        %v4097 = vpop.xlane.xlu0 %4096
        %4098 = vmax.xlane.f32.xlu0 %v4046
        %v4099 = vpop.xlane.xlu0 %4098
        %4100 = vmax.xlane.f32.xlu0 %v4047
        %v4101 = vpop.xlane.xlu0 %4100
        %4102 = vmax.xlane.f32.xlu0 %v4048
        %v4103 = vpop.xlane.xlu0 %4102
        %4104 = vmax.xlane.f32.xlu0 %v4049
        %v4105 = vpop.xlane.xlu0 %4104
        %4106 = vmax.xlane.f32.xlu0 %v4050
        %v4107 = vpop.xlane.xlu0 %4106
        %4108 = vmax.xlane.f32.xlu0 %v4051
        %v4109 = vpop.xlane.xlu0 %4108
        %4110 = vmax.xlane.f32.xlu0 %v4052
        %v4111 = vpop.xlane.xlu0 %4110
        %4112 = vmax.xlane.f32.xlu0 %v4053
        %v4113 = vpop.xlane.xlu0 %4112
        %4114 = vmax.xlane.f32.xlu0 %v4054
        %v4115 = vpop.xlane.xlu0 %4114
        %4116 = vmax.xlane.f32.xlu0 %v4055
        %v4117 = vpop.xlane.xlu0 %4116
        %4118 = vmax.xlane.f32.xlu0 %v4056
        %v4119 = vpop.xlane.xlu0 %4118
        %4120 = vmax.xlane.f32.xlu0 %v4057
        %v4121 = vpop.xlane.xlu0 %4120
        %v4122 = vsub.f32 %v4026, %v4059
        %v4123 = vsub.f32 %v4027, %v4061
        %v4124 = vsub.f32 %v4028, %v4063
        %v4125 = vsub.f32 %v4029, %v4065
        %v4126 = vsub.f32 %v4030, %v4067
        %v4127 = vsub.f32 %v4031, %v4069
        %v4128 = vsub.f32 %v4032, %v4071
        %v4129 = vsub.f32 %v4033, %v4073
        %v4130 = vsub.f32 %v4034, %v4075
        %v4131 = vsub.f32 %v4035, %v4077
        %v4132 = vsub.f32 %v4036, %v4079
        %v4133 = vsub.f32 %v4037, %v4081
        %v4134 = vsub.f32 %v4038, %v4083
        %v4135 = vsub.f32 %v4039, %v4085
        %v4136 = vsub.f32 %v4040, %v4087
        %v4137 = vsub.f32 %v4041, %v4089
        %v4138 = vsub.f32 %v4042, %v4091
        %v4139 = vsub.f32 %v4043, %v4093
        %v4140 = vsub.f32 %v4044, %v4095
        %v4141 = vsub.f32 %v4045, %v4097
        %v4142 = vsub.f32 %v4046, %v4099
        %v4143 = vsub.f32 %v4047, %v4101
        %v4144 = vsub.f32 %v4048, %v4103
        %v4145 = vsub.f32 %v4049, %v4105
        %v4146 = vsub.f32 %v4050, %v4107
        %v4147 = vsub.f32 %v4051, %v4109
        %v4148 = vsub.f32 %v4052, %v4111
        %v4149 = vsub.f32 %v4053, %v4113
        %v4150 = vsub.f32 %v4054, %v4115
        %v4151 = vsub.f32 %v4055, %v4117
        %v4152 = vsub.f32 %v4056, %v4119
        %v4153 = vsub.f32 %v4057, %v4121
        %v4154 = vmul.f32 %v4122, 1.442695
        %v4155 = vpow.pop %v4154
        %v4156 = vmul.f32 %v4123, 1.442695
        %v4157 = vpow.pop %v4156
        %v4158 = vmul.f32 %v4124, 1.442695
        %v4159 = vpow.pop %v4158
        %v4160 = vmul.f32 %v4125, 1.442695
        %v4161 = vpow.pop %v4160
        %v4162 = vmul.f32 %v4126, 1.442695
        %v4163 = vpow.pop %v4162
        %v4164 = vmul.f32 %v4127, 1.442695
        %v4165 = vpow.pop %v4164
        %v4166 = vmul.f32 %v4128, 1.442695
        %v4167 = vpow.pop %v4166
        %v4168 = vmul.f32 %v4129, 1.442695
        %v4169 = vpow.pop %v4168
        %v4170 = vmul.f32 %v4130, 1.442695
        %v4171 = vpow.pop %v4170
        %v4172 = vmul.f32 %v4131, 1.442695
        %v4173 = vpow.pop %v4172
        %v4174 = vmul.f32 %v4132, 1.442695
        %v4175 = vpow.pop %v4174
        %v4176 = vmul.f32 %v4133, 1.442695
        %v4177 = vpow.pop %v4176
        %v4178 = vmul.f32 %v4134, 1.442695
        %v4179 = vpow.pop %v4178
        %v4180 = vmul.f32 %v4135, 1.442695
        %v4181 = vpow.pop %v4180
        %v4182 = vmul.f32 %v4136, 1.442695
        %v4183 = vpow.pop %v4182
        %v4184 = vmul.f32 %v4137, 1.442695
        %v4185 = vpow.pop %v4184
        %v4186 = vmul.f32 %v4138, 1.442695
        %v4187 = vpow.pop %v4186
        %v4188 = vmul.f32 %v4139, 1.442695
        %v4189 = vpow.pop %v4188
        %v4190 = vmul.f32 %v4140, 1.442695
        %v4191 = vpow.pop %v4190
        %v4192 = vmul.f32 %v4141, 1.442695
        %v4193 = vpow.pop %v4192
        %v4194 = vmul.f32 %v4142, 1.442695
        %v4195 = vpow.pop %v4194
        %v4196 = vmul.f32 %v4143, 1.442695
        %v4197 = vpow.pop %v4196
        %v4198 = vmul.f32 %v4144, 1.442695
        %v4199 = vpow.pop %v4198
        %v4200 = vmul.f32 %v4145, 1.442695
        %v4201 = vpow.pop %v4200
        %v4202 = vmul.f32 %v4146, 1.442695
        %v4203 = vpow.pop %v4202
        %v4204 = vmul.f32 %v4147, 1.442695
        %v4205 = vpow.pop %v4204
        %v4206 = vmul.f32 %v4148, 1.442695
        %v4207 = vpow.pop %v4206
        %v4208 = vmul.f32 %v4149, 1.442695
        %v4209 = vpow.pop %v4208
        %v4210 = vmul.f32 %v4150, 1.442695
        %v4211 = vpow.pop %v4210
        %v4212 = vmul.f32 %v4151, 1.442695
        %v4213 = vpow.pop %v4212
        %v4214 = vmul.f32 %v4152, 1.442695
        %v4215 = vpow.pop %v4214
        %v4216 = vmul.f32 %v4153, 1.442695
        %v4217 = vpow.pop %v4216
        %4218 = vadd.xlane.f32.xlu0 %v4155
        %v4219 = vpop.xlane.xlu0 %4218
        %4220 = vadd.xlane.f32.xlu0 %v4157
        %v4221 = vpop.xlane.xlu0 %4220
        %4222 = vadd.xlane.f32.xlu0 %v4159
        %v4223 = vpop.xlane.xlu0 %4222
        %4224 = vadd.xlane.f32.xlu0 %v4161
        %v4225 = vpop.xlane.xlu0 %4224
        %4226 = vadd.xlane.f32.xlu0 %v4163
        %v4227 = vpop.xlane.xlu0 %4226
        %4228 = vadd.xlane.f32.xlu0 %v4165
        %v4229 = vpop.xlane.xlu0 %4228
        %4230 = vadd.xlane.f32.xlu0 %v4167
        %v4231 = vpop.xlane.xlu0 %4230
        %4232 = vadd.xlane.f32.xlu0 %v4169
        %v4233 = vpop.xlane.xlu0 %4232
        %4234 = vadd.xlane.f32.xlu0 %v4171
        %v4235 = vpop.xlane.xlu0 %4234
        %4236 = vadd.xlane.f32.xlu0 %v4173
        %v4237 = vpop.xlane.xlu0 %4236
        %4238 = vadd.xlane.f32.xlu0 %v4175
        %v4239 = vpop.xlane.xlu0 %4238
        %4240 = vadd.xlane.f32.xlu0 %v4177
        %v4241 = vpop.xlane.xlu0 %4240
        %4242 = vadd.xlane.f32.xlu0 %v4179
        %v4243 = vpop.xlane.xlu0 %4242
        %4244 = vadd.xlane.f32.xlu0 %v4181
        %v4245 = vpop.xlane.xlu0 %4244
        %4246 = vadd.xlane.f32.xlu0 %v4183
        %v4247 = vpop.xlane.xlu0 %4246
        %4248 = vadd.xlane.f32.xlu0 %v4185
        %v4249 = vpop.xlane.xlu0 %4248
        %4250 = vadd.xlane.f32.xlu0 %v4187
        %v4251 = vpop.xlane.xlu0 %4250
        %4252 = vadd.xlane.f32.xlu0 %v4189
        %v4253 = vpop.xlane.xlu0 %4252
        %4254 = vadd.xlane.f32.xlu0 %v4191
        %v4255 = vpop.xlane.xlu0 %4254
        %4256 = vadd.xlane.f32.xlu0 %v4193
        %v4257 = vpop.xlane.xlu0 %4256
        %4258 = vadd.xlane.f32.xlu0 %v4195
        %v4259 = vpop.xlane.xlu0 %4258
        %4260 = vadd.xlane.f32.xlu0 %v4197
        %v4261 = vpop.xlane.xlu0 %4260
        %4262 = vadd.xlane.f32.xlu0 %v4199
        %v4263 = vpop.xlane.xlu0 %4262
        %4264 = vadd.xlane.f32.xlu0 %v4201
        %v4265 = vpop.xlane.xlu0 %4264
        %4266 = vadd.xlane.f32.xlu0 %v4203
        %v4267 = vpop.xlane.xlu0 %4266
        %4268 = vadd.xlane.f32.xlu0 %v4205
        %v4269 = vpop.xlane.xlu0 %4268
        %4270 = vadd.xlane.f32.xlu0 %v4207
        %v4271 = vpop.xlane.xlu0 %4270
        %4272 = vadd.xlane.f32.xlu0 %v4209
        %v4273 = vpop.xlane.xlu0 %4272
        %4274 = vadd.xlane.f32.xlu0 %v4211
        %v4275 = vpop.xlane.xlu0 %4274
        %4276 = vadd.xlane.f32.xlu0 %v4213
        %v4277 = vpop.xlane.xlu0 %4276
        %4278 = vadd.xlane.f32.xlu0 %v4215
        %v4279 = vpop.xlane.xlu0 %4278
        %4280 = vadd.xlane.f32.xlu0 %v4217
        %v4281 = vpop.xlane.xlu0 %4280
        %v4282 = vrcp.pop %v4219
        %v4283 = vrcp.pop %v4221
        %v4284 = vrcp.pop %v4223
        %v4285 = vrcp.pop %v4225
        %v4286 = vrcp.pop %v4227
        %v4287 = vrcp.pop %v4229
        %v4288 = vrcp.pop %v4231
        %v4289 = vrcp.pop %v4233
        %v4290 = vrcp.pop %v4235
        %v4291 = vrcp.pop %v4237
        %v4292 = vrcp.pop %v4239
        %v4293 = vrcp.pop %v4241
        %v4294 = vrcp.pop %v4243
        %v4295 = vrcp.pop %v4245
        %v4296 = vrcp.pop %v4247
        %v4297 = vrcp.pop %v4249
        %v4298 = vrcp.pop %v4251
        %v4299 = vrcp.pop %v4253
        %v4300 = vrcp.pop %v4255
        %v4301 = vrcp.pop %v4257
        %v4302 = vrcp.pop %v4259
        %v4303 = vrcp.pop %v4261
        %v4304 = vrcp.pop %v4263
        %v4305 = vrcp.pop %v4265
        %v4306 = vrcp.pop %v4267
        %v4307 = vrcp.pop %v4269
        %v4308 = vrcp.pop %v4271
        %v4309 = vrcp.pop %v4273
        %v4310 = vrcp.pop %v4275
        %v4311 = vrcp.pop %v4277
        %v4312 = vrcp.pop %v4279
        %v4313 = vrcp.pop %v4281
        %v4314 = vmul.f32 %v4155, %v4282
        %v4315 = vmul.f32 %v4157, %v4283
        %v4316 = vmul.f32 %v4159, %v4284
        %v4317 = vmul.f32 %v4161, %v4285
        %v4318 = vmul.f32 %v4163, %v4286
        %v4319 = vmul.f32 %v4165, %v4287
        %v4320 = vmul.f32 %v4167, %v4288
        %v4321 = vmul.f32 %v4169, %v4289
        %v4322 = vmul.f32 %v4171, %v4290
        %v4323 = vmul.f32 %v4173, %v4291
        %v4324 = vmul.f32 %v4175, %v4292
        %v4325 = vmul.f32 %v4177, %v4293
        %v4326 = vmul.f32 %v4179, %v4294
        %v4327 = vmul.f32 %v4181, %v4295
        %v4328 = vmul.f32 %v4183, %v4296
        %v4329 = vmul.f32 %v4185, %v4297
        %v4330 = vmul.f32 %v4187, %v4298
        %v4331 = vmul.f32 %v4189, %v4299
        %v4332 = vmul.f32 %v4191, %v4300
        %v4333 = vmul.f32 %v4193, %v4301
        %v4334 = vmul.f32 %v4195, %v4302
        %v4335 = vmul.f32 %v4197, %v4303
        %v4336 = vmul.f32 %v4199, %v4304
        %v4337 = vmul.f32 %v4201, %v4305
        %v4338 = vmul.f32 %v4203, %v4306
        %v4339 = vmul.f32 %v4205, %v4307
        %v4340 = vmul.f32 %v4207, %v4308
        %v4341 = vmul.f32 %v4209, %v4309
        %v4342 = vmul.f32 %v4211, %v4310
        %v4343 = vmul.f32 %v4213, %v4311
        %v4344 = vmul.f32 %v4215, %v4312
        %v4345 = vmul.f32 %v4217, %v4313
        %v4346 = vpack.c.bf16 %v4315, %v4314
        %v4347 = vpack.c.bf16 %v4317, %v4316
        %v4348 = vpack.c.bf16 %v4319, %v4318
        %v4349 = vpack.c.bf16 %v4321, %v4320
        %v4350 = vpack.c.bf16 %v4323, %v4322
        %v4351 = vpack.c.bf16 %v4325, %v4324
        %v4352 = vpack.c.bf16 %v4327, %v4326
        %v4353 = vpack.c.bf16 %v4329, %v4328
        %v4354 = vpack.c.bf16 %v4331, %v4330
        %v4355 = vpack.c.bf16 %v4333, %v4332
        %v4356 = vpack.c.bf16 %v4335, %v4334
        %v4357 = vpack.c.bf16 %v4337, %v4336
        %v4358 = vpack.c.bf16 %v4339, %v4338
        %v4359 = vpack.c.bf16 %v4341, %v4340
        %v4360 = vpack.c.bf16 %v4343, %v4342
        %v4361 = vpack.c.bf16 %v4345, %v4344
        %4362 = vmatprep.subr.bf16.mxu0 0
        %4363 = vmatpush1.bf16.msra.mxu0 %v3694
        %4364 = vmatprep.subr.bf16.mxu0 0
        %4365 = vmatpush1.bf16.msra.mxu0 %v3693
        %4366 = vmatprep.subr.bf16.mxu0 0
        %4367 = vmatpush1.bf16.msra.mxu0 %v3692
        %4368 = vmatprep.subr.bf16.mxu0 0
        %4369 = vmatpush1.bf16.msra.mxu0 %v3691
        %4370 = vmatprep.subr.bf16.mxu0 0
        %4371 = vmatpush1.bf16.msra.mxu0 %v3690
        %4372 = vmatprep.subr.bf16.mxu0 0
        %4373 = vmatpush1.bf16.msra.mxu0 %v3689
        %4374 = vmatprep.subr.bf16.mxu0 0
        %4375 = vmatpush1.bf16.msra.mxu0 %v3688
        %4376 = vmatprep.subr.bf16.mxu0 0
        %4377 = vmatpush1.bf16.msra.mxu0 %v3687
        %4378 = vmatprep.subr.bf16.mxu0 0
        %4379 = vmatpush2.bf16.msra.mxu0 0
        %4380 = vmatprep.subr.bf16.mxu0 0
        %4381 = vmatpush2.bf16.msra.mxu0 0
        %4382 = vmatprep.subr.bf16.mxu0 0
        %4383 = vmatpush2.bf16.msra.mxu0 0
        %4384 = vmatprep.subr.bf16.mxu0 0
        %4385 = vmatpush2.bf16.msra.mxu0 0
        %4386 = vmatprep.subr.bf16.mxu0 0
        %4387 = vmatpush2.bf16.msra.mxu0 0
        %4388 = vmatprep.subr.bf16.mxu0 0
        %4389 = vmatpush2.bf16.msra.mxu0 0
        %4390 = vmatprep.subr.bf16.mxu0 0
        %4391 = vmatpush2.bf16.msra.mxu0 0
        %4392 = vmatprep.subr.bf16.mxu0 0
        %4393 = vmatpush2.bf16.msra.mxu0 0
        %4394 = vmatprep.mubr.bf16.mxu0 0
        %4395 = vmatmul.mubr.bf16.gmra.mxu0 %v4346
        %v4396 = vpop.f32.mrf.mxu0
        %v4397 = vadd.f32 0.0, %v4396
        %v4398 = vpop.f32.mrf.mxu0
        %v4399 = vpop.f32.mrf.mxu0
        %v4400 = vadd.f32 0.0, %v4399
        %v4401 = vpop.f32.mrf.mxu0
        %4402 = vmatprep.mubr.bf16.mxu0 0
        %4403 = vmatmul.mubr.bf16.gmra.mxu0 %v4347
        %v4404 = vpop.f32.mrf.mxu0
        %v4405 = vadd.f32 0.0, %v4404
        %v4406 = vpop.f32.mrf.mxu0
        %v4407 = vpop.f32.mrf.mxu0
        %v4408 = vadd.f32 0.0, %v4407
        %v4409 = vpop.f32.mrf.mxu0
        %4410 = vmatprep.mubr.bf16.mxu0 0
        %4411 = vmatmul.mubr.bf16.gmra.mxu0 %v4348
        %v4412 = vpop.f32.mrf.mxu0
        %v4413 = vadd.f32 0.0, %v4412
        %v4414 = vpop.f32.mrf.mxu0
        %v4415 = vpop.f32.mrf.mxu0
        %v4416 = vadd.f32 0.0, %v4415
        %v4417 = vpop.f32.mrf.mxu0
        %4418 = vmatprep.mubr.bf16.mxu0 0
        %4419 = vmatmul.mubr.bf16.gmra.mxu0 %v4349
        %v4420 = vpop.f32.mrf.mxu0
        %v4421 = vadd.f32 0.0, %v4420
        %v4422 = vpop.f32.mrf.mxu0
        %v4423 = vpop.f32.mrf.mxu0
        %v4424 = vadd.f32 0.0, %v4423
        %v4425 = vpop.f32.mrf.mxu0
        %4426 = vmatprep.mubr.bf16.mxu0 0
        %4427 = vmatmul.mubr.bf16.gmra.mxu0 %v4350
        %v4428 = vpop.f32.mrf.mxu0
        %v4429 = vadd.f32 0.0, %v4428
        %v4430 = vpop.f32.mrf.mxu0
        %v4431 = vpop.f32.mrf.mxu0
        %v4432 = vadd.f32 0.0, %v4431
        %v4433 = vpop.f32.mrf.mxu0
        %4434 = vmatprep.mubr.bf16.mxu0 0
        %4435 = vmatmul.mubr.bf16.gmra.mxu0 %v4351
        %v4436 = vpop.f32.mrf.mxu0
        %v4437 = vadd.f32 0.0, %v4436
        %v4438 = vpop.f32.mrf.mxu0
        %v4439 = vpop.f32.mrf.mxu0
        %v4440 = vadd.f32 0.0, %v4439
        %v4441 = vpop.f32.mrf.mxu0
        %4442 = vmatprep.mubr.bf16.mxu0 0
        %4443 = vmatmul.mubr.bf16.gmra.mxu0 %v4352
        %v4444 = vpop.f32.mrf.mxu0
        %v4445 = vadd.f32 0.0, %v4444
        %v4446 = vpop.f32.mrf.mxu0
        %v4447 = vpop.f32.mrf.mxu0
        %v4448 = vadd.f32 0.0, %v4447
        %v4449 = vpop.f32.mrf.mxu0
        %4450 = vmatprep.mubr.bf16.mxu0 0
        %4451 = vmatmul.mubr.bf16.gmra.mxu0 %v4353
        %v4452 = vpop.f32.mrf.mxu0
        %v4453 = vadd.f32 0.0, %v4452
        %v4454 = vpop.f32.mrf.mxu0
        %v4455 = vpop.f32.mrf.mxu0
        %v4456 = vadd.f32 0.0, %v4455
        %v4457 = vpop.f32.mrf.mxu0
        %4458 = vdwg.mxu0
        %4459 = vmatprep.subr.bf16.mxu0 0
        %4460 = vmatpush1.bf16.msra.mxu0 %v3702
        %4461 = vmatprep.subr.bf16.mxu0 0
        %4462 = vmatpush1.bf16.msra.mxu0 %v3701
        %4463 = vmatprep.subr.bf16.mxu0 0
        %4464 = vmatpush1.bf16.msra.mxu0 %v3700
        %4465 = vmatprep.subr.bf16.mxu0 0
        %4466 = vmatpush1.bf16.msra.mxu0 %v3699
        %4467 = vmatprep.subr.bf16.mxu0 0
        %4468 = vmatpush1.bf16.msra.mxu0 %v3698
        %4469 = vmatprep.subr.bf16.mxu0 0
        %4470 = vmatpush1.bf16.msra.mxu0 %v3697
        %4471 = vmatprep.subr.bf16.mxu0 0
        %4472 = vmatpush1.bf16.msra.mxu0 %v3696
        %4473 = vmatprep.subr.bf16.mxu0 0
        %4474 = vmatpush1.bf16.msra.mxu0 %v3695
        %4475 = vmatprep.subr.bf16.mxu0 0
        %4476 = vmatpush2.bf16.msra.mxu0 0
        %4477 = vmatprep.subr.bf16.mxu0 0
        %4478 = vmatpush2.bf16.msra.mxu0 0
        %4479 = vmatprep.subr.bf16.mxu0 0
        %4480 = vmatpush2.bf16.msra.mxu0 0
        %4481 = vmatprep.subr.bf16.mxu0 0
        %4482 = vmatpush2.bf16.msra.mxu0 0
        %4483 = vmatprep.subr.bf16.mxu0 0
        %4484 = vmatpush2.bf16.msra.mxu0 0
        %4485 = vmatprep.subr.bf16.mxu0 0
        %4486 = vmatpush2.bf16.msra.mxu0 0
        %4487 = vmatprep.subr.bf16.mxu0 0
        %4488 = vmatpush2.bf16.msra.mxu0 0
        %4489 = vmatprep.subr.bf16.mxu0 0
        %4490 = vmatpush2.bf16.msra.mxu0 0
        %4491 = vmatprep.mubr.bf16.mxu0 0
        %4492 = vmatmul.mubr.bf16.gmra.mxu0 %v4354
        %v4493 = vpop.f32.mrf.mxu0
        %v4494 = vadd.f32 0.0, %v4493
        %v4495 = vpop.f32.mrf.mxu0
        %v4496 = vpop.f32.mrf.mxu0
        %v4497 = vadd.f32 0.0, %v4496
        %v4498 = vpop.f32.mrf.mxu0
        %4499 = vmatprep.mubr.bf16.mxu0 0
        %4500 = vmatmul.mubr.bf16.gmra.mxu0 %v4355
        %v4501 = vpop.f32.mrf.mxu0
        %v4502 = vadd.f32 0.0, %v4501
        %v4503 = vpop.f32.mrf.mxu0
        %v4504 = vpop.f32.mrf.mxu0
        %v4505 = vadd.f32 0.0, %v4504
        %v4506 = vpop.f32.mrf.mxu0
        %4507 = vmatprep.mubr.bf16.mxu0 0
        %4508 = vmatmul.mubr.bf16.gmra.mxu0 %v4356
        %v4509 = vpop.f32.mrf.mxu0
        %v4510 = vadd.f32 0.0, %v4509
        %v4511 = vpop.f32.mrf.mxu0
        %v4512 = vpop.f32.mrf.mxu0
        %v4513 = vadd.f32 0.0, %v4512
        %v4514 = vpop.f32.mrf.mxu0
        %4515 = vmatprep.mubr.bf16.mxu0 0
        %4516 = vmatmul.mubr.bf16.gmra.mxu0 %v4357
        %v4517 = vpop.f32.mrf.mxu0
        %v4518 = vadd.f32 0.0, %v4517
        %v4519 = vpop.f32.mrf.mxu0
        %v4520 = vpop.f32.mrf.mxu0
        %v4521 = vadd.f32 0.0, %v4520
        %v4522 = vpop.f32.mrf.mxu0
        %4523 = vmatprep.mubr.bf16.mxu0 0
        %4524 = vmatmul.mubr.bf16.gmra.mxu0 %v4358
        %v4525 = vpop.f32.mrf.mxu0
        %v4526 = vadd.f32 0.0, %v4525
        %v4527 = vpop.f32.mrf.mxu0
        %v4528 = vpop.f32.mrf.mxu0
        %v4529 = vadd.f32 0.0, %v4528
        %v4530 = vpop.f32.mrf.mxu0
        %4531 = vmatprep.mubr.bf16.mxu0 0
        %4532 = vmatmul.mubr.bf16.gmra.mxu0 %v4359
        %v4533 = vpop.f32.mrf.mxu0
        %v4534 = vadd.f32 0.0, %v4533
        %v4535 = vpop.f32.mrf.mxu0
        %v4536 = vpop.f32.mrf.mxu0
        %v4537 = vadd.f32 0.0, %v4536
        %v4538 = vpop.f32.mrf.mxu0
        %4539 = vmatprep.mubr.bf16.mxu0 0
        %4540 = vmatmul.mubr.bf16.gmra.mxu0 %v4360
        %v4541 = vpop.f32.mrf.mxu0
        %v4542 = vadd.f32 0.0, %v4541
        %v4543 = vpop.f32.mrf.mxu0
        %v4544 = vpop.f32.mrf.mxu0
        %v4545 = vadd.f32 0.0, %v4544
        %v4546 = vpop.f32.mrf.mxu0
        %4547 = vmatprep.mubr.bf16.mxu0 0
        %4548 = vmatmul.mubr.bf16.gmra.mxu0 %v4361
        %v4549 = vpop.f32.mrf.mxu0
        %v4550 = vadd.f32 0.0, %v4549
        %v4551 = vpop.f32.mrf.mxu0
        %v4552 = vpop.f32.mrf.mxu0
        %v4553 = vadd.f32 0.0, %v4552
        %v4554 = vpop.f32.mrf.mxu0
        %4555 = vdwg.mxu0
        %v4556 = vpack.c.bf16 %v4400, %v4397
        %v4557 = vpack.c.bf16 %v4408, %v4405
        %v4558 = vpack.c.bf16 %v4416, %v4413
        %v4559 = vpack.c.bf16 %v4424, %v4421
        %v4560 = vpack.c.bf16 %v4432, %v4429
        %v4561 = vpack.c.bf16 %v4440, %v4437
        %v4562 = vpack.c.bf16 %v4448, %v4445
        %v4563 = vpack.c.bf16 %v4456, %v4453
        %v4564 = vpack.c.bf16 %v4497, %v4494
        %v4565 = vpack.c.bf16 %v4505, %v4502
        %v4566 = vpack.c.bf16 %v4513, %v4510
        %v4567 = vpack.c.bf16 %v4521, %v4518
        %v4568 = vpack.c.bf16 %v4529, %v4526
        %v4569 = vpack.c.bf16 %v4537, %v4534
        %v4570 = vpack.c.bf16 %v4545, %v4542
        %v4571 = vpack.c.bf16 %v4553, %v4550
        %v4588 = vunpack.c.l.b16 %v4556
        %v4589 = vunpack.c.h.b16 %v4556
        %v4590 = vunpack.c.l.b16 %v4557
        %v4591 = vunpack.c.h.b16 %v4557
        %v4592 = vunpack.c.l.b16 %v4558
        %v4593 = vunpack.c.h.b16 %v4558
        %v4594 = vunpack.c.l.b16 %v4559
        %v4595 = vunpack.c.h.b16 %v4559
        %v4596 = vunpack.c.l.b16 %v4560
        %v4597 = vunpack.c.h.b16 %v4560
        %v4598 = vunpack.c.l.b16 %v4561
        %v4599 = vunpack.c.h.b16 %v4561
        %v4600 = vunpack.c.l.b16 %v4562
        %v4601 = vunpack.c.h.b16 %v4562
        %v4602 = vunpack.c.l.b16 %v4563
        %v4603 = vunpack.c.h.b16 %v4563
        %v4604 = vunpack.c.l.b16 %v4564
        %v4605 = vunpack.c.h.b16 %v4564
        %v4606 = vunpack.c.l.b16 %v4565
        %v4607 = vunpack.c.h.b16 %v4565
        %v4608 = vunpack.c.l.b16 %v4566
        %v4609 = vunpack.c.h.b16 %v4566
        %v4610 = vunpack.c.l.b16 %v4567
        %v4611 = vunpack.c.h.b16 %v4567
        %v4612 = vunpack.c.l.b16 %v4568
        %v4613 = vunpack.c.h.b16 %v4568
        %v4614 = vunpack.c.l.b16 %v4569
        %v4615 = vunpack.c.h.b16 %v4569
        %v4616 = vunpack.c.l.b16 %v4570
        %v4617 = vunpack.c.h.b16 %v4570
        %v4618 = vunpack.c.l.b16 %v4571
        %v4619 = vunpack.c.h.b16 %v4571
        %v4620 = vpack.c.b16 %v4588, %v4588
        %v4621 = vpack.c.b16 %v4589, %v4589
        %v4622 = vpack.c.b16 %v4590, %v4590
        %v4623 = vpack.c.b16 %v4591, %v4591
        %v4624 = vpack.c.b16 %v4592, %v4592
        %v4625 = vpack.c.b16 %v4593, %v4593
        %v4626 = vpack.c.b16 %v4594, %v4594
        %v4627 = vpack.c.b16 %v4595, %v4595
        %v4628 = vpack.c.b16 %v4596, %v4596
        %v4629 = vpack.c.b16 %v4597, %v4597
        %v4630 = vpack.c.b16 %v4598, %v4598
        %v4631 = vpack.c.b16 %v4599, %v4599
        %v4632 = vpack.c.b16 %v4600, %v4600
        %v4633 = vpack.c.b16 %v4601, %v4601
        %v4634 = vpack.c.b16 %v4602, %v4602
        %v4635 = vpack.c.b16 %v4603, %v4603
        %v4636 = vpack.c.b16 %v4604, %v4604
        %v4637 = vpack.c.b16 %v4605, %v4605
        %v4638 = vpack.c.b16 %v4606, %v4606
        %v4639 = vpack.c.b16 %v4607, %v4607
        %v4640 = vpack.c.b16 %v4608, %v4608
        %v4641 = vpack.c.b16 %v4609, %v4609
        %v4642 = vpack.c.b16 %v4610, %v4610
        %v4643 = vpack.c.b16 %v4611, %v4611
        %v4644 = vpack.c.b16 %v4612, %v4612
        %v4645 = vpack.c.b16 %v4613, %v4613
        %v4646 = vpack.c.b16 %v4614, %v4614
        %v4647 = vpack.c.b16 %v4615, %v4615
        %v4648 = vpack.c.b16 %v4616, %v4616
        %v4649 = vpack.c.b16 %v4617, %v4617
        %v4650 = vpack.c.b16 %v4618, %v4618
        %v4651 = vpack.c.b16 %v4619, %v4619
        %vm4684 = vcmask 519168
        %4685 = vst.msk [vmem:[#allocation2] sm:$0xf] %vm4684, %v4620
        %4686 = vst.msk [vmem:[#allocation2 + $0xc] sm:$0xf] %vm4684, %v4621
        %4687 = vst.msk [vmem:[#allocation2 + $0x18] sm:$0xf] %vm4684, %v4622
        %4688 = vst.msk [vmem:[#allocation2 + $0x24] sm:$0xf] %vm4684, %v4623
        %4689 = vst.msk [vmem:[#allocation2 + $0x30] sm:$0xf] %vm4684, %v4624
        %4690 = vst.msk [vmem:[#allocation2 + $0x3c] sm:$0xf] %vm4684, %v4625
        %4691 = vst.msk [vmem:[#allocation2 + $0x48] sm:$0xf] %vm4684, %v4626
        %4692 = vst.msk [vmem:[#allocation2 + $0x54] sm:$0xf] %vm4684, %v4627
        %4693 = vst.msk [vmem:[#allocation2 + $0x60] sm:$0xf] %vm4684, %v4628
        %4694 = vst.msk [vmem:[#allocation2 + $0x6c] sm:$0xf] %vm4684, %v4629
        %4695 = vst.msk [vmem:[#allocation2 + $0x78] sm:$0xf] %vm4684, %v4630
        %4696 = vst.msk [vmem:[#allocation2 + $0x84] sm:$0xf] %vm4684, %v4631
        %4697 = vst.msk [vmem:[#allocation2 + $0x90] sm:$0xf] %vm4684, %v4632
        %4698 = vst.msk [vmem:[#allocation2 + $0x9c] sm:$0xf] %vm4684, %v4633
        %4699 = vst.msk [vmem:[#allocation2 + $0xa8] sm:$0xf] %vm4684, %v4634
        %4700 = vst.msk [vmem:[#allocation2 + $0xb4] sm:$0xf] %vm4684, %v4635
        %4701 = vst.msk [vmem:[#allocation2 + $0xc0] sm:$0xf] %vm4684, %v4636
        %4702 = vst.msk [vmem:[#allocation2 + $0xcc] sm:$0xf] %vm4684, %v4637
        %4703 = vst.msk [vmem:[#allocation2 + $0xd8] sm:$0xf] %vm4684, %v4638
        %4704 = vst.msk [vmem:[#allocation2 + $0xe4] sm:$0xf] %vm4684, %v4639
        %4705 = vst.msk [vmem:[#allocation2 + $0xf0] sm:$0xf] %vm4684, %v4640
        %4706 = vst.msk [vmem:[#allocation2 + $0xfc] sm:$0xf] %vm4684, %v4641
        %4707 = vst.msk [vmem:[#allocation2 + $0x108] sm:$0xf] %vm4684, %v4642
        %4708 = vst.msk [vmem:[#allocation2 + $0x114] sm:$0xf] %vm4684, %v4643
        %4709 = vst.msk [vmem:[#allocation2 + $0x120] sm:$0xf] %vm4684, %v4644
        %4710 = vst.msk [vmem:[#allocation2 + $0x12c] sm:$0xf] %vm4684, %v4645
        %4711 = vst.msk [vmem:[#allocation2 + $0x138] sm:$0xf] %vm4684, %v4646
        %4712 = vst.msk [vmem:[#allocation2 + $0x144] sm:$0xf] %vm4684, %v4647
        %4713 = vst.msk [vmem:[#allocation2 + $0x150] sm:$0xf] %vm4684, %v4648
        %4714 = vst.msk [vmem:[#allocation2 + $0x15c] sm:$0xf] %vm4684, %v4649
        %4715 = vst.msk [vmem:[#allocation2 + $0x168] sm:$0xf] %vm4684, %v4650
        %4716 = vst.msk [vmem:[#allocation2 + $0x174] sm:$0xf] %vm4684, %v4651
        %4725 = vrot.lane.b32.xlu0 %v3655, 64
        %v4726 = vpop.permute.xlu0 %4725
        %4727 = vrot.lane.b32.xlu0 %v3656, 64
        %v4728 = vpop.permute.xlu0 %4727
        %4729 = vrot.lane.b32.xlu0 %v3657, 64
        %v4730 = vpop.permute.xlu0 %4729
        %4731 = vrot.lane.b32.xlu0 %v3658, 64
        %v4732 = vpop.permute.xlu0 %4731
        %4733 = vrot.lane.b32.xlu0 %v3659, 64
        %v4734 = vpop.permute.xlu0 %4733
        %4735 = vrot.lane.b32.xlu0 %v3660, 64
        %v4736 = vpop.permute.xlu0 %4735
        %4737 = vrot.lane.b32.xlu0 %v3661, 64
        %v4738 = vpop.permute.xlu0 %4737
        %4739 = vrot.lane.b32.xlu0 %v3662, 64
        %v4740 = vpop.permute.xlu0 %4739
        %4749 = vrot.lane.b32.xlu0 %v3671, 64
        %v4750 = vpop.permute.xlu0 %4749
        %4751 = vrot.lane.b32.xlu0 %v3672, 64
        %v4752 = vpop.permute.xlu0 %4751
        %4753 = vrot.lane.b32.xlu0 %v3673, 64
        %v4754 = vpop.permute.xlu0 %4753
        %4755 = vrot.lane.b32.xlu0 %v3674, 64
        %v4756 = vpop.permute.xlu0 %4755
        %4757 = vrot.lane.b32.xlu0 %v3675, 64
        %v4758 = vpop.permute.xlu0 %4757
        %4759 = vrot.lane.b32.xlu0 %v3676, 64
        %v4760 = vpop.permute.xlu0 %4759
        %4761 = vrot.lane.b32.xlu0 %v3677, 64
        %v4762 = vpop.permute.xlu0 %4761
        %4763 = vrot.lane.b32.xlu0 %v3678, 64
        %v4764 = vpop.permute.xlu0 %4763
        %v4766 = vsel %vm3703, %v4726, 0
        %v4769 = vsel %vm3703, %v4728, 0
        %v4772 = vsel %vm3703, %v4730, 0
        %v4775 = vsel %vm3703, %v4732, 0
        %v4778 = vsel %vm3703, %v4734, 0
        %v4781 = vsel %vm3703, %v4736, 0
        %v4784 = vsel %vm3703, %v4738, 0
        %v4787 = vsel %vm3703, %v4740, 0
        %v4790 = vsel %vm3703, %v4750, 0
        %v4793 = vsel %vm3703, %v4752, 0
        %v4796 = vsel %vm3703, %v4754, 0
        %v4799 = vsel %vm3703, %v4756, 0
        %v4802 = vsel %vm3703, %v4758, 0
        %v4805 = vsel %vm3703, %v4760, 0
        %v4808 = vsel %vm3703, %v4762, 0
        %v4811 = vsel %vm3703, %v4764, 0
        %4813 = vmatprep.subr.bf16.mxu0 0
        %4814 = vmatpush1.bf16.xpose.msra.mxu0 %v4811
        %4815 = vmatprep.subr.bf16.mxu0 0
        %4816 = vmatpush1.bf16.xpose.msra.mxu0 %v4808
        %4817 = vmatprep.subr.bf16.mxu0 0
        %4818 = vmatpush1.bf16.xpose.msra.mxu0 %v4805
        %4819 = vmatprep.subr.bf16.mxu0 0
        %4820 = vmatpush1.bf16.xpose.msra.mxu0 %v4802
        %4821 = vmatprep.subr.bf16.mxu0 0
        %4822 = vmatpush1.bf16.xpose.msra.mxu0 %v4799
        %4823 = vmatprep.subr.bf16.mxu0 0
        %4824 = vmatpush1.bf16.xpose.msra.mxu0 %v4796
        %4825 = vmatprep.subr.bf16.mxu0 0
        %4826 = vmatpush1.bf16.xpose.msra.mxu0 %v4793
        %4827 = vmatprep.subr.bf16.mxu0 0
        %4828 = vmatpush1.bf16.xpose.msra.mxu0 %v4790
        %4829 = vmatprep.subr.bf16.mxu0 0
        %4830 = vmatpush2.bf16.xpose.msra.mxu0 0
        %4831 = vmatprep.subr.bf16.mxu0 0
        %4832 = vmatpush2.bf16.xpose.msra.mxu0 0
        %4833 = vmatprep.subr.bf16.mxu0 0
        %4834 = vmatpush2.bf16.xpose.msra.mxu0 0
        %4835 = vmatprep.subr.bf16.mxu0 0
        %4836 = vmatpush2.bf16.xpose.msra.mxu0 0
        %4837 = vmatprep.subr.bf16.mxu0 0
        %4838 = vmatpush2.bf16.xpose.msra.mxu0 0
        %4839 = vmatprep.subr.bf16.mxu0 0
        %4840 = vmatpush2.bf16.xpose.msra.mxu0 0
        %4841 = vmatprep.subr.bf16.mxu0 0
        %4842 = vmatpush2.bf16.xpose.msra.mxu0 0
        %4843 = vmatprep.subr.bf16.mxu0 0
        %4844 = vmatpush2.bf16.xpose.msra.mxu0 0
        %4845 = vmatprep.mubr.bf16.mxu0 0
        %4846 = vmatmul.mubr.bf16.gmra.mxu0 %v4766
        %v4847 = vpop.f32.mrf.mxu0
        %v4848 = vadd.f32 0.0, %v4847
        %v4849 = vpop.f32.mrf.mxu0
        %v4850 = vpop.f32.mrf.mxu0
        %v4851 = vadd.f32 0.0, %v4850
        %v4852 = vpop.f32.mrf.mxu0
        %4853 = vmatprep.mubr.bf16.mxu0 0
        %4854 = vmatmul.mubr.bf16.gmra.mxu0 %v4769
        %v4855 = vpop.f32.mrf.mxu0
        %v4856 = vadd.f32 0.0, %v4855
        %v4857 = vpop.f32.mrf.mxu0
        %v4858 = vpop.f32.mrf.mxu0
        %v4859 = vadd.f32 0.0, %v4858
        %v4860 = vpop.f32.mrf.mxu0
        %4861 = vmatprep.mubr.bf16.mxu0 0
        %4862 = vmatmul.mubr.bf16.gmra.mxu0 %v4772
        %v4863 = vpop.f32.mrf.mxu0
        %v4864 = vadd.f32 0.0, %v4863
        %v4865 = vpop.f32.mrf.mxu0
        %v4866 = vpop.f32.mrf.mxu0
        %v4867 = vadd.f32 0.0, %v4866
        %v4868 = vpop.f32.mrf.mxu0
        %4869 = vmatprep.mubr.bf16.mxu0 0
        %4870 = vmatmul.mubr.bf16.gmra.mxu0 %v4775
        %v4871 = vpop.f32.mrf.mxu0
        %v4872 = vadd.f32 0.0, %v4871
        %v4873 = vpop.f32.mrf.mxu0
        %v4874 = vpop.f32.mrf.mxu0
        %v4875 = vadd.f32 0.0, %v4874
        %v4876 = vpop.f32.mrf.mxu0
        %4877 = vmatprep.mubr.bf16.mxu0 0
        %4878 = vmatmul.mubr.bf16.gmra.mxu0 %v4778
        %v4879 = vpop.f32.mrf.mxu0
        %v4880 = vadd.f32 0.0, %v4879
        %v4881 = vpop.f32.mrf.mxu0
        %v4882 = vpop.f32.mrf.mxu0
        %v4883 = vadd.f32 0.0, %v4882
        %v4884 = vpop.f32.mrf.mxu0
        %4885 = vmatprep.mubr.bf16.mxu0 0
        %4886 = vmatmul.mubr.bf16.gmra.mxu0 %v4781
        %v4887 = vpop.f32.mrf.mxu0
        %v4888 = vadd.f32 0.0, %v4887
        %v4889 = vpop.f32.mrf.mxu0
        %v4890 = vpop.f32.mrf.mxu0
        %v4891 = vadd.f32 0.0, %v4890
        %v4892 = vpop.f32.mrf.mxu0
        %4893 = vmatprep.mubr.bf16.mxu0 0
        %4894 = vmatmul.mubr.bf16.gmra.mxu0 %v4784
        %v4895 = vpop.f32.mrf.mxu0
        %v4896 = vadd.f32 0.0, %v4895
        %v4897 = vpop.f32.mrf.mxu0
        %v4898 = vpop.f32.mrf.mxu0
        %v4899 = vadd.f32 0.0, %v4898
        %v4900 = vpop.f32.mrf.mxu0
        %4901 = vmatprep.mubr.bf16.mxu0 0
        %4902 = vmatmul.mubr.bf16.gmra.mxu0 %v4787
        %v4903 = vpop.f32.mrf.mxu0
        %v4904 = vadd.f32 0.0, %v4903
        %v4905 = vpop.f32.mrf.mxu0
        %v4906 = vpop.f32.mrf.mxu0
        %v4907 = vadd.f32 0.0, %v4906
        %v4908 = vpop.f32.mrf.mxu0
        %4909 = vdwg.mxu0
        %4918 = vrot.lane.b32.xlu0 %v3663, 64
        %v4919 = vpop.permute.xlu0 %4918
        %4920 = vrot.lane.b32.xlu0 %v3664, 64
        %v4921 = vpop.permute.xlu0 %4920
        %4922 = vrot.lane.b32.xlu0 %v3665, 64
        %v4923 = vpop.permute.xlu0 %4922
        %4924 = vrot.lane.b32.xlu0 %v3666, 64
        %v4925 = vpop.permute.xlu0 %4924
        %4926 = vrot.lane.b32.xlu0 %v3667, 64
        %v4927 = vpop.permute.xlu0 %4926
        %4928 = vrot.lane.b32.xlu0 %v3668, 64
        %v4929 = vpop.permute.xlu0 %4928
        %4930 = vrot.lane.b32.xlu0 %v3669, 64
        %v4931 = vpop.permute.xlu0 %4930
        %4932 = vrot.lane.b32.xlu0 %v3670, 64
        %v4933 = vpop.permute.xlu0 %4932
        %4942 = vrot.lane.b32.xlu0 %v3679, 64
        %v4943 = vpop.permute.xlu0 %4942
        %4944 = vrot.lane.b32.xlu0 %v3680, 64
        %v4945 = vpop.permute.xlu0 %4944
        %4946 = vrot.lane.b32.xlu0 %v3681, 64
        %v4947 = vpop.permute.xlu0 %4946
        %4948 = vrot.lane.b32.xlu0 %v3682, 64
        %v4949 = vpop.permute.xlu0 %4948
        %4950 = vrot.lane.b32.xlu0 %v3683, 64
        %v4951 = vpop.permute.xlu0 %4950
        %4952 = vrot.lane.b32.xlu0 %v3684, 64
        %v4953 = vpop.permute.xlu0 %4952
        %4954 = vrot.lane.b32.xlu0 %v3685, 64
        %v4955 = vpop.permute.xlu0 %4954
        %4956 = vrot.lane.b32.xlu0 %v3686, 64
        %v4957 = vpop.permute.xlu0 %4956
        %v4959 = vsel %vm3703, %v4919, 0
        %v4962 = vsel %vm3703, %v4921, 0
        %v4965 = vsel %vm3703, %v4923, 0
        %v4968 = vsel %vm3703, %v4925, 0
        %v4971 = vsel %vm3703, %v4927, 0
        %v4974 = vsel %vm3703, %v4929, 0
        %v4977 = vsel %vm3703, %v4931, 0
        %v4980 = vsel %vm3703, %v4933, 0
        %v4983 = vsel %vm3703, %v4943, 0
        %v4986 = vsel %vm3703, %v4945, 0
        %v4989 = vsel %vm3703, %v4947, 0
        %v4992 = vsel %vm3703, %v4949, 0
        %v4995 = vsel %vm3703, %v4951, 0
        %v4998 = vsel %vm3703, %v4953, 0
        %v5001 = vsel %vm3703, %v4955, 0
        %v5004 = vsel %vm3703, %v4957, 0
        %5006 = vmatprep.subr.bf16.mxu0 0
        %5007 = vmatpush1.bf16.xpose.msra.mxu0 %v5004
        %5008 = vmatprep.subr.bf16.mxu0 0
        %5009 = vmatpush1.bf16.xpose.msra.mxu0 %v5001
        %5010 = vmatprep.subr.bf16.mxu0 0
        %5011 = vmatpush1.bf16.xpose.msra.mxu0 %v4998
        %5012 = vmatprep.subr.bf16.mxu0 0
        %5013 = vmatpush1.bf16.xpose.msra.mxu0 %v4995
        %5014 = vmatprep.subr.bf16.mxu0 0
        %5015 = vmatpush1.bf16.xpose.msra.mxu0 %v4992
        %5016 = vmatprep.subr.bf16.mxu0 0
        %5017 = vmatpush1.bf16.xpose.msra.mxu0 %v4989
        %5018 = vmatprep.subr.bf16.mxu0 0
        %5019 = vmatpush1.bf16.xpose.msra.mxu0 %v4986
        %5020 = vmatprep.subr.bf16.mxu0 0
        %5021 = vmatpush1.bf16.xpose.msra.mxu0 %v4983
        %5022 = vmatprep.subr.bf16.mxu0 0
        %5023 = vmatpush2.bf16.xpose.msra.mxu0 0
        %5024 = vmatprep.subr.bf16.mxu0 0
        %5025 = vmatpush2.bf16.xpose.msra.mxu0 0
        %5026 = vmatprep.subr.bf16.mxu0 0
        %5027 = vmatpush2.bf16.xpose.msra.mxu0 0
        %5028 = vmatprep.subr.bf16.mxu0 0
        %5029 = vmatpush2.bf16.xpose.msra.mxu0 0
        %5030 = vmatprep.subr.bf16.mxu0 0
        %5031 = vmatpush2.bf16.xpose.msra.mxu0 0
        %5032 = vmatprep.subr.bf16.mxu0 0
        %5033 = vmatpush2.bf16.xpose.msra.mxu0 0
        %5034 = vmatprep.subr.bf16.mxu0 0
        %5035 = vmatpush2.bf16.xpose.msra.mxu0 0
        %5036 = vmatprep.subr.bf16.mxu0 0
        %5037 = vmatpush2.bf16.xpose.msra.mxu0 0
        %5038 = vmatprep.mubr.bf16.mxu0 0
        %5039 = vmatmul.mubr.bf16.gmra.mxu0 %v4959
        %v5040 = vpop.f32.mrf.mxu0
        %v5041 = vadd.f32 0.0, %v5040
        %v5042 = vpop.f32.mrf.mxu0
        %v5043 = vpop.f32.mrf.mxu0
        %v5044 = vadd.f32 0.0, %v5043
        %v5045 = vpop.f32.mrf.mxu0
        %5046 = vmatprep.mubr.bf16.mxu0 0
        %5047 = vmatmul.mubr.bf16.gmra.mxu0 %v4962
        %v5048 = vpop.f32.mrf.mxu0
        %v5049 = vadd.f32 0.0, %v5048
        %v5050 = vpop.f32.mrf.mxu0
        %v5051 = vpop.f32.mrf.mxu0
        %v5052 = vadd.f32 0.0, %v5051
        %v5053 = vpop.f32.mrf.mxu0
        %5054 = vmatprep.mubr.bf16.mxu0 0
        %5055 = vmatmul.mubr.bf16.gmra.mxu0 %v4965
        %v5056 = vpop.f32.mrf.mxu0
        %v5057 = vadd.f32 0.0, %v5056
        %v5058 = vpop.f32.mrf.mxu0
        %v5059 = vpop.f32.mrf.mxu0
        %v5060 = vadd.f32 0.0, %v5059
        %v5061 = vpop.f32.mrf.mxu0
        %5062 = vmatprep.mubr.bf16.mxu0 0
        %5063 = vmatmul.mubr.bf16.gmra.mxu0 %v4968
        %v5064 = vpop.f32.mrf.mxu0
        %v5065 = vadd.f32 0.0, %v5064
        %v5066 = vpop.f32.mrf.mxu0
        %v5067 = vpop.f32.mrf.mxu0
        %v5068 = vadd.f32 0.0, %v5067
        %v5069 = vpop.f32.mrf.mxu0
        %5070 = vmatprep.mubr.bf16.mxu0 0
        %5071 = vmatmul.mubr.bf16.gmra.mxu0 %v4971
        %v5072 = vpop.f32.mrf.mxu0
        %v5073 = vadd.f32 0.0, %v5072
        %v5074 = vpop.f32.mrf.mxu0
        %v5075 = vpop.f32.mrf.mxu0
        %v5076 = vadd.f32 0.0, %v5075
        %v5077 = vpop.f32.mrf.mxu0
        %5078 = vmatprep.mubr.bf16.mxu0 0
        %5079 = vmatmul.mubr.bf16.gmra.mxu0 %v4974
        %v5080 = vpop.f32.mrf.mxu0
        %v5081 = vadd.f32 0.0, %v5080
        %v5082 = vpop.f32.mrf.mxu0
        %v5083 = vpop.f32.mrf.mxu0
        %v5084 = vadd.f32 0.0, %v5083
        %v5085 = vpop.f32.mrf.mxu0
        %5086 = vmatprep.mubr.bf16.mxu0 0
        %5087 = vmatmul.mubr.bf16.gmra.mxu0 %v4977
        %v5088 = vpop.f32.mrf.mxu0
        %v5089 = vadd.f32 0.0, %v5088
        %v5090 = vpop.f32.mrf.mxu0
        %v5091 = vpop.f32.mrf.mxu0
        %v5092 = vadd.f32 0.0, %v5091
        %v5093 = vpop.f32.mrf.mxu0
        %5094 = vmatprep.mubr.bf16.mxu0 0
        %5095 = vmatmul.mubr.bf16.gmra.mxu0 %v4980
        %v5096 = vpop.f32.mrf.mxu0
        %v5097 = vadd.f32 0.0, %v5096
        %v5098 = vpop.f32.mrf.mxu0
        %v5099 = vpop.f32.mrf.mxu0
        %v5100 = vadd.f32 0.0, %v5099
        %v5101 = vpop.f32.mrf.mxu0
        %5102 = vdwg.mxu0
        %v5103 = vsel %vm4010, %v4848, -inf
        %v5104 = vsel %vm4011, %v4851, -inf
        %v5105 = vsel %vm4012, %v4856, -inf
        %v5106 = vsel %vm4013, %v4859, -inf
        %v5107 = vsel %vm4014, %v4864, -inf
        %v5108 = vsel %vm4015, %v4867, -inf
        %v5109 = vsel %vm4016, %v4872, -inf
        %v5110 = vsel %vm4017, %v4875, -inf
        %v5111 = vsel %vm4018, %v4880, -inf
        %v5112 = vsel %vm4019, %v4883, -inf
        %v5113 = vsel %vm4020, %v4888, -inf
        %v5114 = vsel %vm4021, %v4891, -inf
        %v5115 = vsel %vm4022, %v4896, -inf
        %v5116 = vsel %vm4023, %v4899, -inf
        %v5117 = vsel %vm4024, %v4904, -inf
        %v5118 = vsel %vm4025, %v4907, -inf
        %v5119 = vsel %vm4010, %v5041, -inf
        %v5120 = vsel %vm4011, %v5044, -inf
        %v5121 = vsel %vm4012, %v5049, -inf
        %v5122 = vsel %vm4013, %v5052, -inf
        %v5123 = vsel %vm4014, %v5057, -inf
        %v5124 = vsel %vm4015, %v5060, -inf
        %v5125 = vsel %vm4016, %v5065, -inf
        %v5126 = vsel %vm4017, %v5068, -inf
        %v5127 = vsel %vm4018, %v5073, -inf
        %v5128 = vsel %vm4019, %v5076, -inf
        %v5129 = vsel %vm4020, %v5081, -inf
        %v5130 = vsel %vm4021, %v5084, -inf
        %v5131 = vsel %vm4022, %v5089, -inf
        %v5132 = vsel %vm4023, %v5092, -inf
        %v5133 = vsel %vm4024, %v5097, -inf
        %v5134 = vsel %vm4025, %v5100, -inf
        %5135 = vmax.xlane.f32.xlu0 %v5103
        %v5136 = vpop.xlane.xlu0 %5135
        %5137 = vmax.xlane.f32.xlu0 %v5104
        %v5138 = vpop.xlane.xlu0 %5137
        %5139 = vmax.xlane.f32.xlu0 %v5105
        %v5140 = vpop.xlane.xlu0 %5139
        %5141 = vmax.xlane.f32.xlu0 %v5106
        %v5142 = vpop.xlane.xlu0 %5141
        %5143 = vmax.xlane.f32.xlu0 %v5107
        %v5144 = vpop.xlane.xlu0 %5143
        %5145 = vmax.xlane.f32.xlu0 %v5108
        %v5146 = vpop.xlane.xlu0 %5145
        %5147 = vmax.xlane.f32.xlu0 %v5109
        %v5148 = vpop.xlane.xlu0 %5147
        %5149 = vmax.xlane.f32.xlu0 %v5110
        %v5150 = vpop.xlane.xlu0 %5149
        %5151 = vmax.xlane.f32.xlu0 %v5111
        %v5152 = vpop.xlane.xlu0 %5151
        %5153 = vmax.xlane.f32.xlu0 %v5112
        %v5154 = vpop.xlane.xlu0 %5153
        %5155 = vmax.xlane.f32.xlu0 %v5113
        %v5156 = vpop.xlane.xlu0 %5155
        %5157 = vmax.xlane.f32.xlu0 %v5114
        %v5158 = vpop.xlane.xlu0 %5157
        %5159 = vmax.xlane.f32.xlu0 %v5115
        %v5160 = vpop.xlane.xlu0 %5159
        %5161 = vmax.xlane.f32.xlu0 %v5116
        %v5162 = vpop.xlane.xlu0 %5161
        %5163 = vmax.xlane.f32.xlu0 %v5117
        %v5164 = vpop.xlane.xlu0 %5163
        %5165 = vmax.xlane.f32.xlu0 %v5118
        %v5166 = vpop.xlane.xlu0 %5165
        %5167 = vmax.xlane.f32.xlu0 %v5119
        %v5168 = vpop.xlane.xlu0 %5167
        %5169 = vmax.xlane.f32.xlu0 %v5120
        %v5170 = vpop.xlane.xlu0 %5169
        %5171 = vmax.xlane.f32.xlu0 %v5121
        %v5172 = vpop.xlane.xlu0 %5171
        %5173 = vmax.xlane.f32.xlu0 %v5122
        %v5174 = vpop.xlane.xlu0 %5173
        %5175 = vmax.xlane.f32.xlu0 %v5123
        %v5176 = vpop.xlane.xlu0 %5175
        %5177 = vmax.xlane.f32.xlu0 %v5124
        %v5178 = vpop.xlane.xlu0 %5177
        %5179 = vmax.xlane.f32.xlu0 %v5125
        %v5180 = vpop.xlane.xlu0 %5179
        %5181 = vmax.xlane.f32.xlu0 %v5126
        %v5182 = vpop.xlane.xlu0 %5181
        %5183 = vmax.xlane.f32.xlu0 %v5127
        %v5184 = vpop.xlane.xlu0 %5183
        %5185 = vmax.xlane.f32.xlu0 %v5128
        %v5186 = vpop.xlane.xlu0 %5185
        %5187 = vmax.xlane.f32.xlu0 %v5129
        %v5188 = vpop.xlane.xlu0 %5187
        %5189 = vmax.xlane.f32.xlu0 %v5130
        %v5190 = vpop.xlane.xlu0 %5189
        %5191 = vmax.xlane.f32.xlu0 %v5131
        %v5192 = vpop.xlane.xlu0 %5191
        %5193 = vmax.xlane.f32.xlu0 %v5132
        %v5194 = vpop.xlane.xlu0 %5193
        %5195 = vmax.xlane.f32.xlu0 %v5133
        %v5196 = vpop.xlane.xlu0 %5195
        %5197 = vmax.xlane.f32.xlu0 %v5134
        %v5198 = vpop.xlane.xlu0 %5197
        %v5199 = vsub.f32 %v5103, %v5136
        %v5200 = vsub.f32 %v5104, %v5138
        %v5201 = vsub.f32 %v5105, %v5140
        %v5202 = vsub.f32 %v5106, %v5142
        %v5203 = vsub.f32 %v5107, %v5144
        %v5204 = vsub.f32 %v5108, %v5146
        %v5205 = vsub.f32 %v5109, %v5148
        %v5206 = vsub.f32 %v5110, %v5150
        %v5207 = vsub.f32 %v5111, %v5152
        %v5208 = vsub.f32 %v5112, %v5154
        %v5209 = vsub.f32 %v5113, %v5156
        %v5210 = vsub.f32 %v5114, %v5158
        %v5211 = vsub.f32 %v5115, %v5160
        %v5212 = vsub.f32 %v5116, %v5162
        %v5213 = vsub.f32 %v5117, %v5164
        %v5214 = vsub.f32 %v5118, %v5166
        %v5215 = vsub.f32 %v5119, %v5168
        %v5216 = vsub.f32 %v5120, %v5170
        %v5217 = vsub.f32 %v5121, %v5172
        %v5218 = vsub.f32 %v5122, %v5174
        %v5219 = vsub.f32 %v5123, %v5176
        %v5220 = vsub.f32 %v5124, %v5178
        %v5221 = vsub.f32 %v5125, %v5180
        %v5222 = vsub.f32 %v5126, %v5182
        %v5223 = vsub.f32 %v5127, %v5184
        %v5224 = vsub.f32 %v5128, %v5186
        %v5225 = vsub.f32 %v5129, %v5188
        %v5226 = vsub.f32 %v5130, %v5190
        %v5227 = vsub.f32 %v5131, %v5192
        %v5228 = vsub.f32 %v5132, %v5194
        %v5229 = vsub.f32 %v5133, %v5196
        %v5230 = vsub.f32 %v5134, %v5198
        %v5231 = vmul.f32 %v5199, 1.442695
        %v5232 = vpow.pop %v5231
        %v5233 = vmul.f32 %v5200, 1.442695
        %v5234 = vpow.pop %v5233
        %v5235 = vmul.f32 %v5201, 1.442695
        %v5236 = vpow.pop %v5235
        %v5237 = vmul.f32 %v5202, 1.442695
        %v5238 = vpow.pop %v5237
        %v5239 = vmul.f32 %v5203, 1.442695
        %v5240 = vpow.pop %v5239
        %v5241 = vmul.f32 %v5204, 1.442695
        %v5242 = vpow.pop %v5241
        %v5243 = vmul.f32 %v5205, 1.442695
        %v5244 = vpow.pop %v5243
        %v5245 = vmul.f32 %v5206, 1.442695
        %v5246 = vpow.pop %v5245
        %v5247 = vmul.f32 %v5207, 1.442695
        %v5248 = vpow.pop %v5247
        %v5249 = vmul.f32 %v5208, 1.442695
        %v5250 = vpow.pop %v5249
        %v5251 = vmul.f32 %v5209, 1.442695
        %v5252 = vpow.pop %v5251
        %v5253 = vmul.f32 %v5210, 1.442695
        %v5254 = vpow.pop %v5253
        %v5255 = vmul.f32 %v5211, 1.442695
        %v5256 = vpow.pop %v5255
        %v5257 = vmul.f32 %v5212, 1.442695
        %v5258 = vpow.pop %v5257
        %v5259 = vmul.f32 %v5213, 1.442695
        %v5260 = vpow.pop %v5259
        %v5261 = vmul.f32 %v5214, 1.442695
        %v5262 = vpow.pop %v5261
        %v5263 = vmul.f32 %v5215, 1.442695
        %v5264 = vpow.pop %v5263
        %v5265 = vmul.f32 %v5216, 1.442695
        %v5266 = vpow.pop %v5265
        %v5267 = vmul.f32 %v5217, 1.442695
        %v5268 = vpow.pop %v5267
        %v5269 = vmul.f32 %v5218, 1.442695
        %v5270 = vpow.pop %v5269
        %v5271 = vmul.f32 %v5219, 1.442695
        %v5272 = vpow.pop %v5271
        %v5273 = vmul.f32 %v5220, 1.442695
        %v5274 = vpow.pop %v5273
        %v5275 = vmul.f32 %v5221, 1.442695
        %v5276 = vpow.pop %v5275
        %v5277 = vmul.f32 %v5222, 1.442695
        %v5278 = vpow.pop %v5277
        %v5279 = vmul.f32 %v5223, 1.442695
        %v5280 = vpow.pop %v5279
        %v5281 = vmul.f32 %v5224, 1.442695
        %v5282 = vpow.pop %v5281
        %v5283 = vmul.f32 %v5225, 1.442695
        %v5284 = vpow.pop %v5283
        %v5285 = vmul.f32 %v5226, 1.442695
        %v5286 = vpow.pop %v5285
        %v5287 = vmul.f32 %v5227, 1.442695
        %v5288 = vpow.pop %v5287
        %v5289 = vmul.f32 %v5228, 1.442695
        %v5290 = vpow.pop %v5289
        %v5291 = vmul.f32 %v5229, 1.442695
        %v5292 = vpow.pop %v5291
        %v5293 = vmul.f32 %v5230, 1.442695
        %v5294 = vpow.pop %v5293
        %5295 = vadd.xlane.f32.xlu0 %v5232
        %v5296 = vpop.xlane.xlu0 %5295
        %5297 = vadd.xlane.f32.xlu0 %v5234
        %v5298 = vpop.xlane.xlu0 %5297
        %5299 = vadd.xlane.f32.xlu0 %v5236
        %v5300 = vpop.xlane.xlu0 %5299
        %5301 = vadd.xlane.f32.xlu0 %v5238
        %v5302 = vpop.xlane.xlu0 %5301
        %5303 = vadd.xlane.f32.xlu0 %v5240
        %v5304 = vpop.xlane.xlu0 %5303
        %5305 = vadd.xlane.f32.xlu0 %v5242
        %v5306 = vpop.xlane.xlu0 %5305
        %5307 = vadd.xlane.f32.xlu0 %v5244
        %v5308 = vpop.xlane.xlu0 %5307
        %5309 = vadd.xlane.f32.xlu0 %v5246
        %v5310 = vpop.xlane.xlu0 %5309
        %5311 = vadd.xlane.f32.xlu0 %v5248
        %v5312 = vpop.xlane.xlu0 %5311
        %5313 = vadd.xlane.f32.xlu0 %v5250
        %v5314 = vpop.xlane.xlu0 %5313
        %5315 = vadd.xlane.f32.xlu0 %v5252
        %v5316 = vpop.xlane.xlu0 %5315
        %5317 = vadd.xlane.f32.xlu0 %v5254
        %v5318 = vpop.xlane.xlu0 %5317
        %5319 = vadd.xlane.f32.xlu0 %v5256
        %v5320 = vpop.xlane.xlu0 %5319
        %5321 = vadd.xlane.f32.xlu0 %v5258
        %v5322 = vpop.xlane.xlu0 %5321
        %5323 = vadd.xlane.f32.xlu0 %v5260
        %v5324 = vpop.xlane.xlu0 %5323
        %5325 = vadd.xlane.f32.xlu0 %v5262
        %v5326 = vpop.xlane.xlu0 %5325
        %5327 = vadd.xlane.f32.xlu0 %v5264
        %v5328 = vpop.xlane.xlu0 %5327
        %5329 = vadd.xlane.f32.xlu0 %v5266
        %v5330 = vpop.xlane.xlu0 %5329
        %5331 = vadd.xlane.f32.xlu0 %v5268
        %v5332 = vpop.xlane.xlu0 %5331
        %5333 = vadd.xlane.f32.xlu0 %v5270
        %v5334 = vpop.xlane.xlu0 %5333
        %5335 = vadd.xlane.f32.xlu0 %v5272
        %v5336 = vpop.xlane.xlu0 %5335
        %5337 = vadd.xlane.f32.xlu0 %v5274
        %v5338 = vpop.xlane.xlu0 %5337
        %5339 = vadd.xlane.f32.xlu0 %v5276
        %v5340 = vpop.xlane.xlu0 %5339
        %5341 = vadd.xlane.f32.xlu0 %v5278
        %v5342 = vpop.xlane.xlu0 %5341
        %5343 = vadd.xlane.f32.xlu0 %v5280
        %v5344 = vpop.xlane.xlu0 %5343
        %5345 = vadd.xlane.f32.xlu0 %v5282
        %v5346 = vpop.xlane.xlu0 %5345
        %5347 = vadd.xlane.f32.xlu0 %v5284
        %v5348 = vpop.xlane.xlu0 %5347
        %5349 = vadd.xlane.f32.xlu0 %v5286
        %v5350 = vpop.xlane.xlu0 %5349
        %5351 = vadd.xlane.f32.xlu0 %v5288
        %v5352 = vpop.xlane.xlu0 %5351
        %5353 = vadd.xlane.f32.xlu0 %v5290
        %v5354 = vpop.xlane.xlu0 %5353
        %5355 = vadd.xlane.f32.xlu0 %v5292
        %v5356 = vpop.xlane.xlu0 %5355
        %5357 = vadd.xlane.f32.xlu0 %v5294
        %v5358 = vpop.xlane.xlu0 %5357
        %v5359 = vrcp.pop %v5296
        %v5360 = vrcp.pop %v5298
        %v5361 = vrcp.pop %v5300
        %v5362 = vrcp.pop %v5302
        %v5363 = vrcp.pop %v5304
        %v5364 = vrcp.pop %v5306
        %v5365 = vrcp.pop %v5308
        %v5366 = vrcp.pop %v5310
        %v5367 = vrcp.pop %v5312
        %v5368 = vrcp.pop %v5314
        %v5369 = vrcp.pop %v5316
        %v5370 = vrcp.pop %v5318
        %v5371 = vrcp.pop %v5320
        %v5372 = vrcp.pop %v5322
        %v5373 = vrcp.pop %v5324
        %v5374 = vrcp.pop %v5326
        %v5375 = vrcp.pop %v5328
        %v5376 = vrcp.pop %v5330
        %v5377 = vrcp.pop %v5332
        %v5378 = vrcp.pop %v5334
        %v5379 = vrcp.pop %v5336
        %v5380 = vrcp.pop %v5338
        %v5381 = vrcp.pop %v5340
        %v5382 = vrcp.pop %v5342
        %v5383 = vrcp.pop %v5344
        %v5384 = vrcp.pop %v5346
        %v5385 = vrcp.pop %v5348
        %v5386 = vrcp.pop %v5350
        %v5387 = vrcp.pop %v5352
        %v5388 = vrcp.pop %v5354
        %v5389 = vrcp.pop %v5356
        %v5390 = vrcp.pop %v5358
        %v5391 = vmul.f32 %v5232, %v5359
        %v5392 = vmul.f32 %v5234, %v5360
        %v5393 = vmul.f32 %v5236, %v5361
        %v5394 = vmul.f32 %v5238, %v5362
        %v5395 = vmul.f32 %v5240, %v5363
        %v5396 = vmul.f32 %v5242, %v5364
        %v5397 = vmul.f32 %v5244, %v5365
        %v5398 = vmul.f32 %v5246, %v5366
        %v5399 = vmul.f32 %v5248, %v5367
        %v5400 = vmul.f32 %v5250, %v5368
        %v5401 = vmul.f32 %v5252, %v5369
        %v5402 = vmul.f32 %v5254, %v5370
        %v5403 = vmul.f32 %v5256, %v5371
        %v5404 = vmul.f32 %v5258, %v5372
        %v5405 = vmul.f32 %v5260, %v5373
        %v5406 = vmul.f32 %v5262, %v5374
        %v5407 = vmul.f32 %v5264, %v5375
        %v5408 = vmul.f32 %v5266, %v5376
        %v5409 = vmul.f32 %v5268, %v5377
        %v5410 = vmul.f32 %v5270, %v5378
        %v5411 = vmul.f32 %v5272, %v5379
        %v5412 = vmul.f32 %v5274, %v5380
        %v5413 = vmul.f32 %v5276, %v5381
        %v5414 = vmul.f32 %v5278, %v5382
        %v5415 = vmul.f32 %v5280, %v5383
        %v5416 = vmul.f32 %v5282, %v5384
        %v5417 = vmul.f32 %v5284, %v5385
        %v5418 = vmul.f32 %v5286, %v5386
        %v5419 = vmul.f32 %v5288, %v5387
        %v5420 = vmul.f32 %v5290, %v5388
        %v5421 = vmul.f32 %v5292, %v5389
        %v5422 = vmul.f32 %v5294, %v5390
        %v5423 = vpack.c.bf16 %v5392, %v5391
        %v5424 = vpack.c.bf16 %v5394, %v5393
        %v5425 = vpack.c.bf16 %v5396, %v5395
        %v5426 = vpack.c.bf16 %v5398, %v5397
        %v5427 = vpack.c.bf16 %v5400, %v5399
        %v5428 = vpack.c.bf16 %v5402, %v5401
        %v5429 = vpack.c.bf16 %v5404, %v5403
        %v5430 = vpack.c.bf16 %v5406, %v5405
        %v5431 = vpack.c.bf16 %v5408, %v5407
        %v5432 = vpack.c.bf16 %v5410, %v5409
        %v5433 = vpack.c.bf16 %v5412, %v5411
        %v5434 = vpack.c.bf16 %v5414, %v5413
        %v5435 = vpack.c.bf16 %v5416, %v5415
        %v5436 = vpack.c.bf16 %v5418, %v5417
        %v5437 = vpack.c.bf16 %v5420, %v5419
        %v5438 = vpack.c.bf16 %v5422, %v5421
        %5447 = vrot.lane.b32.xlu0 %v3687, 64
        %v5448 = vpop.permute.xlu0 %5447
        %5449 = vrot.lane.b32.xlu0 %v3688, 64
        %v5450 = vpop.permute.xlu0 %5449
        %5451 = vrot.lane.b32.xlu0 %v3689, 64
        %v5452 = vpop.permute.xlu0 %5451
        %5453 = vrot.lane.b32.xlu0 %v3690, 64
        %v5454 = vpop.permute.xlu0 %5453
        %5455 = vrot.lane.b32.xlu0 %v3691, 64
        %v5456 = vpop.permute.xlu0 %5455
        %5457 = vrot.lane.b32.xlu0 %v3692, 64
        %v5458 = vpop.permute.xlu0 %5457
        %5459 = vrot.lane.b32.xlu0 %v3693, 64
        %v5460 = vpop.permute.xlu0 %5459
        %5461 = vrot.lane.b32.xlu0 %v3694, 64
        %v5462 = vpop.permute.xlu0 %5461
        %5471 = vmatprep.subr.bf16.mxu0 0
        %5472 = vmatpush1.bf16.msra.mxu0 %v5462
        %5473 = vmatprep.subr.bf16.mxu0 0
        %5474 = vmatpush1.bf16.msra.mxu0 %v5460
        %5475 = vmatprep.subr.bf16.mxu0 0
        %5476 = vmatpush1.bf16.msra.mxu0 %v5458
        %5477 = vmatprep.subr.bf16.mxu0 0
        %5478 = vmatpush1.bf16.msra.mxu0 %v5456
        %5479 = vmatprep.subr.bf16.mxu0 0
        %5480 = vmatpush1.bf16.msra.mxu0 %v5454
        %5481 = vmatprep.subr.bf16.mxu0 0
        %5482 = vmatpush1.bf16.msra.mxu0 %v5452
        %5483 = vmatprep.subr.bf16.mxu0 0
        %5484 = vmatpush1.bf16.msra.mxu0 %v5450
        %5485 = vmatprep.subr.bf16.mxu0 0
        %5486 = vmatpush1.bf16.msra.mxu0 %v5448
        %5487 = vmatprep.subr.bf16.mxu0 0
        %5488 = vmatpush2.bf16.msra.mxu0 0
        %5489 = vmatprep.subr.bf16.mxu0 0
        %5490 = vmatpush2.bf16.msra.mxu0 0
        %5491 = vmatprep.subr.bf16.mxu0 0
        %5492 = vmatpush2.bf16.msra.mxu0 0
        %5493 = vmatprep.subr.bf16.mxu0 0
        %5494 = vmatpush2.bf16.msra.mxu0 0
        %5495 = vmatprep.subr.bf16.mxu0 0
        %5496 = vmatpush2.bf16.msra.mxu0 0
        %5497 = vmatprep.subr.bf16.mxu0 0
        %5498 = vmatpush2.bf16.msra.mxu0 0
        %5499 = vmatprep.subr.bf16.mxu0 0
        %5500 = vmatpush2.bf16.msra.mxu0 0
        %5501 = vmatprep.subr.bf16.mxu0 0
        %5502 = vmatpush2.bf16.msra.mxu0 0
        %5503 = vmatprep.mubr.bf16.mxu0 0
        %5504 = vmatmul.mubr.bf16.gmra.mxu0 %v5423
        %v5505 = vpop.f32.mrf.mxu0
        %v5506 = vadd.f32 0.0, %v5505
        %v5507 = vpop.f32.mrf.mxu0
        %v5508 = vpop.f32.mrf.mxu0
        %v5509 = vadd.f32 0.0, %v5508
        %v5510 = vpop.f32.mrf.mxu0
        %5511 = vmatprep.mubr.bf16.mxu0 0
        %5512 = vmatmul.mubr.bf16.gmra.mxu0 %v5424
        %v5513 = vpop.f32.mrf.mxu0
        %v5514 = vadd.f32 0.0, %v5513
        %v5515 = vpop.f32.mrf.mxu0
        %v5516 = vpop.f32.mrf.mxu0
        %v5517 = vadd.f32 0.0, %v5516
        %v5518 = vpop.f32.mrf.mxu0
        %5519 = vmatprep.mubr.bf16.mxu0 0
        %5520 = vmatmul.mubr.bf16.gmra.mxu0 %v5425
        %v5521 = vpop.f32.mrf.mxu0
        %v5522 = vadd.f32 0.0, %v5521
        %v5523 = vpop.f32.mrf.mxu0
        %v5524 = vpop.f32.mrf.mxu0
        %v5525 = vadd.f32 0.0, %v5524
        %v5526 = vpop.f32.mrf.mxu0
        %5527 = vmatprep.mubr.bf16.mxu0 0
        %5528 = vmatmul.mubr.bf16.gmra.mxu0 %v5426
        %v5529 = vpop.f32.mrf.mxu0
        %v5530 = vadd.f32 0.0, %v5529
        %v5531 = vpop.f32.mrf.mxu0
        %v5532 = vpop.f32.mrf.mxu0
        %v5533 = vadd.f32 0.0, %v5532
        %v5534 = vpop.f32.mrf.mxu0
        %5535 = vmatprep.mubr.bf16.mxu0 0
        %5536 = vmatmul.mubr.bf16.gmra.mxu0 %v5427
        %v5537 = vpop.f32.mrf.mxu0
        %v5538 = vadd.f32 0.0, %v5537
        %v5539 = vpop.f32.mrf.mxu0
        %v5540 = vpop.f32.mrf.mxu0
        %v5541 = vadd.f32 0.0, %v5540
        %v5542 = vpop.f32.mrf.mxu0
        %5543 = vmatprep.mubr.bf16.mxu0 0
        %5544 = vmatmul.mubr.bf16.gmra.mxu0 %v5428
        %v5545 = vpop.f32.mrf.mxu0
        %v5546 = vadd.f32 0.0, %v5545
        %v5547 = vpop.f32.mrf.mxu0
        %v5548 = vpop.f32.mrf.mxu0
        %v5549 = vadd.f32 0.0, %v5548
        %v5550 = vpop.f32.mrf.mxu0
        %5551 = vmatprep.mubr.bf16.mxu0 0
        %5552 = vmatmul.mubr.bf16.gmra.mxu0 %v5429
        %v5553 = vpop.f32.mrf.mxu0
        %v5554 = vadd.f32 0.0, %v5553
        %v5555 = vpop.f32.mrf.mxu0
        %v5556 = vpop.f32.mrf.mxu0
        %v5557 = vadd.f32 0.0, %v5556
        %v5558 = vpop.f32.mrf.mxu0
        %5559 = vmatprep.mubr.bf16.mxu0 0
        %5560 = vmatmul.mubr.bf16.gmra.mxu0 %v5430
        %v5561 = vpop.f32.mrf.mxu0
        %v5562 = vadd.f32 0.0, %v5561
        %v5563 = vpop.f32.mrf.mxu0
        %v5564 = vpop.f32.mrf.mxu0
        %v5565 = vadd.f32 0.0, %v5564
        %v5566 = vpop.f32.mrf.mxu0
        %5567 = vdwg.mxu0
        %5576 = vrot.lane.b32.xlu0 %v3695, 64
        %v5577 = vpop.permute.xlu0 %5576
        %5578 = vrot.lane.b32.xlu0 %v3696, 64
        %v5579 = vpop.permute.xlu0 %5578
        %5580 = vrot.lane.b32.xlu0 %v3697, 64
        %v5581 = vpop.permute.xlu0 %5580
        %5582 = vrot.lane.b32.xlu0 %v3698, 64
        %v5583 = vpop.permute.xlu0 %5582
        %5584 = vrot.lane.b32.xlu0 %v3699, 64
        %v5585 = vpop.permute.xlu0 %5584
        %5586 = vrot.lane.b32.xlu0 %v3700, 64
        %v5587 = vpop.permute.xlu0 %5586
        %5588 = vrot.lane.b32.xlu0 %v3701, 64
        %v5589 = vpop.permute.xlu0 %5588
        %5590 = vrot.lane.b32.xlu0 %v3702, 64
        %v5591 = vpop.permute.xlu0 %5590
        %5600 = vmatprep.subr.bf16.mxu0 0
        %5601 = vmatpush1.bf16.msra.mxu0 %v5591
        %5602 = vmatprep.subr.bf16.mxu0 0
        %5603 = vmatpush1.bf16.msra.mxu0 %v5589
        %5604 = vmatprep.subr.bf16.mxu0 0
        %5605 = vmatpush1.bf16.msra.mxu0 %v5587
        %5606 = vmatprep.subr.bf16.mxu0 0
        %5607 = vmatpush1.bf16.msra.mxu0 %v5585
        %5608 = vmatprep.subr.bf16.mxu0 0
        %5609 = vmatpush1.bf16.msra.mxu0 %v5583
        %5610 = vmatprep.subr.bf16.mxu0 0
        %5611 = vmatpush1.bf16.msra.mxu0 %v5581
        %5612 = vmatprep.subr.bf16.mxu0 0
        %5613 = vmatpush1.bf16.msra.mxu0 %v5579
        %5614 = vmatprep.subr.bf16.mxu0 0
        %5615 = vmatpush1.bf16.msra.mxu0 %v5577
        %5616 = vmatprep.subr.bf16.mxu0 0
        %5617 = vmatpush2.bf16.msra.mxu0 0
        %5618 = vmatprep.subr.bf16.mxu0 0
        %5619 = vmatpush2.bf16.msra.mxu0 0
        %5620 = vmatprep.subr.bf16.mxu0 0
        %5621 = vmatpush2.bf16.msra.mxu0 0
        %5622 = vmatprep.subr.bf16.mxu0 0
        %5623 = vmatpush2.bf16.msra.mxu0 0
        %5624 = vmatprep.subr.bf16.mxu0 0
        %5625 = vmatpush2.bf16.msra.mxu0 0
        %5626 = vmatprep.subr.bf16.mxu0 0
        %5627 = vmatpush2.bf16.msra.mxu0 0
        %5628 = vmatprep.subr.bf16.mxu0 0
        %5629 = vmatpush2.bf16.msra.mxu0 0
        %5630 = vmatprep.subr.bf16.mxu0 0
        %5631 = vmatpush2.bf16.msra.mxu0 0
        %5632 = vmatprep.mubr.bf16.mxu0 0
        %5633 = vmatmul.mubr.bf16.gmra.mxu0 %v5431
        %v5634 = vpop.f32.mrf.mxu0
        %v5635 = vadd.f32 0.0, %v5634
        %v5636 = vpop.f32.mrf.mxu0
        %v5637 = vpop.f32.mrf.mxu0
        %v5638 = vadd.f32 0.0, %v5637
        %v5639 = vpop.f32.mrf.mxu0
        %5640 = vmatprep.mubr.bf16.mxu0 0
        %5641 = vmatmul.mubr.bf16.gmra.mxu0 %v5432
        %v5642 = vpop.f32.mrf.mxu0
        %v5643 = vadd.f32 0.0, %v5642
        %v5644 = vpop.f32.mrf.mxu0
        %v5645 = vpop.f32.mrf.mxu0
        %v5646 = vadd.f32 0.0, %v5645
        %v5647 = vpop.f32.mrf.mxu0
        %5648 = vmatprep.mubr.bf16.mxu0 0
        %5649 = vmatmul.mubr.bf16.gmra.mxu0 %v5433
        %v5650 = vpop.f32.mrf.mxu0
        %v5651 = vadd.f32 0.0, %v5650
        %v5652 = vpop.f32.mrf.mxu0
        %v5653 = vpop.f32.mrf.mxu0
        %v5654 = vadd.f32 0.0, %v5653
        %v5655 = vpop.f32.mrf.mxu0
        %5656 = vmatprep.mubr.bf16.mxu0 0
        %5657 = vmatmul.mubr.bf16.gmra.mxu0 %v5434
        %v5658 = vpop.f32.mrf.mxu0
        %v5659 = vadd.f32 0.0, %v5658
        %v5660 = vpop.f32.mrf.mxu0
        %v5661 = vpop.f32.mrf.mxu0
        %v5662 = vadd.f32 0.0, %v5661
        %v5663 = vpop.f32.mrf.mxu0
        %5664 = vmatprep.mubr.bf16.mxu0 0
        %5665 = vmatmul.mubr.bf16.gmra.mxu0 %v5435
        %v5666 = vpop.f32.mrf.mxu0
        %v5667 = vadd.f32 0.0, %v5666
        %v5668 = vpop.f32.mrf.mxu0
        %v5669 = vpop.f32.mrf.mxu0
        %v5670 = vadd.f32 0.0, %v5669
        %v5671 = vpop.f32.mrf.mxu0
        %5672 = vmatprep.mubr.bf16.mxu0 0
        %5673 = vmatmul.mubr.bf16.gmra.mxu0 %v5436
        %v5674 = vpop.f32.mrf.mxu0
        %v5675 = vadd.f32 0.0, %v5674
        %v5676 = vpop.f32.mrf.mxu0
        %v5677 = vpop.f32.mrf.mxu0
        %v5678 = vadd.f32 0.0, %v5677
        %v5679 = vpop.f32.mrf.mxu0
        %5680 = vmatprep.mubr.bf16.mxu0 0
        %5681 = vmatmul.mubr.bf16.gmra.mxu0 %v5437
        %v5682 = vpop.f32.mrf.mxu0
        %v5683 = vadd.f32 0.0, %v5682
        %v5684 = vpop.f32.mrf.mxu0
        %v5685 = vpop.f32.mrf.mxu0
        %v5686 = vadd.f32 0.0, %v5685
        %v5687 = vpop.f32.mrf.mxu0
        %5688 = vmatprep.mubr.bf16.mxu0 0
        %5689 = vmatmul.mubr.bf16.gmra.mxu0 %v5438
        %v5690 = vpop.f32.mrf.mxu0
        %v5691 = vadd.f32 0.0, %v5690
        %v5692 = vpop.f32.mrf.mxu0
        %v5693 = vpop.f32.mrf.mxu0
        %v5694 = vadd.f32 0.0, %v5693
        %v5695 = vpop.f32.mrf.mxu0
        %5696 = vdwg.mxu0
        %v5697 = vpack.c.bf16 %v5509, %v5506
        %v5698 = vpack.c.bf16 %v5517, %v5514
        %v5699 = vpack.c.bf16 %v5525, %v5522
        %v5700 = vpack.c.bf16 %v5533, %v5530
        %v5701 = vpack.c.bf16 %v5541, %v5538
        %v5702 = vpack.c.bf16 %v5549, %v5546
        %v5703 = vpack.c.bf16 %v5557, %v5554
        %v5704 = vpack.c.bf16 %v5565, %v5562
        %v5705 = vpack.c.bf16 %v5638, %v5635
        %v5706 = vpack.c.bf16 %v5646, %v5643
        %v5707 = vpack.c.bf16 %v5654, %v5651
        %v5708 = vpack.c.bf16 %v5662, %v5659
        %v5709 = vpack.c.bf16 %v5670, %v5667
        %v5710 = vpack.c.bf16 %v5678, %v5675
        %v5711 = vpack.c.bf16 %v5686, %v5683
        %v5712 = vpack.c.bf16 %v5694, %v5691
        %v5729 = vunpack.c.l.b16 %v5697
        %v5730 = vunpack.c.h.b16 %v5697
        %v5731 = vunpack.c.l.b16 %v5698
        %v5732 = vunpack.c.h.b16 %v5698
        %v5733 = vunpack.c.l.b16 %v5699
        %v5734 = vunpack.c.h.b16 %v5699
        %v5735 = vunpack.c.l.b16 %v5700
        %v5736 = vunpack.c.h.b16 %v5700
        %v5737 = vunpack.c.l.b16 %v5701
        %v5738 = vunpack.c.h.b16 %v5701
        %v5739 = vunpack.c.l.b16 %v5702
        %v5740 = vunpack.c.h.b16 %v5702
        %v5741 = vunpack.c.l.b16 %v5703
        %v5742 = vunpack.c.h.b16 %v5703
        %v5743 = vunpack.c.l.b16 %v5704
        %v5744 = vunpack.c.h.b16 %v5704
        %v5745 = vunpack.c.l.b16 %v5705
        %v5746 = vunpack.c.h.b16 %v5705
        %v5747 = vunpack.c.l.b16 %v5706
        %v5748 = vunpack.c.h.b16 %v5706
        %v5749 = vunpack.c.l.b16 %v5707
        %v5750 = vunpack.c.h.b16 %v5707
        %v5751 = vunpack.c.l.b16 %v5708
        %v5752 = vunpack.c.h.b16 %v5708
        %v5753 = vunpack.c.l.b16 %v5709
        %v5754 = vunpack.c.h.b16 %v5709
        %v5755 = vunpack.c.l.b16 %v5710
        %v5756 = vunpack.c.h.b16 %v5710
        %v5757 = vunpack.c.l.b16 %v5711
        %v5758 = vunpack.c.h.b16 %v5711
        %v5759 = vunpack.c.l.b16 %v5712
        %v5760 = vunpack.c.h.b16 %v5712
        %v5761 = vpack.c.b16 %v5729, %v5729
        %v5762 = vpack.c.b16 %v5730, %v5730
        %v5763 = vpack.c.b16 %v5731, %v5731
        %v5764 = vpack.c.b16 %v5732, %v5732
        %v5765 = vpack.c.b16 %v5733, %v5733
        %v5766 = vpack.c.b16 %v5734, %v5734
        %v5767 = vpack.c.b16 %v5735, %v5735
        %v5768 = vpack.c.b16 %v5736, %v5736
        %v5769 = vpack.c.b16 %v5737, %v5737
        %v5770 = vpack.c.b16 %v5738, %v5738
        %v5771 = vpack.c.b16 %v5739, %v5739
        %v5772 = vpack.c.b16 %v5740, %v5740
        %v5773 = vpack.c.b16 %v5741, %v5741
        %v5774 = vpack.c.b16 %v5742, %v5742
        %v5775 = vpack.c.b16 %v5743, %v5743
        %v5776 = vpack.c.b16 %v5744, %v5744
        %v5777 = vpack.c.b16 %v5745, %v5745
        %v5778 = vpack.c.b16 %v5746, %v5746
        %v5779 = vpack.c.b16 %v5747, %v5747
        %v5780 = vpack.c.b16 %v5748, %v5748
        %v5781 = vpack.c.b16 %v5749, %v5749
        %v5782 = vpack.c.b16 %v5750, %v5750
        %v5783 = vpack.c.b16 %v5751, %v5751
        %v5784 = vpack.c.b16 %v5752, %v5752
        %v5785 = vpack.c.b16 %v5753, %v5753
        %v5786 = vpack.c.b16 %v5754, %v5754
        %v5787 = vpack.c.b16 %v5755, %v5755
        %v5788 = vpack.c.b16 %v5756, %v5756
        %v5789 = vpack.c.b16 %v5757, %v5757
        %v5790 = vpack.c.b16 %v5758, %v5758
        %v5791 = vpack.c.b16 %v5759, %v5759
        %v5792 = vpack.c.b16 %v5760, %v5760
        %5793 = vrot.lane.b32.xlu0 %v5761, 64
        %v5794 = vpop.permute.xlu0 %5793
        %5795 = vrot.lane.b32.xlu0 %v5762, 64
        %v5796 = vpop.permute.xlu0 %5795
        %5797 = vrot.lane.b32.xlu0 %v5763, 64
        %v5798 = vpop.permute.xlu0 %5797
        %5799 = vrot.lane.b32.xlu0 %v5764, 64
        %v5800 = vpop.permute.xlu0 %5799
        %5801 = vrot.lane.b32.xlu0 %v5765, 64
        %v5802 = vpop.permute.xlu0 %5801
        %5803 = vrot.lane.b32.xlu0 %v5766, 64
        %v5804 = vpop.permute.xlu0 %5803
        %5805 = vrot.lane.b32.xlu0 %v5767, 64
        %v5806 = vpop.permute.xlu0 %5805
        %5807 = vrot.lane.b32.xlu0 %v5768, 64
        %v5808 = vpop.permute.xlu0 %5807
        %5809 = vrot.lane.b32.xlu0 %v5769, 64
        %v5810 = vpop.permute.xlu0 %5809
        %5811 = vrot.lane.b32.xlu0 %v5770, 64
        %v5812 = vpop.permute.xlu0 %5811
        %5813 = vrot.lane.b32.xlu0 %v5771, 64
        %v5814 = vpop.permute.xlu0 %5813
        %5815 = vrot.lane.b32.xlu0 %v5772, 64
        %v5816 = vpop.permute.xlu0 %5815
        %5817 = vrot.lane.b32.xlu0 %v5773, 64
        %v5818 = vpop.permute.xlu0 %5817
        %5819 = vrot.lane.b32.xlu0 %v5774, 64
        %v5820 = vpop.permute.xlu0 %5819
        %5821 = vrot.lane.b32.xlu0 %v5775, 64
        %v5822 = vpop.permute.xlu0 %5821
        %5823 = vrot.lane.b32.xlu0 %v5776, 64
        %v5824 = vpop.permute.xlu0 %5823
        %5825 = vrot.lane.b32.xlu0 %v5777, 64
        %v5826 = vpop.permute.xlu0 %5825
        %5827 = vrot.lane.b32.xlu0 %v5778, 64
        %v5828 = vpop.permute.xlu0 %5827
        %5829 = vrot.lane.b32.xlu0 %v5779, 64
        %v5830 = vpop.permute.xlu0 %5829
        %5831 = vrot.lane.b32.xlu0 %v5780, 64
        %v5832 = vpop.permute.xlu0 %5831
        %5833 = vrot.lane.b32.xlu0 %v5781, 64
        %v5834 = vpop.permute.xlu0 %5833
        %5835 = vrot.lane.b32.xlu0 %v5782, 64
        %v5836 = vpop.permute.xlu0 %5835
        %5837 = vrot.lane.b32.xlu0 %v5783, 64
        %v5838 = vpop.permute.xlu0 %5837
        %5839 = vrot.lane.b32.xlu0 %v5784, 64
        %v5840 = vpop.permute.xlu0 %5839
        %5841 = vrot.lane.b32.xlu0 %v5785, 64
        %v5842 = vpop.permute.xlu0 %5841
        %5843 = vrot.lane.b32.xlu0 %v5786, 64
        %v5844 = vpop.permute.xlu0 %5843
        %5845 = vrot.lane.b32.xlu0 %v5787, 64
        %v5846 = vpop.permute.xlu0 %5845
        %5847 = vrot.lane.b32.xlu0 %v5788, 64
        %v5848 = vpop.permute.xlu0 %5847
        %5849 = vrot.lane.b32.xlu0 %v5789, 64
        %v5850 = vpop.permute.xlu0 %5849
        %5851 = vrot.lane.b32.xlu0 %v5790, 64
        %v5852 = vpop.permute.xlu0 %5851
        %5853 = vrot.lane.b32.xlu0 %v5791, 64
        %v5854 = vpop.permute.xlu0 %5853
        %5855 = vrot.lane.b32.xlu0 %v5792, 64
        %v5856 = vpop.permute.xlu0 %5855
        %vm5889 = vcmask 1043968
        %5890 = vst.msk [vmem:[#allocation2] sm:$0xf] %vm5889, %v5794
        %5891 = vst.msk [vmem:[#allocation2 + $0xc] sm:$0xf] %vm5889, %v5796
        %5892 = vst.msk [vmem:[#allocation2 + $0x18] sm:$0xf] %vm5889, %v5798
        %5893 = vst.msk [vmem:[#allocation2 + $0x24] sm:$0xf] %vm5889, %v5800
        %5894 = vst.msk [vmem:[#allocation2 + $0x30] sm:$0xf] %vm5889, %v5802
        %5895 = vst.msk [vmem:[#allocation2 + $0x3c] sm:$0xf] %vm5889, %v5804
        %5896 = vst.msk [vmem:[#allocation2 + $0x48] sm:$0xf] %vm5889, %v5806
        %5897 = vst.msk [vmem:[#allocation2 + $0x54] sm:$0xf] %vm5889, %v5808
        %5898 = vst.msk [vmem:[#allocation2 + $0x60] sm:$0xf] %vm5889, %v5810
        %5899 = vst.msk [vmem:[#allocation2 + $0x6c] sm:$0xf] %vm5889, %v5812
        %5900 = vst.msk [vmem:[#allocation2 + $0x78] sm:$0xf] %vm5889, %v5814
        %5901 = vst.msk [vmem:[#allocation2 + $0x84] sm:$0xf] %vm5889, %v5816
        %5902 = vst.msk [vmem:[#allocation2 + $0x90] sm:$0xf] %vm5889, %v5818
        %5903 = vst.msk [vmem:[#allocation2 + $0x9c] sm:$0xf] %vm5889, %v5820
        %5904 = vst.msk [vmem:[#allocation2 + $0xa8] sm:$0xf] %vm5889, %v5822
        %5905 = vst.msk [vmem:[#allocation2 + $0xb4] sm:$0xf] %vm5889, %v5824
        %5906 = vst.msk [vmem:[#allocation2 + $0xc0] sm:$0xf] %vm5889, %v5826
        %5907 = vst.msk [vmem:[#allocation2 + $0xcc] sm:$0xf] %vm5889, %v5828
        %5908 = vst.msk [vmem:[#allocation2 + $0xd8] sm:$0xf] %vm5889, %v5830
        %5909 = vst.msk [vmem:[#allocation2 + $0xe4] sm:$0xf] %vm5889, %v5832
        %5910 = vst.msk [vmem:[#allocation2 + $0xf0] sm:$0xf] %vm5889, %v5834
        %5911 = vst.msk [vmem:[#allocation2 + $0xfc] sm:$0xf] %vm5889, %v5836
        %5912 = vst.msk [vmem:[#allocation2 + $0x108] sm:$0xf] %vm5889, %v5838
        %5913 = vst.msk [vmem:[#allocation2 + $0x114] sm:$0xf] %vm5889, %v5840
        %5914 = vst.msk [vmem:[#allocation2 + $0x120] sm:$0xf] %vm5889, %v5842
        %5915 = vst.msk [vmem:[#allocation2 + $0x12c] sm:$0xf] %vm5889, %v5844
        %5916 = vst.msk [vmem:[#allocation2 + $0x138] sm:$0xf] %vm5889, %v5846
        %5917 = vst.msk [vmem:[#allocation2 + $0x144] sm:$0xf] %vm5889, %v5848
        %5918 = vst.msk [vmem:[#allocation2 + $0x150] sm:$0xf] %vm5889, %v5850
        %5919 = vst.msk [vmem:[#allocation2 + $0x15c] sm:$0xf] %vm5889, %v5852
        %5920 = vst.msk [vmem:[#allocation2 + $0x168] sm:$0xf] %vm5889, %v5854
        %5921 = vst.msk [vmem:[#allocation2 + $0x174] sm:$0xf] %vm5889, %v5856
        %v5922 = vpack.c.bf16 %v1972, %v1968
        %v5923 = vpack.c.bf16 %v1982, %v1978
        %v5924 = vpack.c.bf16 %v1992, %v1988
        %v5925 = vpack.c.bf16 %v2002, %v1998
        %v5926 = vpack.c.bf16 %v2012, %v2008
        %v5927 = vpack.c.bf16 %v2022, %v2018
        %v5928 = vpack.c.bf16 %v2032, %v2028
        %v5929 = vpack.c.bf16 %v2042, %v2038
        %v5930 = vpack.c.bf16 %v2052, %v2048
        %v5931 = vpack.c.bf16 %v2062, %v2058
        %v5932 = vpack.c.bf16 %v2072, %v2068
        %v5933 = vpack.c.bf16 %v2082, %v2078
        %v5934 = vpack.c.bf16 %v2092, %v2088
        %v5935 = vpack.c.bf16 %v2102, %v2098
        %v5936 = vpack.c.bf16 %v2112, %v2108
        %v5937 = vpack.c.bf16 %v2122, %v2118
        %v5938 = vmul.bf16 %v5922, 1040203264
        %v5939 = vmul.bf16 %v5923, 1040203264
        %v5940 = vmul.bf16 %v5924, 1040203264
        %v5941 = vmul.bf16 %v5925, 1040203264
        %v5942 = vmul.bf16 %v5926, 1040203264
        %v5943 = vmul.bf16 %v5927, 1040203264
        %v5944 = vmul.bf16 %v5928, 1040203264
        %v5945 = vmul.bf16 %v5929, 1040203264
        %v5946 = vmul.bf16 %v5930, 1040203264
        %v5947 = vmul.bf16 %v5931, 1040203264
        %v5948 = vmul.bf16 %v5932, 1040203264
        %v5949 = vmul.bf16 %v5933, 1040203264
        %v5950 = vmul.bf16 %v5934, 1040203264
        %v5951 = vmul.bf16 %v5935, 1040203264
        %v5952 = vmul.bf16 %v5936, 1040203264
        %v5953 = vmul.bf16 %v5937, 1040203264
        %v5954 = vpack.c.bf16 %v2742, %v2738
        %v5955 = vpack.c.bf16 %v2752, %v2748
        %v5956 = vpack.c.bf16 %v2762, %v2758
        %v5957 = vpack.c.bf16 %v2772, %v2768
        %v5958 = vpack.c.bf16 %v2782, %v2778
        %v5959 = vpack.c.bf16 %v2792, %v2788
        %v5960 = vpack.c.bf16 %v2802, %v2798
        %v5961 = vpack.c.bf16 %v2812, %v2808
        %v5962 = vpack.c.bf16 %v2822, %v2818
        %v5963 = vpack.c.bf16 %v2832, %v2828
        %v5964 = vpack.c.bf16 %v2842, %v2838
        %v5965 = vpack.c.bf16 %v2852, %v2848
        %v5966 = vpack.c.bf16 %v2862, %v2858
        %v5967 = vpack.c.bf16 %v2872, %v2868
        %v5968 = vpack.c.bf16 %v2882, %v2878
        %v5969 = vpack.c.bf16 %v2892, %v2888
        %v5970 = vpack.c.bf16 %v3130, %v3126
        %v5971 = vpack.c.bf16 %v3140, %v3136
        %v5972 = vpack.c.bf16 %v3150, %v3146
        %v5973 = vpack.c.bf16 %v3160, %v3156
        %v5974 = vpack.c.bf16 %v3170, %v3166
        %v5975 = vpack.c.bf16 %v3180, %v3176
        %v5976 = vpack.c.bf16 %v3190, %v3186
        %v5977 = vpack.c.bf16 %v3200, %v3196
        %v5978 = vpack.c.bf16 %v3210, %v3206
        %v5979 = vpack.c.bf16 %v3220, %v3216
        %v5980 = vpack.c.bf16 %v3230, %v3226
        %v5981 = vpack.c.bf16 %v3240, %v3236
        %v5982 = vpack.c.bf16 %v3250, %v3246
        %v5983 = vpack.c.bf16 %v3260, %v3256
        %v5984 = vpack.c.bf16 %v3270, %v3266
        %v5985 = vpack.c.bf16 %v3280, %v3276
        %v5987 = vsel %vm3703, %v5938, 0
        %v5990 = vsel %vm3703, %v5939, 0
        %v5993 = vsel %vm3703, %v5940, 0
        %v5996 = vsel %vm3703, %v5941, 0
        %v5999 = vsel %vm3703, %v5942, 0
        %v6002 = vsel %vm3703, %v5943, 0
        %v6005 = vsel %vm3703, %v5944, 0
        %v6008 = vsel %vm3703, %v5945, 0
        %v6011 = vsel %vm3703, %v5954, 0
        %v6014 = vsel %vm3703, %v5955, 0
        %v6017 = vsel %vm3703, %v5956, 0
        %v6020 = vsel %vm3703, %v5957, 0
        %v6023 = vsel %vm3703, %v5958, 0
        %v6026 = vsel %vm3703, %v5959, 0
        %v6029 = vsel %vm3703, %v5960, 0
        %v6032 = vsel %vm3703, %v5961, 0
        %6034 = vmatprep.subr.bf16.mxu0 0
        %6035 = vmatpush1.bf16.xpose.msra.mxu0 %v6032
        %6036 = vmatprep.subr.bf16.mxu0 0
        %6037 = vmatpush1.bf16.xpose.msra.mxu0 %v6029
        %6038 = vmatprep.subr.bf16.mxu0 0
        %6039 = vmatpush1.bf16.xpose.msra.mxu0 %v6026
        %6040 = vmatprep.subr.bf16.mxu0 0
        %6041 = vmatpush1.bf16.xpose.msra.mxu0 %v6023
        %6042 = vmatprep.subr.bf16.mxu0 0
        %6043 = vmatpush1.bf16.xpose.msra.mxu0 %v6020
        %6044 = vmatprep.subr.bf16.mxu0 0
        %6045 = vmatpush1.bf16.xpose.msra.mxu0 %v6017
        %6046 = vmatprep.subr.bf16.mxu0 0
        %6047 = vmatpush1.bf16.xpose.msra.mxu0 %v6014
        %6048 = vmatprep.subr.bf16.mxu0 0
        %6049 = vmatpush1.bf16.xpose.msra.mxu0 %v6011
        %6050 = vmatprep.subr.bf16.mxu0 0
        %6051 = vmatpush2.bf16.xpose.msra.mxu0 0
        %6052 = vmatprep.subr.bf16.mxu0 0
        %6053 = vmatpush2.bf16.xpose.msra.mxu0 0
        %6054 = vmatprep.subr.bf16.mxu0 0
        %6055 = vmatpush2.bf16.xpose.msra.mxu0 0
        %6056 = vmatprep.subr.bf16.mxu0 0
        %6057 = vmatpush2.bf16.xpose.msra.mxu0 0
        %6058 = vmatprep.subr.bf16.mxu0 0
        %6059 = vmatpush2.bf16.xpose.msra.mxu0 0
        %6060 = vmatprep.subr.bf16.mxu0 0
        %6061 = vmatpush2.bf16.xpose.msra.mxu0 0
        %6062 = vmatprep.subr.bf16.mxu0 0
        %6063 = vmatpush2.bf16.xpose.msra.mxu0 0
        %6064 = vmatprep.subr.bf16.mxu0 0
        %6065 = vmatpush2.bf16.xpose.msra.mxu0 0
        %6066 = vmatprep.mubr.bf16.mxu0 0
        %6067 = vmatmul.mubr.bf16.gmra.mxu0 %v5987
        %v6068 = vpop.f32.mrf.mxu0
        %v6069 = vadd.f32 0.0, %v6068
        %v6070 = vpop.f32.mrf.mxu0
        %v6071 = vpop.f32.mrf.mxu0
        %v6072 = vadd.f32 0.0, %v6071
        %v6073 = vpop.f32.mrf.mxu0
        %6074 = vmatprep.mubr.bf16.mxu0 0
        %6075 = vmatmul.mubr.bf16.gmra.mxu0 %v5990
        %v6076 = vpop.f32.mrf.mxu0
        %v6077 = vadd.f32 0.0, %v6076
        %v6078 = vpop.f32.mrf.mxu0
        %v6079 = vpop.f32.mrf.mxu0
        %v6080 = vadd.f32 0.0, %v6079
        %v6081 = vpop.f32.mrf.mxu0
        %6082 = vmatprep.mubr.bf16.mxu0 0
        %6083 = vmatmul.mubr.bf16.gmra.mxu0 %v5993
        %v6084 = vpop.f32.mrf.mxu0
        %v6085 = vadd.f32 0.0, %v6084
        %v6086 = vpop.f32.mrf.mxu0
        %v6087 = vpop.f32.mrf.mxu0
        %v6088 = vadd.f32 0.0, %v6087
        %v6089 = vpop.f32.mrf.mxu0
        %6090 = vmatprep.mubr.bf16.mxu0 0
        %6091 = vmatmul.mubr.bf16.gmra.mxu0 %v5996
        %v6092 = vpop.f32.mrf.mxu0
        %v6093 = vadd.f32 0.0, %v6092
        %v6094 = vpop.f32.mrf.mxu0
        %v6095 = vpop.f32.mrf.mxu0
        %v6096 = vadd.f32 0.0, %v6095
        %v6097 = vpop.f32.mrf.mxu0
        %6098 = vmatprep.mubr.bf16.mxu0 0
        %6099 = vmatmul.mubr.bf16.gmra.mxu0 %v5999
        %v6100 = vpop.f32.mrf.mxu0
        %v6101 = vadd.f32 0.0, %v6100
        %v6102 = vpop.f32.mrf.mxu0
        %v6103 = vpop.f32.mrf.mxu0
        %v6104 = vadd.f32 0.0, %v6103
        %v6105 = vpop.f32.mrf.mxu0
        %6106 = vmatprep.mubr.bf16.mxu0 0
        %6107 = vmatmul.mubr.bf16.gmra.mxu0 %v6002
        %v6108 = vpop.f32.mrf.mxu0
        %v6109 = vadd.f32 0.0, %v6108
        %v6110 = vpop.f32.mrf.mxu0
        %v6111 = vpop.f32.mrf.mxu0
        %v6112 = vadd.f32 0.0, %v6111
        %v6113 = vpop.f32.mrf.mxu0
        %6114 = vmatprep.mubr.bf16.mxu0 0
        %6115 = vmatmul.mubr.bf16.gmra.mxu0 %v6005
        %v6116 = vpop.f32.mrf.mxu0
        %v6117 = vadd.f32 0.0, %v6116
        %v6118 = vpop.f32.mrf.mxu0
        %v6119 = vpop.f32.mrf.mxu0
        %v6120 = vadd.f32 0.0, %v6119
        %v6121 = vpop.f32.mrf.mxu0
        %6122 = vmatprep.mubr.bf16.mxu0 0
        %6123 = vmatmul.mubr.bf16.gmra.mxu0 %v6008
        %v6124 = vpop.f32.mrf.mxu0
        %v6125 = vadd.f32 0.0, %v6124
        %v6126 = vpop.f32.mrf.mxu0
        %v6127 = vpop.f32.mrf.mxu0
        %v6128 = vadd.f32 0.0, %v6127
        %v6129 = vpop.f32.mrf.mxu0
        %6130 = vdwg.mxu0
        %v6132 = vsel %vm3703, %v5946, 0
        %v6135 = vsel %vm3703, %v5947, 0
        %v6138 = vsel %vm3703, %v5948, 0
        %v6141 = vsel %vm3703, %v5949, 0
        %v6144 = vsel %vm3703, %v5950, 0
        %v6147 = vsel %vm3703, %v5951, 0
        %v6150 = vsel %vm3703, %v5952, 0
        %v6153 = vsel %vm3703, %v5953, 0
        %v6156 = vsel %vm3703, %v5962, 0
        %v6159 = vsel %vm3703, %v5963, 0
        %v6162 = vsel %vm3703, %v5964, 0
        %v6165 = vsel %vm3703, %v5965, 0
        %v6168 = vsel %vm3703, %v5966, 0
        %v6171 = vsel %vm3703, %v5967, 0
        %v6174 = vsel %vm3703, %v5968, 0
        %v6177 = vsel %vm3703, %v5969, 0
        %6179 = vmatprep.subr.bf16.mxu0 0
        %6180 = vmatpush1.bf16.xpose.msra.mxu0 %v6177
        %6181 = vmatprep.subr.bf16.mxu0 0
        %6182 = vmatpush1.bf16.xpose.msra.mxu0 %v6174
        %6183 = vmatprep.subr.bf16.mxu0 0
        %6184 = vmatpush1.bf16.xpose.msra.mxu0 %v6171
        %6185 = vmatprep.subr.bf16.mxu0 0
        %6186 = vmatpush1.bf16.xpose.msra.mxu0 %v6168
        %6187 = vmatprep.subr.bf16.mxu0 0
        %6188 = vmatpush1.bf16.xpose.msra.mxu0 %v6165
        %6189 = vmatprep.subr.bf16.mxu0 0
        %6190 = vmatpush1.bf16.xpose.msra.mxu0 %v6162
        %6191 = vmatprep.subr.bf16.mxu0 0
        %6192 = vmatpush1.bf16.xpose.msra.mxu0 %v6159
        %6193 = vmatprep.subr.bf16.mxu0 0
        %6194 = vmatpush1.bf16.xpose.msra.mxu0 %v6156
        %6195 = vmatprep.subr.bf16.mxu0 0
        %6196 = vmatpush2.bf16.xpose.msra.mxu0 0
        %6197 = vmatprep.subr.bf16.mxu0 0
        %6198 = vmatpush2.bf16.xpose.msra.mxu0 0
        %6199 = vmatprep.subr.bf16.mxu0 0
        %6200 = vmatpush2.bf16.xpose.msra.mxu0 0
        %6201 = vmatprep.subr.bf16.mxu0 0
        %6202 = vmatpush2.bf16.xpose.msra.mxu0 0
        %6203 = vmatprep.subr.bf16.mxu0 0
        %6204 = vmatpush2.bf16.xpose.msra.mxu0 0
        %6205 = vmatprep.subr.bf16.mxu0 0
        %6206 = vmatpush2.bf16.xpose.msra.mxu0 0
        %6207 = vmatprep.subr.bf16.mxu0 0
        %6208 = vmatpush2.bf16.xpose.msra.mxu0 0
        %6209 = vmatprep.subr.bf16.mxu0 0
        %6210 = vmatpush2.bf16.xpose.msra.mxu0 0
        %6211 = vmatprep.mubr.bf16.mxu0 0
        %6212 = vmatmul.mubr.bf16.gmra.mxu0 %v6132
        %v6213 = vpop.f32.mrf.mxu0
        %v6214 = vadd.f32 0.0, %v6213
        %v6215 = vpop.f32.mrf.mxu0
        %v6216 = vpop.f32.mrf.mxu0
        %v6217 = vadd.f32 0.0, %v6216
        %v6218 = vpop.f32.mrf.mxu0
        %6219 = vmatprep.mubr.bf16.mxu0 0
        %6220 = vmatmul.mubr.bf16.gmra.mxu0 %v6135
        %v6221 = vpop.f32.mrf.mxu0
        %v6222 = vadd.f32 0.0, %v6221
        %v6223 = vpop.f32.mrf.mxu0
        %v6224 = vpop.f32.mrf.mxu0
        %v6225 = vadd.f32 0.0, %v6224
        %v6226 = vpop.f32.mrf.mxu0
        %6227 = vmatprep.mubr.bf16.mxu0 0
        %6228 = vmatmul.mubr.bf16.gmra.mxu0 %v6138
        %v6229 = vpop.f32.mrf.mxu0
        %v6230 = vadd.f32 0.0, %v6229
        %v6231 = vpop.f32.mrf.mxu0
        %v6232 = vpop.f32.mrf.mxu0
        %v6233 = vadd.f32 0.0, %v6232
        %v6234 = vpop.f32.mrf.mxu0
        %6235 = vmatprep.mubr.bf16.mxu0 0
        %6236 = vmatmul.mubr.bf16.gmra.mxu0 %v6141
        %v6237 = vpop.f32.mrf.mxu0
        %v6238 = vadd.f32 0.0, %v6237
        %v6239 = vpop.f32.mrf.mxu0
        %v6240 = vpop.f32.mrf.mxu0
        %v6241 = vadd.f32 0.0, %v6240
        %v6242 = vpop.f32.mrf.mxu0
        %6243 = vmatprep.mubr.bf16.mxu0 0
        %6244 = vmatmul.mubr.bf16.gmra.mxu0 %v6144
        %v6245 = vpop.f32.mrf.mxu0
        %v6246 = vadd.f32 0.0, %v6245
        %v6247 = vpop.f32.mrf.mxu0
        %v6248 = vpop.f32.mrf.mxu0
        %v6249 = vadd.f32 0.0, %v6248
        %v6250 = vpop.f32.mrf.mxu0
        %6251 = vmatprep.mubr.bf16.mxu0 0
        %6252 = vmatmul.mubr.bf16.gmra.mxu0 %v6147
        %v6253 = vpop.f32.mrf.mxu0
        %v6254 = vadd.f32 0.0, %v6253
        %v6255 = vpop.f32.mrf.mxu0
        %v6256 = vpop.f32.mrf.mxu0
        %v6257 = vadd.f32 0.0, %v6256
        %v6258 = vpop.f32.mrf.mxu0
        %6259 = vmatprep.mubr.bf16.mxu0 0
        %6260 = vmatmul.mubr.bf16.gmra.mxu0 %v6150
        %v6261 = vpop.f32.mrf.mxu0
        %v6262 = vadd.f32 0.0, %v6261
        %v6263 = vpop.f32.mrf.mxu0
        %v6264 = vpop.f32.mrf.mxu0
        %v6265 = vadd.f32 0.0, %v6264
        %v6266 = vpop.f32.mrf.mxu0
        %6267 = vmatprep.mubr.bf16.mxu0 0
        %6268 = vmatmul.mubr.bf16.gmra.mxu0 %v6153
        %v6269 = vpop.f32.mrf.mxu0
        %v6270 = vadd.f32 0.0, %v6269
        %v6271 = vpop.f32.mrf.mxu0
        %v6272 = vpop.f32.mrf.mxu0
        %v6273 = vadd.f32 0.0, %v6272
        %v6274 = vpop.f32.mrf.mxu0
        %6275 = vdwg.mxu0
        %v6276 = vsel %vm4010, %v6069, -inf
        %v6277 = vsel %vm4011, %v6072, -inf
        %v6278 = vsel %vm4012, %v6077, -inf
        %v6279 = vsel %vm4013, %v6080, -inf
        %v6280 = vsel %vm4014, %v6085, -inf
        %v6281 = vsel %vm4015, %v6088, -inf
        %v6282 = vsel %vm4016, %v6093, -inf
        %v6283 = vsel %vm4017, %v6096, -inf
        %v6284 = vsel %vm4018, %v6101, -inf
        %v6285 = vsel %vm4019, %v6104, -inf
        %v6286 = vsel %vm4020, %v6109, -inf
        %v6287 = vsel %vm4021, %v6112, -inf
        %v6288 = vsel %vm4022, %v6117, -inf
        %v6289 = vsel %vm4023, %v6120, -inf
        %v6290 = vsel %vm4024, %v6125, -inf
        %v6291 = vsel %vm4025, %v6128, -inf
        %v6292 = vsel %vm4010, %v6214, -inf
        %v6293 = vsel %vm4011, %v6217, -inf
        %v6294 = vsel %vm4012, %v6222, -inf
        %v6295 = vsel %vm4013, %v6225, -inf
        %v6296 = vsel %vm4014, %v6230, -inf
        %v6297 = vsel %vm4015, %v6233, -inf
        %v6298 = vsel %vm4016, %v6238, -inf
        %v6299 = vsel %vm4017, %v6241, -inf
        %v6300 = vsel %vm4018, %v6246, -inf
        %v6301 = vsel %vm4019, %v6249, -inf
        %v6302 = vsel %vm4020, %v6254, -inf
        %v6303 = vsel %vm4021, %v6257, -inf
        %v6304 = vsel %vm4022, %v6262, -inf
        %v6305 = vsel %vm4023, %v6265, -inf
        %v6306 = vsel %vm4024, %v6270, -inf
        %v6307 = vsel %vm4025, %v6273, -inf
        %6308 = vmax.xlane.f32.xlu0 %v6276
        %v6309 = vpop.xlane.xlu0 %6308
        %6310 = vmax.xlane.f32.xlu0 %v6277
        %v6311 = vpop.xlane.xlu0 %6310
        %6312 = vmax.xlane.f32.xlu0 %v6278
        %v6313 = vpop.xlane.xlu0 %6312
        %6314 = vmax.xlane.f32.xlu0 %v6279
        %v6315 = vpop.xlane.xlu0 %6314
        %6316 = vmax.xlane.f32.xlu0 %v6280
        %v6317 = vpop.xlane.xlu0 %6316
        %6318 = vmax.xlane.f32.xlu0 %v6281
        %v6319 = vpop.xlane.xlu0 %6318
        %6320 = vmax.xlane.f32.xlu0 %v6282
        %v6321 = vpop.xlane.xlu0 %6320
        %6322 = vmax.xlane.f32.xlu0 %v6283
        %v6323 = vpop.xlane.xlu0 %6322
        %6324 = vmax.xlane.f32.xlu0 %v6284
        %v6325 = vpop.xlane.xlu0 %6324
        %6326 = vmax.xlane.f32.xlu0 %v6285
        %v6327 = vpop.xlane.xlu0 %6326
        %6328 = vmax.xlane.f32.xlu0 %v6286
        %v6329 = vpop.xlane.xlu0 %6328
        %6330 = vmax.xlane.f32.xlu0 %v6287
        %v6331 = vpop.xlane.xlu0 %6330
        %6332 = vmax.xlane.f32.xlu0 %v6288
        %v6333 = vpop.xlane.xlu0 %6332
        %6334 = vmax.xlane.f32.xlu0 %v6289
        %v6335 = vpop.xlane.xlu0 %6334
        %6336 = vmax.xlane.f32.xlu0 %v6290
        %v6337 = vpop.xlane.xlu0 %6336
        %6338 = vmax.xlane.f32.xlu0 %v6291
        %v6339 = vpop.xlane.xlu0 %6338
        %6340 = vmax.xlane.f32.xlu0 %v6292
        %v6341 = vpop.xlane.xlu0 %6340
        %6342 = vmax.xlane.f32.xlu0 %v6293
        %v6343 = vpop.xlane.xlu0 %6342
        %6344 = vmax.xlane.f32.xlu0 %v6294
        %v6345 = vpop.xlane.xlu0 %6344
        %6346 = vmax.xlane.f32.xlu0 %v6295
        %v6347 = vpop.xlane.xlu0 %6346
        %6348 = vmax.xlane.f32.xlu0 %v6296
        %v6349 = vpop.xlane.xlu0 %6348
        %6350 = vmax.xlane.f32.xlu0 %v6297
        %v6351 = vpop.xlane.xlu0 %6350
        %6352 = vmax.xlane.f32.xlu0 %v6298
        %v6353 = vpop.xlane.xlu0 %6352
        %6354 = vmax.xlane.f32.xlu0 %v6299
        %v6355 = vpop.xlane.xlu0 %6354
        %6356 = vmax.xlane.f32.xlu0 %v6300
        %v6357 = vpop.xlane.xlu0 %6356
        %6358 = vmax.xlane.f32.xlu0 %v6301
        %v6359 = vpop.xlane.xlu0 %6358
        %6360 = vmax.xlane.f32.xlu0 %v6302
        %v6361 = vpop.xlane.xlu0 %6360
        %6362 = vmax.xlane.f32.xlu0 %v6303
        %v6363 = vpop.xlane.xlu0 %6362
        %6364 = vmax.xlane.f32.xlu0 %v6304
        %v6365 = vpop.xlane.xlu0 %6364
        %6366 = vmax.xlane.f32.xlu0 %v6305
        %v6367 = vpop.xlane.xlu0 %6366
        %6368 = vmax.xlane.f32.xlu0 %v6306
        %v6369 = vpop.xlane.xlu0 %6368
        %6370 = vmax.xlane.f32.xlu0 %v6307
        %v6371 = vpop.xlane.xlu0 %6370
        %v6372 = vsub.f32 %v6276, %v6309
        %v6373 = vsub.f32 %v6277, %v6311
        %v6374 = vsub.f32 %v6278, %v6313
        %v6375 = vsub.f32 %v6279, %v6315
        %v6376 = vsub.f32 %v6280, %v6317
        %v6377 = vsub.f32 %v6281, %v6319
        %v6378 = vsub.f32 %v6282, %v6321
        %v6379 = vsub.f32 %v6283, %v6323
        %v6380 = vsub.f32 %v6284, %v6325
        %v6381 = vsub.f32 %v6285, %v6327
        %v6382 = vsub.f32 %v6286, %v6329
        %v6383 = vsub.f32 %v6287, %v6331
        %v6384 = vsub.f32 %v6288, %v6333
        %v6385 = vsub.f32 %v6289, %v6335
        %v6386 = vsub.f32 %v6290, %v6337
        %v6387 = vsub.f32 %v6291, %v6339
        %v6388 = vsub.f32 %v6292, %v6341
        %v6389 = vsub.f32 %v6293, %v6343
        %v6390 = vsub.f32 %v6294, %v6345
        %v6391 = vsub.f32 %v6295, %v6347
        %v6392 = vsub.f32 %v6296, %v6349
        %v6393 = vsub.f32 %v6297, %v6351
        %v6394 = vsub.f32 %v6298, %v6353
        %v6395 = vsub.f32 %v6299, %v6355
        %v6396 = vsub.f32 %v6300, %v6357
        %v6397 = vsub.f32 %v6301, %v6359
        %v6398 = vsub.f32 %v6302, %v6361
        %v6399 = vsub.f32 %v6303, %v6363
        %v6400 = vsub.f32 %v6304, %v6365
        %v6401 = vsub.f32 %v6305, %v6367
        %v6402 = vsub.f32 %v6306, %v6369
        %v6403 = vsub.f32 %v6307, %v6371
        %v6404 = vmul.f32 %v6372, 1.442695
        %v6405 = vpow.pop %v6404
        %v6406 = vmul.f32 %v6373, 1.442695
        %v6407 = vpow.pop %v6406
        %v6408 = vmul.f32 %v6374, 1.442695
        %v6409 = vpow.pop %v6408
        %v6410 = vmul.f32 %v6375, 1.442695
        %v6411 = vpow.pop %v6410
        %v6412 = vmul.f32 %v6376, 1.442695
        %v6413 = vpow.pop %v6412
        %v6414 = vmul.f32 %v6377, 1.442695
        %v6415 = vpow.pop %v6414
        %v6416 = vmul.f32 %v6378, 1.442695
        %v6417 = vpow.pop %v6416
        %v6418 = vmul.f32 %v6379, 1.442695
        %v6419 = vpow.pop %v6418
        %v6420 = vmul.f32 %v6380, 1.442695
        %v6421 = vpow.pop %v6420
        %v6422 = vmul.f32 %v6381, 1.442695
        %v6423 = vpow.pop %v6422
        %v6424 = vmul.f32 %v6382, 1.442695
        %v6425 = vpow.pop %v6424
        %v6426 = vmul.f32 %v6383, 1.442695
        %v6427 = vpow.pop %v6426
        %v6428 = vmul.f32 %v6384, 1.442695
        %v6429 = vpow.pop %v6428
        %v6430 = vmul.f32 %v6385, 1.442695
        %v6431 = vpow.pop %v6430
        %v6432 = vmul.f32 %v6386, 1.442695
        %v6433 = vpow.pop %v6432
        %v6434 = vmul.f32 %v6387, 1.442695
        %v6435 = vpow.pop %v6434
        %v6436 = vmul.f32 %v6388, 1.442695
        %v6437 = vpow.pop %v6436
        %v6438 = vmul.f32 %v6389, 1.442695
        %v6439 = vpow.pop %v6438
        %v6440 = vmul.f32 %v6390, 1.442695
        %v6441 = vpow.pop %v6440
        %v6442 = vmul.f32 %v6391, 1.442695
        %v6443 = vpow.pop %v6442
        %v6444 = vmul.f32 %v6392, 1.442695
        %v6445 = vpow.pop %v6444
        %v6446 = vmul.f32 %v6393, 1.442695
        %v6447 = vpow.pop %v6446
        %v6448 = vmul.f32 %v6394, 1.442695
        %v6449 = vpow.pop %v6448
        %v6450 = vmul.f32 %v6395, 1.442695
        %v6451 = vpow.pop %v6450
        %v6452 = vmul.f32 %v6396, 1.442695
        %v6453 = vpow.pop %v6452
        %v6454 = vmul.f32 %v6397, 1.442695
        %v6455 = vpow.pop %v6454
        %v6456 = vmul.f32 %v6398, 1.442695
        %v6457 = vpow.pop %v6456
        %v6458 = vmul.f32 %v6399, 1.442695
        %v6459 = vpow.pop %v6458
        %v6460 = vmul.f32 %v6400, 1.442695
        %v6461 = vpow.pop %v6460
        %v6462 = vmul.f32 %v6401, 1.442695
        %v6463 = vpow.pop %v6462
        %v6464 = vmul.f32 %v6402, 1.442695
        %v6465 = vpow.pop %v6464
        %v6466 = vmul.f32 %v6403, 1.442695
        %v6467 = vpow.pop %v6466
        %6468 = vadd.xlane.f32.xlu0 %v6405
        %v6469 = vpop.xlane.xlu0 %6468
        %6470 = vadd.xlane.f32.xlu0 %v6407
        %v6471 = vpop.xlane.xlu0 %6470
        %6472 = vadd.xlane.f32.xlu0 %v6409
        %v6473 = vpop.xlane.xlu0 %6472
        %6474 = vadd.xlane.f32.xlu0 %v6411
        %v6475 = vpop.xlane.xlu0 %6474
        %6476 = vadd.xlane.f32.xlu0 %v6413
        %v6477 = vpop.xlane.xlu0 %6476
        %6478 = vadd.xlane.f32.xlu0 %v6415
        %v6479 = vpop.xlane.xlu0 %6478
        %6480 = vadd.xlane.f32.xlu0 %v6417
        %v6481 = vpop.xlane.xlu0 %6480
        %6482 = vadd.xlane.f32.xlu0 %v6419
        %v6483 = vpop.xlane.xlu0 %6482
        %6484 = vadd.xlane.f32.xlu0 %v6421
        %v6485 = vpop.xlane.xlu0 %6484
        %6486 = vadd.xlane.f32.xlu0 %v6423
        %v6487 = vpop.xlane.xlu0 %6486
        %6488 = vadd.xlane.f32.xlu0 %v6425
        %v6489 = vpop.xlane.xlu0 %6488
        %6490 = vadd.xlane.f32.xlu0 %v6427
        %v6491 = vpop.xlane.xlu0 %6490
        %6492 = vadd.xlane.f32.xlu0 %v6429
        %v6493 = vpop.xlane.xlu0 %6492
        %6494 = vadd.xlane.f32.xlu0 %v6431
        %v6495 = vpop.xlane.xlu0 %6494
        %6496 = vadd.xlane.f32.xlu0 %v6433
        %v6497 = vpop.xlane.xlu0 %6496
        %6498 = vadd.xlane.f32.xlu0 %v6435
        %v6499 = vpop.xlane.xlu0 %6498
        %6500 = vadd.xlane.f32.xlu0 %v6437
        %v6501 = vpop.xlane.xlu0 %6500
        %6502 = vadd.xlane.f32.xlu0 %v6439
        %v6503 = vpop.xlane.xlu0 %6502
        %6504 = vadd.xlane.f32.xlu0 %v6441
        %v6505 = vpop.xlane.xlu0 %6504
        %6506 = vadd.xlane.f32.xlu0 %v6443
        %v6507 = vpop.xlane.xlu0 %6506
        %6508 = vadd.xlane.f32.xlu0 %v6445
        %v6509 = vpop.xlane.xlu0 %6508
        %6510 = vadd.xlane.f32.xlu0 %v6447
        %v6511 = vpop.xlane.xlu0 %6510
        %6512 = vadd.xlane.f32.xlu0 %v6449
        %v6513 = vpop.xlane.xlu0 %6512
        %6514 = vadd.xlane.f32.xlu0 %v6451
        %v6515 = vpop.xlane.xlu0 %6514
        %6516 = vadd.xlane.f32.xlu0 %v6453
        %v6517 = vpop.xlane.xlu0 %6516
        %6518 = vadd.xlane.f32.xlu0 %v6455
        %v6519 = vpop.xlane.xlu0 %6518
        %6520 = vadd.xlane.f32.xlu0 %v6457
        %v6521 = vpop.xlane.xlu0 %6520
        %6522 = vadd.xlane.f32.xlu0 %v6459
        %v6523 = vpop.xlane.xlu0 %6522
        %6524 = vadd.xlane.f32.xlu0 %v6461
        %v6525 = vpop.xlane.xlu0 %6524
        %6526 = vadd.xlane.f32.xlu0 %v6463
        %v6527 = vpop.xlane.xlu0 %6526
        %6528 = vadd.xlane.f32.xlu0 %v6465
        %v6529 = vpop.xlane.xlu0 %6528
        %6530 = vadd.xlane.f32.xlu0 %v6467
        %v6531 = vpop.xlane.xlu0 %6530
        %v6532 = vrcp.pop %v6469
        %v6533 = vrcp.pop %v6471
        %v6534 = vrcp.pop %v6473
        %v6535 = vrcp.pop %v6475
        %v6536 = vrcp.pop %v6477
        %v6537 = vrcp.pop %v6479
        %v6538 = vrcp.pop %v6481
        %v6539 = vrcp.pop %v6483
        %v6540 = vrcp.pop %v6485
        %v6541 = vrcp.pop %v6487
        %v6542 = vrcp.pop %v6489
        %v6543 = vrcp.pop %v6491
        %v6544 = vrcp.pop %v6493
        %v6545 = vrcp.pop %v6495
        %v6546 = vrcp.pop %v6497
        %v6547 = vrcp.pop %v6499
        %v6548 = vrcp.pop %v6501
        %v6549 = vrcp.pop %v6503
        %v6550 = vrcp.pop %v6505
        %v6551 = vrcp.pop %v6507
        %v6552 = vrcp.pop %v6509
        %v6553 = vrcp.pop %v6511
        %v6554 = vrcp.pop %v6513
        %v6555 = vrcp.pop %v6515
        %v6556 = vrcp.pop %v6517
        %v6557 = vrcp.pop %v6519
        %v6558 = vrcp.pop %v6521
        %v6559 = vrcp.pop %v6523
        %v6560 = vrcp.pop %v6525
        %v6561 = vrcp.pop %v6527
        %v6562 = vrcp.pop %v6529
        %v6563 = vrcp.pop %v6531
        %v6564 = vmul.f32 %v6405, %v6532
        %v6565 = vmul.f32 %v6407, %v6533
        %v6566 = vmul.f32 %v6409, %v6534
        %v6567 = vmul.f32 %v6411, %v6535
        %v6568 = vmul.f32 %v6413, %v6536
        %v6569 = vmul.f32 %v6415, %v6537
        %v6570 = vmul.f32 %v6417, %v6538
        %v6571 = vmul.f32 %v6419, %v6539
        %v6572 = vmul.f32 %v6421, %v6540
        %v6573 = vmul.f32 %v6423, %v6541
        %v6574 = vmul.f32 %v6425, %v6542
        %v6575 = vmul.f32 %v6427, %v6543
        %v6576 = vmul.f32 %v6429, %v6544
        %v6577 = vmul.f32 %v6431, %v6545
        %v6578 = vmul.f32 %v6433, %v6546
        %v6579 = vmul.f32 %v6435, %v6547
        %v6580 = vmul.f32 %v6437, %v6548
        %v6581 = vmul.f32 %v6439, %v6549
        %v6582 = vmul.f32 %v6441, %v6550
        %v6583 = vmul.f32 %v6443, %v6551
        %v6584 = vmul.f32 %v6445, %v6552
        %v6585 = vmul.f32 %v6447, %v6553
        %v6586 = vmul.f32 %v6449, %v6554
        %v6587 = vmul.f32 %v6451, %v6555
        %v6588 = vmul.f32 %v6453, %v6556
        %v6589 = vmul.f32 %v6455, %v6557
        %v6590 = vmul.f32 %v6457, %v6558
        %v6591 = vmul.f32 %v6459, %v6559
        %v6592 = vmul.f32 %v6461, %v6560
        %v6593 = vmul.f32 %v6463, %v6561
        %v6594 = vmul.f32 %v6465, %v6562
        %v6595 = vmul.f32 %v6467, %v6563
        %v6596 = vpack.c.bf16 %v6565, %v6564
        %v6597 = vpack.c.bf16 %v6567, %v6566
        %v6598 = vpack.c.bf16 %v6569, %v6568
        %v6599 = vpack.c.bf16 %v6571, %v6570
        %v6600 = vpack.c.bf16 %v6573, %v6572
        %v6601 = vpack.c.bf16 %v6575, %v6574
        %v6602 = vpack.c.bf16 %v6577, %v6576
        %v6603 = vpack.c.bf16 %v6579, %v6578
        %v6604 = vpack.c.bf16 %v6581, %v6580
        %v6605 = vpack.c.bf16 %v6583, %v6582
        %v6606 = vpack.c.bf16 %v6585, %v6584
        %v6607 = vpack.c.bf16 %v6587, %v6586
        %v6608 = vpack.c.bf16 %v6589, %v6588
        %v6609 = vpack.c.bf16 %v6591, %v6590
        %v6610 = vpack.c.bf16 %v6593, %v6592
        %v6611 = vpack.c.bf16 %v6595, %v6594
        %6612 = vmatprep.subr.bf16.mxu0 0
        %6613 = vmatpush1.bf16.msra.mxu0 %v5977
        %6614 = vmatprep.subr.bf16.mxu0 0
        %6615 = vmatpush1.bf16.msra.mxu0 %v5976
        %6616 = vmatprep.subr.bf16.mxu0 0
        %6617 = vmatpush1.bf16.msra.mxu0 %v5975
        %6618 = vmatprep.subr.bf16.mxu0 0
        %6619 = vmatpush1.bf16.msra.mxu0 %v5974
        %6620 = vmatprep.subr.bf16.mxu0 0
        %6621 = vmatpush1.bf16.msra.mxu0 %v5973
        %6622 = vmatprep.subr.bf16.mxu0 0
        %6623 = vmatpush1.bf16.msra.mxu0 %v5972
        %6624 = vmatprep.subr.bf16.mxu0 0
        %6625 = vmatpush1.bf16.msra.mxu0 %v5971
        %6626 = vmatprep.subr.bf16.mxu0 0
        %6627 = vmatpush1.bf16.msra.mxu0 %v5970
        %6628 = vmatprep.subr.bf16.mxu0 0
        %6629 = vmatpush2.bf16.msra.mxu0 0
        %6630 = vmatprep.subr.bf16.mxu0 0
        %6631 = vmatpush2.bf16.msra.mxu0 0
        %6632 = vmatprep.subr.bf16.mxu0 0
        %6633 = vmatpush2.bf16.msra.mxu0 0
        %6634 = vmatprep.subr.bf16.mxu0 0
        %6635 = vmatpush2.bf16.msra.mxu0 0
        %6636 = vmatprep.subr.bf16.mxu0 0
        %6637 = vmatpush2.bf16.msra.mxu0 0
        %6638 = vmatprep.subr.bf16.mxu0 0
        %6639 = vmatpush2.bf16.msra.mxu0 0
        %6640 = vmatprep.subr.bf16.mxu0 0
        %6641 = vmatpush2.bf16.msra.mxu0 0
        %6642 = vmatprep.subr.bf16.mxu0 0
        %6643 = vmatpush2.bf16.msra.mxu0 0
        %6644 = vmatprep.mubr.bf16.mxu0 0
        %6645 = vmatmul.mubr.bf16.gmra.mxu0 %v6596
        %v6646 = vpop.f32.mrf.mxu0
        %v6647 = vadd.f32 0.0, %v6646
        %v6648 = vpop.f32.mrf.mxu0
        %v6649 = vpop.f32.mrf.mxu0
        %v6650 = vadd.f32 0.0, %v6649
        %v6651 = vpop.f32.mrf.mxu0
        %6652 = vmatprep.mubr.bf16.mxu0 0
        %6653 = vmatmul.mubr.bf16.gmra.mxu0 %v6597
        %v6654 = vpop.f32.mrf.mxu0
        %v6655 = vadd.f32 0.0, %v6654
        %v6656 = vpop.f32.mrf.mxu0
        %v6657 = vpop.f32.mrf.mxu0
        %v6658 = vadd.f32 0.0, %v6657
        %v6659 = vpop.f32.mrf.mxu0
        %6660 = vmatprep.mubr.bf16.mxu0 0
        %6661 = vmatmul.mubr.bf16.gmra.mxu0 %v6598
        %v6662 = vpop.f32.mrf.mxu0
        %v6663 = vadd.f32 0.0, %v6662
        %v6664 = vpop.f32.mrf.mxu0
        %v6665 = vpop.f32.mrf.mxu0
        %v6666 = vadd.f32 0.0, %v6665
        %v6667 = vpop.f32.mrf.mxu0
        %6668 = vmatprep.mubr.bf16.mxu0 0
        %6669 = vmatmul.mubr.bf16.gmra.mxu0 %v6599
        %v6670 = vpop.f32.mrf.mxu0
        %v6671 = vadd.f32 0.0, %v6670
        %v6672 = vpop.f32.mrf.mxu0
        %v6673 = vpop.f32.mrf.mxu0
        %v6674 = vadd.f32 0.0, %v6673
        %v6675 = vpop.f32.mrf.mxu0
        %6676 = vmatprep.mubr.bf16.mxu0 0
        %6677 = vmatmul.mubr.bf16.gmra.mxu0 %v6600
        %v6678 = vpop.f32.mrf.mxu0
        %v6679 = vadd.f32 0.0, %v6678
        %v6680 = vpop.f32.mrf.mxu0
        %v6681 = vpop.f32.mrf.mxu0
        %v6682 = vadd.f32 0.0, %v6681
        %v6683 = vpop.f32.mrf.mxu0
        %6684 = vmatprep.mubr.bf16.mxu0 0
        %6685 = vmatmul.mubr.bf16.gmra.mxu0 %v6601
        %v6686 = vpop.f32.mrf.mxu0
        %v6687 = vadd.f32 0.0, %v6686
        %v6688 = vpop.f32.mrf.mxu0
        %v6689 = vpop.f32.mrf.mxu0
        %v6690 = vadd.f32 0.0, %v6689
        %v6691 = vpop.f32.mrf.mxu0
        %6692 = vmatprep.mubr.bf16.mxu0 0
        %6693 = vmatmul.mubr.bf16.gmra.mxu0 %v6602
        %v6694 = vpop.f32.mrf.mxu0
        %v6695 = vadd.f32 0.0, %v6694
        %v6696 = vpop.f32.mrf.mxu0
        %v6697 = vpop.f32.mrf.mxu0
        %v6698 = vadd.f32 0.0, %v6697
        %v6699 = vpop.f32.mrf.mxu0
        %6700 = vmatprep.mubr.bf16.mxu0 0
        %6701 = vmatmul.mubr.bf16.gmra.mxu0 %v6603
        %v6702 = vpop.f32.mrf.mxu0
        %v6703 = vadd.f32 0.0, %v6702
        %v6704 = vpop.f32.mrf.mxu0
        %v6705 = vpop.f32.mrf.mxu0
        %v6706 = vadd.f32 0.0, %v6705
        %v6707 = vpop.f32.mrf.mxu0
        %6708 = vdwg.mxu0
        %6709 = vmatprep.subr.bf16.mxu0 0
        %6710 = vmatpush1.bf16.msra.mxu0 %v5985
        %6711 = vmatprep.subr.bf16.mxu0 0
        %6712 = vmatpush1.bf16.msra.mxu0 %v5984
        %6713 = vmatprep.subr.bf16.mxu0 0
        %6714 = vmatpush1.bf16.msra.mxu0 %v5983
        %6715 = vmatprep.subr.bf16.mxu0 0
        %6716 = vmatpush1.bf16.msra.mxu0 %v5982
        %6717 = vmatprep.subr.bf16.mxu0 0
        %6718 = vmatpush1.bf16.msra.mxu0 %v5981
        %6719 = vmatprep.subr.bf16.mxu0 0
        %6720 = vmatpush1.bf16.msra.mxu0 %v5980
        %6721 = vmatprep.subr.bf16.mxu0 0
        %6722 = vmatpush1.bf16.msra.mxu0 %v5979
        %6723 = vmatprep.subr.bf16.mxu0 0
        %6724 = vmatpush1.bf16.msra.mxu0 %v5978
        %6725 = vmatprep.subr.bf16.mxu0 0
        %6726 = vmatpush2.bf16.msra.mxu0 0
        %6727 = vmatprep.subr.bf16.mxu0 0
        %6728 = vmatpush2.bf16.msra.mxu0 0
        %6729 = vmatprep.subr.bf16.mxu0 0
        %6730 = vmatpush2.bf16.msra.mxu0 0
        %6731 = vmatprep.subr.bf16.mxu0 0
        %6732 = vmatpush2.bf16.msra.mxu0 0
        %6733 = vmatprep.subr.bf16.mxu0 0
        %6734 = vmatpush2.bf16.msra.mxu0 0
        %6735 = vmatprep.subr.bf16.mxu0 0
        %6736 = vmatpush2.bf16.msra.mxu0 0
        %6737 = vmatprep.subr.bf16.mxu0 0
        %6738 = vmatpush2.bf16.msra.mxu0 0
        %6739 = vmatprep.subr.bf16.mxu0 0
        %6740 = vmatpush2.bf16.msra.mxu0 0
        %6741 = vmatprep.mubr.bf16.mxu0 0
        %6742 = vmatmul.mubr.bf16.gmra.mxu0 %v6604
        %v6743 = vpop.f32.mrf.mxu0
        %v6744 = vadd.f32 0.0, %v6743
        %v6745 = vpop.f32.mrf.mxu0
        %v6746 = vpop.f32.mrf.mxu0
        %v6747 = vadd.f32 0.0, %v6746
        %v6748 = vpop.f32.mrf.mxu0
        %6749 = vmatprep.mubr.bf16.mxu0 0
        %6750 = vmatmul.mubr.bf16.gmra.mxu0 %v6605
        %v6751 = vpop.f32.mrf.mxu0
        %v6752 = vadd.f32 0.0, %v6751
        %v6753 = vpop.f32.mrf.mxu0
        %v6754 = vpop.f32.mrf.mxu0
        %v6755 = vadd.f32 0.0, %v6754
        %v6756 = vpop.f32.mrf.mxu0
        %6757 = vmatprep.mubr.bf16.mxu0 0
        %6758 = vmatmul.mubr.bf16.gmra.mxu0 %v6606
        %v6759 = vpop.f32.mrf.mxu0
        %v6760 = vadd.f32 0.0, %v6759
        %v6761 = vpop.f32.mrf.mxu0
        %v6762 = vpop.f32.mrf.mxu0
        %v6763 = vadd.f32 0.0, %v6762
        %v6764 = vpop.f32.mrf.mxu0
        %6765 = vmatprep.mubr.bf16.mxu0 0
        %6766 = vmatmul.mubr.bf16.gmra.mxu0 %v6607
        %v6767 = vpop.f32.mrf.mxu0
        %v6768 = vadd.f32 0.0, %v6767
        %v6769 = vpop.f32.mrf.mxu0
        %v6770 = vpop.f32.mrf.mxu0
        %v6771 = vadd.f32 0.0, %v6770
        %v6772 = vpop.f32.mrf.mxu0
        %6773 = vmatprep.mubr.bf16.mxu0 0
        %6774 = vmatmul.mubr.bf16.gmra.mxu0 %v6608
        %v6775 = vpop.f32.mrf.mxu0
        %v6776 = vadd.f32 0.0, %v6775
        %v6777 = vpop.f32.mrf.mxu0
        %v6778 = vpop.f32.mrf.mxu0
        %v6779 = vadd.f32 0.0, %v6778
        %v6780 = vpop.f32.mrf.mxu0
        %6781 = vmatprep.mubr.bf16.mxu0 0
        %6782 = vmatmul.mubr.bf16.gmra.mxu0 %v6609
        %v6783 = vpop.f32.mrf.mxu0
        %v6784 = vadd.f32 0.0, %v6783
        %v6785 = vpop.f32.mrf.mxu0
        %v6786 = vpop.f32.mrf.mxu0
        %v6787 = vadd.f32 0.0, %v6786
        %v6788 = vpop.f32.mrf.mxu0
        %6789 = vmatprep.mubr.bf16.mxu0 0
        %6790 = vmatmul.mubr.bf16.gmra.mxu0 %v6610
        %v6791 = vpop.f32.mrf.mxu0
        %v6792 = vadd.f32 0.0, %v6791
        %v6793 = vpop.f32.mrf.mxu0
        %v6794 = vpop.f32.mrf.mxu0
        %v6795 = vadd.f32 0.0, %v6794
        %v6796 = vpop.f32.mrf.mxu0
        %6797 = vmatprep.mubr.bf16.mxu0 0
        %6798 = vmatmul.mubr.bf16.gmra.mxu0 %v6611
        %v6799 = vpop.f32.mrf.mxu0
        %v6800 = vadd.f32 0.0, %v6799
        %v6801 = vpop.f32.mrf.mxu0
        %v6802 = vpop.f32.mrf.mxu0
        %v6803 = vadd.f32 0.0, %v6802
        %v6804 = vpop.f32.mrf.mxu0
        %6805 = vdwg.mxu0
        %v6806 = vpack.c.bf16 %v6650, %v6647
        %v6807 = vpack.c.bf16 %v6658, %v6655
        %v6808 = vpack.c.bf16 %v6666, %v6663
        %v6809 = vpack.c.bf16 %v6674, %v6671
        %v6810 = vpack.c.bf16 %v6682, %v6679
        %v6811 = vpack.c.bf16 %v6690, %v6687
        %v6812 = vpack.c.bf16 %v6698, %v6695
        %v6813 = vpack.c.bf16 %v6706, %v6703
        %v6814 = vpack.c.bf16 %v6747, %v6744
        %v6815 = vpack.c.bf16 %v6755, %v6752
        %v6816 = vpack.c.bf16 %v6763, %v6760
        %v6817 = vpack.c.bf16 %v6771, %v6768
        %v6818 = vpack.c.bf16 %v6779, %v6776
        %v6819 = vpack.c.bf16 %v6787, %v6784
        %v6820 = vpack.c.bf16 %v6795, %v6792
        %v6821 = vpack.c.bf16 %v6803, %v6800
        %v6838 = vunpack.c.l.b16 %v6806
        %v6839 = vunpack.c.h.b16 %v6806
        %v6840 = vunpack.c.l.b16 %v6807
        %v6841 = vunpack.c.h.b16 %v6807
        %v6842 = vunpack.c.l.b16 %v6808
        %v6843 = vunpack.c.h.b16 %v6808
        %v6844 = vunpack.c.l.b16 %v6809
        %v6845 = vunpack.c.h.b16 %v6809
        %v6846 = vunpack.c.l.b16 %v6810
        %v6847 = vunpack.c.h.b16 %v6810
        %v6848 = vunpack.c.l.b16 %v6811
        %v6849 = vunpack.c.h.b16 %v6811
        %v6850 = vunpack.c.l.b16 %v6812
        %v6851 = vunpack.c.h.b16 %v6812
        %v6852 = vunpack.c.l.b16 %v6813
        %v6853 = vunpack.c.h.b16 %v6813
        %v6854 = vunpack.c.l.b16 %v6814
        %v6855 = vunpack.c.h.b16 %v6814
        %v6856 = vunpack.c.l.b16 %v6815
        %v6857 = vunpack.c.h.b16 %v6815
        %v6858 = vunpack.c.l.b16 %v6816
        %v6859 = vunpack.c.h.b16 %v6816
        %v6860 = vunpack.c.l.b16 %v6817
        %v6861 = vunpack.c.h.b16 %v6817
        %v6862 = vunpack.c.l.b16 %v6818
        %v6863 = vunpack.c.h.b16 %v6818
        %v6864 = vunpack.c.l.b16 %v6819
        %v6865 = vunpack.c.h.b16 %v6819
        %v6866 = vunpack.c.l.b16 %v6820
        %v6867 = vunpack.c.h.b16 %v6820
        %v6868 = vunpack.c.l.b16 %v6821
        %v6869 = vunpack.c.h.b16 %v6821
        %v6870 = vpack.c.b16 %v6838, %v6838
        %v6871 = vpack.c.b16 %v6839, %v6839
        %v6872 = vpack.c.b16 %v6840, %v6840
        %v6873 = vpack.c.b16 %v6841, %v6841
        %v6874 = vpack.c.b16 %v6842, %v6842
        %v6875 = vpack.c.b16 %v6843, %v6843
        %v6876 = vpack.c.b16 %v6844, %v6844
        %v6877 = vpack.c.b16 %v6845, %v6845
        %v6878 = vpack.c.b16 %v6846, %v6846
        %v6879 = vpack.c.b16 %v6847, %v6847
        %v6880 = vpack.c.b16 %v6848, %v6848
        %v6881 = vpack.c.b16 %v6849, %v6849
        %v6882 = vpack.c.b16 %v6850, %v6850
        %v6883 = vpack.c.b16 %v6851, %v6851
        %v6884 = vpack.c.b16 %v6852, %v6852
        %v6885 = vpack.c.b16 %v6853, %v6853
        %v6886 = vpack.c.b16 %v6854, %v6854
        %v6887 = vpack.c.b16 %v6855, %v6855
        %v6888 = vpack.c.b16 %v6856, %v6856
        %v6889 = vpack.c.b16 %v6857, %v6857
        %v6890 = vpack.c.b16 %v6858, %v6858
        %v6891 = vpack.c.b16 %v6859, %v6859
        %v6892 = vpack.c.b16 %v6860, %v6860
        %v6893 = vpack.c.b16 %v6861, %v6861
        %v6894 = vpack.c.b16 %v6862, %v6862
        %v6895 = vpack.c.b16 %v6863, %v6863
        %v6896 = vpack.c.b16 %v6864, %v6864
        %v6897 = vpack.c.b16 %v6865, %v6865
        %v6898 = vpack.c.b16 %v6866, %v6866
        %v6899 = vpack.c.b16 %v6867, %v6867
        %v6900 = vpack.c.b16 %v6868, %v6868
        %v6901 = vpack.c.b16 %v6869, %v6869
        %6934 = vst.msk [vmem:[#allocation2 + $0x4] sm:$0xf] %vm4684, %v6870
        %6935 = vst.msk [vmem:[#allocation2 + $0x10] sm:$0xf] %vm4684, %v6871
        %6936 = vst.msk [vmem:[#allocation2 + $0x1c] sm:$0xf] %vm4684, %v6872
        %6937 = vst.msk [vmem:[#allocation2 + $0x28] sm:$0xf] %vm4684, %v6873
        %6938 = vst.msk [vmem:[#allocation2 + $0x34] sm:$0xf] %vm4684, %v6874
        %6939 = vst.msk [vmem:[#allocation2 + $0x40] sm:$0xf] %vm4684, %v6875
        %6940 = vst.msk [vmem:[#allocation2 + $0x4c] sm:$0xf] %vm4684, %v6876
        %6941 = vst.msk [vmem:[#allocation2 + $0x58] sm:$0xf] %vm4684, %v6877
        %6942 = vst.msk [vmem:[#allocation2 + $0x64] sm:$0xf] %vm4684, %v6878
        %6943 = vst.msk [vmem:[#allocation2 + $0x70] sm:$0xf] %vm4684, %v6879
        %6944 = vst.msk [vmem:[#allocation2 + $0x7c] sm:$0xf] %vm4684, %v6880
        %6945 = vst.msk [vmem:[#allocation2 + $0x88] sm:$0xf] %vm4684, %v6881
        %6946 = vst.msk [vmem:[#allocation2 + $0x94] sm:$0xf] %vm4684, %v6882
        %6947 = vst.msk [vmem:[#allocation2 + $0xa0] sm:$0xf] %vm4684, %v6883
        %6948 = vst.msk [vmem:[#allocation2 + $0xac] sm:$0xf] %vm4684, %v6884
        %6949 = vst.msk [vmem:[#allocation2 + $0xb8] sm:$0xf] %vm4684, %v6885
        %6950 = vst.msk [vmem:[#allocation2 + $0xc4] sm:$0xf] %vm4684, %v6886
        %6951 = vst.msk [vmem:[#allocation2 + $0xd0] sm:$0xf] %vm4684, %v6887
        %6952 = vst.msk [vmem:[#allocation2 + $0xdc] sm:$0xf] %vm4684, %v6888
        %6953 = vst.msk [vmem:[#allocation2 + $0xe8] sm:$0xf] %vm4684, %v6889
        %6954 = vst.msk [vmem:[#allocation2 + $0xf4] sm:$0xf] %vm4684, %v6890
        %6955 = vst.msk [vmem:[#allocation2 + $0x100] sm:$0xf] %vm4684, %v6891
        %6956 = vst.msk [vmem:[#allocation2 + $0x10c] sm:$0xf] %vm4684, %v6892
        %6957 = vst.msk [vmem:[#allocation2 + $0x118] sm:$0xf] %vm4684, %v6893
        %6958 = vst.msk [vmem:[#allocation2 + $0x124] sm:$0xf] %vm4684, %v6894
        %6959 = vst.msk [vmem:[#allocation2 + $0x130] sm:$0xf] %vm4684, %v6895
        %6960 = vst.msk [vmem:[#allocation2 + $0x13c] sm:$0xf] %vm4684, %v6896
        %6961 = vst.msk [vmem:[#allocation2 + $0x148] sm:$0xf] %vm4684, %v6897
        %6962 = vst.msk [vmem:[#allocation2 + $0x154] sm:$0xf] %vm4684, %v6898
        %6963 = vst.msk [vmem:[#allocation2 + $0x160] sm:$0xf] %vm4684, %v6899
        %6964 = vst.msk [vmem:[#allocation2 + $0x16c] sm:$0xf] %vm4684, %v6900
        %6965 = vst.msk [vmem:[#allocation2 + $0x178] sm:$0xf] %vm4684, %v6901
        %6974 = vrot.lane.b32.xlu0 %v5938, 64
        %v6975 = vpop.permute.xlu0 %6974
        %6976 = vrot.lane.b32.xlu0 %v5939, 64
        %v6977 = vpop.permute.xlu0 %6976
        %6978 = vrot.lane.b32.xlu0 %v5940, 64
        %v6979 = vpop.permute.xlu0 %6978
        %6980 = vrot.lane.b32.xlu0 %v5941, 64
        %v6981 = vpop.permute.xlu0 %6980
        %6982 = vrot.lane.b32.xlu0 %v5942, 64
        %v6983 = vpop.permute.xlu0 %6982
        %6984 = vrot.lane.b32.xlu0 %v5943, 64
        %v6985 = vpop.permute.xlu0 %6984
        %6986 = vrot.lane.b32.xlu0 %v5944, 64
        %v6987 = vpop.permute.xlu0 %6986
        %6988 = vrot.lane.b32.xlu0 %v5945, 64
        %v6989 = vpop.permute.xlu0 %6988
        %6998 = vrot.lane.b32.xlu0 %v5954, 64
        %v6999 = vpop.permute.xlu0 %6998
        %7000 = vrot.lane.b32.xlu0 %v5955, 64
        %v7001 = vpop.permute.xlu0 %7000
        %7002 = vrot.lane.b32.xlu0 %v5956, 64
        %v7003 = vpop.permute.xlu0 %7002
        %7004 = vrot.lane.b32.xlu0 %v5957, 64
        %v7005 = vpop.permute.xlu0 %7004
        %7006 = vrot.lane.b32.xlu0 %v5958, 64
        %v7007 = vpop.permute.xlu0 %7006
        %7008 = vrot.lane.b32.xlu0 %v5959, 64
        %v7009 = vpop.permute.xlu0 %7008
        %7010 = vrot.lane.b32.xlu0 %v5960, 64
        %v7011 = vpop.permute.xlu0 %7010
        %7012 = vrot.lane.b32.xlu0 %v5961, 64
        %v7013 = vpop.permute.xlu0 %7012
        %v7015 = vsel %vm3703, %v6975, 0
        %v7018 = vsel %vm3703, %v6977, 0
        %v7021 = vsel %vm3703, %v6979, 0
        %v7024 = vsel %vm3703, %v6981, 0
        %v7027 = vsel %vm3703, %v6983, 0
        %v7030 = vsel %vm3703, %v6985, 0
        %v7033 = vsel %vm3703, %v6987, 0
        %v7036 = vsel %vm3703, %v6989, 0
        %v7039 = vsel %vm3703, %v6999, 0
        %v7042 = vsel %vm3703, %v7001, 0
        %v7045 = vsel %vm3703, %v7003, 0
        %v7048 = vsel %vm3703, %v7005, 0
        %v7051 = vsel %vm3703, %v7007, 0
        %v7054 = vsel %vm3703, %v7009, 0
        %v7057 = vsel %vm3703, %v7011, 0
        %v7060 = vsel %vm3703, %v7013, 0
        %7062 = vmatprep.subr.bf16.mxu0 0
        %7063 = vmatpush1.bf16.xpose.msra.mxu0 %v7060
        %7064 = vmatprep.subr.bf16.mxu0 0
        %7065 = vmatpush1.bf16.xpose.msra.mxu0 %v7057
        %7066 = vmatprep.subr.bf16.mxu0 0
        %7067 = vmatpush1.bf16.xpose.msra.mxu0 %v7054
        %7068 = vmatprep.subr.bf16.mxu0 0
        %7069 = vmatpush1.bf16.xpose.msra.mxu0 %v7051
        %7070 = vmatprep.subr.bf16.mxu0 0
        %7071 = vmatpush1.bf16.xpose.msra.mxu0 %v7048
        %7072 = vmatprep.subr.bf16.mxu0 0
        %7073 = vmatpush1.bf16.xpose.msra.mxu0 %v7045
        %7074 = vmatprep.subr.bf16.mxu0 0
        %7075 = vmatpush1.bf16.xpose.msra.mxu0 %v7042
        %7076 = vmatprep.subr.bf16.mxu0 0
        %7077 = vmatpush1.bf16.xpose.msra.mxu0 %v7039
        %7078 = vmatprep.subr.bf16.mxu0 0
        %7079 = vmatpush2.bf16.xpose.msra.mxu0 0
        %7080 = vmatprep.subr.bf16.mxu0 0
        %7081 = vmatpush2.bf16.xpose.msra.mxu0 0
        %7082 = vmatprep.subr.bf16.mxu0 0
        %7083 = vmatpush2.bf16.xpose.msra.mxu0 0
        %7084 = vmatprep.subr.bf16.mxu0 0
        %7085 = vmatpush2.bf16.xpose.msra.mxu0 0
        %7086 = vmatprep.subr.bf16.mxu0 0
        %7087 = vmatpush2.bf16.xpose.msra.mxu0 0
        %7088 = vmatprep.subr.bf16.mxu0 0
        %7089 = vmatpush2.bf16.xpose.msra.mxu0 0
        %7090 = vmatprep.subr.bf16.mxu0 0
        %7091 = vmatpush2.bf16.xpose.msra.mxu0 0
        %7092 = vmatprep.subr.bf16.mxu0 0
        %7093 = vmatpush2.bf16.xpose.msra.mxu0 0
        %7094 = vmatprep.mubr.bf16.mxu0 0
        %7095 = vmatmul.mubr.bf16.gmra.mxu0 %v7015
        %v7096 = vpop.f32.mrf.mxu0
        %v7097 = vadd.f32 0.0, %v7096
        %v7098 = vpop.f32.mrf.mxu0
        %v7099 = vpop.f32.mrf.mxu0
        %v7100 = vadd.f32 0.0, %v7099
        %v7101 = vpop.f32.mrf.mxu0
        %7102 = vmatprep.mubr.bf16.mxu0 0
        %7103 = vmatmul.mubr.bf16.gmra.mxu0 %v7018
        %v7104 = vpop.f32.mrf.mxu0
        %v7105 = vadd.f32 0.0, %v7104
        %v7106 = vpop.f32.mrf.mxu0
        %v7107 = vpop.f32.mrf.mxu0
        %v7108 = vadd.f32 0.0, %v7107
        %v7109 = vpop.f32.mrf.mxu0
        %7110 = vmatprep.mubr.bf16.mxu0 0
        %7111 = vmatmul.mubr.bf16.gmra.mxu0 %v7021
        %v7112 = vpop.f32.mrf.mxu0
        %v7113 = vadd.f32 0.0, %v7112
        %v7114 = vpop.f32.mrf.mxu0
        %v7115 = vpop.f32.mrf.mxu0
        %v7116 = vadd.f32 0.0, %v7115
        %v7117 = vpop.f32.mrf.mxu0
        %7118 = vmatprep.mubr.bf16.mxu0 0
        %7119 = vmatmul.mubr.bf16.gmra.mxu0 %v7024
        %v7120 = vpop.f32.mrf.mxu0
        %v7121 = vadd.f32 0.0, %v7120
        %v7122 = vpop.f32.mrf.mxu0
        %v7123 = vpop.f32.mrf.mxu0
        %v7124 = vadd.f32 0.0, %v7123
        %v7125 = vpop.f32.mrf.mxu0
        %7126 = vmatprep.mubr.bf16.mxu0 0
        %7127 = vmatmul.mubr.bf16.gmra.mxu0 %v7027
        %v7128 = vpop.f32.mrf.mxu0
        %v7129 = vadd.f32 0.0, %v7128
        %v7130 = vpop.f32.mrf.mxu0
        %v7131 = vpop.f32.mrf.mxu0
        %v7132 = vadd.f32 0.0, %v7131
        %v7133 = vpop.f32.mrf.mxu0
        %7134 = vmatprep.mubr.bf16.mxu0 0
        %7135 = vmatmul.mubr.bf16.gmra.mxu0 %v7030
        %v7136 = vpop.f32.mrf.mxu0
        %v7137 = vadd.f32 0.0, %v7136
        %v7138 = vpop.f32.mrf.mxu0
        %v7139 = vpop.f32.mrf.mxu0
        %v7140 = vadd.f32 0.0, %v7139
        %v7141 = vpop.f32.mrf.mxu0
        %7142 = vmatprep.mubr.bf16.mxu0 0
        %7143 = vmatmul.mubr.bf16.gmra.mxu0 %v7033
        %v7144 = vpop.f32.mrf.mxu0
        %v7145 = vadd.f32 0.0, %v7144
        %v7146 = vpop.f32.mrf.mxu0
        %v7147 = vpop.f32.mrf.mxu0
        %v7148 = vadd.f32 0.0, %v7147
        %v7149 = vpop.f32.mrf.mxu0
        %7150 = vmatprep.mubr.bf16.mxu0 0
        %7151 = vmatmul.mubr.bf16.gmra.mxu0 %v7036
        %v7152 = vpop.f32.mrf.mxu0
        %v7153 = vadd.f32 0.0, %v7152
        %v7154 = vpop.f32.mrf.mxu0
        %v7155 = vpop.f32.mrf.mxu0
        %v7156 = vadd.f32 0.0, %v7155
        %v7157 = vpop.f32.mrf.mxu0
        %7158 = vdwg.mxu0
        %7167 = vrot.lane.b32.xlu0 %v5946, 64
        %v7168 = vpop.permute.xlu0 %7167
        %7169 = vrot.lane.b32.xlu0 %v5947, 64
        %v7170 = vpop.permute.xlu0 %7169
        %7171 = vrot.lane.b32.xlu0 %v5948, 64
        %v7172 = vpop.permute.xlu0 %7171
        %7173 = vrot.lane.b32.xlu0 %v5949, 64
        %v7174 = vpop.permute.xlu0 %7173
        %7175 = vrot.lane.b32.xlu0 %v5950, 64
        %v7176 = vpop.permute.xlu0 %7175
        %7177 = vrot.lane.b32.xlu0 %v5951, 64
        %v7178 = vpop.permute.xlu0 %7177
        %7179 = vrot.lane.b32.xlu0 %v5952, 64
        %v7180 = vpop.permute.xlu0 %7179
        %7181 = vrot.lane.b32.xlu0 %v5953, 64
        %v7182 = vpop.permute.xlu0 %7181
        %7191 = vrot.lane.b32.xlu0 %v5962, 64
        %v7192 = vpop.permute.xlu0 %7191
        %7193 = vrot.lane.b32.xlu0 %v5963, 64
        %v7194 = vpop.permute.xlu0 %7193
        %7195 = vrot.lane.b32.xlu0 %v5964, 64
        %v7196 = vpop.permute.xlu0 %7195
        %7197 = vrot.lane.b32.xlu0 %v5965, 64
        %v7198 = vpop.permute.xlu0 %7197
        %7199 = vrot.lane.b32.xlu0 %v5966, 64
        %v7200 = vpop.permute.xlu0 %7199
        %7201 = vrot.lane.b32.xlu0 %v5967, 64
        %v7202 = vpop.permute.xlu0 %7201
        %7203 = vrot.lane.b32.xlu0 %v5968, 64
        %v7204 = vpop.permute.xlu0 %7203
        %7205 = vrot.lane.b32.xlu0 %v5969, 64
        %v7206 = vpop.permute.xlu0 %7205
        %v7208 = vsel %vm3703, %v7168, 0
        %v7211 = vsel %vm3703, %v7170, 0
        %v7214 = vsel %vm3703, %v7172, 0
        %v7217 = vsel %vm3703, %v7174, 0
        %v7220 = vsel %vm3703, %v7176, 0
        %v7223 = vsel %vm3703, %v7178, 0
        %v7226 = vsel %vm3703, %v7180, 0
        %v7229 = vsel %vm3703, %v7182, 0
        %v7232 = vsel %vm3703, %v7192, 0
        %v7235 = vsel %vm3703, %v7194, 0
        %v7238 = vsel %vm3703, %v7196, 0
        %v7241 = vsel %vm3703, %v7198, 0
        %v7244 = vsel %vm3703, %v7200, 0
        %v7247 = vsel %vm3703, %v7202, 0
        %v7250 = vsel %vm3703, %v7204, 0
        %v7253 = vsel %vm3703, %v7206, 0
        %7255 = vmatprep.subr.bf16.mxu0 0
        %7256 = vmatpush1.bf16.xpose.msra.mxu0 %v7253
        %7257 = vmatprep.subr.bf16.mxu0 0
        %7258 = vmatpush1.bf16.xpose.msra.mxu0 %v7250
        %7259 = vmatprep.subr.bf16.mxu0 0
        %7260 = vmatpush1.bf16.xpose.msra.mxu0 %v7247
        %7261 = vmatprep.subr.bf16.mxu0 0
        %7262 = vmatpush1.bf16.xpose.msra.mxu0 %v7244
        %7263 = vmatprep.subr.bf16.mxu0 0
        %7264 = vmatpush1.bf16.xpose.msra.mxu0 %v7241
        %7265 = vmatprep.subr.bf16.mxu0 0
        %7266 = vmatpush1.bf16.xpose.msra.mxu0 %v7238
        %7267 = vmatprep.subr.bf16.mxu0 0
        %7268 = vmatpush1.bf16.xpose.msra.mxu0 %v7235
        %7269 = vmatprep.subr.bf16.mxu0 0
        %7270 = vmatpush1.bf16.xpose.msra.mxu0 %v7232
        %7271 = vmatprep.subr.bf16.mxu0 0
        %7272 = vmatpush2.bf16.xpose.msra.mxu0 0
        %7273 = vmatprep.subr.bf16.mxu0 0
        %7274 = vmatpush2.bf16.xpose.msra.mxu0 0
        %7275 = vmatprep.subr.bf16.mxu0 0
        %7276 = vmatpush2.bf16.xpose.msra.mxu0 0
        %7277 = vmatprep.subr.bf16.mxu0 0
        %7278 = vmatpush2.bf16.xpose.msra.mxu0 0
        %7279 = vmatprep.subr.bf16.mxu0 0
        %7280 = vmatpush2.bf16.xpose.msra.mxu0 0
        %7281 = vmatprep.subr.bf16.mxu0 0
        %7282 = vmatpush2.bf16.xpose.msra.mxu0 0
        %7283 = vmatprep.subr.bf16.mxu0 0
        %7284 = vmatpush2.bf16.xpose.msra.mxu0 0
        %7285 = vmatprep.subr.bf16.mxu0 0
        %7286 = vmatpush2.bf16.xpose.msra.mxu0 0
        %7287 = vmatprep.mubr.bf16.mxu0 0
        %7288 = vmatmul.mubr.bf16.gmra.mxu0 %v7208
        %v7289 = vpop.f32.mrf.mxu0
        %v7290 = vadd.f32 0.0, %v7289
        %v7291 = vpop.f32.mrf.mxu0
        %v7292 = vpop.f32.mrf.mxu0
        %v7293 = vadd.f32 0.0, %v7292
        %v7294 = vpop.f32.mrf.mxu0
        %7295 = vmatprep.mubr.bf16.mxu0 0
        %7296 = vmatmul.mubr.bf16.gmra.mxu0 %v7211
        %v7297 = vpop.f32.mrf.mxu0
        %v7298 = vadd.f32 0.0, %v7297
        %v7299 = vpop.f32.mrf.mxu0
        %v7300 = vpop.f32.mrf.mxu0
        %v7301 = vadd.f32 0.0, %v7300
        %v7302 = vpop.f32.mrf.mxu0
        %7303 = vmatprep.mubr.bf16.mxu0 0
        %7304 = vmatmul.mubr.bf16.gmra.mxu0 %v7214
        %v7305 = vpop.f32.mrf.mxu0
        %v7306 = vadd.f32 0.0, %v7305
        %v7307 = vpop.f32.mrf.mxu0
        %v7308 = vpop.f32.mrf.mxu0
        %v7309 = vadd.f32 0.0, %v7308
        %v7310 = vpop.f32.mrf.mxu0
        %7311 = vmatprep.mubr.bf16.mxu0 0
        %7312 = vmatmul.mubr.bf16.gmra.mxu0 %v7217
        %v7313 = vpop.f32.mrf.mxu0
        %v7314 = vadd.f32 0.0, %v7313
        %v7315 = vpop.f32.mrf.mxu0
        %v7316 = vpop.f32.mrf.mxu0
        %v7317 = vadd.f32 0.0, %v7316
        %v7318 = vpop.f32.mrf.mxu0
        %7319 = vmatprep.mubr.bf16.mxu0 0
        %7320 = vmatmul.mubr.bf16.gmra.mxu0 %v7220
        %v7321 = vpop.f32.mrf.mxu0
        %v7322 = vadd.f32 0.0, %v7321
        %v7323 = vpop.f32.mrf.mxu0
        %v7324 = vpop.f32.mrf.mxu0
        %v7325 = vadd.f32 0.0, %v7324
        %v7326 = vpop.f32.mrf.mxu0
        %7327 = vmatprep.mubr.bf16.mxu0 0
        %7328 = vmatmul.mubr.bf16.gmra.mxu0 %v7223
        %v7329 = vpop.f32.mrf.mxu0
        %v7330 = vadd.f32 0.0, %v7329
        %v7331 = vpop.f32.mrf.mxu0
        %v7332 = vpop.f32.mrf.mxu0
        %v7333 = vadd.f32 0.0, %v7332
        %v7334 = vpop.f32.mrf.mxu0
        %7335 = vmatprep.mubr.bf16.mxu0 0
        %7336 = vmatmul.mubr.bf16.gmra.mxu0 %v7226
        %v7337 = vpop.f32.mrf.mxu0
        %v7338 = vadd.f32 0.0, %v7337
        %v7339 = vpop.f32.mrf.mxu0
        %v7340 = vpop.f32.mrf.mxu0
        %v7341 = vadd.f32 0.0, %v7340
        %v7342 = vpop.f32.mrf.mxu0
        %7343 = vmatprep.mubr.bf16.mxu0 0
        %7344 = vmatmul.mubr.bf16.gmra.mxu0 %v7229
        %v7345 = vpop.f32.mrf.mxu0
        %v7346 = vadd.f32 0.0, %v7345
        %v7347 = vpop.f32.mrf.mxu0
        %v7348 = vpop.f32.mrf.mxu0
        %v7349 = vadd.f32 0.0, %v7348
        %v7350 = vpop.f32.mrf.mxu0
        %7351 = vdwg.mxu0
        %v7352 = vsel %vm4010, %v7097, -inf
        %v7353 = vsel %vm4011, %v7100, -inf
        %v7354 = vsel %vm4012, %v7105, -inf
        %v7355 = vsel %vm4013, %v7108, -inf
        %v7356 = vsel %vm4014, %v7113, -inf
        %v7357 = vsel %vm4015, %v7116, -inf
        %v7358 = vsel %vm4016, %v7121, -inf
        %v7359 = vsel %vm4017, %v7124, -inf
        %v7360 = vsel %vm4018, %v7129, -inf
        %v7361 = vsel %vm4019, %v7132, -inf
        %v7362 = vsel %vm4020, %v7137, -inf
        %v7363 = vsel %vm4021, %v7140, -inf
        %v7364 = vsel %vm4022, %v7145, -inf
        %v7365 = vsel %vm4023, %v7148, -inf
        %v7366 = vsel %vm4024, %v7153, -inf
        %v7367 = vsel %vm4025, %v7156, -inf
        %v7368 = vsel %vm4010, %v7290, -inf
        %v7369 = vsel %vm4011, %v7293, -inf
        %v7370 = vsel %vm4012, %v7298, -inf
        %v7371 = vsel %vm4013, %v7301, -inf
        %v7372 = vsel %vm4014, %v7306, -inf
        %v7373 = vsel %vm4015, %v7309, -inf
        %v7374 = vsel %vm4016, %v7314, -inf
        %v7375 = vsel %vm4017, %v7317, -inf
        %v7376 = vsel %vm4018, %v7322, -inf
        %v7377 = vsel %vm4019, %v7325, -inf
        %v7378 = vsel %vm4020, %v7330, -inf
        %v7379 = vsel %vm4021, %v7333, -inf
        %v7380 = vsel %vm4022, %v7338, -inf
        %v7381 = vsel %vm4023, %v7341, -inf
        %v7382 = vsel %vm4024, %v7346, -inf
        %v7383 = vsel %vm4025, %v7349, -inf
        %7384 = vmax.xlane.f32.xlu0 %v7352
        %v7385 = vpop.xlane.xlu0 %7384
        %7386 = vmax.xlane.f32.xlu0 %v7353
        %v7387 = vpop.xlane.xlu0 %7386
        %7388 = vmax.xlane.f32.xlu0 %v7354
        %v7389 = vpop.xlane.xlu0 %7388
        %7390 = vmax.xlane.f32.xlu0 %v7355
        %v7391 = vpop.xlane.xlu0 %7390
        %7392 = vmax.xlane.f32.xlu0 %v7356
        %v7393 = vpop.xlane.xlu0 %7392
        %7394 = vmax.xlane.f32.xlu0 %v7357
        %v7395 = vpop.xlane.xlu0 %7394
        %7396 = vmax.xlane.f32.xlu0 %v7358
        %v7397 = vpop.xlane.xlu0 %7396
        %7398 = vmax.xlane.f32.xlu0 %v7359
        %v7399 = vpop.xlane.xlu0 %7398
        %7400 = vmax.xlane.f32.xlu0 %v7360
        %v7401 = vpop.xlane.xlu0 %7400
        %7402 = vmax.xlane.f32.xlu0 %v7361
        %v7403 = vpop.xlane.xlu0 %7402
        %7404 = vmax.xlane.f32.xlu0 %v7362
        %v7405 = vpop.xlane.xlu0 %7404
        %7406 = vmax.xlane.f32.xlu0 %v7363
        %v7407 = vpop.xlane.xlu0 %7406
        %7408 = vmax.xlane.f32.xlu0 %v7364
        %v7409 = vpop.xlane.xlu0 %7408
        %7410 = vmax.xlane.f32.xlu0 %v7365
        %v7411 = vpop.xlane.xlu0 %7410
        %7412 = vmax.xlane.f32.xlu0 %v7366
        %v7413 = vpop.xlane.xlu0 %7412
        %7414 = vmax.xlane.f32.xlu0 %v7367
        %v7415 = vpop.xlane.xlu0 %7414
        %7416 = vmax.xlane.f32.xlu0 %v7368
        %v7417 = vpop.xlane.xlu0 %7416
        %7418 = vmax.xlane.f32.xlu0 %v7369
        %v7419 = vpop.xlane.xlu0 %7418
        %7420 = vmax.xlane.f32.xlu0 %v7370
        %v7421 = vpop.xlane.xlu0 %7420
        %7422 = vmax.xlane.f32.xlu0 %v7371
        %v7423 = vpop.xlane.xlu0 %7422
        %7424 = vmax.xlane.f32.xlu0 %v7372
        %v7425 = vpop.xlane.xlu0 %7424
        %7426 = vmax.xlane.f32.xlu0 %v7373
        %v7427 = vpop.xlane.xlu0 %7426
        %7428 = vmax.xlane.f32.xlu0 %v7374
        %v7429 = vpop.xlane.xlu0 %7428
        %7430 = vmax.xlane.f32.xlu0 %v7375
        %v7431 = vpop.xlane.xlu0 %7430
        %7432 = vmax.xlane.f32.xlu0 %v7376
        %v7433 = vpop.xlane.xlu0 %7432
        %7434 = vmax.xlane.f32.xlu0 %v7377
        %v7435 = vpop.xlane.xlu0 %7434
        %7436 = vmax.xlane.f32.xlu0 %v7378
        %v7437 = vpop.xlane.xlu0 %7436
        %7438 = vmax.xlane.f32.xlu0 %v7379
        %v7439 = vpop.xlane.xlu0 %7438
        %7440 = vmax.xlane.f32.xlu0 %v7380
        %v7441 = vpop.xlane.xlu0 %7440
        %7442 = vmax.xlane.f32.xlu0 %v7381
        %v7443 = vpop.xlane.xlu0 %7442
        %7444 = vmax.xlane.f32.xlu0 %v7382
        %v7445 = vpop.xlane.xlu0 %7444
        %7446 = vmax.xlane.f32.xlu0 %v7383
        %v7447 = vpop.xlane.xlu0 %7446
        %v7448 = vsub.f32 %v7352, %v7385
        %v7449 = vsub.f32 %v7353, %v7387
        %v7450 = vsub.f32 %v7354, %v7389
        %v7451 = vsub.f32 %v7355, %v7391
        %v7452 = vsub.f32 %v7356, %v7393
        %v7453 = vsub.f32 %v7357, %v7395
        %v7454 = vsub.f32 %v7358, %v7397
        %v7455 = vsub.f32 %v7359, %v7399
        %v7456 = vsub.f32 %v7360, %v7401
        %v7457 = vsub.f32 %v7361, %v7403
        %v7458 = vsub.f32 %v7362, %v7405
        %v7459 = vsub.f32 %v7363, %v7407
        %v7460 = vsub.f32 %v7364, %v7409
        %v7461 = vsub.f32 %v7365, %v7411
        %v7462 = vsub.f32 %v7366, %v7413
        %v7463 = vsub.f32 %v7367, %v7415
        %v7464 = vsub.f32 %v7368, %v7417
        %v7465 = vsub.f32 %v7369, %v7419
        %v7466 = vsub.f32 %v7370, %v7421
        %v7467 = vsub.f32 %v7371, %v7423
        %v7468 = vsub.f32 %v7372, %v7425
        %v7469 = vsub.f32 %v7373, %v7427
        %v7470 = vsub.f32 %v7374, %v7429
        %v7471 = vsub.f32 %v7375, %v7431
        %v7472 = vsub.f32 %v7376, %v7433
        %v7473 = vsub.f32 %v7377, %v7435
        %v7474 = vsub.f32 %v7378, %v7437
        %v7475 = vsub.f32 %v7379, %v7439
        %v7476 = vsub.f32 %v7380, %v7441
        %v7477 = vsub.f32 %v7381, %v7443
        %v7478 = vsub.f32 %v7382, %v7445
        %v7479 = vsub.f32 %v7383, %v7447
        %v7480 = vmul.f32 %v7448, 1.442695
        %v7481 = vpow.pop %v7480
        %v7482 = vmul.f32 %v7449, 1.442695
        %v7483 = vpow.pop %v7482
        %v7484 = vmul.f32 %v7450, 1.442695
        %v7485 = vpow.pop %v7484
        %v7486 = vmul.f32 %v7451, 1.442695
        %v7487 = vpow.pop %v7486
        %v7488 = vmul.f32 %v7452, 1.442695
        %v7489 = vpow.pop %v7488
        %v7490 = vmul.f32 %v7453, 1.442695
        %v7491 = vpow.pop %v7490
        %v7492 = vmul.f32 %v7454, 1.442695
        %v7493 = vpow.pop %v7492
        %v7494 = vmul.f32 %v7455, 1.442695
        %v7495 = vpow.pop %v7494
        %v7496 = vmul.f32 %v7456, 1.442695
        %v7497 = vpow.pop %v7496
        %v7498 = vmul.f32 %v7457, 1.442695
        %v7499 = vpow.pop %v7498
        %v7500 = vmul.f32 %v7458, 1.442695
        %v7501 = vpow.pop %v7500
        %v7502 = vmul.f32 %v7459, 1.442695
        %v7503 = vpow.pop %v7502
        %v7504 = vmul.f32 %v7460, 1.442695
        %v7505 = vpow.pop %v7504
        %v7506 = vmul.f32 %v7461, 1.442695
        %v7507 = vpow.pop %v7506
        %v7508 = vmul.f32 %v7462, 1.442695
        %v7509 = vpow.pop %v7508
        %v7510 = vmul.f32 %v7463, 1.442695
        %v7511 = vpow.pop %v7510
        %v7512 = vmul.f32 %v7464, 1.442695
        %v7513 = vpow.pop %v7512
        %v7514 = vmul.f32 %v7465, 1.442695
        %v7515 = vpow.pop %v7514
        %v7516 = vmul.f32 %v7466, 1.442695
        %v7517 = vpow.pop %v7516
        %v7518 = vmul.f32 %v7467, 1.442695
        %v7519 = vpow.pop %v7518
        %v7520 = vmul.f32 %v7468, 1.442695
        %v7521 = vpow.pop %v7520
        %v7522 = vmul.f32 %v7469, 1.442695
        %v7523 = vpow.pop %v7522
        %v7524 = vmul.f32 %v7470, 1.442695
        %v7525 = vpow.pop %v7524
        %v7526 = vmul.f32 %v7471, 1.442695
        %v7527 = vpow.pop %v7526
        %v7528 = vmul.f32 %v7472, 1.442695
        %v7529 = vpow.pop %v7528
        %v7530 = vmul.f32 %v7473, 1.442695
        %v7531 = vpow.pop %v7530
        %v7532 = vmul.f32 %v7474, 1.442695
        %v7533 = vpow.pop %v7532
        %v7534 = vmul.f32 %v7475, 1.442695
        %v7535 = vpow.pop %v7534
        %v7536 = vmul.f32 %v7476, 1.442695
        %v7537 = vpow.pop %v7536
        %v7538 = vmul.f32 %v7477, 1.442695
        %v7539 = vpow.pop %v7538
        %v7540 = vmul.f32 %v7478, 1.442695
        %v7541 = vpow.pop %v7540
        %v7542 = vmul.f32 %v7479, 1.442695
        %v7543 = vpow.pop %v7542
        %7544 = vadd.xlane.f32.xlu0 %v7481
        %v7545 = vpop.xlane.xlu0 %7544
        %7546 = vadd.xlane.f32.xlu0 %v7483
        %v7547 = vpop.xlane.xlu0 %7546
        %7548 = vadd.xlane.f32.xlu0 %v7485
        %v7549 = vpop.xlane.xlu0 %7548
        %7550 = vadd.xlane.f32.xlu0 %v7487
        %v7551 = vpop.xlane.xlu0 %7550
        %7552 = vadd.xlane.f32.xlu0 %v7489
        %v7553 = vpop.xlane.xlu0 %7552
        %7554 = vadd.xlane.f32.xlu0 %v7491
        %v7555 = vpop.xlane.xlu0 %7554
        %7556 = vadd.xlane.f32.xlu0 %v7493
        %v7557 = vpop.xlane.xlu0 %7556
        %7558 = vadd.xlane.f32.xlu0 %v7495
        %v7559 = vpop.xlane.xlu0 %7558
        %7560 = vadd.xlane.f32.xlu0 %v7497
        %v7561 = vpop.xlane.xlu0 %7560
        %7562 = vadd.xlane.f32.xlu0 %v7499
        %v7563 = vpop.xlane.xlu0 %7562
        %7564 = vadd.xlane.f32.xlu0 %v7501
        %v7565 = vpop.xlane.xlu0 %7564
        %7566 = vadd.xlane.f32.xlu0 %v7503
        %v7567 = vpop.xlane.xlu0 %7566
        %7568 = vadd.xlane.f32.xlu0 %v7505
        %v7569 = vpop.xlane.xlu0 %7568
        %7570 = vadd.xlane.f32.xlu0 %v7507
        %v7571 = vpop.xlane.xlu0 %7570
        %7572 = vadd.xlane.f32.xlu0 %v7509
        %v7573 = vpop.xlane.xlu0 %7572
        %7574 = vadd.xlane.f32.xlu0 %v7511
        %v7575 = vpop.xlane.xlu0 %7574
        %7576 = vadd.xlane.f32.xlu0 %v7513
        %v7577 = vpop.xlane.xlu0 %7576
        %7578 = vadd.xlane.f32.xlu0 %v7515
        %v7579 = vpop.xlane.xlu0 %7578
        %7580 = vadd.xlane.f32.xlu0 %v7517
        %v7581 = vpop.xlane.xlu0 %7580
        %7582 = vadd.xlane.f32.xlu0 %v7519
        %v7583 = vpop.xlane.xlu0 %7582
        %7584 = vadd.xlane.f32.xlu0 %v7521
        %v7585 = vpop.xlane.xlu0 %7584
        %7586 = vadd.xlane.f32.xlu0 %v7523
        %v7587 = vpop.xlane.xlu0 %7586
        %7588 = vadd.xlane.f32.xlu0 %v7525
        %v7589 = vpop.xlane.xlu0 %7588
        %7590 = vadd.xlane.f32.xlu0 %v7527
        %v7591 = vpop.xlane.xlu0 %7590
        %7592 = vadd.xlane.f32.xlu0 %v7529
        %v7593 = vpop.xlane.xlu0 %7592
        %7594 = vadd.xlane.f32.xlu0 %v7531
        %v7595 = vpop.xlane.xlu0 %7594
        %7596 = vadd.xlane.f32.xlu0 %v7533
        %v7597 = vpop.xlane.xlu0 %7596
        %7598 = vadd.xlane.f32.xlu0 %v7535
        %v7599 = vpop.xlane.xlu0 %7598
        %7600 = vadd.xlane.f32.xlu0 %v7537
        %v7601 = vpop.xlane.xlu0 %7600
        %7602 = vadd.xlane.f32.xlu0 %v7539
        %v7603 = vpop.xlane.xlu0 %7602
        %7604 = vadd.xlane.f32.xlu0 %v7541
        %v7605 = vpop.xlane.xlu0 %7604
        %7606 = vadd.xlane.f32.xlu0 %v7543
        %v7607 = vpop.xlane.xlu0 %7606
        %v7608 = vrcp.pop %v7545
        %v7609 = vrcp.pop %v7547
        %v7610 = vrcp.pop %v7549
        %v7611 = vrcp.pop %v7551
        %v7612 = vrcp.pop %v7553
        %v7613 = vrcp.pop %v7555
        %v7614 = vrcp.pop %v7557
        %v7615 = vrcp.pop %v7559
        %v7616 = vrcp.pop %v7561
        %v7617 = vrcp.pop %v7563
        %v7618 = vrcp.pop %v7565
        %v7619 = vrcp.pop %v7567
        %v7620 = vrcp.pop %v7569
        %v7621 = vrcp.pop %v7571
        %v7622 = vrcp.pop %v7573
        %v7623 = vrcp.pop %v7575
        %v7624 = vrcp.pop %v7577
        %v7625 = vrcp.pop %v7579
        %v7626 = vrcp.pop %v7581
        %v7627 = vrcp.pop %v7583
        %v7628 = vrcp.pop %v7585
        %v7629 = vrcp.pop %v7587
        %v7630 = vrcp.pop %v7589
        %v7631 = vrcp.pop %v7591
        %v7632 = vrcp.pop %v7593
        %v7633 = vrcp.pop %v7595
        %v7634 = vrcp.pop %v7597
        %v7635 = vrcp.pop %v7599
        %v7636 = vrcp.pop %v7601
        %v7637 = vrcp.pop %v7603
        %v7638 = vrcp.pop %v7605
        %v7639 = vrcp.pop %v7607
        %v7640 = vmul.f32 %v7481, %v7608
        %v7641 = vmul.f32 %v7483, %v7609
        %v7642 = vmul.f32 %v7485, %v7610
        %v7643 = vmul.f32 %v7487, %v7611
        %v7644 = vmul.f32 %v7489, %v7612
        %v7645 = vmul.f32 %v7491, %v7613
        %v7646 = vmul.f32 %v7493, %v7614
        %v7647 = vmul.f32 %v7495, %v7615
        %v7648 = vmul.f32 %v7497, %v7616
        %v7649 = vmul.f32 %v7499, %v7617
        %v7650 = vmul.f32 %v7501, %v7618
        %v7651 = vmul.f32 %v7503, %v7619
        %v7652 = vmul.f32 %v7505, %v7620
        %v7653 = vmul.f32 %v7507, %v7621
        %v7654 = vmul.f32 %v7509, %v7622
        %v7655 = vmul.f32 %v7511, %v7623
        %v7656 = vmul.f32 %v7513, %v7624
        %v7657 = vmul.f32 %v7515, %v7625
        %v7658 = vmul.f32 %v7517, %v7626
        %v7659 = vmul.f32 %v7519, %v7627
        %v7660 = vmul.f32 %v7521, %v7628
        %v7661 = vmul.f32 %v7523, %v7629
        %v7662 = vmul.f32 %v7525, %v7630
        %v7663 = vmul.f32 %v7527, %v7631
        %v7664 = vmul.f32 %v7529, %v7632
        %v7665 = vmul.f32 %v7531, %v7633
        %v7666 = vmul.f32 %v7533, %v7634
        %v7667 = vmul.f32 %v7535, %v7635
        %v7668 = vmul.f32 %v7537, %v7636
        %v7669 = vmul.f32 %v7539, %v7637
        %v7670 = vmul.f32 %v7541, %v7638
        %v7671 = vmul.f32 %v7543, %v7639
        %v7672 = vpack.c.bf16 %v7641, %v7640
        %v7673 = vpack.c.bf16 %v7643, %v7642
        %v7674 = vpack.c.bf16 %v7645, %v7644
        %v7675 = vpack.c.bf16 %v7647, %v7646
        %v7676 = vpack.c.bf16 %v7649, %v7648
        %v7677 = vpack.c.bf16 %v7651, %v7650
        %v7678 = vpack.c.bf16 %v7653, %v7652
        %v7679 = vpack.c.bf16 %v7655, %v7654
        %v7680 = vpack.c.bf16 %v7657, %v7656
        %v7681 = vpack.c.bf16 %v7659, %v7658
        %v7682 = vpack.c.bf16 %v7661, %v7660
        %v7683 = vpack.c.bf16 %v7663, %v7662
        %v7684 = vpack.c.bf16 %v7665, %v7664
        %v7685 = vpack.c.bf16 %v7667, %v7666
        %v7686 = vpack.c.bf16 %v7669, %v7668
        %v7687 = vpack.c.bf16 %v7671, %v7670
        %7696 = vrot.lane.b32.xlu0 %v5970, 64
        %v7697 = vpop.permute.xlu0 %7696
        %7698 = vrot.lane.b32.xlu0 %v5971, 64
        %v7699 = vpop.permute.xlu0 %7698
        %7700 = vrot.lane.b32.xlu0 %v5972, 64
        %v7701 = vpop.permute.xlu0 %7700
        %7702 = vrot.lane.b32.xlu0 %v5973, 64
        %v7703 = vpop.permute.xlu0 %7702
        %7704 = vrot.lane.b32.xlu0 %v5974, 64
        %v7705 = vpop.permute.xlu0 %7704
        %7706 = vrot.lane.b32.xlu0 %v5975, 64
        %v7707 = vpop.permute.xlu0 %7706
        %7708 = vrot.lane.b32.xlu0 %v5976, 64
        %v7709 = vpop.permute.xlu0 %7708
        %7710 = vrot.lane.b32.xlu0 %v5977, 64
        %v7711 = vpop.permute.xlu0 %7710
        %7720 = vmatprep.subr.bf16.mxu0 0
        %7721 = vmatpush1.bf16.msra.mxu0 %v7711
        %7722 = vmatprep.subr.bf16.mxu0 0
        %7723 = vmatpush1.bf16.msra.mxu0 %v7709
        %7724 = vmatprep.subr.bf16.mxu0 0
        %7725 = vmatpush1.bf16.msra.mxu0 %v7707
        %7726 = vmatprep.subr.bf16.mxu0 0
        %7727 = vmatpush1.bf16.msra.mxu0 %v7705
        %7728 = vmatprep.subr.bf16.mxu0 0
        %7729 = vmatpush1.bf16.msra.mxu0 %v7703
        %7730 = vmatprep.subr.bf16.mxu0 0
        %7731 = vmatpush1.bf16.msra.mxu0 %v7701
        %7732 = vmatprep.subr.bf16.mxu0 0
        %7733 = vmatpush1.bf16.msra.mxu0 %v7699
        %7734 = vmatprep.subr.bf16.mxu0 0
        %7735 = vmatpush1.bf16.msra.mxu0 %v7697
        %7736 = vmatprep.subr.bf16.mxu0 0
        %7737 = vmatpush2.bf16.msra.mxu0 0
        %7738 = vmatprep.subr.bf16.mxu0 0
        %7739 = vmatpush2.bf16.msra.mxu0 0
        %7740 = vmatprep.subr.bf16.mxu0 0
        %7741 = vmatpush2.bf16.msra.mxu0 0
        %7742 = vmatprep.subr.bf16.mxu0 0
        %7743 = vmatpush2.bf16.msra.mxu0 0
        %7744 = vmatprep.subr.bf16.mxu0 0
        %7745 = vmatpush2.bf16.msra.mxu0 0
        %7746 = vmatprep.subr.bf16.mxu0 0
        %7747 = vmatpush2.bf16.msra.mxu0 0
        %7748 = vmatprep.subr.bf16.mxu0 0
        %7749 = vmatpush2.bf16.msra.mxu0 0
        %7750 = vmatprep.subr.bf16.mxu0 0
        %7751 = vmatpush2.bf16.msra.mxu0 0
        %7752 = vmatprep.mubr.bf16.mxu0 0
        %7753 = vmatmul.mubr.bf16.gmra.mxu0 %v7672
        %v7754 = vpop.f32.mrf.mxu0
        %v7755 = vadd.f32 0.0, %v7754
        %v7756 = vpop.f32.mrf.mxu0
        %v7757 = vpop.f32.mrf.mxu0
        %v7758 = vadd.f32 0.0, %v7757
        %v7759 = vpop.f32.mrf.mxu0
        %7760 = vmatprep.mubr.bf16.mxu0 0
        %7761 = vmatmul.mubr.bf16.gmra.mxu0 %v7673
        %v7762 = vpop.f32.mrf.mxu0
        %v7763 = vadd.f32 0.0, %v7762
        %v7764 = vpop.f32.mrf.mxu0
        %v7765 = vpop.f32.mrf.mxu0
        %v7766 = vadd.f32 0.0, %v7765
        %v7767 = vpop.f32.mrf.mxu0
        %7768 = vmatprep.mubr.bf16.mxu0 0
        %7769 = vmatmul.mubr.bf16.gmra.mxu0 %v7674
        %v7770 = vpop.f32.mrf.mxu0
        %v7771 = vadd.f32 0.0, %v7770
        %v7772 = vpop.f32.mrf.mxu0
        %v7773 = vpop.f32.mrf.mxu0
        %v7774 = vadd.f32 0.0, %v7773
        %v7775 = vpop.f32.mrf.mxu0
        %7776 = vmatprep.mubr.bf16.mxu0 0
        %7777 = vmatmul.mubr.bf16.gmra.mxu0 %v7675
        %v7778 = vpop.f32.mrf.mxu0
        %v7779 = vadd.f32 0.0, %v7778
        %v7780 = vpop.f32.mrf.mxu0
        %v7781 = vpop.f32.mrf.mxu0
        %v7782 = vadd.f32 0.0, %v7781
        %v7783 = vpop.f32.mrf.mxu0
        %7784 = vmatprep.mubr.bf16.mxu0 0
        %7785 = vmatmul.mubr.bf16.gmra.mxu0 %v7676
        %v7786 = vpop.f32.mrf.mxu0
        %v7787 = vadd.f32 0.0, %v7786
        %v7788 = vpop.f32.mrf.mxu0
        %v7789 = vpop.f32.mrf.mxu0
        %v7790 = vadd.f32 0.0, %v7789
        %v7791 = vpop.f32.mrf.mxu0
        %7792 = vmatprep.mubr.bf16.mxu0 0
        %7793 = vmatmul.mubr.bf16.gmra.mxu0 %v7677
        %v7794 = vpop.f32.mrf.mxu0
        %v7795 = vadd.f32 0.0, %v7794
        %v7796 = vpop.f32.mrf.mxu0
        %v7797 = vpop.f32.mrf.mxu0
        %v7798 = vadd.f32 0.0, %v7797
        %v7799 = vpop.f32.mrf.mxu0
        %7800 = vmatprep.mubr.bf16.mxu0 0
        %7801 = vmatmul.mubr.bf16.gmra.mxu0 %v7678
        %v7802 = vpop.f32.mrf.mxu0
        %v7803 = vadd.f32 0.0, %v7802
        %v7804 = vpop.f32.mrf.mxu0
        %v7805 = vpop.f32.mrf.mxu0
        %v7806 = vadd.f32 0.0, %v7805
        %v7807 = vpop.f32.mrf.mxu0
        %7808 = vmatprep.mubr.bf16.mxu0 0
        %7809 = vmatmul.mubr.bf16.gmra.mxu0 %v7679
        %v7810 = vpop.f32.mrf.mxu0
        %v7811 = vadd.f32 0.0, %v7810
        %v7812 = vpop.f32.mrf.mxu0
        %v7813 = vpop.f32.mrf.mxu0
        %v7814 = vadd.f32 0.0, %v7813
        %v7815 = vpop.f32.mrf.mxu0
        %7816 = vdwg.mxu0
        %7825 = vrot.lane.b32.xlu0 %v5978, 64
        %v7826 = vpop.permute.xlu0 %7825
        %7827 = vrot.lane.b32.xlu0 %v5979, 64
        %v7828 = vpop.permute.xlu0 %7827
        %7829 = vrot.lane.b32.xlu0 %v5980, 64
        %v7830 = vpop.permute.xlu0 %7829
        %7831 = vrot.lane.b32.xlu0 %v5981, 64
        %v7832 = vpop.permute.xlu0 %7831
        %7833 = vrot.lane.b32.xlu0 %v5982, 64
        %v7834 = vpop.permute.xlu0 %7833
        %7835 = vrot.lane.b32.xlu0 %v5983, 64
        %v7836 = vpop.permute.xlu0 %7835
        %7837 = vrot.lane.b32.xlu0 %v5984, 64
        %v7838 = vpop.permute.xlu0 %7837
        %7839 = vrot.lane.b32.xlu0 %v5985, 64
        %v7840 = vpop.permute.xlu0 %7839
        %7849 = vmatprep.subr.bf16.mxu0 0
        %7850 = vmatpush1.bf16.msra.mxu0 %v7840
        %7851 = vmatprep.subr.bf16.mxu0 0
        %7852 = vmatpush1.bf16.msra.mxu0 %v7838
        %7853 = vmatprep.subr.bf16.mxu0 0
        %7854 = vmatpush1.bf16.msra.mxu0 %v7836
        %7855 = vmatprep.subr.bf16.mxu0 0
        %7856 = vmatpush1.bf16.msra.mxu0 %v7834
        %7857 = vmatprep.subr.bf16.mxu0 0
        %7858 = vmatpush1.bf16.msra.mxu0 %v7832
        %7859 = vmatprep.subr.bf16.mxu0 0
        %7860 = vmatpush1.bf16.msra.mxu0 %v7830
        %7861 = vmatprep.subr.bf16.mxu0 0
        %7862 = vmatpush1.bf16.msra.mxu0 %v7828
        %7863 = vmatprep.subr.bf16.mxu0 0
        %7864 = vmatpush1.bf16.msra.mxu0 %v7826
        %7865 = vmatprep.subr.bf16.mxu0 0
        %7866 = vmatpush2.bf16.msra.mxu0 0
        %7867 = vmatprep.subr.bf16.mxu0 0
        %7868 = vmatpush2.bf16.msra.mxu0 0
        %7869 = vmatprep.subr.bf16.mxu0 0
        %7870 = vmatpush2.bf16.msra.mxu0 0
        %7871 = vmatprep.subr.bf16.mxu0 0
        %7872 = vmatpush2.bf16.msra.mxu0 0
        %7873 = vmatprep.subr.bf16.mxu0 0
        %7874 = vmatpush2.bf16.msra.mxu0 0
        %7875 = vmatprep.subr.bf16.mxu0 0
        %7876 = vmatpush2.bf16.msra.mxu0 0
        %7877 = vmatprep.subr.bf16.mxu0 0
        %7878 = vmatpush2.bf16.msra.mxu0 0
        %7879 = vmatprep.subr.bf16.mxu0 0
        %7880 = vmatpush2.bf16.msra.mxu0 0
        %7881 = vmatprep.mubr.bf16.mxu0 0
        %7882 = vmatmul.mubr.bf16.gmra.mxu0 %v7680
        %v7883 = vpop.f32.mrf.mxu0
        %v7884 = vadd.f32 0.0, %v7883
        %v7885 = vpop.f32.mrf.mxu0
        %v7886 = vpop.f32.mrf.mxu0
        %v7887 = vadd.f32 0.0, %v7886
        %v7888 = vpop.f32.mrf.mxu0
        %7889 = vmatprep.mubr.bf16.mxu0 0
        %7890 = vmatmul.mubr.bf16.gmra.mxu0 %v7681
        %v7891 = vpop.f32.mrf.mxu0
        %v7892 = vadd.f32 0.0, %v7891
        %v7893 = vpop.f32.mrf.mxu0
        %v7894 = vpop.f32.mrf.mxu0
        %v7895 = vadd.f32 0.0, %v7894
        %v7896 = vpop.f32.mrf.mxu0
        %7897 = vmatprep.mubr.bf16.mxu0 0
        %7898 = vmatmul.mubr.bf16.gmra.mxu0 %v7682
        %v7899 = vpop.f32.mrf.mxu0
        %v7900 = vadd.f32 0.0, %v7899
        %v7901 = vpop.f32.mrf.mxu0
        %v7902 = vpop.f32.mrf.mxu0
        %v7903 = vadd.f32 0.0, %v7902
        %v7904 = vpop.f32.mrf.mxu0
        %7905 = vmatprep.mubr.bf16.mxu0 0
        %7906 = vmatmul.mubr.bf16.gmra.mxu0 %v7683
        %v7907 = vpop.f32.mrf.mxu0
        %v7908 = vadd.f32 0.0, %v7907
        %v7909 = vpop.f32.mrf.mxu0
        %v7910 = vpop.f32.mrf.mxu0
        %v7911 = vadd.f32 0.0, %v7910
        %v7912 = vpop.f32.mrf.mxu0
        %7913 = vmatprep.mubr.bf16.mxu0 0
        %7914 = vmatmul.mubr.bf16.gmra.mxu0 %v7684
        %v7915 = vpop.f32.mrf.mxu0
        %v7916 = vadd.f32 0.0, %v7915
        %v7917 = vpop.f32.mrf.mxu0
        %v7918 = vpop.f32.mrf.mxu0
        %v7919 = vadd.f32 0.0, %v7918
        %v7920 = vpop.f32.mrf.mxu0
        %7921 = vmatprep.mubr.bf16.mxu0 0
        %7922 = vmatmul.mubr.bf16.gmra.mxu0 %v7685
        %v7923 = vpop.f32.mrf.mxu0
        %v7924 = vadd.f32 0.0, %v7923
        %v7925 = vpop.f32.mrf.mxu0
        %v7926 = vpop.f32.mrf.mxu0
        %v7927 = vadd.f32 0.0, %v7926
        %v7928 = vpop.f32.mrf.mxu0
        %7929 = vmatprep.mubr.bf16.mxu0 0
        %7930 = vmatmul.mubr.bf16.gmra.mxu0 %v7686
        %v7931 = vpop.f32.mrf.mxu0
        %v7932 = vadd.f32 0.0, %v7931
        %v7933 = vpop.f32.mrf.mxu0
        %v7934 = vpop.f32.mrf.mxu0
        %v7935 = vadd.f32 0.0, %v7934
        %v7936 = vpop.f32.mrf.mxu0
        %7937 = vmatprep.mubr.bf16.mxu0 0
        %7938 = vmatmul.mubr.bf16.gmra.mxu0 %v7687
        %v7939 = vpop.f32.mrf.mxu0
        %v7940 = vadd.f32 0.0, %v7939
        %v7941 = vpop.f32.mrf.mxu0
        %v7942 = vpop.f32.mrf.mxu0
        %v7943 = vadd.f32 0.0, %v7942
        %v7944 = vpop.f32.mrf.mxu0
        %7945 = vdwg.mxu0
        %v7946 = vpack.c.bf16 %v7758, %v7755
        %v7947 = vpack.c.bf16 %v7766, %v7763
        %v7948 = vpack.c.bf16 %v7774, %v7771
        %v7949 = vpack.c.bf16 %v7782, %v7779
        %v7950 = vpack.c.bf16 %v7790, %v7787
        %v7951 = vpack.c.bf16 %v7798, %v7795
        %v7952 = vpack.c.bf16 %v7806, %v7803
        %v7953 = vpack.c.bf16 %v7814, %v7811
        %v7954 = vpack.c.bf16 %v7887, %v7884
        %v7955 = vpack.c.bf16 %v7895, %v7892
        %v7956 = vpack.c.bf16 %v7903, %v7900
        %v7957 = vpack.c.bf16 %v7911, %v7908
        %v7958 = vpack.c.bf16 %v7919, %v7916
        %v7959 = vpack.c.bf16 %v7927, %v7924
        %v7960 = vpack.c.bf16 %v7935, %v7932
        %v7961 = vpack.c.bf16 %v7943, %v7940
        %v7978 = vunpack.c.l.b16 %v7946
        %v7979 = vunpack.c.h.b16 %v7946
        %v7980 = vunpack.c.l.b16 %v7947
        %v7981 = vunpack.c.h.b16 %v7947
        %v7982 = vunpack.c.l.b16 %v7948
        %v7983 = vunpack.c.h.b16 %v7948
        %v7984 = vunpack.c.l.b16 %v7949
        %v7985 = vunpack.c.h.b16 %v7949
        %v7986 = vunpack.c.l.b16 %v7950
        %v7987 = vunpack.c.h.b16 %v7950
        %v7988 = vunpack.c.l.b16 %v7951
        %v7989 = vunpack.c.h.b16 %v7951
        %v7990 = vunpack.c.l.b16 %v7952
        %v7991 = vunpack.c.h.b16 %v7952
        %v7992 = vunpack.c.l.b16 %v7953
        %v7993 = vunpack.c.h.b16 %v7953
        %v7994 = vunpack.c.l.b16 %v7954
        %v7995 = vunpack.c.h.b16 %v7954
        %v7996 = vunpack.c.l.b16 %v7955
        %v7997 = vunpack.c.h.b16 %v7955
        %v7998 = vunpack.c.l.b16 %v7956
        %v7999 = vunpack.c.h.b16 %v7956
        %v8000 = vunpack.c.l.b16 %v7957
        %v8001 = vunpack.c.h.b16 %v7957
        %v8002 = vunpack.c.l.b16 %v7958
        %v8003 = vunpack.c.h.b16 %v7958
        %v8004 = vunpack.c.l.b16 %v7959
        %v8005 = vunpack.c.h.b16 %v7959
        %v8006 = vunpack.c.l.b16 %v7960
        %v8007 = vunpack.c.h.b16 %v7960
        %v8008 = vunpack.c.l.b16 %v7961
        %v8009 = vunpack.c.h.b16 %v7961
        %v8010 = vpack.c.b16 %v7978, %v7978
        %v8011 = vpack.c.b16 %v7979, %v7979
        %v8012 = vpack.c.b16 %v7980, %v7980
        %v8013 = vpack.c.b16 %v7981, %v7981
        %v8014 = vpack.c.b16 %v7982, %v7982
        %v8015 = vpack.c.b16 %v7983, %v7983
        %v8016 = vpack.c.b16 %v7984, %v7984
        %v8017 = vpack.c.b16 %v7985, %v7985
        %v8018 = vpack.c.b16 %v7986, %v7986
        %v8019 = vpack.c.b16 %v7987, %v7987
        %v8020 = vpack.c.b16 %v7988, %v7988
        %v8021 = vpack.c.b16 %v7989, %v7989
        %v8022 = vpack.c.b16 %v7990, %v7990
        %v8023 = vpack.c.b16 %v7991, %v7991
        %v8024 = vpack.c.b16 %v7992, %v7992
        %v8025 = vpack.c.b16 %v7993, %v7993
        %v8026 = vpack.c.b16 %v7994, %v7994
        %v8027 = vpack.c.b16 %v7995, %v7995
        %v8028 = vpack.c.b16 %v7996, %v7996
        %v8029 = vpack.c.b16 %v7997, %v7997
        %v8030 = vpack.c.b16 %v7998, %v7998
        %v8031 = vpack.c.b16 %v7999, %v7999
        %v8032 = vpack.c.b16 %v8000, %v8000
        %v8033 = vpack.c.b16 %v8001, %v8001
        %v8034 = vpack.c.b16 %v8002, %v8002
        %v8035 = vpack.c.b16 %v8003, %v8003
        %v8036 = vpack.c.b16 %v8004, %v8004
        %v8037 = vpack.c.b16 %v8005, %v8005
        %v8038 = vpack.c.b16 %v8006, %v8006
        %v8039 = vpack.c.b16 %v8007, %v8007
        %v8040 = vpack.c.b16 %v8008, %v8008
        %v8041 = vpack.c.b16 %v8009, %v8009
        %8042 = vrot.lane.b32.xlu0 %v8010, 64
        %v8043 = vpop.permute.xlu0 %8042
        %8044 = vrot.lane.b32.xlu0 %v8011, 64
        %v8045 = vpop.permute.xlu0 %8044
        %8046 = vrot.lane.b32.xlu0 %v8012, 64
        %v8047 = vpop.permute.xlu0 %8046
        %8048 = vrot.lane.b32.xlu0 %v8013, 64
        %v8049 = vpop.permute.xlu0 %8048
        %8050 = vrot.lane.b32.xlu0 %v8014, 64
        %v8051 = vpop.permute.xlu0 %8050
        %8052 = vrot.lane.b32.xlu0 %v8015, 64
        %v8053 = vpop.permute.xlu0 %8052
        %8054 = vrot.lane.b32.xlu0 %v8016, 64
        %v8055 = vpop.permute.xlu0 %8054
        %8056 = vrot.lane.b32.xlu0 %v8017, 64
        %v8057 = vpop.permute.xlu0 %8056
        %8058 = vrot.lane.b32.xlu0 %v8018, 64
        %v8059 = vpop.permute.xlu0 %8058
        %8060 = vrot.lane.b32.xlu0 %v8019, 64
        %v8061 = vpop.permute.xlu0 %8060
        %8062 = vrot.lane.b32.xlu0 %v8020, 64
        %v8063 = vpop.permute.xlu0 %8062
        %8064 = vrot.lane.b32.xlu0 %v8021, 64
        %v8065 = vpop.permute.xlu0 %8064
        %8066 = vrot.lane.b32.xlu0 %v8022, 64
        %v8067 = vpop.permute.xlu0 %8066
        %8068 = vrot.lane.b32.xlu0 %v8023, 64
        %v8069 = vpop.permute.xlu0 %8068
        %8070 = vrot.lane.b32.xlu0 %v8024, 64
        %v8071 = vpop.permute.xlu0 %8070
        %8072 = vrot.lane.b32.xlu0 %v8025, 64
        %v8073 = vpop.permute.xlu0 %8072
        %8074 = vrot.lane.b32.xlu0 %v8026, 64
        %v8075 = vpop.permute.xlu0 %8074
        %8076 = vrot.lane.b32.xlu0 %v8027, 64
        %v8077 = vpop.permute.xlu0 %8076
        %8078 = vrot.lane.b32.xlu0 %v8028, 64
        %v8079 = vpop.permute.xlu0 %8078
        %8080 = vrot.lane.b32.xlu0 %v8029, 64
        %v8081 = vpop.permute.xlu0 %8080
        %8082 = vrot.lane.b32.xlu0 %v8030, 64
        %v8083 = vpop.permute.xlu0 %8082
        %8084 = vrot.lane.b32.xlu0 %v8031, 64
        %v8085 = vpop.permute.xlu0 %8084
        %8086 = vrot.lane.b32.xlu0 %v8032, 64
        %v8087 = vpop.permute.xlu0 %8086
        %8088 = vrot.lane.b32.xlu0 %v8033, 64
        %v8089 = vpop.permute.xlu0 %8088
        %8090 = vrot.lane.b32.xlu0 %v8034, 64
        %v8091 = vpop.permute.xlu0 %8090
        %8092 = vrot.lane.b32.xlu0 %v8035, 64
        %v8093 = vpop.permute.xlu0 %8092
        %8094 = vrot.lane.b32.xlu0 %v8036, 64
        %v8095 = vpop.permute.xlu0 %8094
        %8096 = vrot.lane.b32.xlu0 %v8037, 64
        %v8097 = vpop.permute.xlu0 %8096
        %8098 = vrot.lane.b32.xlu0 %v8038, 64
        %v8099 = vpop.permute.xlu0 %8098
        %8100 = vrot.lane.b32.xlu0 %v8039, 64
        %v8101 = vpop.permute.xlu0 %8100
        %8102 = vrot.lane.b32.xlu0 %v8040, 64
        %v8103 = vpop.permute.xlu0 %8102
        %8104 = vrot.lane.b32.xlu0 %v8041, 64
        %v8105 = vpop.permute.xlu0 %8104
        %8138 = vst.msk [vmem:[#allocation2 + $0x4] sm:$0xf] %vm5889, %v8043
        %8139 = vst.msk [vmem:[#allocation2 + $0x10] sm:$0xf] %vm5889, %v8045
        %8140 = vst.msk [vmem:[#allocation2 + $0x1c] sm:$0xf] %vm5889, %v8047
        %8141 = vst.msk [vmem:[#allocation2 + $0x28] sm:$0xf] %vm5889, %v8049
        %8142 = vst.msk [vmem:[#allocation2 + $0x34] sm:$0xf] %vm5889, %v8051
        %8143 = vst.msk [vmem:[#allocation2 + $0x40] sm:$0xf] %vm5889, %v8053
        %8144 = vst.msk [vmem:[#allocation2 + $0x4c] sm:$0xf] %vm5889, %v8055
        %8145 = vst.msk [vmem:[#allocation2 + $0x58] sm:$0xf] %vm5889, %v8057
        %8146 = vst.msk [vmem:[#allocation2 + $0x64] sm:$0xf] %vm5889, %v8059
        %8147 = vst.msk [vmem:[#allocation2 + $0x70] sm:$0xf] %vm5889, %v8061
        %8148 = vst.msk [vmem:[#allocation2 + $0x7c] sm:$0xf] %vm5889, %v8063
        %8149 = vst.msk [vmem:[#allocation2 + $0x88] sm:$0xf] %vm5889, %v8065
        %8150 = vst.msk [vmem:[#allocation2 + $0x94] sm:$0xf] %vm5889, %v8067
        %8151 = vst.msk [vmem:[#allocation2 + $0xa0] sm:$0xf] %vm5889, %v8069
        %8152 = vst.msk [vmem:[#allocation2 + $0xac] sm:$0xf] %vm5889, %v8071
        %8153 = vst.msk [vmem:[#allocation2 + $0xb8] sm:$0xf] %vm5889, %v8073
        %8154 = vst.msk [vmem:[#allocation2 + $0xc4] sm:$0xf] %vm5889, %v8075
        %8155 = vst.msk [vmem:[#allocation2 + $0xd0] sm:$0xf] %vm5889, %v8077
        %8156 = vst.msk [vmem:[#allocation2 + $0xdc] sm:$0xf] %vm5889, %v8079
        %8157 = vst.msk [vmem:[#allocation2 + $0xe8] sm:$0xf] %vm5889, %v8081
        %8158 = vst.msk [vmem:[#allocation2 + $0xf4] sm:$0xf] %vm5889, %v8083
        %8159 = vst.msk [vmem:[#allocation2 + $0x100] sm:$0xf] %vm5889, %v8085
        %8160 = vst.msk [vmem:[#allocation2 + $0x10c] sm:$0xf] %vm5889, %v8087
        %8161 = vst.msk [vmem:[#allocation2 + $0x118] sm:$0xf] %vm5889, %v8089
        %8162 = vst.msk [vmem:[#allocation2 + $0x124] sm:$0xf] %vm5889, %v8091
        %8163 = vst.msk [vmem:[#allocation2 + $0x130] sm:$0xf] %vm5889, %v8093
        %8164 = vst.msk [vmem:[#allocation2 + $0x13c] sm:$0xf] %vm5889, %v8095
        %8165 = vst.msk [vmem:[#allocation2 + $0x148] sm:$0xf] %vm5889, %v8097
        %8166 = vst.msk [vmem:[#allocation2 + $0x154] sm:$0xf] %vm5889, %v8099
        %8167 = vst.msk [vmem:[#allocation2 + $0x160] sm:$0xf] %vm5889, %v8101
        %8168 = vst.msk [vmem:[#allocation2 + $0x16c] sm:$0xf] %vm5889, %v8103
        %8169 = vst.msk [vmem:[#allocation2 + $0x178] sm:$0xf] %vm5889, %v8105
        %v8170 = vpack.c.bf16 %v2356, %v2352
        %v8171 = vpack.c.bf16 %v2366, %v2362
        %v8172 = vpack.c.bf16 %v2376, %v2372
        %v8173 = vpack.c.bf16 %v2386, %v2382
        %v8174 = vpack.c.bf16 %v2396, %v2392
        %v8175 = vpack.c.bf16 %v2406, %v2402
        %v8176 = vpack.c.bf16 %v2416, %v2412
        %v8177 = vpack.c.bf16 %v2426, %v2422
        %v8178 = vpack.c.bf16 %v2436, %v2432
        %v8179 = vpack.c.bf16 %v2446, %v2442
        %v8180 = vpack.c.bf16 %v2456, %v2452
        %v8181 = vpack.c.bf16 %v2466, %v2462
        %v8182 = vpack.c.bf16 %v2476, %v2472
        %v8183 = vpack.c.bf16 %v2486, %v2482
        %v8184 = vpack.c.bf16 %v2496, %v2492
        %v8185 = vpack.c.bf16 %v2506, %v2502
        %v8186 = vmul.bf16 %v8170, 1040203264
        %v8187 = vmul.bf16 %v8171, 1040203264
        %v8188 = vmul.bf16 %v8172, 1040203264
        %v8189 = vmul.bf16 %v8173, 1040203264
        %v8190 = vmul.bf16 %v8174, 1040203264
        %v8191 = vmul.bf16 %v8175, 1040203264
        %v8192 = vmul.bf16 %v8176, 1040203264
        %v8193 = vmul.bf16 %v8177, 1040203264
        %v8194 = vmul.bf16 %v8178, 1040203264
        %v8195 = vmul.bf16 %v8179, 1040203264
        %v8196 = vmul.bf16 %v8180, 1040203264
        %v8197 = vmul.bf16 %v8181, 1040203264
        %v8198 = vmul.bf16 %v8182, 1040203264
        %v8199 = vmul.bf16 %v8183, 1040203264
        %v8200 = vmul.bf16 %v8184, 1040203264
        %v8201 = vmul.bf16 %v8185, 1040203264
        %v8202 = vpack.c.bf16 %v2744, %v2740
        %v8203 = vpack.c.bf16 %v2754, %v2750
        %v8204 = vpack.c.bf16 %v2764, %v2760
        %v8205 = vpack.c.bf16 %v2774, %v2770
        %v8206 = vpack.c.bf16 %v2784, %v2780
        %v8207 = vpack.c.bf16 %v2794, %v2790
        %v8208 = vpack.c.bf16 %v2804, %v2800
        %v8209 = vpack.c.bf16 %v2814, %v2810
        %v8210 = vpack.c.bf16 %v2824, %v2820
        %v8211 = vpack.c.bf16 %v2834, %v2830
        %v8212 = vpack.c.bf16 %v2844, %v2840
        %v8213 = vpack.c.bf16 %v2854, %v2850
        %v8214 = vpack.c.bf16 %v2864, %v2860
        %v8215 = vpack.c.bf16 %v2874, %v2870
        %v8216 = vpack.c.bf16 %v2884, %v2880
        %v8217 = vpack.c.bf16 %v2894, %v2890
        %v8218 = vpack.c.bf16 %v3481, %v3478
        %v8219 = vpack.c.bf16 %v3489, %v3486
        %v8220 = vpack.c.bf16 %v3497, %v3494
        %v8221 = vpack.c.bf16 %v3505, %v3502
        %v8222 = vpack.c.bf16 %v3513, %v3510
        %v8223 = vpack.c.bf16 %v3521, %v3518
        %v8224 = vpack.c.bf16 %v3529, %v3526
        %v8225 = vpack.c.bf16 %v3537, %v3534
        %v8226 = vpack.c.bf16 %v3545, %v3542
        %v8227 = vpack.c.bf16 %v3553, %v3550
        %v8228 = vpack.c.bf16 %v3561, %v3558
        %v8229 = vpack.c.bf16 %v3569, %v3566
        %v8230 = vpack.c.bf16 %v3577, %v3574
        %v8231 = vpack.c.bf16 %v3585, %v3582
        %v8232 = vpack.c.bf16 %v3593, %v3590
        %v8233 = vpack.c.bf16 %v3601, %v3598
        %v8235 = vsel %vm3703, %v8186, 0
        %v8238 = vsel %vm3703, %v8187, 0
        %v8241 = vsel %vm3703, %v8188, 0
        %v8244 = vsel %vm3703, %v8189, 0
        %v8247 = vsel %vm3703, %v8190, 0
        %v8250 = vsel %vm3703, %v8191, 0
        %v8253 = vsel %vm3703, %v8192, 0
        %v8256 = vsel %vm3703, %v8193, 0
        %v8259 = vsel %vm3703, %v8202, 0
        %v8262 = vsel %vm3703, %v8203, 0
        %v8265 = vsel %vm3703, %v8204, 0
        %v8268 = vsel %vm3703, %v8205, 0
        %v8271 = vsel %vm3703, %v8206, 0
        %v8274 = vsel %vm3703, %v8207, 0
        %v8277 = vsel %vm3703, %v8208, 0
        %v8280 = vsel %vm3703, %v8209, 0
        %8282 = vmatprep.subr.bf16.mxu0 0
        %8283 = vmatpush1.bf16.xpose.msra.mxu0 %v8280
        %8284 = vmatprep.subr.bf16.mxu0 0
        %8285 = vmatpush1.bf16.xpose.msra.mxu0 %v8277
        %8286 = vmatprep.subr.bf16.mxu0 0
        %8287 = vmatpush1.bf16.xpose.msra.mxu0 %v8274
        %8288 = vmatprep.subr.bf16.mxu0 0
        %8289 = vmatpush1.bf16.xpose.msra.mxu0 %v8271
        %8290 = vmatprep.subr.bf16.mxu0 0
        %8291 = vmatpush1.bf16.xpose.msra.mxu0 %v8268
        %8292 = vmatprep.subr.bf16.mxu0 0
        %8293 = vmatpush1.bf16.xpose.msra.mxu0 %v8265
        %8294 = vmatprep.subr.bf16.mxu0 0
        %8295 = vmatpush1.bf16.xpose.msra.mxu0 %v8262
        %8296 = vmatprep.subr.bf16.mxu0 0
        %8297 = vmatpush1.bf16.xpose.msra.mxu0 %v8259
        %8298 = vmatprep.subr.bf16.mxu0 0
        %8299 = vmatpush2.bf16.xpose.msra.mxu0 0
        %8300 = vmatprep.subr.bf16.mxu0 0
        %8301 = vmatpush2.bf16.xpose.msra.mxu0 0
        %8302 = vmatprep.subr.bf16.mxu0 0
        %8303 = vmatpush2.bf16.xpose.msra.mxu0 0
        %8304 = vmatprep.subr.bf16.mxu0 0
        %8305 = vmatpush2.bf16.xpose.msra.mxu0 0
        %8306 = vmatprep.subr.bf16.mxu0 0
        %8307 = vmatpush2.bf16.xpose.msra.mxu0 0
        %8308 = vmatprep.subr.bf16.mxu0 0
        %8309 = vmatpush2.bf16.xpose.msra.mxu0 0
        %8310 = vmatprep.subr.bf16.mxu0 0
        %8311 = vmatpush2.bf16.xpose.msra.mxu0 0
        %8312 = vmatprep.subr.bf16.mxu0 0
        %8313 = vmatpush2.bf16.xpose.msra.mxu0 0
        %8314 = vmatprep.mubr.bf16.mxu0 0
        %8315 = vmatmul.mubr.bf16.gmra.mxu0 %v8235
        %v8316 = vpop.f32.mrf.mxu0
        %v8317 = vadd.f32 0.0, %v8316
        %v8318 = vpop.f32.mrf.mxu0
        %v8319 = vpop.f32.mrf.mxu0
        %v8320 = vadd.f32 0.0, %v8319
        %v8321 = vpop.f32.mrf.mxu0
        %8322 = vmatprep.mubr.bf16.mxu0 0
        %8323 = vmatmul.mubr.bf16.gmra.mxu0 %v8238
        %v8324 = vpop.f32.mrf.mxu0
        %v8325 = vadd.f32 0.0, %v8324
        %v8326 = vpop.f32.mrf.mxu0
        %v8327 = vpop.f32.mrf.mxu0
        %v8328 = vadd.f32 0.0, %v8327
        %v8329 = vpop.f32.mrf.mxu0
        %8330 = vmatprep.mubr.bf16.mxu0 0
        %8331 = vmatmul.mubr.bf16.gmra.mxu0 %v8241
        %v8332 = vpop.f32.mrf.mxu0
        %v8333 = vadd.f32 0.0, %v8332
        %v8334 = vpop.f32.mrf.mxu0
        %v8335 = vpop.f32.mrf.mxu0
        %v8336 = vadd.f32 0.0, %v8335
        %v8337 = vpop.f32.mrf.mxu0
        %8338 = vmatprep.mubr.bf16.mxu0 0
        %8339 = vmatmul.mubr.bf16.gmra.mxu0 %v8244
        %v8340 = vpop.f32.mrf.mxu0
        %v8341 = vadd.f32 0.0, %v8340
        %v8342 = vpop.f32.mrf.mxu0
        %v8343 = vpop.f32.mrf.mxu0
        %v8344 = vadd.f32 0.0, %v8343
        %v8345 = vpop.f32.mrf.mxu0
        %8346 = vmatprep.mubr.bf16.mxu0 0
        %8347 = vmatmul.mubr.bf16.gmra.mxu0 %v8247
        %v8348 = vpop.f32.mrf.mxu0
        %v8349 = vadd.f32 0.0, %v8348
        %v8350 = vpop.f32.mrf.mxu0
        %v8351 = vpop.f32.mrf.mxu0
        %v8352 = vadd.f32 0.0, %v8351
        %v8353 = vpop.f32.mrf.mxu0
        %8354 = vmatprep.mubr.bf16.mxu0 0
        %8355 = vmatmul.mubr.bf16.gmra.mxu0 %v8250
        %v8356 = vpop.f32.mrf.mxu0
        %v8357 = vadd.f32 0.0, %v8356
        %v8358 = vpop.f32.mrf.mxu0
        %v8359 = vpop.f32.mrf.mxu0
        %v8360 = vadd.f32 0.0, %v8359
        %v8361 = vpop.f32.mrf.mxu0
        %8362 = vmatprep.mubr.bf16.mxu0 0
        %8363 = vmatmul.mubr.bf16.gmra.mxu0 %v8253
        %v8364 = vpop.f32.mrf.mxu0
        %v8365 = vadd.f32 0.0, %v8364
        %v8366 = vpop.f32.mrf.mxu0
        %v8367 = vpop.f32.mrf.mxu0
        %v8368 = vadd.f32 0.0, %v8367
        %v8369 = vpop.f32.mrf.mxu0
        %8370 = vmatprep.mubr.bf16.mxu0 0
        %8371 = vmatmul.mubr.bf16.gmra.mxu0 %v8256
        %v8372 = vpop.f32.mrf.mxu0
        %v8373 = vadd.f32 0.0, %v8372
        %v8374 = vpop.f32.mrf.mxu0
        %v8375 = vpop.f32.mrf.mxu0
        %v8376 = vadd.f32 0.0, %v8375
        %v8377 = vpop.f32.mrf.mxu0
        %8378 = vdwg.mxu0
        %v8380 = vsel %vm3703, %v8194, 0
        %v8383 = vsel %vm3703, %v8195, 0
        %v8386 = vsel %vm3703, %v8196, 0
        %v8389 = vsel %vm3703, %v8197, 0
        %v8392 = vsel %vm3703, %v8198, 0
        %v8395 = vsel %vm3703, %v8199, 0
        %v8398 = vsel %vm3703, %v8200, 0
        %v8401 = vsel %vm3703, %v8201, 0
        %v8404 = vsel %vm3703, %v8210, 0
        %v8407 = vsel %vm3703, %v8211, 0
        %v8410 = vsel %vm3703, %v8212, 0
        %v8413 = vsel %vm3703, %v8213, 0
        %v8416 = vsel %vm3703, %v8214, 0
        %v8419 = vsel %vm3703, %v8215, 0
        %v8422 = vsel %vm3703, %v8216, 0
        %v8425 = vsel %vm3703, %v8217, 0
        %8427 = vmatprep.subr.bf16.mxu0 0
        %8428 = vmatpush1.bf16.xpose.msra.mxu0 %v8425
        %8429 = vmatprep.subr.bf16.mxu0 0
        %8430 = vmatpush1.bf16.xpose.msra.mxu0 %v8422
        %8431 = vmatprep.subr.bf16.mxu0 0
        %8432 = vmatpush1.bf16.xpose.msra.mxu0 %v8419
        %8433 = vmatprep.subr.bf16.mxu0 0
        %8434 = vmatpush1.bf16.xpose.msra.mxu0 %v8416
        %8435 = vmatprep.subr.bf16.mxu0 0
        %8436 = vmatpush1.bf16.xpose.msra.mxu0 %v8413
        %8437 = vmatprep.subr.bf16.mxu0 0
        %8438 = vmatpush1.bf16.xpose.msra.mxu0 %v8410
        %8439 = vmatprep.subr.bf16.mxu0 0
        %8440 = vmatpush1.bf16.xpose.msra.mxu0 %v8407
        %8441 = vmatprep.subr.bf16.mxu0 0
        %8442 = vmatpush1.bf16.xpose.msra.mxu0 %v8404
        %8443 = vmatprep.subr.bf16.mxu0 0
        %8444 = vmatpush2.bf16.xpose.msra.mxu0 0
        %8445 = vmatprep.subr.bf16.mxu0 0
        %8446 = vmatpush2.bf16.xpose.msra.mxu0 0
        %8447 = vmatprep.subr.bf16.mxu0 0
        %8448 = vmatpush2.bf16.xpose.msra.mxu0 0
        %8449 = vmatprep.subr.bf16.mxu0 0
        %8450 = vmatpush2.bf16.xpose.msra.mxu0 0
        %8451 = vmatprep.subr.bf16.mxu0 0
        %8452 = vmatpush2.bf16.xpose.msra.mxu0 0
        %8453 = vmatprep.subr.bf16.mxu0 0
        %8454 = vmatpush2.bf16.xpose.msra.mxu0 0
        %8455 = vmatprep.subr.bf16.mxu0 0
        %8456 = vmatpush2.bf16.xpose.msra.mxu0 0
        %8457 = vmatprep.subr.bf16.mxu0 0
        %8458 = vmatpush2.bf16.xpose.msra.mxu0 0
        %8459 = vmatprep.mubr.bf16.mxu0 0
        %8460 = vmatmul.mubr.bf16.gmra.mxu0 %v8380
        %v8461 = vpop.f32.mrf.mxu0
        %v8462 = vadd.f32 0.0, %v8461
        %v8463 = vpop.f32.mrf.mxu0
        %v8464 = vpop.f32.mrf.mxu0
        %v8465 = vadd.f32 0.0, %v8464
        %v8466 = vpop.f32.mrf.mxu0
        %8467 = vmatprep.mubr.bf16.mxu0 0
        %8468 = vmatmul.mubr.bf16.gmra.mxu0 %v8383
        %v8469 = vpop.f32.mrf.mxu0
        %v8470 = vadd.f32 0.0, %v8469
        %v8471 = vpop.f32.mrf.mxu0
        %v8472 = vpop.f32.mrf.mxu0
        %v8473 = vadd.f32 0.0, %v8472
        %v8474 = vpop.f32.mrf.mxu0
        %8475 = vmatprep.mubr.bf16.mxu0 0
        %8476 = vmatmul.mubr.bf16.gmra.mxu0 %v8386
        %v8477 = vpop.f32.mrf.mxu0
        %v8478 = vadd.f32 0.0, %v8477
        %v8479 = vpop.f32.mrf.mxu0
        %v8480 = vpop.f32.mrf.mxu0
        %v8481 = vadd.f32 0.0, %v8480
        %v8482 = vpop.f32.mrf.mxu0
        %8483 = vmatprep.mubr.bf16.mxu0 0
        %8484 = vmatmul.mubr.bf16.gmra.mxu0 %v8389
        %v8485 = vpop.f32.mrf.mxu0
        %v8486 = vadd.f32 0.0, %v8485
        %v8487 = vpop.f32.mrf.mxu0
        %v8488 = vpop.f32.mrf.mxu0
        %v8489 = vadd.f32 0.0, %v8488
        %v8490 = vpop.f32.mrf.mxu0
        %8491 = vmatprep.mubr.bf16.mxu0 0
        %8492 = vmatmul.mubr.bf16.gmra.mxu0 %v8392
        %v8493 = vpop.f32.mrf.mxu0
        %v8494 = vadd.f32 0.0, %v8493
        %v8495 = vpop.f32.mrf.mxu0
        %v8496 = vpop.f32.mrf.mxu0
        %v8497 = vadd.f32 0.0, %v8496
        %v8498 = vpop.f32.mrf.mxu0
        %8499 = vmatprep.mubr.bf16.mxu0 0
        %8500 = vmatmul.mubr.bf16.gmra.mxu0 %v8395
        %v8501 = vpop.f32.mrf.mxu0
        %v8502 = vadd.f32 0.0, %v8501
        %v8503 = vpop.f32.mrf.mxu0
        %v8504 = vpop.f32.mrf.mxu0
        %v8505 = vadd.f32 0.0, %v8504
        %v8506 = vpop.f32.mrf.mxu0
        %8507 = vmatprep.mubr.bf16.mxu0 0
        %8508 = vmatmul.mubr.bf16.gmra.mxu0 %v8398
        %v8509 = vpop.f32.mrf.mxu0
        %v8510 = vadd.f32 0.0, %v8509
        %v8511 = vpop.f32.mrf.mxu0
        %v8512 = vpop.f32.mrf.mxu0
        %v8513 = vadd.f32 0.0, %v8512
        %v8514 = vpop.f32.mrf.mxu0
        %8515 = vmatprep.mubr.bf16.mxu0 0
        %8516 = vmatmul.mubr.bf16.gmra.mxu0 %v8401
        %v8517 = vpop.f32.mrf.mxu0
        %v8518 = vadd.f32 0.0, %v8517
        %v8519 = vpop.f32.mrf.mxu0
        %v8520 = vpop.f32.mrf.mxu0
        %v8521 = vadd.f32 0.0, %v8520
        %v8522 = vpop.f32.mrf.mxu0
        %8523 = vdwg.mxu0
        %v8524 = vsel %vm4010, %v8317, -inf
        %v8525 = vsel %vm4011, %v8320, -inf
        %v8526 = vsel %vm4012, %v8325, -inf
        %v8527 = vsel %vm4013, %v8328, -inf
        %v8528 = vsel %vm4014, %v8333, -inf
        %v8529 = vsel %vm4015, %v8336, -inf
        %v8530 = vsel %vm4016, %v8341, -inf
        %v8531 = vsel %vm4017, %v8344, -inf
        %v8532 = vsel %vm4018, %v8349, -inf
        %v8533 = vsel %vm4019, %v8352, -inf
        %v8534 = vsel %vm4020, %v8357, -inf
        %v8535 = vsel %vm4021, %v8360, -inf
        %v8536 = vsel %vm4022, %v8365, -inf
        %v8537 = vsel %vm4023, %v8368, -inf
        %v8538 = vsel %vm4024, %v8373, -inf
        %v8539 = vsel %vm4025, %v8376, -inf
        %v8540 = vsel %vm4010, %v8462, -inf
        %v8541 = vsel %vm4011, %v8465, -inf
        %v8542 = vsel %vm4012, %v8470, -inf
        %v8543 = vsel %vm4013, %v8473, -inf
        %v8544 = vsel %vm4014, %v8478, -inf
        %v8545 = vsel %vm4015, %v8481, -inf
        %v8546 = vsel %vm4016, %v8486, -inf
        %v8547 = vsel %vm4017, %v8489, -inf
        %v8548 = vsel %vm4018, %v8494, -inf
        %v8549 = vsel %vm4019, %v8497, -inf
        %v8550 = vsel %vm4020, %v8502, -inf
        %v8551 = vsel %vm4021, %v8505, -inf
        %v8552 = vsel %vm4022, %v8510, -inf
        %v8553 = vsel %vm4023, %v8513, -inf
        %v8554 = vsel %vm4024, %v8518, -inf
        %v8555 = vsel %vm4025, %v8521, -inf
        %8556 = vmax.xlane.f32.xlu0 %v8524
        %v8557 = vpop.xlane.xlu0 %8556
        %8558 = vmax.xlane.f32.xlu0 %v8525
        %v8559 = vpop.xlane.xlu0 %8558
        %8560 = vmax.xlane.f32.xlu0 %v8526
        %v8561 = vpop.xlane.xlu0 %8560
        %8562 = vmax.xlane.f32.xlu0 %v8527
        %v8563 = vpop.xlane.xlu0 %8562
        %8564 = vmax.xlane.f32.xlu0 %v8528
        %v8565 = vpop.xlane.xlu0 %8564
        %8566 = vmax.xlane.f32.xlu0 %v8529
        %v8567 = vpop.xlane.xlu0 %8566
        %8568 = vmax.xlane.f32.xlu0 %v8530
        %v8569 = vpop.xlane.xlu0 %8568
        %8570 = vmax.xlane.f32.xlu0 %v8531
        %v8571 = vpop.xlane.xlu0 %8570
        %8572 = vmax.xlane.f32.xlu0 %v8532
        %v8573 = vpop.xlane.xlu0 %8572
        %8574 = vmax.xlane.f32.xlu0 %v8533
        %v8575 = vpop.xlane.xlu0 %8574
        %8576 = vmax.xlane.f32.xlu0 %v8534
        %v8577 = vpop.xlane.xlu0 %8576
        %8578 = vmax.xlane.f32.xlu0 %v8535
        %v8579 = vpop.xlane.xlu0 %8578
        %8580 = vmax.xlane.f32.xlu0 %v8536
        %v8581 = vpop.xlane.xlu0 %8580
        %8582 = vmax.xlane.f32.xlu0 %v8537
        %v8583 = vpop.xlane.xlu0 %8582
        %8584 = vmax.xlane.f32.xlu0 %v8538
        %v8585 = vpop.xlane.xlu0 %8584
        %8586 = vmax.xlane.f32.xlu0 %v8539
        %v8587 = vpop.xlane.xlu0 %8586
        %8588 = vmax.xlane.f32.xlu0 %v8540
        %v8589 = vpop.xlane.xlu0 %8588
        %8590 = vmax.xlane.f32.xlu0 %v8541
        %v8591 = vpop.xlane.xlu0 %8590
        %8592 = vmax.xlane.f32.xlu0 %v8542
        %v8593 = vpop.xlane.xlu0 %8592
        %8594 = vmax.xlane.f32.xlu0 %v8543
        %v8595 = vpop.xlane.xlu0 %8594
        %8596 = vmax.xlane.f32.xlu0 %v8544
        %v8597 = vpop.xlane.xlu0 %8596
        %8598 = vmax.xlane.f32.xlu0 %v8545
        %v8599 = vpop.xlane.xlu0 %8598
        %8600 = vmax.xlane.f32.xlu0 %v8546
        %v8601 = vpop.xlane.xlu0 %8600
        %8602 = vmax.xlane.f32.xlu0 %v8547
        %v8603 = vpop.xlane.xlu0 %8602
        %8604 = vmax.xlane.f32.xlu0 %v8548
        %v8605 = vpop.xlane.xlu0 %8604
        %8606 = vmax.xlane.f32.xlu0 %v8549
        %v8607 = vpop.xlane.xlu0 %8606
        %8608 = vmax.xlane.f32.xlu0 %v8550
        %v8609 = vpop.xlane.xlu0 %8608
        %8610 = vmax.xlane.f32.xlu0 %v8551
        %v8611 = vpop.xlane.xlu0 %8610
        %8612 = vmax.xlane.f32.xlu0 %v8552
        %v8613 = vpop.xlane.xlu0 %8612
        %8614 = vmax.xlane.f32.xlu0 %v8553
        %v8615 = vpop.xlane.xlu0 %8614
        %8616 = vmax.xlane.f32.xlu0 %v8554
        %v8617 = vpop.xlane.xlu0 %8616
        %8618 = vmax.xlane.f32.xlu0 %v8555
        %v8619 = vpop.xlane.xlu0 %8618
        %v8620 = vsub.f32 %v8524, %v8557
        %v8621 = vsub.f32 %v8525, %v8559
        %v8622 = vsub.f32 %v8526, %v8561
        %v8623 = vsub.f32 %v8527, %v8563
        %v8624 = vsub.f32 %v8528, %v8565
        %v8625 = vsub.f32 %v8529, %v8567
        %v8626 = vsub.f32 %v8530, %v8569
        %v8627 = vsub.f32 %v8531, %v8571
        %v8628 = vsub.f32 %v8532, %v8573
        %v8629 = vsub.f32 %v8533, %v8575
        %v8630 = vsub.f32 %v8534, %v8577
        %v8631 = vsub.f32 %v8535, %v8579
        %v8632 = vsub.f32 %v8536, %v8581
        %v8633 = vsub.f32 %v8537, %v8583
        %v8634 = vsub.f32 %v8538, %v8585
        %v8635 = vsub.f32 %v8539, %v8587
        %v8636 = vsub.f32 %v8540, %v8589
        %v8637 = vsub.f32 %v8541, %v8591
        %v8638 = vsub.f32 %v8542, %v8593
        %v8639 = vsub.f32 %v8543, %v8595
        %v8640 = vsub.f32 %v8544, %v8597
        %v8641 = vsub.f32 %v8545, %v8599
        %v8642 = vsub.f32 %v8546, %v8601
        %v8643 = vsub.f32 %v8547, %v8603
        %v8644 = vsub.f32 %v8548, %v8605
        %v8645 = vsub.f32 %v8549, %v8607
        %v8646 = vsub.f32 %v8550, %v8609
        %v8647 = vsub.f32 %v8551, %v8611
        %v8648 = vsub.f32 %v8552, %v8613
        %v8649 = vsub.f32 %v8553, %v8615
        %v8650 = vsub.f32 %v8554, %v8617
        %v8651 = vsub.f32 %v8555, %v8619
        %v8652 = vmul.f32 %v8620, 1.442695
        %v8653 = vpow.pop %v8652
        %v8654 = vmul.f32 %v8621, 1.442695
        %v8655 = vpow.pop %v8654
        %v8656 = vmul.f32 %v8622, 1.442695
        %v8657 = vpow.pop %v8656
        %v8658 = vmul.f32 %v8623, 1.442695
        %v8659 = vpow.pop %v8658
        %v8660 = vmul.f32 %v8624, 1.442695
        %v8661 = vpow.pop %v8660
        %v8662 = vmul.f32 %v8625, 1.442695
        %v8663 = vpow.pop %v8662
        %v8664 = vmul.f32 %v8626, 1.442695
        %v8665 = vpow.pop %v8664
        %v8666 = vmul.f32 %v8627, 1.442695
        %v8667 = vpow.pop %v8666
        %v8668 = vmul.f32 %v8628, 1.442695
        %v8669 = vpow.pop %v8668
        %v8670 = vmul.f32 %v8629, 1.442695
        %v8671 = vpow.pop %v8670
        %v8672 = vmul.f32 %v8630, 1.442695
        %v8673 = vpow.pop %v8672
        %v8674 = vmul.f32 %v8631, 1.442695
        %v8675 = vpow.pop %v8674
        %v8676 = vmul.f32 %v8632, 1.442695
        %v8677 = vpow.pop %v8676
        %v8678 = vmul.f32 %v8633, 1.442695
        %v8679 = vpow.pop %v8678
        %v8680 = vmul.f32 %v8634, 1.442695
        %v8681 = vpow.pop %v8680
        %v8682 = vmul.f32 %v8635, 1.442695
        %v8683 = vpow.pop %v8682
        %v8684 = vmul.f32 %v8636, 1.442695
        %v8685 = vpow.pop %v8684
        %v8686 = vmul.f32 %v8637, 1.442695
        %v8687 = vpow.pop %v8686
        %v8688 = vmul.f32 %v8638, 1.442695
        %v8689 = vpow.pop %v8688
        %v8690 = vmul.f32 %v8639, 1.442695
        %v8691 = vpow.pop %v8690
        %v8692 = vmul.f32 %v8640, 1.442695
        %v8693 = vpow.pop %v8692
        %v8694 = vmul.f32 %v8641, 1.442695
        %v8695 = vpow.pop %v8694
        %v8696 = vmul.f32 %v8642, 1.442695
        %v8697 = vpow.pop %v8696
        %v8698 = vmul.f32 %v8643, 1.442695
        %v8699 = vpow.pop %v8698
        %v8700 = vmul.f32 %v8644, 1.442695
        %v8701 = vpow.pop %v8700
        %v8702 = vmul.f32 %v8645, 1.442695
        %v8703 = vpow.pop %v8702
        %v8704 = vmul.f32 %v8646, 1.442695
        %v8705 = vpow.pop %v8704
        %v8706 = vmul.f32 %v8647, 1.442695
        %v8707 = vpow.pop %v8706
        %v8708 = vmul.f32 %v8648, 1.442695
        %v8709 = vpow.pop %v8708
        %v8710 = vmul.f32 %v8649, 1.442695
        %v8711 = vpow.pop %v8710
        %v8712 = vmul.f32 %v8650, 1.442695
        %v8713 = vpow.pop %v8712
        %v8714 = vmul.f32 %v8651, 1.442695
        %v8715 = vpow.pop %v8714
        %8716 = vadd.xlane.f32.xlu0 %v8653
        %v8717 = vpop.xlane.xlu0 %8716
        %8718 = vadd.xlane.f32.xlu0 %v8655
        %v8719 = vpop.xlane.xlu0 %8718
        %8720 = vadd.xlane.f32.xlu0 %v8657
        %v8721 = vpop.xlane.xlu0 %8720
        %8722 = vadd.xlane.f32.xlu0 %v8659
        %v8723 = vpop.xlane.xlu0 %8722
        %8724 = vadd.xlane.f32.xlu0 %v8661
        %v8725 = vpop.xlane.xlu0 %8724
        %8726 = vadd.xlane.f32.xlu0 %v8663
        %v8727 = vpop.xlane.xlu0 %8726
        %8728 = vadd.xlane.f32.xlu0 %v8665
        %v8729 = vpop.xlane.xlu0 %8728
        %8730 = vadd.xlane.f32.xlu0 %v8667
        %v8731 = vpop.xlane.xlu0 %8730
        %8732 = vadd.xlane.f32.xlu0 %v8669
        %v8733 = vpop.xlane.xlu0 %8732
        %8734 = vadd.xlane.f32.xlu0 %v8671
        %v8735 = vpop.xlane.xlu0 %8734
        %8736 = vadd.xlane.f32.xlu0 %v8673
        %v8737 = vpop.xlane.xlu0 %8736
        %8738 = vadd.xlane.f32.xlu0 %v8675
        %v8739 = vpop.xlane.xlu0 %8738
        %8740 = vadd.xlane.f32.xlu0 %v8677
        %v8741 = vpop.xlane.xlu0 %8740
        %8742 = vadd.xlane.f32.xlu0 %v8679
        %v8743 = vpop.xlane.xlu0 %8742
        %8744 = vadd.xlane.f32.xlu0 %v8681
        %v8745 = vpop.xlane.xlu0 %8744
        %8746 = vadd.xlane.f32.xlu0 %v8683
        %v8747 = vpop.xlane.xlu0 %8746
        %8748 = vadd.xlane.f32.xlu0 %v8685
        %v8749 = vpop.xlane.xlu0 %8748
        %8750 = vadd.xlane.f32.xlu0 %v8687
        %v8751 = vpop.xlane.xlu0 %8750
        %8752 = vadd.xlane.f32.xlu0 %v8689
        %v8753 = vpop.xlane.xlu0 %8752
        %8754 = vadd.xlane.f32.xlu0 %v8691
        %v8755 = vpop.xlane.xlu0 %8754
        %8756 = vadd.xlane.f32.xlu0 %v8693
        %v8757 = vpop.xlane.xlu0 %8756
        %8758 = vadd.xlane.f32.xlu0 %v8695
        %v8759 = vpop.xlane.xlu0 %8758
        %8760 = vadd.xlane.f32.xlu0 %v8697
        %v8761 = vpop.xlane.xlu0 %8760
        %8762 = vadd.xlane.f32.xlu0 %v8699
        %v8763 = vpop.xlane.xlu0 %8762
        %8764 = vadd.xlane.f32.xlu0 %v8701
        %v8765 = vpop.xlane.xlu0 %8764
        %8766 = vadd.xlane.f32.xlu0 %v8703
        %v8767 = vpop.xlane.xlu0 %8766
        %8768 = vadd.xlane.f32.xlu0 %v8705
        %v8769 = vpop.xlane.xlu0 %8768
        %8770 = vadd.xlane.f32.xlu0 %v8707
        %v8771 = vpop.xlane.xlu0 %8770
        %8772 = vadd.xlane.f32.xlu0 %v8709
        %v8773 = vpop.xlane.xlu0 %8772
        %8774 = vadd.xlane.f32.xlu0 %v8711
        %v8775 = vpop.xlane.xlu0 %8774
        %8776 = vadd.xlane.f32.xlu0 %v8713
        %v8777 = vpop.xlane.xlu0 %8776
        %8778 = vadd.xlane.f32.xlu0 %v8715
        %v8779 = vpop.xlane.xlu0 %8778
        %v8780 = vrcp.pop %v8717
        %v8781 = vrcp.pop %v8719
        %v8782 = vrcp.pop %v8721
        %v8783 = vrcp.pop %v8723
        %v8784 = vrcp.pop %v8725
        %v8785 = vrcp.pop %v8727
        %v8786 = vrcp.pop %v8729
        %v8787 = vrcp.pop %v8731
        %v8788 = vrcp.pop %v8733
        %v8789 = vrcp.pop %v8735
        %v8790 = vrcp.pop %v8737
        %v8791 = vrcp.pop %v8739
        %v8792 = vrcp.pop %v8741
        %v8793 = vrcp.pop %v8743
        %v8794 = vrcp.pop %v8745
        %v8795 = vrcp.pop %v8747
        %v8796 = vrcp.pop %v8749
        %v8797 = vrcp.pop %v8751
        %v8798 = vrcp.pop %v8753
        %v8799 = vrcp.pop %v8755
        %v8800 = vrcp.pop %v8757
        %v8801 = vrcp.pop %v8759
        %v8802 = vrcp.pop %v8761
        %v8803 = vrcp.pop %v8763
        %v8804 = vrcp.pop %v8765
        %v8805 = vrcp.pop %v8767
        %v8806 = vrcp.pop %v8769
        %v8807 = vrcp.pop %v8771
        %v8808 = vrcp.pop %v8773
        %v8809 = vrcp.pop %v8775
        %v8810 = vrcp.pop %v8777
        %v8811 = vrcp.pop %v8779
        %v8812 = vmul.f32 %v8653, %v8780
        %v8813 = vmul.f32 %v8655, %v8781
        %v8814 = vmul.f32 %v8657, %v8782
        %v8815 = vmul.f32 %v8659, %v8783
        %v8816 = vmul.f32 %v8661, %v8784
        %v8817 = vmul.f32 %v8663, %v8785
        %v8818 = vmul.f32 %v8665, %v8786
        %v8819 = vmul.f32 %v8667, %v8787
        %v8820 = vmul.f32 %v8669, %v8788
        %v8821 = vmul.f32 %v8671, %v8789
        %v8822 = vmul.f32 %v8673, %v8790
        %v8823 = vmul.f32 %v8675, %v8791
        %v8824 = vmul.f32 %v8677, %v8792
        %v8825 = vmul.f32 %v8679, %v8793
        %v8826 = vmul.f32 %v8681, %v8794
        %v8827 = vmul.f32 %v8683, %v8795
        %v8828 = vmul.f32 %v8685, %v8796
        %v8829 = vmul.f32 %v8687, %v8797
        %v8830 = vmul.f32 %v8689, %v8798
        %v8831 = vmul.f32 %v8691, %v8799
        %v8832 = vmul.f32 %v8693, %v8800
        %v8833 = vmul.f32 %v8695, %v8801
        %v8834 = vmul.f32 %v8697, %v8802
        %v8835 = vmul.f32 %v8699, %v8803
        %v8836 = vmul.f32 %v8701, %v8804
        %v8837 = vmul.f32 %v8703, %v8805
        %v8838 = vmul.f32 %v8705, %v8806
        %v8839 = vmul.f32 %v8707, %v8807
        %v8840 = vmul.f32 %v8709, %v8808
        %v8841 = vmul.f32 %v8711, %v8809
        %v8842 = vmul.f32 %v8713, %v8810
        %v8843 = vmul.f32 %v8715, %v8811
        %v8844 = vpack.c.bf16 %v8813, %v8812
        %v8845 = vpack.c.bf16 %v8815, %v8814
        %v8846 = vpack.c.bf16 %v8817, %v8816
        %v8847 = vpack.c.bf16 %v8819, %v8818
        %v8848 = vpack.c.bf16 %v8821, %v8820
        %v8849 = vpack.c.bf16 %v8823, %v8822
        %v8850 = vpack.c.bf16 %v8825, %v8824
        %v8851 = vpack.c.bf16 %v8827, %v8826
        %v8852 = vpack.c.bf16 %v8829, %v8828
        %v8853 = vpack.c.bf16 %v8831, %v8830
        %v8854 = vpack.c.bf16 %v8833, %v8832
        %v8855 = vpack.c.bf16 %v8835, %v8834
        %v8856 = vpack.c.bf16 %v8837, %v8836
        %v8857 = vpack.c.bf16 %v8839, %v8838
        %v8858 = vpack.c.bf16 %v8841, %v8840
        %v8859 = vpack.c.bf16 %v8843, %v8842
        %8860 = vmatprep.subr.bf16.mxu0 0
        %8861 = vmatpush1.bf16.msra.mxu0 %v8225
        %8862 = vmatprep.subr.bf16.mxu0 0
        %8863 = vmatpush1.bf16.msra.mxu0 %v8224
        %8864 = vmatprep.subr.bf16.mxu0 0
        %8865 = vmatpush1.bf16.msra.mxu0 %v8223
        %8866 = vmatprep.subr.bf16.mxu0 0
        %8867 = vmatpush1.bf16.msra.mxu0 %v8222
        %8868 = vmatprep.subr.bf16.mxu0 0
        %8869 = vmatpush1.bf16.msra.mxu0 %v8221
        %8870 = vmatprep.subr.bf16.mxu0 0
        %8871 = vmatpush1.bf16.msra.mxu0 %v8220
        %8872 = vmatprep.subr.bf16.mxu0 0
        %8873 = vmatpush1.bf16.msra.mxu0 %v8219
        %8874 = vmatprep.subr.bf16.mxu0 0
        %8875 = vmatpush1.bf16.msra.mxu0 %v8218
        %8876 = vmatprep.subr.bf16.mxu0 0
        %8877 = vmatpush2.bf16.msra.mxu0 0
        %8878 = vmatprep.subr.bf16.mxu0 0
        %8879 = vmatpush2.bf16.msra.mxu0 0
        %8880 = vmatprep.subr.bf16.mxu0 0
        %8881 = vmatpush2.bf16.msra.mxu0 0
        %8882 = vmatprep.subr.bf16.mxu0 0
        %8883 = vmatpush2.bf16.msra.mxu0 0
        %8884 = vmatprep.subr.bf16.mxu0 0
        %8885 = vmatpush2.bf16.msra.mxu0 0
        %8886 = vmatprep.subr.bf16.mxu0 0
        %8887 = vmatpush2.bf16.msra.mxu0 0
        %8888 = vmatprep.subr.bf16.mxu0 0
        %8889 = vmatpush2.bf16.msra.mxu0 0
        %8890 = vmatprep.subr.bf16.mxu0 0
        %8891 = vmatpush2.bf16.msra.mxu0 0
        %8892 = vmatprep.mubr.bf16.mxu0 0
        %8893 = vmatmul.mubr.bf16.gmra.mxu0 %v8844
        %v8894 = vpop.f32.mrf.mxu0
        %v8895 = vadd.f32 0.0, %v8894
        %v8896 = vpop.f32.mrf.mxu0
        %v8897 = vpop.f32.mrf.mxu0
        %v8898 = vadd.f32 0.0, %v8897
        %v8899 = vpop.f32.mrf.mxu0
        %8900 = vmatprep.mubr.bf16.mxu0 0
        %8901 = vmatmul.mubr.bf16.gmra.mxu0 %v8845
        %v8902 = vpop.f32.mrf.mxu0
        %v8903 = vadd.f32 0.0, %v8902
        %v8904 = vpop.f32.mrf.mxu0
        %v8905 = vpop.f32.mrf.mxu0
        %v8906 = vadd.f32 0.0, %v8905
        %v8907 = vpop.f32.mrf.mxu0
        %8908 = vmatprep.mubr.bf16.mxu0 0
        %8909 = vmatmul.mubr.bf16.gmra.mxu0 %v8846
        %v8910 = vpop.f32.mrf.mxu0
        %v8911 = vadd.f32 0.0, %v8910
        %v8912 = vpop.f32.mrf.mxu0
        %v8913 = vpop.f32.mrf.mxu0
        %v8914 = vadd.f32 0.0, %v8913
        %v8915 = vpop.f32.mrf.mxu0
        %8916 = vmatprep.mubr.bf16.mxu0 0
        %8917 = vmatmul.mubr.bf16.gmra.mxu0 %v8847
        %v8918 = vpop.f32.mrf.mxu0
        %v8919 = vadd.f32 0.0, %v8918
        %v8920 = vpop.f32.mrf.mxu0
        %v8921 = vpop.f32.mrf.mxu0
        %v8922 = vadd.f32 0.0, %v8921
        %v8923 = vpop.f32.mrf.mxu0
        %8924 = vmatprep.mubr.bf16.mxu0 0
        %8925 = vmatmul.mubr.bf16.gmra.mxu0 %v8848
        %v8926 = vpop.f32.mrf.mxu0
        %v8927 = vadd.f32 0.0, %v8926
        %v8928 = vpop.f32.mrf.mxu0
        %v8929 = vpop.f32.mrf.mxu0
        %v8930 = vadd.f32 0.0, %v8929
        %v8931 = vpop.f32.mrf.mxu0
        %8932 = vmatprep.mubr.bf16.mxu0 0
        %8933 = vmatmul.mubr.bf16.gmra.mxu0 %v8849
        %v8934 = vpop.f32.mrf.mxu0
        %v8935 = vadd.f32 0.0, %v8934
        %v8936 = vpop.f32.mrf.mxu0
        %v8937 = vpop.f32.mrf.mxu0
        %v8938 = vadd.f32 0.0, %v8937
        %v8939 = vpop.f32.mrf.mxu0
        %8940 = vmatprep.mubr.bf16.mxu0 0
        %8941 = vmatmul.mubr.bf16.gmra.mxu0 %v8850
        %v8942 = vpop.f32.mrf.mxu0
        %v8943 = vadd.f32 0.0, %v8942
        %v8944 = vpop.f32.mrf.mxu0
        %v8945 = vpop.f32.mrf.mxu0
        %v8946 = vadd.f32 0.0, %v8945
        %v8947 = vpop.f32.mrf.mxu0
        %8948 = vmatprep.mubr.bf16.mxu0 0
        %8949 = vmatmul.mubr.bf16.gmra.mxu0 %v8851
        %v8950 = vpop.f32.mrf.mxu0
        %v8951 = vadd.f32 0.0, %v8950
        %v8952 = vpop.f32.mrf.mxu0
        %v8953 = vpop.f32.mrf.mxu0
        %v8954 = vadd.f32 0.0, %v8953
        %v8955 = vpop.f32.mrf.mxu0
        %8956 = vdwg.mxu0
        %8957 = vmatprep.subr.bf16.mxu0 0
        %8958 = vmatpush1.bf16.msra.mxu0 %v8233
        %8959 = vmatprep.subr.bf16.mxu0 0
        %8960 = vmatpush1.bf16.msra.mxu0 %v8232
        %8961 = vmatprep.subr.bf16.mxu0 0
        %8962 = vmatpush1.bf16.msra.mxu0 %v8231
        %8963 = vmatprep.subr.bf16.mxu0 0
        %8964 = vmatpush1.bf16.msra.mxu0 %v8230
        %8965 = vmatprep.subr.bf16.mxu0 0
        %8966 = vmatpush1.bf16.msra.mxu0 %v8229
        %8967 = vmatprep.subr.bf16.mxu0 0
        %8968 = vmatpush1.bf16.msra.mxu0 %v8228
        %8969 = vmatprep.subr.bf16.mxu0 0
        %8970 = vmatpush1.bf16.msra.mxu0 %v8227
        %8971 = vmatprep.subr.bf16.mxu0 0
        %8972 = vmatpush1.bf16.msra.mxu0 %v8226
        %8973 = vmatprep.subr.bf16.mxu0 0
        %8974 = vmatpush2.bf16.msra.mxu0 0
        %8975 = vmatprep.subr.bf16.mxu0 0
        %8976 = vmatpush2.bf16.msra.mxu0 0
        %8977 = vmatprep.subr.bf16.mxu0 0
        %8978 = vmatpush2.bf16.msra.mxu0 0
        %8979 = vmatprep.subr.bf16.mxu0 0
        %8980 = vmatpush2.bf16.msra.mxu0 0
        %8981 = vmatprep.subr.bf16.mxu0 0
        %8982 = vmatpush2.bf16.msra.mxu0 0
        %8983 = vmatprep.subr.bf16.mxu0 0
        %8984 = vmatpush2.bf16.msra.mxu0 0
        %8985 = vmatprep.subr.bf16.mxu0 0
        %8986 = vmatpush2.bf16.msra.mxu0 0
        %8987 = vmatprep.subr.bf16.mxu0 0
        %8988 = vmatpush2.bf16.msra.mxu0 0
        %8989 = vmatprep.mubr.bf16.mxu0 0
        %8990 = vmatmul.mubr.bf16.gmra.mxu0 %v8852
        %v8991 = vpop.f32.mrf.mxu0
        %v8992 = vadd.f32 0.0, %v8991
        %v8993 = vpop.f32.mrf.mxu0
        %v8994 = vpop.f32.mrf.mxu0
        %v8995 = vadd.f32 0.0, %v8994
        %v8996 = vpop.f32.mrf.mxu0
        %8997 = vmatprep.mubr.bf16.mxu0 0
        %8998 = vmatmul.mubr.bf16.gmra.mxu0 %v8853
        %v8999 = vpop.f32.mrf.mxu0
        %v9000 = vadd.f32 0.0, %v8999
        %v9001 = vpop.f32.mrf.mxu0
        %v9002 = vpop.f32.mrf.mxu0
        %v9003 = vadd.f32 0.0, %v9002
        %v9004 = vpop.f32.mrf.mxu0
        %9005 = vmatprep.mubr.bf16.mxu0 0
        %9006 = vmatmul.mubr.bf16.gmra.mxu0 %v8854
        %v9007 = vpop.f32.mrf.mxu0
        %v9008 = vadd.f32 0.0, %v9007
        %v9009 = vpop.f32.mrf.mxu0
        %v9010 = vpop.f32.mrf.mxu0
        %v9011 = vadd.f32 0.0, %v9010
        %v9012 = vpop.f32.mrf.mxu0
        %9013 = vmatprep.mubr.bf16.mxu0 0
        %9014 = vmatmul.mubr.bf16.gmra.mxu0 %v8855
        %v9015 = vpop.f32.mrf.mxu0
        %v9016 = vadd.f32 0.0, %v9015
        %v9017 = vpop.f32.mrf.mxu0
        %v9018 = vpop.f32.mrf.mxu0
        %v9019 = vadd.f32 0.0, %v9018
        %v9020 = vpop.f32.mrf.mxu0
        %9021 = vmatprep.mubr.bf16.mxu0 0
        %9022 = vmatmul.mubr.bf16.gmra.mxu0 %v8856
        %v9023 = vpop.f32.mrf.mxu0
        %v9024 = vadd.f32 0.0, %v9023
        %v9025 = vpop.f32.mrf.mxu0
        %v9026 = vpop.f32.mrf.mxu0
        %v9027 = vadd.f32 0.0, %v9026
        %v9028 = vpop.f32.mrf.mxu0
        %9029 = vmatprep.mubr.bf16.mxu0 0
        %9030 = vmatmul.mubr.bf16.gmra.mxu0 %v8857
        %v9031 = vpop.f32.mrf.mxu0
        %v9032 = vadd.f32 0.0, %v9031
        %v9033 = vpop.f32.mrf.mxu0
        %v9034 = vpop.f32.mrf.mxu0
        %v9035 = vadd.f32 0.0, %v9034
        %v9036 = vpop.f32.mrf.mxu0
        %9037 = vmatprep.mubr.bf16.mxu0 0
        %9038 = vmatmul.mubr.bf16.gmra.mxu0 %v8858
        %v9039 = vpop.f32.mrf.mxu0
        %v9040 = vadd.f32 0.0, %v9039
        %v9041 = vpop.f32.mrf.mxu0
        %v9042 = vpop.f32.mrf.mxu0
        %v9043 = vadd.f32 0.0, %v9042
        %v9044 = vpop.f32.mrf.mxu0
        %9045 = vmatprep.mubr.bf16.mxu0 0
        %9046 = vmatmul.mubr.bf16.gmra.mxu0 %v8859
        %v9047 = vpop.f32.mrf.mxu0
        %v9048 = vadd.f32 0.0, %v9047
        %v9049 = vpop.f32.mrf.mxu0
        %v9050 = vpop.f32.mrf.mxu0
        %v9051 = vadd.f32 0.0, %v9050
        %v9052 = vpop.f32.mrf.mxu0
        %9053 = vdwg.mxu0
        %v9054 = vpack.c.bf16 %v8898, %v8895
        %v9055 = vpack.c.bf16 %v8906, %v8903
        %v9056 = vpack.c.bf16 %v8914, %v8911
        %v9057 = vpack.c.bf16 %v8922, %v8919
        %v9058 = vpack.c.bf16 %v8930, %v8927
        %v9059 = vpack.c.bf16 %v8938, %v8935
        %v9060 = vpack.c.bf16 %v8946, %v8943
        %v9061 = vpack.c.bf16 %v8954, %v8951
        %v9062 = vpack.c.bf16 %v8995, %v8992
        %v9063 = vpack.c.bf16 %v9003, %v9000
        %v9064 = vpack.c.bf16 %v9011, %v9008
        %v9065 = vpack.c.bf16 %v9019, %v9016
        %v9066 = vpack.c.bf16 %v9027, %v9024
        %v9067 = vpack.c.bf16 %v9035, %v9032
        %v9068 = vpack.c.bf16 %v9043, %v9040
        %v9069 = vpack.c.bf16 %v9051, %v9048
        %v9086 = vunpack.c.l.b16 %v9054
        %v9087 = vunpack.c.h.b16 %v9054
        %v9088 = vunpack.c.l.b16 %v9055
        %v9089 = vunpack.c.h.b16 %v9055
        %v9090 = vunpack.c.l.b16 %v9056
        %v9091 = vunpack.c.h.b16 %v9056
        %v9092 = vunpack.c.l.b16 %v9057
        %v9093 = vunpack.c.h.b16 %v9057
        %v9094 = vunpack.c.l.b16 %v9058
        %v9095 = vunpack.c.h.b16 %v9058
        %v9096 = vunpack.c.l.b16 %v9059
        %v9097 = vunpack.c.h.b16 %v9059
        %v9098 = vunpack.c.l.b16 %v9060
        %v9099 = vunpack.c.h.b16 %v9060
        %v9100 = vunpack.c.l.b16 %v9061
        %v9101 = vunpack.c.h.b16 %v9061
        %v9102 = vunpack.c.l.b16 %v9062
        %v9103 = vunpack.c.h.b16 %v9062
        %v9104 = vunpack.c.l.b16 %v9063
        %v9105 = vunpack.c.h.b16 %v9063
        %v9106 = vunpack.c.l.b16 %v9064
        %v9107 = vunpack.c.h.b16 %v9064
        %v9108 = vunpack.c.l.b16 %v9065
        %v9109 = vunpack.c.h.b16 %v9065
        %v9110 = vunpack.c.l.b16 %v9066
        %v9111 = vunpack.c.h.b16 %v9066
        %v9112 = vunpack.c.l.b16 %v9067
        %v9113 = vunpack.c.h.b16 %v9067
        %v9114 = vunpack.c.l.b16 %v9068
        %v9115 = vunpack.c.h.b16 %v9068
        %v9116 = vunpack.c.l.b16 %v9069
        %v9117 = vunpack.c.h.b16 %v9069
        %v9118 = vpack.c.b16 %v9086, %v9086
        %v9119 = vpack.c.b16 %v9087, %v9087
        %v9120 = vpack.c.b16 %v9088, %v9088
        %v9121 = vpack.c.b16 %v9089, %v9089
        %v9122 = vpack.c.b16 %v9090, %v9090
        %v9123 = vpack.c.b16 %v9091, %v9091
        %v9124 = vpack.c.b16 %v9092, %v9092
        %v9125 = vpack.c.b16 %v9093, %v9093
        %v9126 = vpack.c.b16 %v9094, %v9094
        %v9127 = vpack.c.b16 %v9095, %v9095
        %v9128 = vpack.c.b16 %v9096, %v9096
        %v9129 = vpack.c.b16 %v9097, %v9097
        %v9130 = vpack.c.b16 %v9098, %v9098
        %v9131 = vpack.c.b16 %v9099, %v9099
        %v9132 = vpack.c.b16 %v9100, %v9100
        %v9133 = vpack.c.b16 %v9101, %v9101
        %v9134 = vpack.c.b16 %v9102, %v9102
        %v9135 = vpack.c.b16 %v9103, %v9103
        %v9136 = vpack.c.b16 %v9104, %v9104
        %v9137 = vpack.c.b16 %v9105, %v9105
        %v9138 = vpack.c.b16 %v9106, %v9106
        %v9139 = vpack.c.b16 %v9107, %v9107
        %v9140 = vpack.c.b16 %v9108, %v9108
        %v9141 = vpack.c.b16 %v9109, %v9109
        %v9142 = vpack.c.b16 %v9110, %v9110
        %v9143 = vpack.c.b16 %v9111, %v9111
        %v9144 = vpack.c.b16 %v9112, %v9112
        %v9145 = vpack.c.b16 %v9113, %v9113
        %v9146 = vpack.c.b16 %v9114, %v9114
        %v9147 = vpack.c.b16 %v9115, %v9115
        %v9148 = vpack.c.b16 %v9116, %v9116
        %v9149 = vpack.c.b16 %v9117, %v9117
        %9182 = vst.msk [vmem:[#allocation2 + $0x8] sm:$0xf] %vm4684, %v9118
        %9183 = vst.msk [vmem:[#allocation2 + $0x14] sm:$0xf] %vm4684, %v9119
        %9184 = vst.msk [vmem:[#allocation2 + $0x20] sm:$0xf] %vm4684, %v9120
        %9185 = vst.msk [vmem:[#allocation2 + $0x2c] sm:$0xf] %vm4684, %v9121
        %9186 = vst.msk [vmem:[#allocation2 + $0x38] sm:$0xf] %vm4684, %v9122
        %9187 = vst.msk [vmem:[#allocation2 + $0x44] sm:$0xf] %vm4684, %v9123
        %9188 = vst.msk [vmem:[#allocation2 + $0x50] sm:$0xf] %vm4684, %v9124
        %9189 = vst.msk [vmem:[#allocation2 + $0x5c] sm:$0xf] %vm4684, %v9125
        %9190 = vst.msk [vmem:[#allocation2 + $0x68] sm:$0xf] %vm4684, %v9126
        %9191 = vst.msk [vmem:[#allocation2 + $0x74] sm:$0xf] %vm4684, %v9127
        %9192 = vst.msk [vmem:[#allocation2 + $0x80] sm:$0xf] %vm4684, %v9128
        %9193 = vst.msk [vmem:[#allocation2 + $0x8c] sm:$0xf] %vm4684, %v9129
        %9194 = vst.msk [vmem:[#allocation2 + $0x98] sm:$0xf] %vm4684, %v9130
        %9195 = vst.msk [vmem:[#allocation2 + $0xa4] sm:$0xf] %vm4684, %v9131
        %9196 = vst.msk [vmem:[#allocation2 + $0xb0] sm:$0xf] %vm4684, %v9132
        %9197 = vst.msk [vmem:[#allocation2 + $0xbc] sm:$0xf] %vm4684, %v9133
        %9198 = vst.msk [vmem:[#allocation2 + $0xc8] sm:$0xf] %vm4684, %v9134
        %9199 = vst.msk [vmem:[#allocation2 + $0xd4] sm:$0xf] %vm4684, %v9135
        %9200 = vst.msk [vmem:[#allocation2 + $0xe0] sm:$0xf] %vm4684, %v9136
        %9201 = vst.msk [vmem:[#allocation2 + $0xec] sm:$0xf] %vm4684, %v9137
        %9202 = vst.msk [vmem:[#allocation2 + $0xf8] sm:$0xf] %vm4684, %v9138
        %9203 = vst.msk [vmem:[#allocation2 + $0x104] sm:$0xf] %vm4684, %v9139
        %9204 = vst.msk [vmem:[#allocation2 + $0x110] sm:$0xf] %vm4684, %v9140
        %9205 = vst.msk [vmem:[#allocation2 + $0x11c] sm:$0xf] %vm4684, %v9141
        %9206 = vst.msk [vmem:[#allocation2 + $0x128] sm:$0xf] %vm4684, %v9142
        %9207 = vst.msk [vmem:[#allocation2 + $0x134] sm:$0xf] %vm4684, %v9143
        %9208 = vst.msk [vmem:[#allocation2 + $0x140] sm:$0xf] %vm4684, %v9144
        %9209 = vst.msk [vmem:[#allocation2 + $0x14c] sm:$0xf] %vm4684, %v9145
        %9210 = vst.msk [vmem:[#allocation2 + $0x158] sm:$0xf] %vm4684, %v9146
        %9211 = vst.msk [vmem:[#allocation2 + $0x164] sm:$0xf] %vm4684, %v9147
        %9212 = vst.msk [vmem:[#allocation2 + $0x170] sm:$0xf] %vm4684, %v9148
        %9213 = vst.msk [vmem:[#allocation2 + $0x17c] sm:$0xf] %vm4684, %v9149
        %9222 = vrot.lane.b32.xlu0 %v8186, 64
        %v9223 = vpop.permute.xlu0 %9222
        %9224 = vrot.lane.b32.xlu0 %v8187, 64
        %v9225 = vpop.permute.xlu0 %9224
        %9226 = vrot.lane.b32.xlu0 %v8188, 64
        %v9227 = vpop.permute.xlu0 %9226
        %9228 = vrot.lane.b32.xlu0 %v8189, 64
        %v9229 = vpop.permute.xlu0 %9228
        %9230 = vrot.lane.b32.xlu0 %v8190, 64
        %v9231 = vpop.permute.xlu0 %9230
        %9232 = vrot.lane.b32.xlu0 %v8191, 64
        %v9233 = vpop.permute.xlu0 %9232
        %9234 = vrot.lane.b32.xlu0 %v8192, 64
        %v9235 = vpop.permute.xlu0 %9234
        %9236 = vrot.lane.b32.xlu0 %v8193, 64
        %v9237 = vpop.permute.xlu0 %9236
        %9246 = vrot.lane.b32.xlu0 %v8202, 64
        %v9247 = vpop.permute.xlu0 %9246
        %9248 = vrot.lane.b32.xlu0 %v8203, 64
        %v9249 = vpop.permute.xlu0 %9248
        %9250 = vrot.lane.b32.xlu0 %v8204, 64
        %v9251 = vpop.permute.xlu0 %9250
        %9252 = vrot.lane.b32.xlu0 %v8205, 64
        %v9253 = vpop.permute.xlu0 %9252
        %9254 = vrot.lane.b32.xlu0 %v8206, 64
        %v9255 = vpop.permute.xlu0 %9254
        %9256 = vrot.lane.b32.xlu0 %v8207, 64
        %v9257 = vpop.permute.xlu0 %9256
        %9258 = vrot.lane.b32.xlu0 %v8208, 64
        %v9259 = vpop.permute.xlu0 %9258
        %9260 = vrot.lane.b32.xlu0 %v8209, 64
        %v9261 = vpop.permute.xlu0 %9260
        %v9263 = vsel %vm3703, %v9223, 0
        %v9266 = vsel %vm3703, %v9225, 0
        %v9269 = vsel %vm3703, %v9227, 0
        %v9272 = vsel %vm3703, %v9229, 0
        %v9275 = vsel %vm3703, %v9231, 0
        %v9278 = vsel %vm3703, %v9233, 0
        %v9281 = vsel %vm3703, %v9235, 0
        %v9284 = vsel %vm3703, %v9237, 0
        %v9287 = vsel %vm3703, %v9247, 0
        %v9290 = vsel %vm3703, %v9249, 0
        %v9293 = vsel %vm3703, %v9251, 0
        %v9296 = vsel %vm3703, %v9253, 0
        %v9299 = vsel %vm3703, %v9255, 0
        %v9302 = vsel %vm3703, %v9257, 0
        %v9305 = vsel %vm3703, %v9259, 0
        %v9308 = vsel %vm3703, %v9261, 0
        %9310 = vmatprep.subr.bf16.mxu0 0
        %9311 = vmatpush1.bf16.xpose.msra.mxu0 %v9308
        %9312 = vmatprep.subr.bf16.mxu0 0
        %9313 = vmatpush1.bf16.xpose.msra.mxu0 %v9305
        %9314 = vmatprep.subr.bf16.mxu0 0
        %9315 = vmatpush1.bf16.xpose.msra.mxu0 %v9302
        %9316 = vmatprep.subr.bf16.mxu0 0
        %9317 = vmatpush1.bf16.xpose.msra.mxu0 %v9299
        %9318 = vmatprep.subr.bf16.mxu0 0
        %9319 = vmatpush1.bf16.xpose.msra.mxu0 %v9296
        %9320 = vmatprep.subr.bf16.mxu0 0
        %9321 = vmatpush1.bf16.xpose.msra.mxu0 %v9293
        %9322 = vmatprep.subr.bf16.mxu0 0
        %9323 = vmatpush1.bf16.xpose.msra.mxu0 %v9290
        %9324 = vmatprep.subr.bf16.mxu0 0
        %9325 = vmatpush1.bf16.xpose.msra.mxu0 %v9287
        %9326 = vmatprep.subr.bf16.mxu0 0
        %9327 = vmatpush2.bf16.xpose.msra.mxu0 0
        %9328 = vmatprep.subr.bf16.mxu0 0
        %9329 = vmatpush2.bf16.xpose.msra.mxu0 0
        %9330 = vmatprep.subr.bf16.mxu0 0
        %9331 = vmatpush2.bf16.xpose.msra.mxu0 0
        %9332 = vmatprep.subr.bf16.mxu0 0
        %9333 = vmatpush2.bf16.xpose.msra.mxu0 0
        %9334 = vmatprep.subr.bf16.mxu0 0
        %9335 = vmatpush2.bf16.xpose.msra.mxu0 0
        %9336 = vmatprep.subr.bf16.mxu0 0
        %9337 = vmatpush2.bf16.xpose.msra.mxu0 0
        %9338 = vmatprep.subr.bf16.mxu0 0
        %9339 = vmatpush2.bf16.xpose.msra.mxu0 0
        %9340 = vmatprep.subr.bf16.mxu0 0
        %9341 = vmatpush2.bf16.xpose.msra.mxu0 0
        %9342 = vmatprep.mubr.bf16.mxu0 0
        %9343 = vmatmul.mubr.bf16.gmra.mxu0 %v9263
        %v9344 = vpop.f32.mrf.mxu0
        %v9345 = vadd.f32 0.0, %v9344
        %v9346 = vpop.f32.mrf.mxu0
        %v9347 = vpop.f32.mrf.mxu0
        %v9348 = vadd.f32 0.0, %v9347
        %v9349 = vpop.f32.mrf.mxu0
        %9350 = vmatprep.mubr.bf16.mxu0 0
        %9351 = vmatmul.mubr.bf16.gmra.mxu0 %v9266
        %v9352 = vpop.f32.mrf.mxu0
        %v9353 = vadd.f32 0.0, %v9352
        %v9354 = vpop.f32.mrf.mxu0
        %v9355 = vpop.f32.mrf.mxu0
        %v9356 = vadd.f32 0.0, %v9355
        %v9357 = vpop.f32.mrf.mxu0
        %9358 = vmatprep.mubr.bf16.mxu0 0
        %9359 = vmatmul.mubr.bf16.gmra.mxu0 %v9269
        %v9360 = vpop.f32.mrf.mxu0
        %v9361 = vadd.f32 0.0, %v9360
        %v9362 = vpop.f32.mrf.mxu0
        %v9363 = vpop.f32.mrf.mxu0
        %v9364 = vadd.f32 0.0, %v9363
        %v9365 = vpop.f32.mrf.mxu0
        %9366 = vmatprep.mubr.bf16.mxu0 0
        %9367 = vmatmul.mubr.bf16.gmra.mxu0 %v9272
        %v9368 = vpop.f32.mrf.mxu0
        %v9369 = vadd.f32 0.0, %v9368
        %v9370 = vpop.f32.mrf.mxu0
        %v9371 = vpop.f32.mrf.mxu0
        %v9372 = vadd.f32 0.0, %v9371
        %v9373 = vpop.f32.mrf.mxu0
        %9374 = vmatprep.mubr.bf16.mxu0 0
        %9375 = vmatmul.mubr.bf16.gmra.mxu0 %v9275
        %v9376 = vpop.f32.mrf.mxu0
        %v9377 = vadd.f32 0.0, %v9376
        %v9378 = vpop.f32.mrf.mxu0
        %v9379 = vpop.f32.mrf.mxu0
        %v9380 = vadd.f32 0.0, %v9379
        %v9381 = vpop.f32.mrf.mxu0
        %9382 = vmatprep.mubr.bf16.mxu0 0
        %9383 = vmatmul.mubr.bf16.gmra.mxu0 %v9278
        %v9384 = vpop.f32.mrf.mxu0
        %v9385 = vadd.f32 0.0, %v9384
        %v9386 = vpop.f32.mrf.mxu0
        %v9387 = vpop.f32.mrf.mxu0
        %v9388 = vadd.f32 0.0, %v9387
        %v9389 = vpop.f32.mrf.mxu0
        %9390 = vmatprep.mubr.bf16.mxu0 0
        %9391 = vmatmul.mubr.bf16.gmra.mxu0 %v9281
        %v9392 = vpop.f32.mrf.mxu0
        %v9393 = vadd.f32 0.0, %v9392
        %v9394 = vpop.f32.mrf.mxu0
        %v9395 = vpop.f32.mrf.mxu0
        %v9396 = vadd.f32 0.0, %v9395
        %v9397 = vpop.f32.mrf.mxu0
        %9398 = vmatprep.mubr.bf16.mxu0 0
        %9399 = vmatmul.mubr.bf16.gmra.mxu0 %v9284
        %v9400 = vpop.f32.mrf.mxu0
        %v9401 = vadd.f32 0.0, %v9400
        %v9402 = vpop.f32.mrf.mxu0
        %v9403 = vpop.f32.mrf.mxu0
        %v9404 = vadd.f32 0.0, %v9403
        %v9405 = vpop.f32.mrf.mxu0
        %9406 = vdwg.mxu0
        %9415 = vrot.lane.b32.xlu0 %v8194, 64
        %v9416 = vpop.permute.xlu0 %9415
        %9417 = vrot.lane.b32.xlu0 %v8195, 64
        %v9418 = vpop.permute.xlu0 %9417
        %9419 = vrot.lane.b32.xlu0 %v8196, 64
        %v9420 = vpop.permute.xlu0 %9419
        %9421 = vrot.lane.b32.xlu0 %v8197, 64
        %v9422 = vpop.permute.xlu0 %9421
        %9423 = vrot.lane.b32.xlu0 %v8198, 64
        %v9424 = vpop.permute.xlu0 %9423
        %9425 = vrot.lane.b32.xlu0 %v8199, 64
        %v9426 = vpop.permute.xlu0 %9425
        %9427 = vrot.lane.b32.xlu0 %v8200, 64
        %v9428 = vpop.permute.xlu0 %9427
        %9429 = vrot.lane.b32.xlu0 %v8201, 64
        %v9430 = vpop.permute.xlu0 %9429
        %9439 = vrot.lane.b32.xlu0 %v8210, 64
        %v9440 = vpop.permute.xlu0 %9439
        %9441 = vrot.lane.b32.xlu0 %v8211, 64
        %v9442 = vpop.permute.xlu0 %9441
        %9443 = vrot.lane.b32.xlu0 %v8212, 64
        %v9444 = vpop.permute.xlu0 %9443
        %9445 = vrot.lane.b32.xlu0 %v8213, 64
        %v9446 = vpop.permute.xlu0 %9445
        %9447 = vrot.lane.b32.xlu0 %v8214, 64
        %v9448 = vpop.permute.xlu0 %9447
        %9449 = vrot.lane.b32.xlu0 %v8215, 64
        %v9450 = vpop.permute.xlu0 %9449
        %9451 = vrot.lane.b32.xlu0 %v8216, 64
        %v9452 = vpop.permute.xlu0 %9451
        %9453 = vrot.lane.b32.xlu0 %v8217, 64
        %v9454 = vpop.permute.xlu0 %9453
        %v9456 = vsel %vm3703, %v9416, 0
        %v9459 = vsel %vm3703, %v9418, 0
        %v9462 = vsel %vm3703, %v9420, 0
        %v9465 = vsel %vm3703, %v9422, 0
        %v9468 = vsel %vm3703, %v9424, 0
        %v9471 = vsel %vm3703, %v9426, 0
        %v9474 = vsel %vm3703, %v9428, 0
        %v9477 = vsel %vm3703, %v9430, 0
        %v9480 = vsel %vm3703, %v9440, 0
        %v9483 = vsel %vm3703, %v9442, 0
        %v9486 = vsel %vm3703, %v9444, 0
        %v9489 = vsel %vm3703, %v9446, 0
        %v9492 = vsel %vm3703, %v9448, 0
        %v9495 = vsel %vm3703, %v9450, 0
        %v9498 = vsel %vm3703, %v9452, 0
        %v9501 = vsel %vm3703, %v9454, 0
        %9503 = vmatprep.subr.bf16.mxu0 0
        %9504 = vmatpush1.bf16.xpose.msra.mxu0 %v9501
        %9505 = vmatprep.subr.bf16.mxu0 0
        %9506 = vmatpush1.bf16.xpose.msra.mxu0 %v9498
        %9507 = vmatprep.subr.bf16.mxu0 0
        %9508 = vmatpush1.bf16.xpose.msra.mxu0 %v9495
        %9509 = vmatprep.subr.bf16.mxu0 0
        %9510 = vmatpush1.bf16.xpose.msra.mxu0 %v9492
        %9511 = vmatprep.subr.bf16.mxu0 0
        %9512 = vmatpush1.bf16.xpose.msra.mxu0 %v9489
        %9513 = vmatprep.subr.bf16.mxu0 0
        %9514 = vmatpush1.bf16.xpose.msra.mxu0 %v9486
        %9515 = vmatprep.subr.bf16.mxu0 0
        %9516 = vmatpush1.bf16.xpose.msra.mxu0 %v9483
        %9517 = vmatprep.subr.bf16.mxu0 0
        %9518 = vmatpush1.bf16.xpose.msra.mxu0 %v9480
        %9519 = vmatprep.subr.bf16.mxu0 0
        %9520 = vmatpush2.bf16.xpose.msra.mxu0 0
        %9521 = vmatprep.subr.bf16.mxu0 0
        %9522 = vmatpush2.bf16.xpose.msra.mxu0 0
        %9523 = vmatprep.subr.bf16.mxu0 0
        %9524 = vmatpush2.bf16.xpose.msra.mxu0 0
        %9525 = vmatprep.subr.bf16.mxu0 0
        %9526 = vmatpush2.bf16.xpose.msra.mxu0 0
        %9527 = vmatprep.subr.bf16.mxu0 0
        %9528 = vmatpush2.bf16.xpose.msra.mxu0 0
        %9529 = vmatprep.subr.bf16.mxu0 0
        %9530 = vmatpush2.bf16.xpose.msra.mxu0 0
        %9531 = vmatprep.subr.bf16.mxu0 0
        %9532 = vmatpush2.bf16.xpose.msra.mxu0 0
        %9533 = vmatprep.subr.bf16.mxu0 0
        %9534 = vmatpush2.bf16.xpose.msra.mxu0 0
        %9535 = vmatprep.mubr.bf16.mxu0 0
        %9536 = vmatmul.mubr.bf16.gmra.mxu0 %v9456
        %v9537 = vpop.f32.mrf.mxu0
        %v9538 = vadd.f32 0.0, %v9537
        %v9539 = vpop.f32.mrf.mxu0
        %v9540 = vpop.f32.mrf.mxu0
        %v9541 = vadd.f32 0.0, %v9540
        %v9542 = vpop.f32.mrf.mxu0
        %9543 = vmatprep.mubr.bf16.mxu0 0
        %9544 = vmatmul.mubr.bf16.gmra.mxu0 %v9459
        %v9545 = vpop.f32.mrf.mxu0
        %v9546 = vadd.f32 0.0, %v9545
        %v9547 = vpop.f32.mrf.mxu0
        %v9548 = vpop.f32.mrf.mxu0
        %v9549 = vadd.f32 0.0, %v9548
        %v9550 = vpop.f32.mrf.mxu0
        %9551 = vmatprep.mubr.bf16.mxu0 0
        %9552 = vmatmul.mubr.bf16.gmra.mxu0 %v9462
        %v9553 = vpop.f32.mrf.mxu0
        %v9554 = vadd.f32 0.0, %v9553
        %v9555 = vpop.f32.mrf.mxu0
        %v9556 = vpop.f32.mrf.mxu0
        %v9557 = vadd.f32 0.0, %v9556
        %v9558 = vpop.f32.mrf.mxu0
        %9559 = vmatprep.mubr.bf16.mxu0 0
        %9560 = vmatmul.mubr.bf16.gmra.mxu0 %v9465
        %v9561 = vpop.f32.mrf.mxu0
        %v9562 = vadd.f32 0.0, %v9561
        %v9563 = vpop.f32.mrf.mxu0
        %v9564 = vpop.f32.mrf.mxu0
        %v9565 = vadd.f32 0.0, %v9564
        %v9566 = vpop.f32.mrf.mxu0
        %9567 = vmatprep.mubr.bf16.mxu0 0
        %9568 = vmatmul.mubr.bf16.gmra.mxu0 %v9468
        %v9569 = vpop.f32.mrf.mxu0
        %v9570 = vadd.f32 0.0, %v9569
        %v9571 = vpop.f32.mrf.mxu0
        %v9572 = vpop.f32.mrf.mxu0
        %v9573 = vadd.f32 0.0, %v9572
        %v9574 = vpop.f32.mrf.mxu0
        %9575 = vmatprep.mubr.bf16.mxu0 0
        %9576 = vmatmul.mubr.bf16.gmra.mxu0 %v9471
        %v9577 = vpop.f32.mrf.mxu0
        %v9578 = vadd.f32 0.0, %v9577
        %v9579 = vpop.f32.mrf.mxu0
        %v9580 = vpop.f32.mrf.mxu0
        %v9581 = vadd.f32 0.0, %v9580
        %v9582 = vpop.f32.mrf.mxu0
        %9583 = vmatprep.mubr.bf16.mxu0 0
        %9584 = vmatmul.mubr.bf16.gmra.mxu0 %v9474
        %v9585 = vpop.f32.mrf.mxu0
        %v9586 = vadd.f32 0.0, %v9585
        %v9587 = vpop.f32.mrf.mxu0
        %v9588 = vpop.f32.mrf.mxu0
        %v9589 = vadd.f32 0.0, %v9588
        %v9590 = vpop.f32.mrf.mxu0
        %9591 = vmatprep.mubr.bf16.mxu0 0
        %9592 = vmatmul.mubr.bf16.gmra.mxu0 %v9477
        %v9593 = vpop.f32.mrf.mxu0
        %v9594 = vadd.f32 0.0, %v9593
        %v9595 = vpop.f32.mrf.mxu0
        %v9596 = vpop.f32.mrf.mxu0
        %v9597 = vadd.f32 0.0, %v9596
        %v9598 = vpop.f32.mrf.mxu0
        %9599 = vdwg.mxu0
        %v9600 = vsel %vm4010, %v9345, -inf
        %v9601 = vsel %vm4011, %v9348, -inf
        %v9602 = vsel %vm4012, %v9353, -inf
        %v9603 = vsel %vm4013, %v9356, -inf
        %v9604 = vsel %vm4014, %v9361, -inf
        %v9605 = vsel %vm4015, %v9364, -inf
        %v9606 = vsel %vm4016, %v9369, -inf
        %v9607 = vsel %vm4017, %v9372, -inf
        %v9608 = vsel %vm4018, %v9377, -inf
        %v9609 = vsel %vm4019, %v9380, -inf
        %v9610 = vsel %vm4020, %v9385, -inf
        %v9611 = vsel %vm4021, %v9388, -inf
        %v9612 = vsel %vm4022, %v9393, -inf
        %v9613 = vsel %vm4023, %v9396, -inf
        %v9614 = vsel %vm4024, %v9401, -inf
        %v9615 = vsel %vm4025, %v9404, -inf
        %v9616 = vsel %vm4010, %v9538, -inf
        %v9617 = vsel %vm4011, %v9541, -inf
        %v9618 = vsel %vm4012, %v9546, -inf
        %v9619 = vsel %vm4013, %v9549, -inf
        %v9620 = vsel %vm4014, %v9554, -inf
        %v9621 = vsel %vm4015, %v9557, -inf
        %v9622 = vsel %vm4016, %v9562, -inf
        %v9623 = vsel %vm4017, %v9565, -inf
        %v9624 = vsel %vm4018, %v9570, -inf
        %v9625 = vsel %vm4019, %v9573, -inf
        %v9626 = vsel %vm4020, %v9578, -inf
        %v9627 = vsel %vm4021, %v9581, -inf
        %v9628 = vsel %vm4022, %v9586, -inf
        %v9629 = vsel %vm4023, %v9589, -inf
        %v9630 = vsel %vm4024, %v9594, -inf
        %v9631 = vsel %vm4025, %v9597, -inf
        %9632 = vmax.xlane.f32.xlu0 %v9600
        %v9633 = vpop.xlane.xlu0 %9632
        %9634 = vmax.xlane.f32.xlu0 %v9601
        %v9635 = vpop.xlane.xlu0 %9634
        %9636 = vmax.xlane.f32.xlu0 %v9602
        %v9637 = vpop.xlane.xlu0 %9636
        %9638 = vmax.xlane.f32.xlu0 %v9603
        %v9639 = vpop.xlane.xlu0 %9638
        %9640 = vmax.xlane.f32.xlu0 %v9604
        %v9641 = vpop.xlane.xlu0 %9640
        %9642 = vmax.xlane.f32.xlu0 %v9605
        %v9643 = vpop.xlane.xlu0 %9642
        %9644 = vmax.xlane.f32.xlu0 %v9606
        %v9645 = vpop.xlane.xlu0 %9644
        %9646 = vmax.xlane.f32.xlu0 %v9607
        %v9647 = vpop.xlane.xlu0 %9646
        %9648 = vmax.xlane.f32.xlu0 %v9608
        %v9649 = vpop.xlane.xlu0 %9648
        %9650 = vmax.xlane.f32.xlu0 %v9609
        %v9651 = vpop.xlane.xlu0 %9650
        %9652 = vmax.xlane.f32.xlu0 %v9610
        %v9653 = vpop.xlane.xlu0 %9652
        %9654 = vmax.xlane.f32.xlu0 %v9611
        %v9655 = vpop.xlane.xlu0 %9654
        %9656 = vmax.xlane.f32.xlu0 %v9612
        %v9657 = vpop.xlane.xlu0 %9656
        %9658 = vmax.xlane.f32.xlu0 %v9613
        %v9659 = vpop.xlane.xlu0 %9658
        %9660 = vmax.xlane.f32.xlu0 %v9614
        %v9661 = vpop.xlane.xlu0 %9660
        %9662 = vmax.xlane.f32.xlu0 %v9615
        %v9663 = vpop.xlane.xlu0 %9662
        %9664 = vmax.xlane.f32.xlu0 %v9616
        %v9665 = vpop.xlane.xlu0 %9664
        %9666 = vmax.xlane.f32.xlu0 %v9617
        %v9667 = vpop.xlane.xlu0 %9666
        %9668 = vmax.xlane.f32.xlu0 %v9618
        %v9669 = vpop.xlane.xlu0 %9668
        %9670 = vmax.xlane.f32.xlu0 %v9619
        %v9671 = vpop.xlane.xlu0 %9670
        %9672 = vmax.xlane.f32.xlu0 %v9620
        %v9673 = vpop.xlane.xlu0 %9672
        %9674 = vmax.xlane.f32.xlu0 %v9621
        %v9675 = vpop.xlane.xlu0 %9674
        %9676 = vmax.xlane.f32.xlu0 %v9622
        %v9677 = vpop.xlane.xlu0 %9676
        %9678 = vmax.xlane.f32.xlu0 %v9623
        %v9679 = vpop.xlane.xlu0 %9678
        %9680 = vmax.xlane.f32.xlu0 %v9624
        %v9681 = vpop.xlane.xlu0 %9680
        %9682 = vmax.xlane.f32.xlu0 %v9625
        %v9683 = vpop.xlane.xlu0 %9682
        %9684 = vmax.xlane.f32.xlu0 %v9626
        %v9685 = vpop.xlane.xlu0 %9684
        %9686 = vmax.xlane.f32.xlu0 %v9627
        %v9687 = vpop.xlane.xlu0 %9686
        %9688 = vmax.xlane.f32.xlu0 %v9628
        %v9689 = vpop.xlane.xlu0 %9688
        %9690 = vmax.xlane.f32.xlu0 %v9629
        %v9691 = vpop.xlane.xlu0 %9690
        %9692 = vmax.xlane.f32.xlu0 %v9630
        %v9693 = vpop.xlane.xlu0 %9692
        %9694 = vmax.xlane.f32.xlu0 %v9631
        %v9695 = vpop.xlane.xlu0 %9694
        %v9696 = vsub.f32 %v9600, %v9633
        %v9697 = vsub.f32 %v9601, %v9635
        %v9698 = vsub.f32 %v9602, %v9637
        %v9699 = vsub.f32 %v9603, %v9639
        %v9700 = vsub.f32 %v9604, %v9641
        %v9701 = vsub.f32 %v9605, %v9643
        %v9702 = vsub.f32 %v9606, %v9645
        %v9703 = vsub.f32 %v9607, %v9647
        %v9704 = vsub.f32 %v9608, %v9649
        %v9705 = vsub.f32 %v9609, %v9651
        %v9706 = vsub.f32 %v9610, %v9653
        %v9707 = vsub.f32 %v9611, %v9655
        %v9708 = vsub.f32 %v9612, %v9657
        %v9709 = vsub.f32 %v9613, %v9659
        %v9710 = vsub.f32 %v9614, %v9661
        %v9711 = vsub.f32 %v9615, %v9663
        %v9712 = vsub.f32 %v9616, %v9665
        %v9713 = vsub.f32 %v9617, %v9667
        %v9714 = vsub.f32 %v9618, %v9669
        %v9715 = vsub.f32 %v9619, %v9671
        %v9716 = vsub.f32 %v9620, %v9673
        %v9717 = vsub.f32 %v9621, %v9675
        %v9718 = vsub.f32 %v9622, %v9677
        %v9719 = vsub.f32 %v9623, %v9679
        %v9720 = vsub.f32 %v9624, %v9681
        %v9721 = vsub.f32 %v9625, %v9683
        %v9722 = vsub.f32 %v9626, %v9685
        %v9723 = vsub.f32 %v9627, %v9687
        %v9724 = vsub.f32 %v9628, %v9689
        %v9725 = vsub.f32 %v9629, %v9691
        %v9726 = vsub.f32 %v9630, %v9693
        %v9727 = vsub.f32 %v9631, %v9695
        %v9728 = vmul.f32 %v9696, 1.442695
        %v9729 = vpow.pop %v9728
        %v9730 = vmul.f32 %v9697, 1.442695
        %v9731 = vpow.pop %v9730
        %v9732 = vmul.f32 %v9698, 1.442695
        %v9733 = vpow.pop %v9732
        %v9734 = vmul.f32 %v9699, 1.442695
        %v9735 = vpow.pop %v9734
        %v9736 = vmul.f32 %v9700, 1.442695
        %v9737 = vpow.pop %v9736
        %v9738 = vmul.f32 %v9701, 1.442695
        %v9739 = vpow.pop %v9738
        %v9740 = vmul.f32 %v9702, 1.442695
        %v9741 = vpow.pop %v9740
        %v9742 = vmul.f32 %v9703, 1.442695
        %v9743 = vpow.pop %v9742
        %v9744 = vmul.f32 %v9704, 1.442695
        %v9745 = vpow.pop %v9744
        %v9746 = vmul.f32 %v9705, 1.442695
        %v9747 = vpow.pop %v9746
        %v9748 = vmul.f32 %v9706, 1.442695
        %v9749 = vpow.pop %v9748
        %v9750 = vmul.f32 %v9707, 1.442695
        %v9751 = vpow.pop %v9750
        %v9752 = vmul.f32 %v9708, 1.442695
        %v9753 = vpow.pop %v9752
        %v9754 = vmul.f32 %v9709, 1.442695
        %v9755 = vpow.pop %v9754
        %v9756 = vmul.f32 %v9710, 1.442695
        %v9757 = vpow.pop %v9756
        %v9758 = vmul.f32 %v9711, 1.442695
        %v9759 = vpow.pop %v9758
        %v9760 = vmul.f32 %v9712, 1.442695
        %v9761 = vpow.pop %v9760
        %v9762 = vmul.f32 %v9713, 1.442695
        %v9763 = vpow.pop %v9762
        %v9764 = vmul.f32 %v9714, 1.442695
        %v9765 = vpow.pop %v9764
        %v9766 = vmul.f32 %v9715, 1.442695
        %v9767 = vpow.pop %v9766
        %v9768 = vmul.f32 %v9716, 1.442695
        %v9769 = vpow.pop %v9768
        %v9770 = vmul.f32 %v9717, 1.442695
        %v9771 = vpow.pop %v9770
        %v9772 = vmul.f32 %v9718, 1.442695
        %v9773 = vpow.pop %v9772
        %v9774 = vmul.f32 %v9719, 1.442695
        %v9775 = vpow.pop %v9774
        %v9776 = vmul.f32 %v9720, 1.442695
        %v9777 = vpow.pop %v9776
        %v9778 = vmul.f32 %v9721, 1.442695
        %v9779 = vpow.pop %v9778
        %v9780 = vmul.f32 %v9722, 1.442695
        %v9781 = vpow.pop %v9780
        %v9782 = vmul.f32 %v9723, 1.442695
        %v9783 = vpow.pop %v9782
        %v9784 = vmul.f32 %v9724, 1.442695
        %v9785 = vpow.pop %v9784
        %v9786 = vmul.f32 %v9725, 1.442695
        %v9787 = vpow.pop %v9786
        %v9788 = vmul.f32 %v9726, 1.442695
        %v9789 = vpow.pop %v9788
        %v9790 = vmul.f32 %v9727, 1.442695
        %v9791 = vpow.pop %v9790
        %9792 = vadd.xlane.f32.xlu0 %v9729
        %v9793 = vpop.xlane.xlu0 %9792
        %9794 = vadd.xlane.f32.xlu0 %v9731
        %v9795 = vpop.xlane.xlu0 %9794
        %9796 = vadd.xlane.f32.xlu0 %v9733
        %v9797 = vpop.xlane.xlu0 %9796
        %9798 = vadd.xlane.f32.xlu0 %v9735
        %v9799 = vpop.xlane.xlu0 %9798
        %9800 = vadd.xlane.f32.xlu0 %v9737
        %v9801 = vpop.xlane.xlu0 %9800
        %9802 = vadd.xlane.f32.xlu0 %v9739
        %v9803 = vpop.xlane.xlu0 %9802
        %9804 = vadd.xlane.f32.xlu0 %v9741
        %v9805 = vpop.xlane.xlu0 %9804
        %9806 = vadd.xlane.f32.xlu0 %v9743
        %v9807 = vpop.xlane.xlu0 %9806
        %9808 = vadd.xlane.f32.xlu0 %v9745
        %v9809 = vpop.xlane.xlu0 %9808
        %9810 = vadd.xlane.f32.xlu0 %v9747
        %v9811 = vpop.xlane.xlu0 %9810
        %9812 = vadd.xlane.f32.xlu0 %v9749
        %v9813 = vpop.xlane.xlu0 %9812
        %9814 = vadd.xlane.f32.xlu0 %v9751
        %v9815 = vpop.xlane.xlu0 %9814
        %9816 = vadd.xlane.f32.xlu0 %v9753
        %v9817 = vpop.xlane.xlu0 %9816
        %9818 = vadd.xlane.f32.xlu0 %v9755
        %v9819 = vpop.xlane.xlu0 %9818
        %9820 = vadd.xlane.f32.xlu0 %v9757
        %v9821 = vpop.xlane.xlu0 %9820
        %9822 = vadd.xlane.f32.xlu0 %v9759
        %v9823 = vpop.xlane.xlu0 %9822
        %9824 = vadd.xlane.f32.xlu0 %v9761
        %v9825 = vpop.xlane.xlu0 %9824
        %9826 = vadd.xlane.f32.xlu0 %v9763
        %v9827 = vpop.xlane.xlu0 %9826
        %9828 = vadd.xlane.f32.xlu0 %v9765
        %v9829 = vpop.xlane.xlu0 %9828
        %9830 = vadd.xlane.f32.xlu0 %v9767
        %v9831 = vpop.xlane.xlu0 %9830
        %9832 = vadd.xlane.f32.xlu0 %v9769
        %v9833 = vpop.xlane.xlu0 %9832
        %9834 = vadd.xlane.f32.xlu0 %v9771
        %v9835 = vpop.xlane.xlu0 %9834
        %9836 = vadd.xlane.f32.xlu0 %v9773
        %v9837 = vpop.xlane.xlu0 %9836
        %9838 = vadd.xlane.f32.xlu0 %v9775
        %v9839 = vpop.xlane.xlu0 %9838
        %9840 = vadd.xlane.f32.xlu0 %v9777
        %v9841 = vpop.xlane.xlu0 %9840
        %9842 = vadd.xlane.f32.xlu0 %v9779
        %v9843 = vpop.xlane.xlu0 %9842
        %9844 = vadd.xlane.f32.xlu0 %v9781
        %v9845 = vpop.xlane.xlu0 %9844
        %9846 = vadd.xlane.f32.xlu0 %v9783
        %v9847 = vpop.xlane.xlu0 %9846
        %9848 = vadd.xlane.f32.xlu0 %v9785
        %v9849 = vpop.xlane.xlu0 %9848
        %9850 = vadd.xlane.f32.xlu0 %v9787
        %v9851 = vpop.xlane.xlu0 %9850
        %9852 = vadd.xlane.f32.xlu0 %v9789
        %v9853 = vpop.xlane.xlu0 %9852
        %9854 = vadd.xlane.f32.xlu0 %v9791
        %v9855 = vpop.xlane.xlu0 %9854
        %v9856 = vrcp.pop %v9793
        %v9857 = vrcp.pop %v9795
        %v9858 = vrcp.pop %v9797
        %v9859 = vrcp.pop %v9799
        %v9860 = vrcp.pop %v9801
        %v9861 = vrcp.pop %v9803
        %v9862 = vrcp.pop %v9805
        %v9863 = vrcp.pop %v9807
        %v9864 = vrcp.pop %v9809
        %v9865 = vrcp.pop %v9811
        %v9866 = vrcp.pop %v9813
        %v9867 = vrcp.pop %v9815
        %v9868 = vrcp.pop %v9817
        %v9869 = vrcp.pop %v9819
        %v9870 = vrcp.pop %v9821
        %v9871 = vrcp.pop %v9823
        %v9872 = vrcp.pop %v9825
        %v9873 = vrcp.pop %v9827
        %v9874 = vrcp.pop %v9829
        %v9875 = vrcp.pop %v9831
        %v9876 = vrcp.pop %v9833
        %v9877 = vrcp.pop %v9835
        %v9878 = vrcp.pop %v9837
        %v9879 = vrcp.pop %v9839
        %v9880 = vrcp.pop %v9841
        %v9881 = vrcp.pop %v9843
        %v9882 = vrcp.pop %v9845
        %v9883 = vrcp.pop %v9847
        %v9884 = vrcp.pop %v9849
        %v9885 = vrcp.pop %v9851
        %v9886 = vrcp.pop %v9853
        %v9887 = vrcp.pop %v9855
        %v9888 = vmul.f32 %v9729, %v9856
        %v9889 = vmul.f32 %v9731, %v9857
        %v9890 = vmul.f32 %v9733, %v9858
        %v9891 = vmul.f32 %v9735, %v9859
        %v9892 = vmul.f32 %v9737, %v9860
        %v9893 = vmul.f32 %v9739, %v9861
        %v9894 = vmul.f32 %v9741, %v9862
        %v9895 = vmul.f32 %v9743, %v9863
        %v9896 = vmul.f32 %v9745, %v9864
        %v9897 = vmul.f32 %v9747, %v9865
        %v9898 = vmul.f32 %v9749, %v9866
        %v9899 = vmul.f32 %v9751, %v9867
        %v9900 = vmul.f32 %v9753, %v9868
        %v9901 = vmul.f32 %v9755, %v9869
        %v9902 = vmul.f32 %v9757, %v9870
        %v9903 = vmul.f32 %v9759, %v9871
        %v9904 = vmul.f32 %v9761, %v9872
        %v9905 = vmul.f32 %v9763, %v9873
        %v9906 = vmul.f32 %v9765, %v9874
        %v9907 = vmul.f32 %v9767, %v9875
        %v9908 = vmul.f32 %v9769, %v9876
        %v9909 = vmul.f32 %v9771, %v9877
        %v9910 = vmul.f32 %v9773, %v9878
        %v9911 = vmul.f32 %v9775, %v9879
        %v9912 = vmul.f32 %v9777, %v9880
        %v9913 = vmul.f32 %v9779, %v9881
        %v9914 = vmul.f32 %v9781, %v9882
        %v9915 = vmul.f32 %v9783, %v9883
        %v9916 = vmul.f32 %v9785, %v9884
        %v9917 = vmul.f32 %v9787, %v9885
        %v9918 = vmul.f32 %v9789, %v9886
        %v9919 = vmul.f32 %v9791, %v9887
        %v9920 = vpack.c.bf16 %v9889, %v9888
        %v9921 = vpack.c.bf16 %v9891, %v9890
        %v9922 = vpack.c.bf16 %v9893, %v9892
        %v9923 = vpack.c.bf16 %v9895, %v9894
        %v9924 = vpack.c.bf16 %v9897, %v9896
        %v9925 = vpack.c.bf16 %v9899, %v9898
        %v9926 = vpack.c.bf16 %v9901, %v9900
        %v9927 = vpack.c.bf16 %v9903, %v9902
        %v9928 = vpack.c.bf16 %v9905, %v9904
        %v9929 = vpack.c.bf16 %v9907, %v9906
        %v9930 = vpack.c.bf16 %v9909, %v9908
        %v9931 = vpack.c.bf16 %v9911, %v9910
        %v9932 = vpack.c.bf16 %v9913, %v9912
        %v9933 = vpack.c.bf16 %v9915, %v9914
        %v9934 = vpack.c.bf16 %v9917, %v9916
        %v9935 = vpack.c.bf16 %v9919, %v9918
        %9944 = vrot.lane.b32.xlu0 %v8218, 64
        %v9945 = vpop.permute.xlu0 %9944
        %9946 = vrot.lane.b32.xlu0 %v8219, 64
        %v9947 = vpop.permute.xlu0 %9946
        %9948 = vrot.lane.b32.xlu0 %v8220, 64
        %v9949 = vpop.permute.xlu0 %9948
        %9950 = vrot.lane.b32.xlu0 %v8221, 64
        %v9951 = vpop.permute.xlu0 %9950
        %9952 = vrot.lane.b32.xlu0 %v8222, 64
        %v9953 = vpop.permute.xlu0 %9952
        %9954 = vrot.lane.b32.xlu0 %v8223, 64
        %v9955 = vpop.permute.xlu0 %9954
        %9956 = vrot.lane.b32.xlu0 %v8224, 64
        %v9957 = vpop.permute.xlu0 %9956
        %9958 = vrot.lane.b32.xlu0 %v8225, 64
        %v9959 = vpop.permute.xlu0 %9958
        %9968 = vmatprep.subr.bf16.mxu0 0
        %9969 = vmatpush1.bf16.msra.mxu0 %v9959
        %9970 = vmatprep.subr.bf16.mxu0 0
        %9971 = vmatpush1.bf16.msra.mxu0 %v9957
        %9972 = vmatprep.subr.bf16.mxu0 0
        %9973 = vmatpush1.bf16.msra.mxu0 %v9955
        %9974 = vmatprep.subr.bf16.mxu0 0
        %9975 = vmatpush1.bf16.msra.mxu0 %v9953
        %9976 = vmatprep.subr.bf16.mxu0 0
        %9977 = vmatpush1.bf16.msra.mxu0 %v9951
        %9978 = vmatprep.subr.bf16.mxu0 0
        %9979 = vmatpush1.bf16.msra.mxu0 %v9949
        %9980 = vmatprep.subr.bf16.mxu0 0
        %9981 = vmatpush1.bf16.msra.mxu0 %v9947
        %9982 = vmatprep.subr.bf16.mxu0 0
        %9983 = vmatpush1.bf16.msra.mxu0 %v9945
        %9984 = vmatprep.subr.bf16.mxu0 0
        %9985 = vmatpush2.bf16.msra.mxu0 0
        %9986 = vmatprep.subr.bf16.mxu0 0
        %9987 = vmatpush2.bf16.msra.mxu0 0
        %9988 = vmatprep.subr.bf16.mxu0 0
        %9989 = vmatpush2.bf16.msra.mxu0 0
        %9990 = vmatprep.subr.bf16.mxu0 0
        %9991 = vmatpush2.bf16.msra.mxu0 0
        %9992 = vmatprep.subr.bf16.mxu0 0
        %9993 = vmatpush2.bf16.msra.mxu0 0
        %9994 = vmatprep.subr.bf16.mxu0 0
        %9995 = vmatpush2.bf16.msra.mxu0 0
        %9996 = vmatprep.subr.bf16.mxu0 0
        %9997 = vmatpush2.bf16.msra.mxu0 0
        %9998 = vmatprep.subr.bf16.mxu0 0
        %9999 = vmatpush2.bf16.msra.mxu0 0
        %10000 = vmatprep.mubr.bf16.mxu0 0
        %10001 = vmatmul.mubr.bf16.gmra.mxu0 %v9920
        %v10002 = vpop.f32.mrf.mxu0
        %v10003 = vadd.f32 0.0, %v10002
        %v10004 = vpop.f32.mrf.mxu0
        %v10005 = vpop.f32.mrf.mxu0
        %v10006 = vadd.f32 0.0, %v10005
        %v10007 = vpop.f32.mrf.mxu0
        %10008 = vmatprep.mubr.bf16.mxu0 0
        %10009 = vmatmul.mubr.bf16.gmra.mxu0 %v9921
        %v10010 = vpop.f32.mrf.mxu0
        %v10011 = vadd.f32 0.0, %v10010
        %v10012 = vpop.f32.mrf.mxu0
        %v10013 = vpop.f32.mrf.mxu0
        %v10014 = vadd.f32 0.0, %v10013
        %v10015 = vpop.f32.mrf.mxu0
        %10016 = vmatprep.mubr.bf16.mxu0 0
        %10017 = vmatmul.mubr.bf16.gmra.mxu0 %v9922
        %v10018 = vpop.f32.mrf.mxu0
        %v10019 = vadd.f32 0.0, %v10018
        %v10020 = vpop.f32.mrf.mxu0
        %v10021 = vpop.f32.mrf.mxu0
        %v10022 = vadd.f32 0.0, %v10021
        %v10023 = vpop.f32.mrf.mxu0
        %10024 = vmatprep.mubr.bf16.mxu0 0
        %10025 = vmatmul.mubr.bf16.gmra.mxu0 %v9923
        %v10026 = vpop.f32.mrf.mxu0
        %v10027 = vadd.f32 0.0, %v10026
        %v10028 = vpop.f32.mrf.mxu0
        %v10029 = vpop.f32.mrf.mxu0
        %v10030 = vadd.f32 0.0, %v10029
        %v10031 = vpop.f32.mrf.mxu0
        %10032 = vmatprep.mubr.bf16.mxu0 0
        %10033 = vmatmul.mubr.bf16.gmra.mxu0 %v9924
        %v10034 = vpop.f32.mrf.mxu0
        %v10035 = vadd.f32 0.0, %v10034
        %v10036 = vpop.f32.mrf.mxu0
        %v10037 = vpop.f32.mrf.mxu0
        %v10038 = vadd.f32 0.0, %v10037
        %v10039 = vpop.f32.mrf.mxu0
        %10040 = vmatprep.mubr.bf16.mxu0 0
        %10041 = vmatmul.mubr.bf16.gmra.mxu0 %v9925
        %v10042 = vpop.f32.mrf.mxu0
        %v10043 = vadd.f32 0.0, %v10042
        %v10044 = vpop.f32.mrf.mxu0
        %v10045 = vpop.f32.mrf.mxu0
        %v10046 = vadd.f32 0.0, %v10045
        %v10047 = vpop.f32.mrf.mxu0
        %10048 = vmatprep.mubr.bf16.mxu0 0
        %10049 = vmatmul.mubr.bf16.gmra.mxu0 %v9926
        %v10050 = vpop.f32.mrf.mxu0
        %v10051 = vadd.f32 0.0, %v10050
        %v10052 = vpop.f32.mrf.mxu0
        %v10053 = vpop.f32.mrf.mxu0
        %v10054 = vadd.f32 0.0, %v10053
        %v10055 = vpop.f32.mrf.mxu0
        %10056 = vmatprep.mubr.bf16.mxu0 0
        %10057 = vmatmul.mubr.bf16.gmra.mxu0 %v9927
        %v10058 = vpop.f32.mrf.mxu0
        %v10059 = vadd.f32 0.0, %v10058
        %v10060 = vpop.f32.mrf.mxu0
        %v10061 = vpop.f32.mrf.mxu0
        %v10062 = vadd.f32 0.0, %v10061
        %v10063 = vpop.f32.mrf.mxu0
        %10064 = vdwg.mxu0
        %10073 = vrot.lane.b32.xlu0 %v8226, 64
        %v10074 = vpop.permute.xlu0 %10073
        %10075 = vrot.lane.b32.xlu0 %v8227, 64
        %v10076 = vpop.permute.xlu0 %10075
        %10077 = vrot.lane.b32.xlu0 %v8228, 64
        %v10078 = vpop.permute.xlu0 %10077
        %10079 = vrot.lane.b32.xlu0 %v8229, 64
        %v10080 = vpop.permute.xlu0 %10079
        %10081 = vrot.lane.b32.xlu0 %v8230, 64
        %v10082 = vpop.permute.xlu0 %10081
        %10083 = vrot.lane.b32.xlu0 %v8231, 64
        %v10084 = vpop.permute.xlu0 %10083
        %10085 = vrot.lane.b32.xlu0 %v8232, 64
        %v10086 = vpop.permute.xlu0 %10085
        %10087 = vrot.lane.b32.xlu0 %v8233, 64
        %v10088 = vpop.permute.xlu0 %10087
        %10097 = vmatprep.subr.bf16.mxu0 0
        %10098 = vmatpush1.bf16.msra.mxu0 %v10088
        %10099 = vmatprep.subr.bf16.mxu0 0
        %10100 = vmatpush1.bf16.msra.mxu0 %v10086
        %10101 = vmatprep.subr.bf16.mxu0 0
        %10102 = vmatpush1.bf16.msra.mxu0 %v10084
        %10103 = vmatprep.subr.bf16.mxu0 0
        %10104 = vmatpush1.bf16.msra.mxu0 %v10082
        %10105 = vmatprep.subr.bf16.mxu0 0
        %10106 = vmatpush1.bf16.msra.mxu0 %v10080
        %10107 = vmatprep.subr.bf16.mxu0 0
        %10108 = vmatpush1.bf16.msra.mxu0 %v10078
        %10109 = vmatprep.subr.bf16.mxu0 0
        %10110 = vmatpush1.bf16.msra.mxu0 %v10076
        %10111 = vmatprep.subr.bf16.mxu0 0
        %10112 = vmatpush1.bf16.msra.mxu0 %v10074
        %10113 = vmatprep.subr.bf16.mxu0 0
        %10114 = vmatpush2.bf16.msra.mxu0 0
        %10115 = vmatprep.subr.bf16.mxu0 0
        %10116 = vmatpush2.bf16.msra.mxu0 0
        %10117 = vmatprep.subr.bf16.mxu0 0
        %10118 = vmatpush2.bf16.msra.mxu0 0
        %10119 = vmatprep.subr.bf16.mxu0 0
        %10120 = vmatpush2.bf16.msra.mxu0 0
        %10121 = vmatprep.subr.bf16.mxu0 0
        %10122 = vmatpush2.bf16.msra.mxu0 0
        %10123 = vmatprep.subr.bf16.mxu0 0
        %10124 = vmatpush2.bf16.msra.mxu0 0
        %10125 = vmatprep.subr.bf16.mxu0 0
        %10126 = vmatpush2.bf16.msra.mxu0 0
        %10127 = vmatprep.subr.bf16.mxu0 0
        %10128 = vmatpush2.bf16.msra.mxu0 0
        %10129 = vmatprep.mubr.bf16.mxu0 0
        %10130 = vmatmul.mubr.bf16.gmra.mxu0 %v9928
        %v10131 = vpop.f32.mrf.mxu0
        %v10132 = vadd.f32 0.0, %v10131
        %v10133 = vpop.f32.mrf.mxu0
        %v10134 = vpop.f32.mrf.mxu0
        %v10135 = vadd.f32 0.0, %v10134
        %v10136 = vpop.f32.mrf.mxu0
        %10137 = vmatprep.mubr.bf16.mxu0 0
        %10138 = vmatmul.mubr.bf16.gmra.mxu0 %v9929
        %v10139 = vpop.f32.mrf.mxu0
        %v10140 = vadd.f32 0.0, %v10139
        %v10141 = vpop.f32.mrf.mxu0
        %v10142 = vpop.f32.mrf.mxu0
        %v10143 = vadd.f32 0.0, %v10142
        %v10144 = vpop.f32.mrf.mxu0
        %10145 = vmatprep.mubr.bf16.mxu0 0
        %10146 = vmatmul.mubr.bf16.gmra.mxu0 %v9930
        %v10147 = vpop.f32.mrf.mxu0
        %v10148 = vadd.f32 0.0, %v10147
        %v10149 = vpop.f32.mrf.mxu0
        %v10150 = vpop.f32.mrf.mxu0
        %v10151 = vadd.f32 0.0, %v10150
        %v10152 = vpop.f32.mrf.mxu0
        %10153 = vmatprep.mubr.bf16.mxu0 0
        %10154 = vmatmul.mubr.bf16.gmra.mxu0 %v9931
        %v10155 = vpop.f32.mrf.mxu0
        %v10156 = vadd.f32 0.0, %v10155
        %v10157 = vpop.f32.mrf.mxu0
        %v10158 = vpop.f32.mrf.mxu0
        %v10159 = vadd.f32 0.0, %v10158
        %v10160 = vpop.f32.mrf.mxu0
        %10161 = vmatprep.mubr.bf16.mxu0 0
        %10162 = vmatmul.mubr.bf16.gmra.mxu0 %v9932
        %v10163 = vpop.f32.mrf.mxu0
        %v10164 = vadd.f32 0.0, %v10163
        %v10165 = vpop.f32.mrf.mxu0
        %v10166 = vpop.f32.mrf.mxu0
        %v10167 = vadd.f32 0.0, %v10166
        %v10168 = vpop.f32.mrf.mxu0
        %10169 = vmatprep.mubr.bf16.mxu0 0
        %10170 = vmatmul.mubr.bf16.gmra.mxu0 %v9933
        %v10171 = vpop.f32.mrf.mxu0
        %v10172 = vadd.f32 0.0, %v10171
        %v10173 = vpop.f32.mrf.mxu0
        %v10174 = vpop.f32.mrf.mxu0
        %v10175 = vadd.f32 0.0, %v10174
        %v10176 = vpop.f32.mrf.mxu0
        %10177 = vmatprep.mubr.bf16.mxu0 0
        %10178 = vmatmul.mubr.bf16.gmra.mxu0 %v9934
        %v10179 = vpop.f32.mrf.mxu0
        %v10180 = vadd.f32 0.0, %v10179
        %v10181 = vpop.f32.mrf.mxu0
        %v10182 = vpop.f32.mrf.mxu0
        %v10183 = vadd.f32 0.0, %v10182
        %v10184 = vpop.f32.mrf.mxu0
        %10185 = vmatprep.mubr.bf16.mxu0 0
        %10186 = vmatmul.mubr.bf16.gmra.mxu0 %v9935
        %v10187 = vpop.f32.mrf.mxu0
        %v10188 = vadd.f32 0.0, %v10187
        %v10189 = vpop.f32.mrf.mxu0
        %v10190 = vpop.f32.mrf.mxu0
        %v10191 = vadd.f32 0.0, %v10190
        %v10192 = vpop.f32.mrf.mxu0
        %10193 = vdwg.mxu0
        %v10194 = vpack.c.bf16 %v10006, %v10003
        %v10195 = vpack.c.bf16 %v10014, %v10011
        %v10196 = vpack.c.bf16 %v10022, %v10019
        %v10197 = vpack.c.bf16 %v10030, %v10027
        %v10198 = vpack.c.bf16 %v10038, %v10035
        %v10199 = vpack.c.bf16 %v10046, %v10043
        %v10200 = vpack.c.bf16 %v10054, %v10051
        %v10201 = vpack.c.bf16 %v10062, %v10059
        %v10202 = vpack.c.bf16 %v10135, %v10132
        %v10203 = vpack.c.bf16 %v10143, %v10140
        %v10204 = vpack.c.bf16 %v10151, %v10148
        %v10205 = vpack.c.bf16 %v10159, %v10156
        %v10206 = vpack.c.bf16 %v10167, %v10164
        %v10207 = vpack.c.bf16 %v10175, %v10172
        %v10208 = vpack.c.bf16 %v10183, %v10180
        %v10209 = vpack.c.bf16 %v10191, %v10188
        %v10226 = vunpack.c.l.b16 %v10194
        %v10227 = vunpack.c.h.b16 %v10194
        %v10228 = vunpack.c.l.b16 %v10195
        %v10229 = vunpack.c.h.b16 %v10195
        %v10230 = vunpack.c.l.b16 %v10196
        %v10231 = vunpack.c.h.b16 %v10196
        %v10232 = vunpack.c.l.b16 %v10197
        %v10233 = vunpack.c.h.b16 %v10197
        %v10234 = vunpack.c.l.b16 %v10198
        %v10235 = vunpack.c.h.b16 %v10198
        %v10236 = vunpack.c.l.b16 %v10199
        %v10237 = vunpack.c.h.b16 %v10199
        %v10238 = vunpack.c.l.b16 %v10200
        %v10239 = vunpack.c.h.b16 %v10200
        %v10240 = vunpack.c.l.b16 %v10201
        %v10241 = vunpack.c.h.b16 %v10201
        %v10242 = vunpack.c.l.b16 %v10202
        %v10243 = vunpack.c.h.b16 %v10202
        %v10244 = vunpack.c.l.b16 %v10203
        %v10245 = vunpack.c.h.b16 %v10203
        %v10246 = vunpack.c.l.b16 %v10204
        %v10247 = vunpack.c.h.b16 %v10204
        %v10248 = vunpack.c.l.b16 %v10205
        %v10249 = vunpack.c.h.b16 %v10205
        %v10250 = vunpack.c.l.b16 %v10206
        %v10251 = vunpack.c.h.b16 %v10206
        %v10252 = vunpack.c.l.b16 %v10207
        %v10253 = vunpack.c.h.b16 %v10207
        %v10254 = vunpack.c.l.b16 %v10208
        %v10255 = vunpack.c.h.b16 %v10208
        %v10256 = vunpack.c.l.b16 %v10209
        %v10257 = vunpack.c.h.b16 %v10209
        %v10258 = vpack.c.b16 %v10226, %v10226
        %v10259 = vpack.c.b16 %v10227, %v10227
        %v10260 = vpack.c.b16 %v10228, %v10228
        %v10261 = vpack.c.b16 %v10229, %v10229
        %v10262 = vpack.c.b16 %v10230, %v10230
        %v10263 = vpack.c.b16 %v10231, %v10231
        %v10264 = vpack.c.b16 %v10232, %v10232
        %v10265 = vpack.c.b16 %v10233, %v10233
        %v10266 = vpack.c.b16 %v10234, %v10234
        %v10267 = vpack.c.b16 %v10235, %v10235
        %v10268 = vpack.c.b16 %v10236, %v10236
        %v10269 = vpack.c.b16 %v10237, %v10237
        %v10270 = vpack.c.b16 %v10238, %v10238
        %v10271 = vpack.c.b16 %v10239, %v10239
        %v10272 = vpack.c.b16 %v10240, %v10240
        %v10273 = vpack.c.b16 %v10241, %v10241
        %v10274 = vpack.c.b16 %v10242, %v10242
        %v10275 = vpack.c.b16 %v10243, %v10243
        %v10276 = vpack.c.b16 %v10244, %v10244
        %v10277 = vpack.c.b16 %v10245, %v10245
        %v10278 = vpack.c.b16 %v10246, %v10246
        %v10279 = vpack.c.b16 %v10247, %v10247
        %v10280 = vpack.c.b16 %v10248, %v10248
        %v10281 = vpack.c.b16 %v10249, %v10249
        %v10282 = vpack.c.b16 %v10250, %v10250
        %v10283 = vpack.c.b16 %v10251, %v10251
        %v10284 = vpack.c.b16 %v10252, %v10252
        %v10285 = vpack.c.b16 %v10253, %v10253
        %v10286 = vpack.c.b16 %v10254, %v10254
        %v10287 = vpack.c.b16 %v10255, %v10255
        %v10288 = vpack.c.b16 %v10256, %v10256
        %v10289 = vpack.c.b16 %v10257, %v10257
        %10290 = vrot.lane.b32.xlu0 %v10258, 64
        %v10291 = vpop.permute.xlu0 %10290
        %10292 = vrot.lane.b32.xlu0 %v10259, 64
        %v10293 = vpop.permute.xlu0 %10292
        %10294 = vrot.lane.b32.xlu0 %v10260, 64
        %v10295 = vpop.permute.xlu0 %10294
        %10296 = vrot.lane.b32.xlu0 %v10261, 64
        %v10297 = vpop.permute.xlu0 %10296
        %10298 = vrot.lane.b32.xlu0 %v10262, 64
        %v10299 = vpop.permute.xlu0 %10298
        %10300 = vrot.lane.b32.xlu0 %v10263, 64
        %v10301 = vpop.permute.xlu0 %10300
        %10302 = vrot.lane.b32.xlu0 %v10264, 64
        %v10303 = vpop.permute.xlu0 %10302
        %10304 = vrot.lane.b32.xlu0 %v10265, 64
        %v10305 = vpop.permute.xlu0 %10304
        %10306 = vrot.lane.b32.xlu0 %v10266, 64
        %v10307 = vpop.permute.xlu0 %10306
        %10308 = vrot.lane.b32.xlu0 %v10267, 64
        %v10309 = vpop.permute.xlu0 %10308
        %10310 = vrot.lane.b32.xlu0 %v10268, 64
        %v10311 = vpop.permute.xlu0 %10310
        %10312 = vrot.lane.b32.xlu0 %v10269, 64
        %v10313 = vpop.permute.xlu0 %10312
        %10314 = vrot.lane.b32.xlu0 %v10270, 64
        %v10315 = vpop.permute.xlu0 %10314
        %10316 = vrot.lane.b32.xlu0 %v10271, 64
        %v10317 = vpop.permute.xlu0 %10316
        %10318 = vrot.lane.b32.xlu0 %v10272, 64
        %v10319 = vpop.permute.xlu0 %10318
        %10320 = vrot.lane.b32.xlu0 %v10273, 64
        %v10321 = vpop.permute.xlu0 %10320
        %10322 = vrot.lane.b32.xlu0 %v10274, 64
        %v10323 = vpop.permute.xlu0 %10322
        %10324 = vrot.lane.b32.xlu0 %v10275, 64
        %v10325 = vpop.permute.xlu0 %10324
        %10326 = vrot.lane.b32.xlu0 %v10276, 64
        %v10327 = vpop.permute.xlu0 %10326
        %10328 = vrot.lane.b32.xlu0 %v10277, 64
        %v10329 = vpop.permute.xlu0 %10328
        %10330 = vrot.lane.b32.xlu0 %v10278, 64
        %v10331 = vpop.permute.xlu0 %10330
        %10332 = vrot.lane.b32.xlu0 %v10279, 64
        %v10333 = vpop.permute.xlu0 %10332
        %10334 = vrot.lane.b32.xlu0 %v10280, 64
        %v10335 = vpop.permute.xlu0 %10334
        %10336 = vrot.lane.b32.xlu0 %v10281, 64
        %v10337 = vpop.permute.xlu0 %10336
        %10338 = vrot.lane.b32.xlu0 %v10282, 64
        %v10339 = vpop.permute.xlu0 %10338
        %10340 = vrot.lane.b32.xlu0 %v10283, 64
        %v10341 = vpop.permute.xlu0 %10340
        %10342 = vrot.lane.b32.xlu0 %v10284, 64
        %v10343 = vpop.permute.xlu0 %10342
        %10344 = vrot.lane.b32.xlu0 %v10285, 64
        %v10345 = vpop.permute.xlu0 %10344
        %10346 = vrot.lane.b32.xlu0 %v10286, 64
        %v10347 = vpop.permute.xlu0 %10346
        %10348 = vrot.lane.b32.xlu0 %v10287, 64
        %v10349 = vpop.permute.xlu0 %10348
        %10350 = vrot.lane.b32.xlu0 %v10288, 64
        %v10351 = vpop.permute.xlu0 %10350
        %10352 = vrot.lane.b32.xlu0 %v10289, 64
        %v10353 = vpop.permute.xlu0 %10352
        %10386 = vst.msk [vmem:[#allocation2 + $0x8] sm:$0xf] %vm5889, %v10291
        %10387 = vst.msk [vmem:[#allocation2 + $0x14] sm:$0xf] %vm5889, %v10293
        %10388 = vst.msk [vmem:[#allocation2 + $0x20] sm:$0xf] %vm5889, %v10295
        %10389 = vst.msk [vmem:[#allocation2 + $0x2c] sm:$0xf] %vm5889, %v10297
        %10390 = vst.msk [vmem:[#allocation2 + $0x38] sm:$0xf] %vm5889, %v10299
        %10391 = vst.msk [vmem:[#allocation2 + $0x44] sm:$0xf] %vm5889, %v10301
        %10392 = vst.msk [vmem:[#allocation2 + $0x50] sm:$0xf] %vm5889, %v10303
        %10393 = vst.msk [vmem:[#allocation2 + $0x5c] sm:$0xf] %vm5889, %v10305
        %10394 = vst.msk [vmem:[#allocation2 + $0x68] sm:$0xf] %vm5889, %v10307
        %10395 = vst.msk [vmem:[#allocation2 + $0x74] sm:$0xf] %vm5889, %v10309
        %10396 = vst.msk [vmem:[#allocation2 + $0x80] sm:$0xf] %vm5889, %v10311
        %10397 = vst.msk [vmem:[#allocation2 + $0x8c] sm:$0xf] %vm5889, %v10313
        %10398 = vst.msk [vmem:[#allocation2 + $0x98] sm:$0xf] %vm5889, %v10315
        %10399 = vst.msk [vmem:[#allocation2 + $0xa4] sm:$0xf] %vm5889, %v10317
        %10400 = vst.msk [vmem:[#allocation2 + $0xb0] sm:$0xf] %vm5889, %v10319
        %10401 = vst.msk [vmem:[#allocation2 + $0xbc] sm:$0xf] %vm5889, %v10321
        %10402 = vst.msk [vmem:[#allocation2 + $0xc8] sm:$0xf] %vm5889, %v10323
        %10403 = vst.msk [vmem:[#allocation2 + $0xd4] sm:$0xf] %vm5889, %v10325
        %10404 = vst.msk [vmem:[#allocation2 + $0xe0] sm:$0xf] %vm5889, %v10327
        %10405 = vst.msk [vmem:[#allocation2 + $0xec] sm:$0xf] %vm5889, %v10329
        %10406 = vst.msk [vmem:[#allocation2 + $0xf8] sm:$0xf] %vm5889, %v10331
        %10407 = vst.msk [vmem:[#allocation2 + $0x104] sm:$0xf] %vm5889, %v10333
        %10408 = vst.msk [vmem:[#allocation2 + $0x110] sm:$0xf] %vm5889, %v10335
        %10409 = vst.msk [vmem:[#allocation2 + $0x11c] sm:$0xf] %vm5889, %v10337
        %10410 = vst.msk [vmem:[#allocation2 + $0x128] sm:$0xf] %vm5889, %v10339
        %10411 = vst.msk [vmem:[#allocation2 + $0x134] sm:$0xf] %vm5889, %v10341
        %10412 = vst.msk [vmem:[#allocation2 + $0x140] sm:$0xf] %vm5889, %v10343
        %10413 = vst.msk [vmem:[#allocation2 + $0x14c] sm:$0xf] %vm5889, %v10345
        %10414 = vst.msk [vmem:[#allocation2 + $0x158] sm:$0xf] %vm5889, %v10347
        %10415 = vst.msk [vmem:[#allocation2 + $0x164] sm:$0xf] %vm5889, %v10349
        %10416 = vst.msk [vmem:[#allocation2 + $0x170] sm:$0xf] %vm5889, %v10351
        %10417 = vst.msk [vmem:[#allocation2 + $0x17c] sm:$0xf] %vm5889, %v10353
        %v10418 = vld [vmem:[#allocation2] sm:$0xff]
        %v10419 = vld [vmem:[#allocation2 + $0x8] sm:$0xf]
        %v10420 = vld [vmem:[#allocation2 + $0xc] sm:$0xff]
        %v10421 = vld [vmem:[#allocation2 + $0x14] sm:$0xf]
        %v10422 = vld [vmem:[#allocation2 + $0x18] sm:$0xff]
        %v10423 = vld [vmem:[#allocation2 + $0x20] sm:$0xf]
        %v10424 = vld [vmem:[#allocation2 + $0x24] sm:$0xff]
        %v10425 = vld [vmem:[#allocation2 + $0x2c] sm:$0xf]
        %v10426 = vld [vmem:[#allocation2 + $0x30] sm:$0xff]
        %v10427 = vld [vmem:[#allocation2 + $0x38] sm:$0xf]
        %v10428 = vld [vmem:[#allocation2 + $0x3c] sm:$0xff]
        %v10429 = vld [vmem:[#allocation2 + $0x44] sm:$0xf]
        %v10430 = vld [vmem:[#allocation2 + $0x48] sm:$0xff]
        %v10431 = vld [vmem:[#allocation2 + $0x50] sm:$0xf]
        %v10432 = vld [vmem:[#allocation2 + $0x54] sm:$0xff]
        %v10433 = vld [vmem:[#allocation2 + $0x5c] sm:$0xf]
        %v10434 = vld [vmem:[#allocation2 + $0x60] sm:$0xff]
        %v10435 = vld [vmem:[#allocation2 + $0x68] sm:$0xf]
        %v10436 = vld [vmem:[#allocation2 + $0x6c] sm:$0xff]
        %v10437 = vld [vmem:[#allocation2 + $0x74] sm:$0xf]
        %v10438 = vld [vmem:[#allocation2 + $0x78] sm:$0xff]
        %v10439 = vld [vmem:[#allocation2 + $0x80] sm:$0xf]
        %v10440 = vld [vmem:[#allocation2 + $0x84] sm:$0xff]
        %v10441 = vld [vmem:[#allocation2 + $0x8c] sm:$0xf]
        %v10442 = vld [vmem:[#allocation2 + $0x90] sm:$0xff]
        %v10443 = vld [vmem:[#allocation2 + $0x98] sm:$0xf]
        %v10444 = vld [vmem:[#allocation2 + $0x9c] sm:$0xff]
        %v10445 = vld [vmem:[#allocation2 + $0xa4] sm:$0xf]
        %v10446 = vld [vmem:[#allocation2 + $0xa8] sm:$0xff]
        %v10447 = vld [vmem:[#allocation2 + $0xb0] sm:$0xf]
        %v10448 = vld [vmem:[#allocation2 + $0xb4] sm:$0xff]
        %v10449 = vld [vmem:[#allocation2 + $0xbc] sm:$0xf]
        %v10450 = vld [vmem:[#allocation2 + $0xc0] sm:$0xff]
        %v10451 = vld [vmem:[#allocation2 + $0xc8] sm:$0xf]
        %v10452 = vld [vmem:[#allocation2 + $0xcc] sm:$0xff]
        %v10453 = vld [vmem:[#allocation2 + $0xd4] sm:$0xf]
        %v10454 = vld [vmem:[#allocation2 + $0xd8] sm:$0xff]
        %v10455 = vld [vmem:[#allocation2 + $0xe0] sm:$0xf]
        %v10456 = vld [vmem:[#allocation2 + $0xe4] sm:$0xff]
        %v10457 = vld [vmem:[#allocation2 + $0xec] sm:$0xf]
        %v10458 = vld [vmem:[#allocation2 + $0xf0] sm:$0xff]
        %v10459 = vld [vmem:[#allocation2 + $0xf8] sm:$0xf]
        %v10460 = vld [vmem:[#allocation2 + $0xfc] sm:$0xff]
        %v10461 = vld [vmem:[#allocation2 + $0x104] sm:$0xf]
        %v10462 = vld [vmem:[#allocation2 + $0x108] sm:$0xff]
        %v10463 = vld [vmem:[#allocation2 + $0x110] sm:$0xf]
        %v10464 = vld [vmem:[#allocation2 + $0x114] sm:$0xff]
        %v10465 = vld [vmem:[#allocation2 + $0x11c] sm:$0xf]
        %v10466 = vld [vmem:[#allocation2 + $0x120] sm:$0xff]
        %v10467 = vld [vmem:[#allocation2 + $0x128] sm:$0xf]
        %v10468 = vld [vmem:[#allocation2 + $0x12c] sm:$0xff]
        %v10469 = vld [vmem:[#allocation2 + $0x134] sm:$0xf]
        %v10470 = vld [vmem:[#allocation2 + $0x138] sm:$0xff]
        %v10471 = vld [vmem:[#allocation2 + $0x140] sm:$0xf]
        %v10472 = vld [vmem:[#allocation2 + $0x144] sm:$0xff]
        %v10473 = vld [vmem:[#allocation2 + $0x14c] sm:$0xf]
        %v10474 = vld [vmem:[#allocation2 + $0x150] sm:$0xff]
        %v10475 = vld [vmem:[#allocation2 + $0x158] sm:$0xf]
        %v10476 = vld [vmem:[#allocation2 + $0x15c] sm:$0xff]
        %v10477 = vld [vmem:[#allocation2 + $0x164] sm:$0xf]
        %v10478 = vld [vmem:[#allocation2 + $0x168] sm:$0xff]
        %v10479 = vld [vmem:[#allocation2 + $0x170] sm:$0xf]
        %v10480 = vld [vmem:[#allocation2 + $0x174] sm:$0xff]
        %v10481 = vld [vmem:[#allocation2 + $0x17c] sm:$0xf]
        %v10482 = vld [vmem:[#allocation8] sm:$0xff]
        %v10483 = vld [vmem:[#allocation8 + $0x8] sm:$0xf]
        %v10484 = vld [vmem:[#allocation8 + $0xc] sm:$0xff]
        %v10485 = vld [vmem:[#allocation8 + $0x14] sm:$0xf]
        %v10486 = vld [vmem:[#allocation8 + $0x18] sm:$0xff]
        %v10487 = vld [vmem:[#allocation8 + $0x20] sm:$0xf]
        %v10488 = vld [vmem:[#allocation8 + $0x24] sm:$0xff]
        %v10489 = vld [vmem:[#allocation8 + $0x2c] sm:$0xf]
        %v10490 = vld [vmem:[#allocation8 + $0x30] sm:$0xff]
        %v10491 = vld [vmem:[#allocation8 + $0x38] sm:$0xf]
        %v10492 = vld [vmem:[#allocation8 + $0x3c] sm:$0xff]
        %v10493 = vld [vmem:[#allocation8 + $0x44] sm:$0xf]
        %v10494 = vld [vmem:[#allocation8 + $0x48] sm:$0xff]
        %v10495 = vld [vmem:[#allocation8 + $0x50] sm:$0xf]
        %v10496 = vld [vmem:[#allocation8 + $0x54] sm:$0xff]
        %v10497 = vld [vmem:[#allocation8 + $0x5c] sm:$0xf]
        %v10498 = vld [vmem:[#allocation8 + $0x60] sm:$0xff]
        %v10499 = vld [vmem:[#allocation8 + $0x68] sm:$0xf]
        %v10500 = vld [vmem:[#allocation8 + $0x6c] sm:$0xff]
        %v10501 = vld [vmem:[#allocation8 + $0x74] sm:$0xf]
        %v10502 = vld [vmem:[#allocation8 + $0x78] sm:$0xff]
        %v10503 = vld [vmem:[#allocation8 + $0x80] sm:$0xf]
        %v10504 = vld [vmem:[#allocation8 + $0x84] sm:$0xff]
        %v10505 = vld [vmem:[#allocation8 + $0x8c] sm:$0xf]
        %v10506 = vld [vmem:[#allocation8 + $0x90] sm:$0xff]
        %v10507 = vld [vmem:[#allocation8 + $0x98] sm:$0xf]
        %v10508 = vld [vmem:[#allocation8 + $0x9c] sm:$0xff]
        %v10509 = vld [vmem:[#allocation8 + $0xa4] sm:$0xf]
        %v10510 = vld [vmem:[#allocation8 + $0xa8] sm:$0xff]
        %v10511 = vld [vmem:[#allocation8 + $0xb0] sm:$0xf]
        %v10512 = vld [vmem:[#allocation8 + $0xb4] sm:$0xff]
        %v10513 = vld [vmem:[#allocation8 + $0xbc] sm:$0xf]
        %v10514 = vld [vmem:[#allocation8 + $0xc0] sm:$0xff]
        %v10515 = vld [vmem:[#allocation8 + $0xc8] sm:$0xf]
        %v10516 = vld [vmem:[#allocation8 + $0xcc] sm:$0xff]
        %v10517 = vld [vmem:[#allocation8 + $0xd4] sm:$0xf]
        %v10518 = vld [vmem:[#allocation8 + $0xd8] sm:$0xff]
        %v10519 = vld [vmem:[#allocation8 + $0xe0] sm:$0xf]
        %v10520 = vld [vmem:[#allocation8 + $0xe4] sm:$0xff]
        %v10521 = vld [vmem:[#allocation8 + $0xec] sm:$0xf]
        %v10522 = vld [vmem:[#allocation8 + $0xf0] sm:$0xff]
        %v10523 = vld [vmem:[#allocation8 + $0xf8] sm:$0xf]
        %v10524 = vld [vmem:[#allocation8 + $0xfc] sm:$0xff]
        %v10525 = vld [vmem:[#allocation8 + $0x104] sm:$0xf]
        %v10526 = vld [vmem:[#allocation8 + $0x108] sm:$0xff]
        %v10527 = vld [vmem:[#allocation8 + $0x110] sm:$0xf]
        %v10528 = vld [vmem:[#allocation8 + $0x114] sm:$0xff]
        %v10529 = vld [vmem:[#allocation8 + $0x11c] sm:$0xf]
        %v10530 = vld [vmem:[#allocation8 + $0x120] sm:$0xff]
        %v10531 = vld [vmem:[#allocation8 + $0x128] sm:$0xf]
        %v10532 = vld [vmem:[#allocation8 + $0x12c] sm:$0xff]
        %v10533 = vld [vmem:[#allocation8 + $0x134] sm:$0xf]
        %v10534 = vld [vmem:[#allocation8 + $0x138] sm:$0xff]
        %v10535 = vld [vmem:[#allocation8 + $0x140] sm:$0xf]
        %v10536 = vld [vmem:[#allocation8 + $0x144] sm:$0xff]
        %v10537 = vld [vmem:[#allocation8 + $0x14c] sm:$0xf]
        %v10538 = vld [vmem:[#allocation8 + $0x150] sm:$0xff]
        %v10539 = vld [vmem:[#allocation8 + $0x158] sm:$0xf]
        %v10540 = vld [vmem:[#allocation8 + $0x15c] sm:$0xff]
        %v10541 = vld [vmem:[#allocation8 + $0x164] sm:$0xf]
        %v10542 = vld [vmem:[#allocation8 + $0x168] sm:$0xff]
        %v10543 = vld [vmem:[#allocation8 + $0x170] sm:$0xf]
        %v10544 = vld [vmem:[#allocation8 + $0x174] sm:$0xff]
        %v10545 = vld [vmem:[#allocation8 + $0x17c] sm:$0xf]
        %v10546 = vld [vmem:[#allocation8 + $0x180] sm:$0xff]
        %v10547 = vld [vmem:[#allocation8 + $0x188] sm:$0xf]
        %v10548 = vld [vmem:[#allocation8 + $0x18c] sm:$0xff]
        %v10549 = vld [vmem:[#allocation8 + $0x194] sm:$0xf]
        %v10550 = vld [vmem:[#allocation8 + $0x198] sm:$0xff]
        %v10551 = vld [vmem:[#allocation8 + $0x1a0] sm:$0xf]
        %v10552 = vld [vmem:[#allocation8 + $0x1a4] sm:$0xff]
        %v10553 = vld [vmem:[#allocation8 + $0x1ac] sm:$0xf]
        %v10554 = vld [vmem:[#allocation8 + $0x1b0] sm:$0xff]
        %v10555 = vld [vmem:[#allocation8 + $0x1b8] sm:$0xf]
        %v10556 = vld [vmem:[#allocation8 + $0x1bc] sm:$0xff]
        %v10557 = vld [vmem:[#allocation8 + $0x1c4] sm:$0xf]
        %v10558 = vld [vmem:[#allocation8 + $0x1c8] sm:$0xff]
        %v10559 = vld [vmem:[#allocation8 + $0x1d0] sm:$0xf]
        %v10560 = vld [vmem:[#allocation8 + $0x1d4] sm:$0xff]
        %v10561 = vld [vmem:[#allocation8 + $0x1dc] sm:$0xf]
        %v10562 = vld [vmem:[#allocation8 + $0x1e0] sm:$0xff]
        %v10563 = vld [vmem:[#allocation8 + $0x1e8] sm:$0xf]
        %v10564 = vld [vmem:[#allocation8 + $0x1ec] sm:$0xff]
        %v10565 = vld [vmem:[#allocation8 + $0x1f4] sm:$0xf]
        %v10566 = vld [vmem:[#allocation8 + $0x1f8] sm:$0xff]
        %v10567 = vld [vmem:[#allocation8 + $0x200] sm:$0xf]
        %v10568 = vld [vmem:[#allocation8 + $0x204] sm:$0xff]
        %v10569 = vld [vmem:[#allocation8 + $0x20c] sm:$0xf]
        %v10570 = vld [vmem:[#allocation8 + $0x210] sm:$0xff]
        %v10571 = vld [vmem:[#allocation8 + $0x218] sm:$0xf]
        %v10572 = vld [vmem:[#allocation8 + $0x21c] sm:$0xff]
        %v10573 = vld [vmem:[#allocation8 + $0x224] sm:$0xf]
        %v10574 = vld [vmem:[#allocation8 + $0x228] sm:$0xff]
        %v10575 = vld [vmem:[#allocation8 + $0x230] sm:$0xf]
        %v10576 = vld [vmem:[#allocation8 + $0x234] sm:$0xff]
        %v10577 = vld [vmem:[#allocation8 + $0x23c] sm:$0xf]
        %v10578 = vld [vmem:[%s3] sm:$0x7]
        %v10580 = vlaneseq
        %v10581 = vshrl.u32 %v10580, 7
        %v10582 = vsub.s32 0, %v10581
        %v10583 = vrot.slane %v10578, %v10582
        %v10584 = vlaneseq
        %v10585 = vshrl.u32 %v10584, 7
        %v10586 = vsub.s32 1, %v10585
        %v10587 = vrot.slane %v10578, %v10586
        %v10588 = vlaneseq
        %v10589 = vshrl.u32 %v10588, 7
        %v10590 = vsub.s32 2, %v10589
        %v10591 = vrot.slane %v10578, %v10590
        %v10659 = vunpack.c.l.b16 %v10418
        %v10660 = vunpack.c.h.b16 %v10418
        %v10661 = vunpack.c.l.b16 %v10419
        %v10662 = vunpack.c.l.b16 %v10420
        %v10663 = vunpack.c.h.b16 %v10420
        %v10664 = vunpack.c.l.b16 %v10421
        %v10665 = vunpack.c.l.b16 %v10422
        %v10666 = vunpack.c.h.b16 %v10422
        %v10667 = vunpack.c.l.b16 %v10423
        %v10668 = vunpack.c.l.b16 %v10424
        %v10669 = vunpack.c.h.b16 %v10424
        %v10670 = vunpack.c.l.b16 %v10425
        %v10671 = vunpack.c.l.b16 %v10426
        %v10672 = vunpack.c.h.b16 %v10426
        %v10673 = vunpack.c.l.b16 %v10427
        %v10674 = vunpack.c.l.b16 %v10428
        %v10675 = vunpack.c.h.b16 %v10428
        %v10676 = vunpack.c.l.b16 %v10429
        %v10677 = vunpack.c.l.b16 %v10430
        %v10678 = vunpack.c.h.b16 %v10430
        %v10679 = vunpack.c.l.b16 %v10431
        %v10680 = vunpack.c.l.b16 %v10432
        %v10681 = vunpack.c.h.b16 %v10432
        %v10682 = vunpack.c.l.b16 %v10433
        %v10683 = vunpack.c.l.b16 %v10434
        %v10684 = vunpack.c.h.b16 %v10434
        %v10685 = vunpack.c.l.b16 %v10435
        %v10686 = vunpack.c.l.b16 %v10436
        %v10687 = vunpack.c.h.b16 %v10436
        %v10688 = vunpack.c.l.b16 %v10437
        %v10689 = vunpack.c.l.b16 %v10438
        %v10690 = vunpack.c.h.b16 %v10438
        %v10691 = vunpack.c.l.b16 %v10439
        %v10692 = vunpack.c.l.b16 %v10440
        %v10693 = vunpack.c.h.b16 %v10440
        %v10694 = vunpack.c.l.b16 %v10441
        %v10695 = vunpack.c.l.b16 %v10442
        %v10696 = vunpack.c.h.b16 %v10442
        %v10697 = vunpack.c.l.b16 %v10443
        %v10698 = vunpack.c.l.b16 %v10444
        %v10699 = vunpack.c.h.b16 %v10444
        %v10700 = vunpack.c.l.b16 %v10445
        %v10701 = vunpack.c.l.b16 %v10446
        %v10702 = vunpack.c.h.b16 %v10446
        %v10703 = vunpack.c.l.b16 %v10447
        %v10704 = vunpack.c.l.b16 %v10448
        %v10705 = vunpack.c.h.b16 %v10448
        %v10706 = vunpack.c.l.b16 %v10449
        %v10707 = vunpack.c.l.b16 %v10450
        %v10708 = vunpack.c.h.b16 %v10450
        %v10709 = vunpack.c.l.b16 %v10451
        %v10710 = vunpack.c.l.b16 %v10452
        %v10711 = vunpack.c.h.b16 %v10452
        %v10712 = vunpack.c.l.b16 %v10453
        %v10713 = vunpack.c.l.b16 %v10454
        %v10714 = vunpack.c.h.b16 %v10454
        %v10715 = vunpack.c.l.b16 %v10455
        %v10716 = vunpack.c.l.b16 %v10456
        %v10717 = vunpack.c.h.b16 %v10456
        %v10718 = vunpack.c.l.b16 %v10457
        %v10719 = vunpack.c.l.b16 %v10458
        %v10720 = vunpack.c.h.b16 %v10458
        %v10721 = vunpack.c.l.b16 %v10459
        %v10722 = vunpack.c.l.b16 %v10460
        %v10723 = vunpack.c.h.b16 %v10460
        %v10724 = vunpack.c.l.b16 %v10461
        %v10725 = vunpack.c.l.b16 %v10462
        %v10726 = vunpack.c.h.b16 %v10462
        %v10727 = vunpack.c.l.b16 %v10463
        %v10728 = vunpack.c.l.b16 %v10464
        %v10729 = vunpack.c.h.b16 %v10464
        %v10730 = vunpack.c.l.b16 %v10465
        %v10731 = vunpack.c.l.b16 %v10466
        %v10732 = vunpack.c.h.b16 %v10466
        %v10733 = vunpack.c.l.b16 %v10467
        %v10734 = vunpack.c.l.b16 %v10468
        %v10735 = vunpack.c.h.b16 %v10468
        %v10736 = vunpack.c.l.b16 %v10469
        %v10737 = vunpack.c.l.b16 %v10470
        %v10738 = vunpack.c.h.b16 %v10470
        %v10739 = vunpack.c.l.b16 %v10471
        %v10740 = vunpack.c.l.b16 %v10472
        %v10741 = vunpack.c.h.b16 %v10472
        %v10742 = vunpack.c.l.b16 %v10473
        %v10743 = vunpack.c.l.b16 %v10474
        %v10744 = vunpack.c.h.b16 %v10474
        %v10745 = vunpack.c.l.b16 %v10475
        %v10746 = vunpack.c.l.b16 %v10476
        %v10747 = vunpack.c.h.b16 %v10476
        %v10748 = vunpack.c.l.b16 %v10477
        %v10749 = vunpack.c.l.b16 %v10478
        %v10750 = vunpack.c.h.b16 %v10478
        %v10751 = vunpack.c.l.b16 %v10479
        %v10752 = vunpack.c.l.b16 %v10480
        %v10753 = vunpack.c.h.b16 %v10480
        %v10754 = vunpack.c.l.b16 %v10481
        %v10755 = vpack.c.b16 %v10662, %v10659
        %v10756 = vpack.c.b16 %v10663, %v10660
        %v10757 = vpack.c.b16 %v10664, %v10661
        %v10758 = vpack.c.b16 %v10668, %v10665
        %v10759 = vpack.c.b16 %v10669, %v10666
        %v10760 = vpack.c.b16 %v10670, %v10667
        %v10761 = vpack.c.b16 %v10674, %v10671
        %v10762 = vpack.c.b16 %v10675, %v10672
        %v10763 = vpack.c.b16 %v10676, %v10673
        %v10764 = vpack.c.b16 %v10680, %v10677
        %v10765 = vpack.c.b16 %v10681, %v10678
        %v10766 = vpack.c.b16 %v10682, %v10679
        %v10767 = vpack.c.b16 %v10686, %v10683
        %v10768 = vpack.c.b16 %v10687, %v10684
        %v10769 = vpack.c.b16 %v10688, %v10685
        %v10770 = vpack.c.b16 %v10692, %v10689
        %v10771 = vpack.c.b16 %v10693, %v10690
        %v10772 = vpack.c.b16 %v10694, %v10691
        %v10773 = vpack.c.b16 %v10698, %v10695
        %v10774 = vpack.c.b16 %v10699, %v10696
        %v10775 = vpack.c.b16 %v10700, %v10697
        %v10776 = vpack.c.b16 %v10704, %v10701
        %v10777 = vpack.c.b16 %v10705, %v10702
        %v10778 = vpack.c.b16 %v10706, %v10703
        %v10779 = vpack.c.b16 %v10710, %v10707
        %v10780 = vpack.c.b16 %v10711, %v10708
        %v10781 = vpack.c.b16 %v10712, %v10709
        %v10782 = vpack.c.b16 %v10716, %v10713
        %v10783 = vpack.c.b16 %v10717, %v10714
        %v10784 = vpack.c.b16 %v10718, %v10715
        %v10785 = vpack.c.b16 %v10722, %v10719
        %v10786 = vpack.c.b16 %v10723, %v10720
        %v10787 = vpack.c.b16 %v10724, %v10721
        %v10788 = vpack.c.b16 %v10728, %v10725
        %v10789 = vpack.c.b16 %v10729, %v10726
        %v10790 = vpack.c.b16 %v10730, %v10727
        %v10791 = vpack.c.b16 %v10734, %v10731
        %v10792 = vpack.c.b16 %v10735, %v10732
        %v10793 = vpack.c.b16 %v10736, %v10733
        %v10794 = vpack.c.b16 %v10740, %v10737
        %v10795 = vpack.c.b16 %v10741, %v10738
        %v10796 = vpack.c.b16 %v10742, %v10739
        %v10797 = vpack.c.b16 %v10746, %v10743
        %v10798 = vpack.c.b16 %v10747, %v10744
        %v10799 = vpack.c.b16 %v10748, %v10745
        %v10800 = vpack.c.b16 %v10752, %v10749
        %v10801 = vpack.c.b16 %v10753, %v10750
        %v10802 = vpack.c.b16 %v10754, %v10751
        %v10947 = vunpack.c.l.b16 %v10482
        %v10948 = vunpack.c.h.b16 %v10482
        %v10949 = vunpack.c.l.b16 %v10483
        %v10950 = vunpack.c.l.b16 %v10484
        %v10951 = vunpack.c.h.b16 %v10484
        %v10952 = vunpack.c.l.b16 %v10485
        %v10953 = vunpack.c.l.b16 %v10486
        %v10954 = vunpack.c.h.b16 %v10486
        %v10955 = vunpack.c.l.b16 %v10487
        %v10956 = vunpack.c.l.b16 %v10488
        %v10957 = vunpack.c.h.b16 %v10488
        %v10958 = vunpack.c.l.b16 %v10489
        %v10959 = vunpack.c.l.b16 %v10490
        %v10960 = vunpack.c.h.b16 %v10490
        %v10961 = vunpack.c.l.b16 %v10491
        %v10962 = vunpack.c.l.b16 %v10492
        %v10963 = vunpack.c.h.b16 %v10492
        %v10964 = vunpack.c.l.b16 %v10493
        %v10965 = vunpack.c.l.b16 %v10494
        %v10966 = vunpack.c.h.b16 %v10494
        %v10967 = vunpack.c.l.b16 %v10495
        %v10968 = vunpack.c.l.b16 %v10496
        %v10969 = vunpack.c.h.b16 %v10496
        %v10970 = vunpack.c.l.b16 %v10497
        %v10971 = vunpack.c.l.b16 %v10498
        %v10972 = vunpack.c.h.b16 %v10498
        %v10973 = vunpack.c.l.b16 %v10499
        %v10974 = vunpack.c.l.b16 %v10500
        %v10975 = vunpack.c.h.b16 %v10500
        %v10976 = vunpack.c.l.b16 %v10501
        %v10977 = vunpack.c.l.b16 %v10502
        %v10978 = vunpack.c.h.b16 %v10502
        %v10979 = vunpack.c.l.b16 %v10503
        %v10980 = vunpack.c.l.b16 %v10504
        %v10981 = vunpack.c.h.b16 %v10504
        %v10982 = vunpack.c.l.b16 %v10505
        %v10983 = vunpack.c.l.b16 %v10506
        %v10984 = vunpack.c.h.b16 %v10506
        %v10985 = vunpack.c.l.b16 %v10507
        %v10986 = vunpack.c.l.b16 %v10508
        %v10987 = vunpack.c.h.b16 %v10508
        %v10988 = vunpack.c.l.b16 %v10509
        %v10989 = vunpack.c.l.b16 %v10510
        %v10990 = vunpack.c.h.b16 %v10510
        %v10991 = vunpack.c.l.b16 %v10511
        %v10992 = vunpack.c.l.b16 %v10512
        %v10993 = vunpack.c.h.b16 %v10512
        %v10994 = vunpack.c.l.b16 %v10513
        %v10995 = vunpack.c.l.b16 %v10514
        %v10996 = vunpack.c.h.b16 %v10514
        %v10997 = vunpack.c.l.b16 %v10515
        %v10998 = vunpack.c.l.b16 %v10516
        %v10999 = vunpack.c.h.b16 %v10516
        %v11000 = vunpack.c.l.b16 %v10517
        %v11001 = vunpack.c.l.b16 %v10518
        %v11002 = vunpack.c.h.b16 %v10518
        %v11003 = vunpack.c.l.b16 %v10519
        %v11004 = vunpack.c.l.b16 %v10520
        %v11005 = vunpack.c.h.b16 %v10520
        %v11006 = vunpack.c.l.b16 %v10521
        %v11007 = vunpack.c.l.b16 %v10522
        %v11008 = vunpack.c.h.b16 %v10522
        %v11009 = vunpack.c.l.b16 %v10523
        %v11010 = vunpack.c.l.b16 %v10524
        %v11011 = vunpack.c.h.b16 %v10524
        %v11012 = vunpack.c.l.b16 %v10525
        %v11013 = vunpack.c.l.b16 %v10526
        %v11014 = vunpack.c.h.b16 %v10526
        %v11015 = vunpack.c.l.b16 %v10527
        %v11016 = vunpack.c.l.b16 %v10528
        %v11017 = vunpack.c.h.b16 %v10528
        %v11018 = vunpack.c.l.b16 %v10529
        %v11019 = vunpack.c.l.b16 %v10530
        %v11020 = vunpack.c.h.b16 %v10530
        %v11021 = vunpack.c.l.b16 %v10531
        %v11022 = vunpack.c.l.b16 %v10532
        %v11023 = vunpack.c.h.b16 %v10532
        %v11024 = vunpack.c.l.b16 %v10533
        %v11025 = vunpack.c.l.b16 %v10534
        %v11026 = vunpack.c.h.b16 %v10534
        %v11027 = vunpack.c.l.b16 %v10535
        %v11028 = vunpack.c.l.b16 %v10536
        %v11029 = vunpack.c.h.b16 %v10536
        %v11030 = vunpack.c.l.b16 %v10537
        %v11031 = vunpack.c.l.b16 %v10538
        %v11032 = vunpack.c.h.b16 %v10538
        %v11033 = vunpack.c.l.b16 %v10539
        %v11034 = vunpack.c.l.b16 %v10540
        %v11035 = vunpack.c.h.b16 %v10540
        %v11036 = vunpack.c.l.b16 %v10541
        %v11037 = vunpack.c.l.b16 %v10542
        %v11038 = vunpack.c.h.b16 %v10542
        %v11039 = vunpack.c.l.b16 %v10543
        %v11040 = vunpack.c.l.b16 %v10544
        %v11041 = vunpack.c.h.b16 %v10544
        %v11042 = vunpack.c.l.b16 %v10545
        %v11043 = vunpack.c.l.b16 %v10546
        %v11044 = vunpack.c.h.b16 %v10546
        %v11045 = vunpack.c.l.b16 %v10547
        %v11046 = vunpack.c.l.b16 %v10548
        %v11047 = vunpack.c.h.b16 %v10548
        %v11048 = vunpack.c.l.b16 %v10549
        %v11049 = vunpack.c.l.b16 %v10550
        %v11050 = vunpack.c.h.b16 %v10550
        %v11051 = vunpack.c.l.b16 %v10551
        %v11052 = vunpack.c.l.b16 %v10552
        %v11053 = vunpack.c.h.b16 %v10552
        %v11054 = vunpack.c.l.b16 %v10553
        %v11055 = vunpack.c.l.b16 %v10554
        %v11056 = vunpack.c.h.b16 %v10554
        %v11057 = vunpack.c.l.b16 %v10555
        %v11058 = vunpack.c.l.b16 %v10556
        %v11059 = vunpack.c.h.b16 %v10556
        %v11060 = vunpack.c.l.b16 %v10557
        %v11061 = vunpack.c.l.b16 %v10558
        %v11062 = vunpack.c.h.b16 %v10558
        %v11063 = vunpack.c.l.b16 %v10559
        %v11064 = vunpack.c.l.b16 %v10560
        %v11065 = vunpack.c.h.b16 %v10560
        %v11066 = vunpack.c.l.b16 %v10561
        %v11067 = vunpack.c.l.b16 %v10562
        %v11068 = vunpack.c.h.b16 %v10562
        %v11069 = vunpack.c.l.b16 %v10563
        %v11070 = vunpack.c.l.b16 %v10564
        %v11071 = vunpack.c.h.b16 %v10564
        %v11072 = vunpack.c.l.b16 %v10565
        %v11073 = vunpack.c.l.b16 %v10566
        %v11074 = vunpack.c.h.b16 %v10566
        %v11075 = vunpack.c.l.b16 %v10567
        %v11076 = vunpack.c.l.b16 %v10568
        %v11077 = vunpack.c.h.b16 %v10568
        %v11078 = vunpack.c.l.b16 %v10569
        %v11079 = vunpack.c.l.b16 %v10570
        %v11080 = vunpack.c.h.b16 %v10570
        %v11081 = vunpack.c.l.b16 %v10571
        %v11082 = vunpack.c.l.b16 %v10572
        %v11083 = vunpack.c.h.b16 %v10572
        %v11084 = vunpack.c.l.b16 %v10573
        %v11085 = vunpack.c.l.b16 %v10574
        %v11086 = vunpack.c.h.b16 %v10574
        %v11087 = vunpack.c.l.b16 %v10575
        %v11088 = vunpack.c.l.b16 %v10576
        %v11089 = vunpack.c.h.b16 %v10576
        %v11090 = vunpack.c.l.b16 %v10577
        %v11091 = vpack.c.b16 %v10950, %v10947
        %v11092 = vpack.c.b16 %v10951, %v10948
        %v11093 = vpack.c.b16 %v10952, %v10949
        %v11094 = vpack.c.b16 %v10956, %v10953
        %v11095 = vpack.c.b16 %v10957, %v10954
        %v11096 = vpack.c.b16 %v10958, %v10955
        %v11097 = vpack.c.b16 %v10962, %v10959
        %v11098 = vpack.c.b16 %v10963, %v10960
        %v11099 = vpack.c.b16 %v10964, %v10961
        %v11100 = vpack.c.b16 %v10968, %v10965
        %v11101 = vpack.c.b16 %v10969, %v10966
        %v11102 = vpack.c.b16 %v10970, %v10967
        %v11103 = vpack.c.b16 %v10974, %v10971
        %v11104 = vpack.c.b16 %v10975, %v10972
        %v11105 = vpack.c.b16 %v10976, %v10973
        %v11106 = vpack.c.b16 %v10980, %v10977
        %v11107 = vpack.c.b16 %v10981, %v10978
        %v11108 = vpack.c.b16 %v10982, %v10979
        %v11109 = vpack.c.b16 %v10986, %v10983
        %v11110 = vpack.c.b16 %v10987, %v10984
        %v11111 = vpack.c.b16 %v10988, %v10985
        %v11112 = vpack.c.b16 %v10992, %v10989
        %v11113 = vpack.c.b16 %v10993, %v10990
        %v11114 = vpack.c.b16 %v10994, %v10991
        %v11115 = vpack.c.b16 %v10998, %v10995
        %v11116 = vpack.c.b16 %v10999, %v10996
        %v11117 = vpack.c.b16 %v11000, %v10997
        %v11118 = vpack.c.b16 %v11004, %v11001
        %v11119 = vpack.c.b16 %v11005, %v11002
        %v11120 = vpack.c.b16 %v11006, %v11003
        %v11121 = vpack.c.b16 %v11010, %v11007
        %v11122 = vpack.c.b16 %v11011, %v11008
        %v11123 = vpack.c.b16 %v11012, %v11009
        %v11124 = vpack.c.b16 %v11016, %v11013
        %v11125 = vpack.c.b16 %v11017, %v11014
        %v11126 = vpack.c.b16 %v11018, %v11015
        %v11127 = vpack.c.b16 %v11022, %v11019
        %v11128 = vpack.c.b16 %v11023, %v11020
        %v11129 = vpack.c.b16 %v11024, %v11021
        %v11130 = vpack.c.b16 %v11028, %v11025
        %v11131 = vpack.c.b16 %v11029, %v11026
        %v11132 = vpack.c.b16 %v11030, %v11027
        %v11133 = vpack.c.b16 %v11034, %v11031
        %v11134 = vpack.c.b16 %v11035, %v11032
        %v11135 = vpack.c.b16 %v11036, %v11033
        %v11136 = vpack.c.b16 %v11040, %v11037
        %v11137 = vpack.c.b16 %v11041, %v11038
        %v11138 = vpack.c.b16 %v11042, %v11039
        %v11139 = vpack.c.b16 %v11046, %v11043
        %v11140 = vpack.c.b16 %v11047, %v11044
        %v11141 = vpack.c.b16 %v11048, %v11045
        %v11142 = vpack.c.b16 %v11052, %v11049
        %v11143 = vpack.c.b16 %v11053, %v11050
        %v11144 = vpack.c.b16 %v11054, %v11051
        %v11145 = vpack.c.b16 %v11058, %v11055
        %v11146 = vpack.c.b16 %v11059, %v11056
        %v11147 = vpack.c.b16 %v11060, %v11057
        %v11148 = vpack.c.b16 %v11064, %v11061
        %v11149 = vpack.c.b16 %v11065, %v11062
        %v11150 = vpack.c.b16 %v11066, %v11063
        %v11151 = vpack.c.b16 %v11070, %v11067
        %v11152 = vpack.c.b16 %v11071, %v11068
        %v11153 = vpack.c.b16 %v11072, %v11069
        %v11154 = vpack.c.b16 %v11076, %v11073
        %v11155 = vpack.c.b16 %v11077, %v11074
        %v11156 = vpack.c.b16 %v11078, %v11075
        %v11157 = vpack.c.b16 %v11082, %v11079
        %v11158 = vpack.c.b16 %v11083, %v11080
        %v11159 = vpack.c.b16 %v11084, %v11081
        %v11160 = vpack.c.b16 %v11088, %v11085
        %v11161 = vpack.c.b16 %v11089, %v11086
        %v11162 = vpack.c.b16 %v11090, %v11087
        %11235 = vmatprep.subr.bf16.mxu0 %v11113
        %11236 = vmatpush1.bf16.msra.mxu0 %v11112
        %11237 = vmatprep.subr.bf16.mxu0 %v11110
        %11238 = vmatpush1.bf16.msra.mxu0 %v11109
        %11239 = vmatprep.subr.bf16.mxu0 %v11107
        %11240 = vmatpush1.bf16.msra.mxu0 %v11106
        %11241 = vmatprep.subr.bf16.mxu0 %v11104
        %11242 = vmatpush1.bf16.msra.mxu0 %v11103
        %11243 = vmatprep.subr.bf16.mxu0 %v11101
        %11244 = vmatpush1.bf16.msra.mxu0 %v11100
        %11245 = vmatprep.subr.bf16.mxu0 %v11098
        %11246 = vmatpush1.bf16.msra.mxu0 %v11097
        %11247 = vmatprep.subr.bf16.mxu0 %v11095
        %11248 = vmatpush1.bf16.msra.mxu0 %v11094
        %11249 = vmatprep.subr.bf16.mxu0 %v11092
        %11250 = vmatpush1.bf16.msra.mxu0 %v11091
        %11251 = vmatprep.subr.bf16.mxu0 %v11137
        %11252 = vmatpush2.bf16.msra.mxu0 %v11136
        %11253 = vmatprep.subr.bf16.mxu0 %v11134
        %11254 = vmatpush2.bf16.msra.mxu0 %v11133
        %11255 = vmatprep.subr.bf16.mxu0 %v11131
        %11256 = vmatpush2.bf16.msra.mxu0 %v11130
        %11257 = vmatprep.subr.bf16.mxu0 %v11128
        %11258 = vmatpush2.bf16.msra.mxu0 %v11127
        %11259 = vmatprep.subr.bf16.mxu0 %v11125
        %11260 = vmatpush2.bf16.msra.mxu0 %v11124
        %11261 = vmatprep.subr.bf16.mxu0 %v11122
        %11262 = vmatpush2.bf16.msra.mxu0 %v11121
        %11263 = vmatprep.subr.bf16.mxu0 %v11119
        %11264 = vmatpush2.bf16.msra.mxu0 %v11118
        %11265 = vmatprep.subr.bf16.mxu0 %v11116
        %11266 = vmatpush2.bf16.msra.mxu0 %v11115
        %11267 = vmatprep.mubr.bf16.mxu0 %v10756
        %11268 = vmatmul.mubr.bf16.gmra.mxu0 %v10755
        %v11269 = vpop.f32.mrf.mxu0
        %v11270 = vadd.f32 %v10583, %v11269
        %v11271 = vpop.f32.mrf.mxu0
        %v11272 = vadd.f32 %v10587, %v11271
        %v11273 = vpop.f32.mrf.mxu0
        %v11274 = vadd.f32 %v10583, %v11273
        %v11275 = vpop.f32.mrf.mxu0
        %v11276 = vadd.f32 %v10587, %v11275
        %11277 = vmatprep.mubr.bf16.mxu0 %v10759
        %11278 = vmatmul.mubr.bf16.gmra.mxu0 %v10758
        %v11279 = vpop.f32.mrf.mxu0
        %v11280 = vadd.f32 %v10583, %v11279
        %v11281 = vpop.f32.mrf.mxu0
        %v11282 = vadd.f32 %v10587, %v11281
        %v11283 = vpop.f32.mrf.mxu0
        %v11284 = vadd.f32 %v10583, %v11283
        %v11285 = vpop.f32.mrf.mxu0
        %v11286 = vadd.f32 %v10587, %v11285
        %11287 = vmatprep.mubr.bf16.mxu0 %v10762
        %11288 = vmatmul.mubr.bf16.gmra.mxu0 %v10761
        %v11289 = vpop.f32.mrf.mxu0
        %v11290 = vadd.f32 %v10583, %v11289
        %v11291 = vpop.f32.mrf.mxu0
        %v11292 = vadd.f32 %v10587, %v11291
        %v11293 = vpop.f32.mrf.mxu0
        %v11294 = vadd.f32 %v10583, %v11293
        %v11295 = vpop.f32.mrf.mxu0
        %v11296 = vadd.f32 %v10587, %v11295
        %11297 = vmatprep.mubr.bf16.mxu0 %v10765
        %11298 = vmatmul.mubr.bf16.gmra.mxu0 %v10764
        %v11299 = vpop.f32.mrf.mxu0
        %v11300 = vadd.f32 %v10583, %v11299
        %v11301 = vpop.f32.mrf.mxu0
        %v11302 = vadd.f32 %v10587, %v11301
        %v11303 = vpop.f32.mrf.mxu0
        %v11304 = vadd.f32 %v10583, %v11303
        %v11305 = vpop.f32.mrf.mxu0
        %v11306 = vadd.f32 %v10587, %v11305
        %11307 = vmatprep.mubr.bf16.mxu0 %v10768
        %11308 = vmatmul.mubr.bf16.gmra.mxu0 %v10767
        %v11309 = vpop.f32.mrf.mxu0
        %v11310 = vadd.f32 %v10583, %v11309
        %v11311 = vpop.f32.mrf.mxu0
        %v11312 = vadd.f32 %v10587, %v11311
        %v11313 = vpop.f32.mrf.mxu0
        %v11314 = vadd.f32 %v10583, %v11313
        %v11315 = vpop.f32.mrf.mxu0
        %v11316 = vadd.f32 %v10587, %v11315
        %11317 = vmatprep.mubr.bf16.mxu0 %v10771
        %11318 = vmatmul.mubr.bf16.gmra.mxu0 %v10770
        %v11319 = vpop.f32.mrf.mxu0
        %v11320 = vadd.f32 %v10583, %v11319
        %v11321 = vpop.f32.mrf.mxu0
        %v11322 = vadd.f32 %v10587, %v11321
        %v11323 = vpop.f32.mrf.mxu0
        %v11324 = vadd.f32 %v10583, %v11323
        %v11325 = vpop.f32.mrf.mxu0
        %v11326 = vadd.f32 %v10587, %v11325
        %11327 = vmatprep.mubr.bf16.mxu0 %v10774
        %11328 = vmatmul.mubr.bf16.gmra.mxu0 %v10773
        %v11329 = vpop.f32.mrf.mxu0
        %v11330 = vadd.f32 %v10583, %v11329
        %v11331 = vpop.f32.mrf.mxu0
        %v11332 = vadd.f32 %v10587, %v11331
        %v11333 = vpop.f32.mrf.mxu0
        %v11334 = vadd.f32 %v10583, %v11333
        %v11335 = vpop.f32.mrf.mxu0
        %v11336 = vadd.f32 %v10587, %v11335
        %11337 = vmatprep.mubr.bf16.mxu0 %v10777
        %11338 = vmatmul.mubr.bf16.gmra.mxu0 %v10776
        %v11339 = vpop.f32.mrf.mxu0
        %v11340 = vadd.f32 %v10583, %v11339
        %v11341 = vpop.f32.mrf.mxu0
        %v11342 = vadd.f32 %v10587, %v11341
        %v11343 = vpop.f32.mrf.mxu0
        %v11344 = vadd.f32 %v10583, %v11343
        %v11345 = vpop.f32.mrf.mxu0
        %v11346 = vadd.f32 %v10587, %v11345
        %11347 = vmatprep.mubr.bf16.mxu0 %v10780
        %11348 = vmatmul.mubr.bf16.gmra.mxu0 %v10779
        %v11349 = vpop.f32.mrf.mxu0
        %v11350 = vadd.f32 %v10583, %v11349
        %v11351 = vpop.f32.mrf.mxu0
        %v11352 = vadd.f32 %v10587, %v11351
        %v11353 = vpop.f32.mrf.mxu0
        %v11354 = vadd.f32 %v10583, %v11353
        %v11355 = vpop.f32.mrf.mxu0
        %v11356 = vadd.f32 %v10587, %v11355
        %11357 = vmatprep.mubr.bf16.mxu0 %v10783
        %11358 = vmatmul.mubr.bf16.gmra.mxu0 %v10782
        %v11359 = vpop.f32.mrf.mxu0
        %v11360 = vadd.f32 %v10583, %v11359
        %v11361 = vpop.f32.mrf.mxu0
        %v11362 = vadd.f32 %v10587, %v11361
        %v11363 = vpop.f32.mrf.mxu0
        %v11364 = vadd.f32 %v10583, %v11363
        %v11365 = vpop.f32.mrf.mxu0
        %v11366 = vadd.f32 %v10587, %v11365
        %11367 = vmatprep.mubr.bf16.mxu0 %v10786
        %11368 = vmatmul.mubr.bf16.gmra.mxu0 %v10785
        %v11369 = vpop.f32.mrf.mxu0
        %v11370 = vadd.f32 %v10583, %v11369
        %v11371 = vpop.f32.mrf.mxu0
        %v11372 = vadd.f32 %v10587, %v11371
        %v11373 = vpop.f32.mrf.mxu0
        %v11374 = vadd.f32 %v10583, %v11373
        %v11375 = vpop.f32.mrf.mxu0
        %v11376 = vadd.f32 %v10587, %v11375
        %11377 = vmatprep.mubr.bf16.mxu0 %v10789
        %11378 = vmatmul.mubr.bf16.gmra.mxu0 %v10788
        %v11379 = vpop.f32.mrf.mxu0
        %v11380 = vadd.f32 %v10583, %v11379
        %v11381 = vpop.f32.mrf.mxu0
        %v11382 = vadd.f32 %v10587, %v11381
        %v11383 = vpop.f32.mrf.mxu0
        %v11384 = vadd.f32 %v10583, %v11383
        %v11385 = vpop.f32.mrf.mxu0
        %v11386 = vadd.f32 %v10587, %v11385
        %11387 = vmatprep.mubr.bf16.mxu0 %v10792
        %11388 = vmatmul.mubr.bf16.gmra.mxu0 %v10791
        %v11389 = vpop.f32.mrf.mxu0
        %v11390 = vadd.f32 %v10583, %v11389
        %v11391 = vpop.f32.mrf.mxu0
        %v11392 = vadd.f32 %v10587, %v11391
        %v11393 = vpop.f32.mrf.mxu0
        %v11394 = vadd.f32 %v10583, %v11393
        %v11395 = vpop.f32.mrf.mxu0
        %v11396 = vadd.f32 %v10587, %v11395
        %11397 = vmatprep.mubr.bf16.mxu0 %v10795
        %11398 = vmatmul.mubr.bf16.gmra.mxu0 %v10794
        %v11399 = vpop.f32.mrf.mxu0
        %v11400 = vadd.f32 %v10583, %v11399
        %v11401 = vpop.f32.mrf.mxu0
        %v11402 = vadd.f32 %v10587, %v11401
        %v11403 = vpop.f32.mrf.mxu0
        %v11404 = vadd.f32 %v10583, %v11403
        %v11405 = vpop.f32.mrf.mxu0
        %v11406 = vadd.f32 %v10587, %v11405
        %11407 = vmatprep.mubr.bf16.mxu0 %v10798
        %11408 = vmatmul.mubr.bf16.gmra.mxu0 %v10797
        %v11409 = vpop.f32.mrf.mxu0
        %v11410 = vadd.f32 %v10583, %v11409
        %v11411 = vpop.f32.mrf.mxu0
        %v11412 = vadd.f32 %v10587, %v11411
        %v11413 = vpop.f32.mrf.mxu0
        %v11414 = vadd.f32 %v10583, %v11413
        %v11415 = vpop.f32.mrf.mxu0
        %v11416 = vadd.f32 %v10587, %v11415
        %11417 = vmatprep.mubr.bf16.mxu0 %v10801
        %11418 = vmatmul.mubr.bf16.gmra.mxu0 %v10800
        %v11419 = vpop.f32.mrf.mxu0
        %v11420 = vadd.f32 %v10583, %v11419
        %v11421 = vpop.f32.mrf.mxu0
        %v11422 = vadd.f32 %v10587, %v11421
        %v11423 = vpop.f32.mrf.mxu0
        %v11424 = vadd.f32 %v10583, %v11423
        %v11425 = vpop.f32.mrf.mxu0
        %v11426 = vadd.f32 %v10587, %v11425
        %11427 = vdwg.mxu0
        %11428 = vmatprep.subr.bf16.mxu0 %v11161
        %11429 = vmatpush1.bf16.msra.mxu0 %v11160
        %11430 = vmatprep.subr.bf16.mxu0 %v11158
        %11431 = vmatpush1.bf16.msra.mxu0 %v11157
        %11432 = vmatprep.subr.bf16.mxu0 %v11155
        %11433 = vmatpush1.bf16.msra.mxu0 %v11154
        %11434 = vmatprep.subr.bf16.mxu0 %v11152
        %11435 = vmatpush1.bf16.msra.mxu0 %v11151
        %11436 = vmatprep.subr.bf16.mxu0 %v11149
        %11437 = vmatpush1.bf16.msra.mxu0 %v11148
        %11438 = vmatprep.subr.bf16.mxu0 %v11146
        %11439 = vmatpush1.bf16.msra.mxu0 %v11145
        %11440 = vmatprep.subr.bf16.mxu0 %v11143
        %11441 = vmatpush1.bf16.msra.mxu0 %v11142
        %11442 = vmatprep.subr.bf16.mxu0 %v11140
        %11443 = vmatpush1.bf16.msra.mxu0 %v11139
        %11444 = vmatprep.subr.bf16.mxu0 0
        %11445 = vmatpush2.bf16.msra.mxu0 0
        %11446 = vmatprep.subr.bf16.mxu0 0
        %11447 = vmatpush2.bf16.msra.mxu0 0
        %11448 = vmatprep.subr.bf16.mxu0 0
        %11449 = vmatpush2.bf16.msra.mxu0 0
        %11450 = vmatprep.subr.bf16.mxu0 0
        %11451 = vmatpush2.bf16.msra.mxu0 0
        %11452 = vmatprep.subr.bf16.mxu0 0
        %11453 = vmatpush2.bf16.msra.mxu0 0
        %11454 = vmatprep.subr.bf16.mxu0 0
        %11455 = vmatpush2.bf16.msra.mxu0 0
        %11456 = vmatprep.subr.bf16.mxu0 0
        %11457 = vmatpush2.bf16.msra.mxu0 0
        %11458 = vmatprep.subr.bf16.mxu0 0
        %11459 = vmatpush2.bf16.msra.mxu0 0
        %11460 = vmatprep.mubr.bf16.mxu0 0
        %11461 = vmatmul.mubr.bf16.gmra.mxu0 %v10757
        %v11462 = vpop.f32.mrf.mxu0
        %v11463 = vadd.f32 %v11270, %v11462
        %v11464 = vpop.f32.mrf.mxu0
        %v11465 = vadd.f32 %v11272, %v11464
        %v11466 = vpop.f32.mrf.mxu0
        %v11467 = vadd.f32 %v11274, %v11466
        %v11468 = vpop.f32.mrf.mxu0
        %v11469 = vadd.f32 %v11276, %v11468
        %11470 = vmatprep.mubr.bf16.mxu0 0
        %11471 = vmatmul.mubr.bf16.gmra.mxu0 %v10760
        %v11472 = vpop.f32.mrf.mxu0
        %v11473 = vadd.f32 %v11280, %v11472
        %v11474 = vpop.f32.mrf.mxu0
        %v11475 = vadd.f32 %v11282, %v11474
        %v11476 = vpop.f32.mrf.mxu0
        %v11477 = vadd.f32 %v11284, %v11476
        %v11478 = vpop.f32.mrf.mxu0
        %v11479 = vadd.f32 %v11286, %v11478
        %11480 = vmatprep.mubr.bf16.mxu0 0
        %11481 = vmatmul.mubr.bf16.gmra.mxu0 %v10763
        %v11482 = vpop.f32.mrf.mxu0
        %v11483 = vadd.f32 %v11290, %v11482
        %v11484 = vpop.f32.mrf.mxu0
        %v11485 = vadd.f32 %v11292, %v11484
        %v11486 = vpop.f32.mrf.mxu0
        %v11487 = vadd.f32 %v11294, %v11486
        %v11488 = vpop.f32.mrf.mxu0
        %v11489 = vadd.f32 %v11296, %v11488
        %11490 = vmatprep.mubr.bf16.mxu0 0
        %11491 = vmatmul.mubr.bf16.gmra.mxu0 %v10766
        %v11492 = vpop.f32.mrf.mxu0
        %v11493 = vadd.f32 %v11300, %v11492
        %v11494 = vpop.f32.mrf.mxu0
        %v11495 = vadd.f32 %v11302, %v11494
        %v11496 = vpop.f32.mrf.mxu0
        %v11497 = vadd.f32 %v11304, %v11496
        %v11498 = vpop.f32.mrf.mxu0
        %v11499 = vadd.f32 %v11306, %v11498
        %11500 = vmatprep.mubr.bf16.mxu0 0
        %11501 = vmatmul.mubr.bf16.gmra.mxu0 %v10769
        %v11502 = vpop.f32.mrf.mxu0
        %v11503 = vadd.f32 %v11310, %v11502
        %v11504 = vpop.f32.mrf.mxu0
        %v11505 = vadd.f32 %v11312, %v11504
        %v11506 = vpop.f32.mrf.mxu0
        %v11507 = vadd.f32 %v11314, %v11506
        %v11508 = vpop.f32.mrf.mxu0
        %v11509 = vadd.f32 %v11316, %v11508
        %11510 = vmatprep.mubr.bf16.mxu0 0
        %11511 = vmatmul.mubr.bf16.gmra.mxu0 %v10772
        %v11512 = vpop.f32.mrf.mxu0
        %v11513 = vadd.f32 %v11320, %v11512
        %v11514 = vpop.f32.mrf.mxu0
        %v11515 = vadd.f32 %v11322, %v11514
        %v11516 = vpop.f32.mrf.mxu0
        %v11517 = vadd.f32 %v11324, %v11516
        %v11518 = vpop.f32.mrf.mxu0
        %v11519 = vadd.f32 %v11326, %v11518
        %11520 = vmatprep.mubr.bf16.mxu0 0
        %11521 = vmatmul.mubr.bf16.gmra.mxu0 %v10775
        %v11522 = vpop.f32.mrf.mxu0
        %v11523 = vadd.f32 %v11330, %v11522
        %v11524 = vpop.f32.mrf.mxu0
        %v11525 = vadd.f32 %v11332, %v11524
        %v11526 = vpop.f32.mrf.mxu0
        %v11527 = vadd.f32 %v11334, %v11526
        %v11528 = vpop.f32.mrf.mxu0
        %v11529 = vadd.f32 %v11336, %v11528
        %11530 = vmatprep.mubr.bf16.mxu0 0
        %11531 = vmatmul.mubr.bf16.gmra.mxu0 %v10778
        %v11532 = vpop.f32.mrf.mxu0
        %v11533 = vadd.f32 %v11340, %v11532
        %v11534 = vpop.f32.mrf.mxu0
        %v11535 = vadd.f32 %v11342, %v11534
        %v11536 = vpop.f32.mrf.mxu0
        %v11537 = vadd.f32 %v11344, %v11536
        %v11538 = vpop.f32.mrf.mxu0
        %v11539 = vadd.f32 %v11346, %v11538
        %11540 = vmatprep.mubr.bf16.mxu0 0
        %11541 = vmatmul.mubr.bf16.gmra.mxu0 %v10781
        %v11542 = vpop.f32.mrf.mxu0
        %v11543 = vadd.f32 %v11350, %v11542
        %v11544 = vpop.f32.mrf.mxu0
        %v11545 = vadd.f32 %v11352, %v11544
        %v11546 = vpop.f32.mrf.mxu0
        %v11547 = vadd.f32 %v11354, %v11546
        %v11548 = vpop.f32.mrf.mxu0
        %v11549 = vadd.f32 %v11356, %v11548
        %11550 = vmatprep.mubr.bf16.mxu0 0
        %11551 = vmatmul.mubr.bf16.gmra.mxu0 %v10784
        %v11552 = vpop.f32.mrf.mxu0
        %v11553 = vadd.f32 %v11360, %v11552
        %v11554 = vpop.f32.mrf.mxu0
        %v11555 = vadd.f32 %v11362, %v11554
        %v11556 = vpop.f32.mrf.mxu0
        %v11557 = vadd.f32 %v11364, %v11556
        %v11558 = vpop.f32.mrf.mxu0
        %v11559 = vadd.f32 %v11366, %v11558
        %11560 = vmatprep.mubr.bf16.mxu0 0
        %11561 = vmatmul.mubr.bf16.gmra.mxu0 %v10787
        %v11562 = vpop.f32.mrf.mxu0
        %v11563 = vadd.f32 %v11370, %v11562
        %v11564 = vpop.f32.mrf.mxu0
        %v11565 = vadd.f32 %v11372, %v11564
        %v11566 = vpop.f32.mrf.mxu0
        %v11567 = vadd.f32 %v11374, %v11566
        %v11568 = vpop.f32.mrf.mxu0
        %v11569 = vadd.f32 %v11376, %v11568
        %11570 = vmatprep.mubr.bf16.mxu0 0
        %11571 = vmatmul.mubr.bf16.gmra.mxu0 %v10790
        %v11572 = vpop.f32.mrf.mxu0
        %v11573 = vadd.f32 %v11380, %v11572
        %v11574 = vpop.f32.mrf.mxu0
        %v11575 = vadd.f32 %v11382, %v11574
        %v11576 = vpop.f32.mrf.mxu0
        %v11577 = vadd.f32 %v11384, %v11576
        %v11578 = vpop.f32.mrf.mxu0
        %v11579 = vadd.f32 %v11386, %v11578
        %11580 = vmatprep.mubr.bf16.mxu0 0
        %11581 = vmatmul.mubr.bf16.gmra.mxu0 %v10793
        %v11582 = vpop.f32.mrf.mxu0
        %v11583 = vadd.f32 %v11390, %v11582
        %v11584 = vpop.f32.mrf.mxu0
        %v11585 = vadd.f32 %v11392, %v11584
        %v11586 = vpop.f32.mrf.mxu0
        %v11587 = vadd.f32 %v11394, %v11586
        %v11588 = vpop.f32.mrf.mxu0
        %v11589 = vadd.f32 %v11396, %v11588
        %11590 = vmatprep.mubr.bf16.mxu0 0
        %11591 = vmatmul.mubr.bf16.gmra.mxu0 %v10796
        %v11592 = vpop.f32.mrf.mxu0
        %v11593 = vadd.f32 %v11400, %v11592
        %v11594 = vpop.f32.mrf.mxu0
        %v11595 = vadd.f32 %v11402, %v11594
        %v11596 = vpop.f32.mrf.mxu0
        %v11597 = vadd.f32 %v11404, %v11596
        %v11598 = vpop.f32.mrf.mxu0
        %v11599 = vadd.f32 %v11406, %v11598
        %11600 = vmatprep.mubr.bf16.mxu0 0
        %11601 = vmatmul.mubr.bf16.gmra.mxu0 %v10799
        %v11602 = vpop.f32.mrf.mxu0
        %v11603 = vadd.f32 %v11410, %v11602
        %v11604 = vpop.f32.mrf.mxu0
        %v11605 = vadd.f32 %v11412, %v11604
        %v11606 = vpop.f32.mrf.mxu0
        %v11607 = vadd.f32 %v11414, %v11606
        %v11608 = vpop.f32.mrf.mxu0
        %v11609 = vadd.f32 %v11416, %v11608
        %11610 = vmatprep.mubr.bf16.mxu0 0
        %11611 = vmatmul.mubr.bf16.gmra.mxu0 %v10802
        %v11612 = vpop.f32.mrf.mxu0
        %v11613 = vadd.f32 %v11420, %v11612
        %v11614 = vpop.f32.mrf.mxu0
        %v11615 = vadd.f32 %v11422, %v11614
        %v11616 = vpop.f32.mrf.mxu0
        %v11617 = vadd.f32 %v11424, %v11616
        %v11618 = vpop.f32.mrf.mxu0
        %v11619 = vadd.f32 %v11426, %v11618
        %11620 = vdwg.mxu0
        %11621 = vmatprep.subr.bf16.mxu0 0
        %11622 = vmatpush1.bf16.msra.mxu0 %v11114
        %11623 = vmatprep.subr.bf16.mxu0 0
        %11624 = vmatpush1.bf16.msra.mxu0 %v11111
        %11625 = vmatprep.subr.bf16.mxu0 0
        %11626 = vmatpush1.bf16.msra.mxu0 %v11108
        %11627 = vmatprep.subr.bf16.mxu0 0
        %11628 = vmatpush1.bf16.msra.mxu0 %v11105
        %11629 = vmatprep.subr.bf16.mxu0 0
        %11630 = vmatpush1.bf16.msra.mxu0 %v11102
        %11631 = vmatprep.subr.bf16.mxu0 0
        %11632 = vmatpush1.bf16.msra.mxu0 %v11099
        %11633 = vmatprep.subr.bf16.mxu0 0
        %11634 = vmatpush1.bf16.msra.mxu0 %v11096
        %11635 = vmatprep.subr.bf16.mxu0 0
        %11636 = vmatpush1.bf16.msra.mxu0 %v11093
        %11637 = vmatprep.subr.bf16.mxu0 0
        %11638 = vmatpush2.bf16.msra.mxu0 %v11138
        %11639 = vmatprep.subr.bf16.mxu0 0
        %11640 = vmatpush2.bf16.msra.mxu0 %v11135
        %11641 = vmatprep.subr.bf16.mxu0 0
        %11642 = vmatpush2.bf16.msra.mxu0 %v11132
        %11643 = vmatprep.subr.bf16.mxu0 0
        %11644 = vmatpush2.bf16.msra.mxu0 %v11129
        %11645 = vmatprep.subr.bf16.mxu0 0
        %11646 = vmatpush2.bf16.msra.mxu0 %v11126
        %11647 = vmatprep.subr.bf16.mxu0 0
        %11648 = vmatpush2.bf16.msra.mxu0 %v11123
        %11649 = vmatprep.subr.bf16.mxu0 0
        %11650 = vmatpush2.bf16.msra.mxu0 %v11120
        %11651 = vmatprep.subr.bf16.mxu0 0
        %11652 = vmatpush2.bf16.msra.mxu0 %v11117
        %11653 = vmatprep.mubr.bf16.mxu0 %v10756
        %11654 = vmatmul.mubr.bf16.gmra.mxu0 %v10755
        %v11655 = vpop.f32.mrf.mxu0
        %v11656 = vadd.f32 %v10591, %v11655
        %v11657 = vpop.f32.mrf.mxu0
        %v11658 = vpop.f32.mrf.mxu0
        %v11659 = vadd.f32 %v10591, %v11658
        %v11660 = vpop.f32.mrf.mxu0
        %11661 = vmatprep.mubr.bf16.mxu0 %v10759
        %11662 = vmatmul.mubr.bf16.gmra.mxu0 %v10758
        %v11663 = vpop.f32.mrf.mxu0
        %v11664 = vadd.f32 %v10591, %v11663
        %v11665 = vpop.f32.mrf.mxu0
        %v11666 = vpop.f32.mrf.mxu0
        %v11667 = vadd.f32 %v10591, %v11666
        %v11668 = vpop.f32.mrf.mxu0
        %11669 = vmatprep.mubr.bf16.mxu0 %v10762
        %11670 = vmatmul.mubr.bf16.gmra.mxu0 %v10761
        %v11671 = vpop.f32.mrf.mxu0
        %v11672 = vadd.f32 %v10591, %v11671
        %v11673 = vpop.f32.mrf.mxu0
        %v11674 = vpop.f32.mrf.mxu0
        %v11675 = vadd.f32 %v10591, %v11674
        %v11676 = vpop.f32.mrf.mxu0
        %11677 = vmatprep.mubr.bf16.mxu0 %v10765
        %11678 = vmatmul.mubr.bf16.gmra.mxu0 %v10764
        %v11679 = vpop.f32.mrf.mxu0
        %v11680 = vadd.f32 %v10591, %v11679
        %v11681 = vpop.f32.mrf.mxu0
        %v11682 = vpop.f32.mrf.mxu0
        %v11683 = vadd.f32 %v10591, %v11682
        %v11684 = vpop.f32.mrf.mxu0
        %11685 = vmatprep.mubr.bf16.mxu0 %v10768
        %11686 = vmatmul.mubr.bf16.gmra.mxu0 %v10767
        %v11687 = vpop.f32.mrf.mxu0
        %v11688 = vadd.f32 %v10591, %v11687
        %v11689 = vpop.f32.mrf.mxu0
        %v11690 = vpop.f32.mrf.mxu0
        %v11691 = vadd.f32 %v10591, %v11690
        %v11692 = vpop.f32.mrf.mxu0
        %11693 = vmatprep.mubr.bf16.mxu0 %v10771
        %11694 = vmatmul.mubr.bf16.gmra.mxu0 %v10770
        %v11695 = vpop.f32.mrf.mxu0
        %v11696 = vadd.f32 %v10591, %v11695
        %v11697 = vpop.f32.mrf.mxu0
        %v11698 = vpop.f32.mrf.mxu0
        %v11699 = vadd.f32 %v10591, %v11698
        %v11700 = vpop.f32.mrf.mxu0
        %11701 = vmatprep.mubr.bf16.mxu0 %v10774
        %11702 = vmatmul.mubr.bf16.gmra.mxu0 %v10773
        %v11703 = vpop.f32.mrf.mxu0
        %v11704 = vadd.f32 %v10591, %v11703
        %v11705 = vpop.f32.mrf.mxu0
        %v11706 = vpop.f32.mrf.mxu0
        %v11707 = vadd.f32 %v10591, %v11706
        %v11708 = vpop.f32.mrf.mxu0
        %11709 = vmatprep.mubr.bf16.mxu0 %v10777
        %11710 = vmatmul.mubr.bf16.gmra.mxu0 %v10776
        %v11711 = vpop.f32.mrf.mxu0
        %v11712 = vadd.f32 %v10591, %v11711
        %v11713 = vpop.f32.mrf.mxu0
        %v11714 = vpop.f32.mrf.mxu0
        %v11715 = vadd.f32 %v10591, %v11714
        %v11716 = vpop.f32.mrf.mxu0
        %11717 = vmatprep.mubr.bf16.mxu0 %v10780
        %11718 = vmatmul.mubr.bf16.gmra.mxu0 %v10779
        %v11719 = vpop.f32.mrf.mxu0
        %v11720 = vadd.f32 %v10591, %v11719
        %v11721 = vpop.f32.mrf.mxu0
        %v11722 = vpop.f32.mrf.mxu0
        %v11723 = vadd.f32 %v10591, %v11722
        %v11724 = vpop.f32.mrf.mxu0
        %11725 = vmatprep.mubr.bf16.mxu0 %v10783
        %11726 = vmatmul.mubr.bf16.gmra.mxu0 %v10782
        %v11727 = vpop.f32.mrf.mxu0
        %v11728 = vadd.f32 %v10591, %v11727
        %v11729 = vpop.f32.mrf.mxu0
        %v11730 = vpop.f32.mrf.mxu0
        %v11731 = vadd.f32 %v10591, %v11730
        %v11732 = vpop.f32.mrf.mxu0
        %11733 = vmatprep.mubr.bf16.mxu0 %v10786
        %11734 = vmatmul.mubr.bf16.gmra.mxu0 %v10785
        %v11735 = vpop.f32.mrf.mxu0
        %v11736 = vadd.f32 %v10591, %v11735
        %v11737 = vpop.f32.mrf.mxu0
        %v11738 = vpop.f32.mrf.mxu0
        %v11739 = vadd.f32 %v10591, %v11738
        %v11740 = vpop.f32.mrf.mxu0
        %11741 = vmatprep.mubr.bf16.mxu0 %v10789
        %11742 = vmatmul.mubr.bf16.gmra.mxu0 %v10788
        %v11743 = vpop.f32.mrf.mxu0
        %v11744 = vadd.f32 %v10591, %v11743
        %v11745 = vpop.f32.mrf.mxu0
        %v11746 = vpop.f32.mrf.mxu0
        %v11747 = vadd.f32 %v10591, %v11746
        %v11748 = vpop.f32.mrf.mxu0
        %11749 = vmatprep.mubr.bf16.mxu0 %v10792
        %11750 = vmatmul.mubr.bf16.gmra.mxu0 %v10791
        %v11751 = vpop.f32.mrf.mxu0
        %v11752 = vadd.f32 %v10591, %v11751
        %v11753 = vpop.f32.mrf.mxu0
        %v11754 = vpop.f32.mrf.mxu0
        %v11755 = vadd.f32 %v10591, %v11754
        %v11756 = vpop.f32.mrf.mxu0
        %11757 = vmatprep.mubr.bf16.mxu0 %v10795
        %11758 = vmatmul.mubr.bf16.gmra.mxu0 %v10794
        %v11759 = vpop.f32.mrf.mxu0
        %v11760 = vadd.f32 %v10591, %v11759
        %v11761 = vpop.f32.mrf.mxu0
        %v11762 = vpop.f32.mrf.mxu0
        %v11763 = vadd.f32 %v10591, %v11762
        %v11764 = vpop.f32.mrf.mxu0
        %11765 = vmatprep.mubr.bf16.mxu0 %v10798
        %11766 = vmatmul.mubr.bf16.gmra.mxu0 %v10797
        %v11767 = vpop.f32.mrf.mxu0
        %v11768 = vadd.f32 %v10591, %v11767
        %v11769 = vpop.f32.mrf.mxu0
        %v11770 = vpop.f32.mrf.mxu0
        %v11771 = vadd.f32 %v10591, %v11770
        %v11772 = vpop.f32.mrf.mxu0
        %11773 = vmatprep.mubr.bf16.mxu0 %v10801
        %11774 = vmatmul.mubr.bf16.gmra.mxu0 %v10800
        %v11775 = vpop.f32.mrf.mxu0
        %v11776 = vadd.f32 %v10591, %v11775
        %v11777 = vpop.f32.mrf.mxu0
        %v11778 = vpop.f32.mrf.mxu0
        %v11779 = vadd.f32 %v10591, %v11778
        %v11780 = vpop.f32.mrf.mxu0
        %11781 = vdwg.mxu0
        %11782 = vmatprep.subr.bf16.mxu0 0
        %11783 = vmatpush1.bf16.msra.mxu0 %v11162
        %11784 = vmatprep.subr.bf16.mxu0 0
        %11785 = vmatpush1.bf16.msra.mxu0 %v11159
        %11786 = vmatprep.subr.bf16.mxu0 0
        %11787 = vmatpush1.bf16.msra.mxu0 %v11156
        %11788 = vmatprep.subr.bf16.mxu0 0
        %11789 = vmatpush1.bf16.msra.mxu0 %v11153
        %11790 = vmatprep.subr.bf16.mxu0 0
        %11791 = vmatpush1.bf16.msra.mxu0 %v11150
        %11792 = vmatprep.subr.bf16.mxu0 0
        %11793 = vmatpush1.bf16.msra.mxu0 %v11147
        %11794 = vmatprep.subr.bf16.mxu0 0
        %11795 = vmatpush1.bf16.msra.mxu0 %v11144
        %11796 = vmatprep.subr.bf16.mxu0 0
        %11797 = vmatpush1.bf16.msra.mxu0 %v11141
        %11798 = vmatprep.subr.bf16.mxu0 0
        %11799 = vmatpush2.bf16.msra.mxu0 0
        %11800 = vmatprep.subr.bf16.mxu0 0
        %11801 = vmatpush2.bf16.msra.mxu0 0
        %11802 = vmatprep.subr.bf16.mxu0 0
        %11803 = vmatpush2.bf16.msra.mxu0 0
        %11804 = vmatprep.subr.bf16.mxu0 0
        %11805 = vmatpush2.bf16.msra.mxu0 0
        %11806 = vmatprep.subr.bf16.mxu0 0
        %11807 = vmatpush2.bf16.msra.mxu0 0
        %11808 = vmatprep.subr.bf16.mxu0 0
        %11809 = vmatpush2.bf16.msra.mxu0 0
        %11810 = vmatprep.subr.bf16.mxu0 0
        %11811 = vmatpush2.bf16.msra.mxu0 0
        %11812 = vmatprep.subr.bf16.mxu0 0
        %11813 = vmatpush2.bf16.msra.mxu0 0
        %11814 = vmatprep.mubr.bf16.mxu0 0
        %11815 = vmatmul.mubr.bf16.gmra.mxu0 %v10757
        %v11816 = vpop.f32.mrf.mxu0
        %v11817 = vadd.f32 %v11656, %v11816
        %v11818 = vpop.f32.mrf.mxu0
        %v11819 = vpop.f32.mrf.mxu0
        %v11820 = vadd.f32 %v11659, %v11819
        %v11821 = vpop.f32.mrf.mxu0
        %11822 = vmatprep.mubr.bf16.mxu0 0
        %11823 = vmatmul.mubr.bf16.gmra.mxu0 %v10760
        %v11824 = vpop.f32.mrf.mxu0
        %v11825 = vadd.f32 %v11664, %v11824
        %v11826 = vpop.f32.mrf.mxu0
        %v11827 = vpop.f32.mrf.mxu0
        %v11828 = vadd.f32 %v11667, %v11827
        %v11829 = vpop.f32.mrf.mxu0
        %11830 = vmatprep.mubr.bf16.mxu0 0
        %11831 = vmatmul.mubr.bf16.gmra.mxu0 %v10763
        %v11832 = vpop.f32.mrf.mxu0
        %v11833 = vadd.f32 %v11672, %v11832
        %v11834 = vpop.f32.mrf.mxu0
        %v11835 = vpop.f32.mrf.mxu0
        %v11836 = vadd.f32 %v11675, %v11835
        %v11837 = vpop.f32.mrf.mxu0
        %11838 = vmatprep.mubr.bf16.mxu0 0
        %11839 = vmatmul.mubr.bf16.gmra.mxu0 %v10766
        %v11840 = vpop.f32.mrf.mxu0
        %v11841 = vadd.f32 %v11680, %v11840
        %v11842 = vpop.f32.mrf.mxu0
        %v11843 = vpop.f32.mrf.mxu0
        %v11844 = vadd.f32 %v11683, %v11843
        %v11845 = vpop.f32.mrf.mxu0
        %11846 = vmatprep.mubr.bf16.mxu0 0
        %11847 = vmatmul.mubr.bf16.gmra.mxu0 %v10769
        %v11848 = vpop.f32.mrf.mxu0
        %v11849 = vadd.f32 %v11688, %v11848
        %v11850 = vpop.f32.mrf.mxu0
        %v11851 = vpop.f32.mrf.mxu0
        %v11852 = vadd.f32 %v11691, %v11851
        %v11853 = vpop.f32.mrf.mxu0
        %11854 = vmatprep.mubr.bf16.mxu0 0
        %11855 = vmatmul.mubr.bf16.gmra.mxu0 %v10772
        %v11856 = vpop.f32.mrf.mxu0
        %v11857 = vadd.f32 %v11696, %v11856
        %v11858 = vpop.f32.mrf.mxu0
        %v11859 = vpop.f32.mrf.mxu0
        %v11860 = vadd.f32 %v11699, %v11859
        %v11861 = vpop.f32.mrf.mxu0
        %11862 = vmatprep.mubr.bf16.mxu0 0
        %11863 = vmatmul.mubr.bf16.gmra.mxu0 %v10775
        %v11864 = vpop.f32.mrf.mxu0
        %v11865 = vadd.f32 %v11704, %v11864
        %v11866 = vpop.f32.mrf.mxu0
        %v11867 = vpop.f32.mrf.mxu0
        %v11868 = vadd.f32 %v11707, %v11867
        %v11869 = vpop.f32.mrf.mxu0
        %11870 = vmatprep.mubr.bf16.mxu0 0
        %11871 = vmatmul.mubr.bf16.gmra.mxu0 %v10778
        %v11872 = vpop.f32.mrf.mxu0
        %v11873 = vadd.f32 %v11712, %v11872
        %v11874 = vpop.f32.mrf.mxu0
        %v11875 = vpop.f32.mrf.mxu0
        %v11876 = vadd.f32 %v11715, %v11875
        %v11877 = vpop.f32.mrf.mxu0
        %11878 = vmatprep.mubr.bf16.mxu0 0
        %11879 = vmatmul.mubr.bf16.gmra.mxu0 %v10781
        %v11880 = vpop.f32.mrf.mxu0
        %v11881 = vadd.f32 %v11720, %v11880
        %v11882 = vpop.f32.mrf.mxu0
        %v11883 = vpop.f32.mrf.mxu0
        %v11884 = vadd.f32 %v11723, %v11883
        %v11885 = vpop.f32.mrf.mxu0
        %11886 = vmatprep.mubr.bf16.mxu0 0
        %11887 = vmatmul.mubr.bf16.gmra.mxu0 %v10784
        %v11888 = vpop.f32.mrf.mxu0
        %v11889 = vadd.f32 %v11728, %v11888
        %v11890 = vpop.f32.mrf.mxu0
        %v11891 = vpop.f32.mrf.mxu0
        %v11892 = vadd.f32 %v11731, %v11891
        %v11893 = vpop.f32.mrf.mxu0
        %11894 = vmatprep.mubr.bf16.mxu0 0
        %11895 = vmatmul.mubr.bf16.gmra.mxu0 %v10787
        %v11896 = vpop.f32.mrf.mxu0
        %v11897 = vadd.f32 %v11736, %v11896
        %v11898 = vpop.f32.mrf.mxu0
        %v11899 = vpop.f32.mrf.mxu0
        %v11900 = vadd.f32 %v11739, %v11899
        %v11901 = vpop.f32.mrf.mxu0
        %11902 = vmatprep.mubr.bf16.mxu0 0
        %11903 = vmatmul.mubr.bf16.gmra.mxu0 %v10790
        %v11904 = vpop.f32.mrf.mxu0
        %v11905 = vadd.f32 %v11744, %v11904
        %v11906 = vpop.f32.mrf.mxu0
        %v11907 = vpop.f32.mrf.mxu0
        %v11908 = vadd.f32 %v11747, %v11907
        %v11909 = vpop.f32.mrf.mxu0
        %11910 = vmatprep.mubr.bf16.mxu0 0
        %11911 = vmatmul.mubr.bf16.gmra.mxu0 %v10793
        %v11912 = vpop.f32.mrf.mxu0
        %v11913 = vadd.f32 %v11752, %v11912
        %v11914 = vpop.f32.mrf.mxu0
        %v11915 = vpop.f32.mrf.mxu0
        %v11916 = vadd.f32 %v11755, %v11915
        %v11917 = vpop.f32.mrf.mxu0
        %11918 = vmatprep.mubr.bf16.mxu0 0
        %11919 = vmatmul.mubr.bf16.gmra.mxu0 %v10796
        %v11920 = vpop.f32.mrf.mxu0
        %v11921 = vadd.f32 %v11760, %v11920
        %v11922 = vpop.f32.mrf.mxu0
        %v11923 = vpop.f32.mrf.mxu0
        %v11924 = vadd.f32 %v11763, %v11923
        %v11925 = vpop.f32.mrf.mxu0
        %11926 = vmatprep.mubr.bf16.mxu0 0
        %11927 = vmatmul.mubr.bf16.gmra.mxu0 %v10799
        %v11928 = vpop.f32.mrf.mxu0
        %v11929 = vadd.f32 %v11768, %v11928
        %v11930 = vpop.f32.mrf.mxu0
        %v11931 = vpop.f32.mrf.mxu0
        %v11932 = vadd.f32 %v11771, %v11931
        %v11933 = vpop.f32.mrf.mxu0
        %11934 = vmatprep.mubr.bf16.mxu0 0
        %11935 = vmatmul.mubr.bf16.gmra.mxu0 %v10802
        %v11936 = vpop.f32.mrf.mxu0
        %v11937 = vadd.f32 %v11776, %v11936
        %v11938 = vpop.f32.mrf.mxu0
        %v11939 = vpop.f32.mrf.mxu0
        %v11940 = vadd.f32 %v11779, %v11939
        %v11941 = vpop.f32.mrf.mxu0
        %11942 = vdwg.mxu0
        %11943 = vst [vmem:[%s245] sm:$0xff] %v11463
        %11944 = vst [vmem:[%s245 + $0x8] sm:$0xff] %v11465
        %11945 = vst [vmem:[%s245 + $0x10] sm:$0xff] %v11817
        %11946 = vst [vmem:[%s245 + $0x18] sm:$0xff] %v11467
        %11947 = vst [vmem:[%s245 + $0x20] sm:$0xff] %v11469
        %11948 = vst [vmem:[%s245 + $0x28] sm:$0xff] %v11820
        %11949 = vst [vmem:[%s245 + $0x30] sm:$0xff] %v11473
        %11950 = vst [vmem:[%s245 + $0x38] sm:$0xff] %v11475
        %11951 = vst [vmem:[%s245 + $0x40] sm:$0xff] %v11825
        %11952 = vst [vmem:[%s245 + $0x48] sm:$0xff] %v11477
        %11953 = vst [vmem:[%s245 + $0x50] sm:$0xff] %v11479
        %11954 = vst [vmem:[%s245 + $0x58] sm:$0xff] %v11828
        %11955 = vst [vmem:[%s245 + $0x60] sm:$0xff] %v11483
        %11956 = vst [vmem:[%s245 + $0x68] sm:$0xff] %v11485
        %11957 = vst [vmem:[%s245 + $0x70] sm:$0xff] %v11833
        %11958 = vst [vmem:[%s245 + $0x78] sm:$0xff] %v11487
        %11959 = vst [vmem:[%s245 + $0x80] sm:$0xff] %v11489
        %11960 = vst [vmem:[%s245 + $0x88] sm:$0xff] %v11836
        %11961 = vst [vmem:[%s245 + $0x90] sm:$0xff] %v11493
        %11962 = vst [vmem:[%s245 + $0x98] sm:$0xff] %v11495
        %11963 = vst [vmem:[%s245 + $0xa0] sm:$0xff] %v11841
        %11964 = vst [vmem:[%s245 + $0xa8] sm:$0xff] %v11497
        %11965 = vst [vmem:[%s245 + $0xb0] sm:$0xff] %v11499
        %11966 = vst [vmem:[%s245 + $0xb8] sm:$0xff] %v11844
        %11967 = vst [vmem:[%s245 + $0xc0] sm:$0xff] %v11503
        %11968 = vst [vmem:[%s245 + $0xc8] sm:$0xff] %v11505
        %11969 = vst [vmem:[%s245 + $0xd0] sm:$0xff] %v11849
        %11970 = vst [vmem:[%s245 + $0xd8] sm:$0xff] %v11507
        %11971 = vst [vmem:[%s245 + $0xe0] sm:$0xff] %v11509
        %11972 = vst [vmem:[%s245 + $0xe8] sm:$0xff] %v11852
        %11973 = vst [vmem:[%s245 + $0xf0] sm:$0xff] %v11513
        %11974 = vst [vmem:[%s245 + $0xf8] sm:$0xff] %v11515
        %11975 = vst [vmem:[%s245 + $0x100] sm:$0xff] %v11857
        %11976 = vst [vmem:[%s245 + $0x108] sm:$0xff] %v11517
        %11977 = vst [vmem:[%s245 + $0x110] sm:$0xff] %v11519
        %11978 = vst [vmem:[%s245 + $0x118] sm:$0xff] %v11860
        %11979 = vst [vmem:[%s245 + $0x120] sm:$0xff] %v11523
        %11980 = vst [vmem:[%s245 + $0x128] sm:$0xff] %v11525
        %11981 = vst [vmem:[%s245 + $0x130] sm:$0xff] %v11865
        %11982 = vst [vmem:[%s245 + $0x138] sm:$0xff] %v11527
        %11983 = vst [vmem:[%s245 + $0x140] sm:$0xff] %v11529
        %11984 = vst [vmem:[%s245 + $0x148] sm:$0xff] %v11868
        %11985 = vst [vmem:[%s245 + $0x150] sm:$0xff] %v11533
        %11986 = vst [vmem:[%s245 + $0x158] sm:$0xff] %v11535
        %11987 = vst [vmem:[%s245 + $0x160] sm:$0xff] %v11873
        %11988 = vst [vmem:[%s245 + $0x168] sm:$0xff] %v11537
        %11989 = vst [vmem:[%s245 + $0x170] sm:$0xff] %v11539
        %11990 = vst [vmem:[%s245 + $0x178] sm:$0xff] %v11876
        %11991 = vst [vmem:[%s245 + $0x180] sm:$0xff] %v11543
        %11992 = vst [vmem:[%s245 + $0x188] sm:$0xff] %v11545
        %11993 = vst [vmem:[%s245 + $0x190] sm:$0xff] %v11881
        %11994 = vst [vmem:[%s245 + $0x198] sm:$0xff] %v11547
        %11995 = vst [vmem:[%s245 + $0x1a0] sm:$0xff] %v11549
        %11996 = vst [vmem:[%s245 + $0x1a8] sm:$0xff] %v11884
        %11997 = vst [vmem:[%s245 + $0x1b0] sm:$0xff] %v11553
        %11998 = vst [vmem:[%s245 + $0x1b8] sm:$0xff] %v11555
        %11999 = vst [vmem:[%s245 + $0x1c0] sm:$0xff] %v11889
        %12000 = vst [vmem:[%s245 + $0x1c8] sm:$0xff] %v11557
        %12001 = vst [vmem:[%s245 + $0x1d0] sm:$0xff] %v11559
        %12002 = vst [vmem:[%s245 + $0x1d8] sm:$0xff] %v11892
        %12003 = vst [vmem:[%s245 + $0x1e0] sm:$0xff] %v11563
        %12004 = vst [vmem:[%s245 + $0x1e8] sm:$0xff] %v11565
        %12005 = vst [vmem:[%s245 + $0x1f0] sm:$0xff] %v11897
        %12006 = vst [vmem:[%s245 + $0x1f8] sm:$0xff] %v11567
        %12007 = vst [vmem:[%s245 + $0x200] sm:$0xff] %v11569
        %12008 = vst [vmem:[%s245 + $0x208] sm:$0xff] %v11900
        %12009 = vst [vmem:[%s245 + $0x210] sm:$0xff] %v11573
        %12010 = vst [vmem:[%s245 + $0x218] sm:$0xff] %v11575
        %12011 = vst [vmem:[%s245 + $0x220] sm:$0xff] %v11905
        %12012 = vst [vmem:[%s245 + $0x228] sm:$0xff] %v11577
        %12013 = vst [vmem:[%s245 + $0x230] sm:$0xff] %v11579
        %12014 = vst [vmem:[%s245 + $0x238] sm:$0xff] %v11908
        %12015 = vst [vmem:[%s245 + $0x240] sm:$0xff] %v11583
        %12016 = vst [vmem:[%s245 + $0x248] sm:$0xff] %v11585
        %12017 = vst [vmem:[%s245 + $0x250] sm:$0xff] %v11913
        %12018 = vst [vmem:[%s245 + $0x258] sm:$0xff] %v11587
        %12019 = vst [vmem:[%s245 + $0x260] sm:$0xff] %v11589
        %12020 = vst [vmem:[%s245 + $0x268] sm:$0xff] %v11916
        %12021 = vst [vmem:[%s245 + $0x270] sm:$0xff] %v11593
        %12022 = vst [vmem:[%s245 + $0x278] sm:$0xff] %v11595
        %12023 = vst [vmem:[%s245 + $0x280] sm:$0xff] %v11921
        %12024 = vst [vmem:[%s245 + $0x288] sm:$0xff] %v11597
        %12025 = vst [vmem:[%s245 + $0x290] sm:$0xff] %v11599
        %12026 = vst [vmem:[%s245 + $0x298] sm:$0xff] %v11924
        %12027 = vst [vmem:[%s245 + $0x2a0] sm:$0xff] %v11603
        %12028 = vst [vmem:[%s245 + $0x2a8] sm:$0xff] %v11605
        %12029 = vst [vmem:[%s245 + $0x2b0] sm:$0xff] %v11929
        %12030 = vst [vmem:[%s245 + $0x2b8] sm:$0xff] %v11607
        %12031 = vst [vmem:[%s245 + $0x2c0] sm:$0xff] %v11609
        %12032 = vst [vmem:[%s245 + $0x2c8] sm:$0xff] %v11932
        %12033 = vst [vmem:[%s245 + $0x2d0] sm:$0xff] %v11613
        %12034 = vst [vmem:[%s245 + $0x2d8] sm:$0xff] %v11615
        %12035 = vst [vmem:[%s245 + $0x2e0] sm:$0xff] %v11937
        %12036 = vst [vmem:[%s245 + $0x2e8] sm:$0xff] %v11617
        %12037 = vst [vmem:[%s245 + $0x2f0] sm:$0xff] %v11619
        %12038 = vst [vmem:[%s245 + $0x2f8] sm:$0xff] %v11940
        %s12039 = sand.u32 %s119, 1
        %s12040 = scalar_lea.sflag [#allocation5], %s12039
        %s12041 = sand.u32 %s119, 1
        %s12042 = smul.addr %s12041, 768
        %s12043 = scalar_lea.vmem [#allocation9], %s12042
        // Predicated region
        $region49: #{tpu_custom_call.1} parent=35 // pred_check
          %p12044 = pneg %p129
        $region50: #{tpu_custom_call.1} parent=35 // pred_check_branch
          %12046 = sbr.rel (%p12044) target = $region52
        $region51: #{tpu_custom_call.1} parent=35 // pred_region
          %s12047 = smul.u32 2, %s22
          %s12049 = ssub.s32 12288, 12288
          %12050 = vsyncadd %s12040, %s12049
          %s12051 = smul.addr %s12047, 48
          %s12052 = smul.addr %s12051, 128
          %s12053 = scalar_lea.hbm %s4, %s12052
          %s12054 = sshll.u32 %s12043, 4
          %s12055 = int_to_ptr.vmem [resolvable:$true] %s12054
          %12060 = dma.vmem_to_hbm [thread:$0]  %s12055, 12288, %s12053, %s12040, 384, 384, 24
        $region52: #{tpu_custom_call.1} parent=35 // pred_fallthru
          _
      $region36: #{tpu_custom_call.1} parent=5 // pred_fallthru
        _
      %p12061 = scmp.le.s32.totalorder 2, %s17
      // Predicated region
      $region53: #{tpu_custom_call.1} parent=5 // pred_check
        %p12062 = pneg %p12061
      $region54: #{tpu_custom_call.1} parent=5 // pred_check_branch
        %12064 = sbr.rel (%p12062) target = $region56
      $region55: #{tpu_custom_call.1} parent=5 // pred_region
        %s12065 = ssub.s32 %s17, 2
        // Predicated region
        $region57: #{tpu_custom_call.1} parent=55 // pred_check
          %p12066 = pneg %p135
        $region58: #{tpu_custom_call.1} parent=55 // pred_check_branch
          %12068 = sbr.rel (%p12066) target = $region60
        $region59: #{tpu_custom_call.1} parent=55 // pred_region
          %s12069 = sand.u32 %s120, 1
          %s12070 = scalar_lea.sflag [#allocation5], %s12069
          %s12071 = sand.u32 %s120, 1
          %s12072 = smul.addr %s12071, 768
          %s12073 = scalar_lea.vmem [#allocation9], %s12072
          %12074 = dma.done %s12070, 12288
        $region60: #{tpu_custom_call.1} parent=55 // pred_fallthru
          _
      $region56: #{tpu_custom_call.1} parent=5 // pred_fallthru
        _
    $region6: #{tpu_custom_call.1} parent=1 // loop_footer
      %s21 = sadd.s32 1, %s17
    $region7: #{tpu_custom_call.1} parent=1 // loop_footer_branch
      %16 = sbr.rel target = $region3
    $region8: #{tpu_custom_call.1} parent=1 // loop_exit
      _
    %12075 = vsyncpa [#allocation4], 1
    %s12076 = scalar_lea.sflag [#allocation4], 1
    %12077 = vsyncpa %s12076, 1
    %12078 = vsyncpa [#allocation7], 1
    %12079 = vsyncpa [#allocation5], 1
    %s12080 = scalar_lea.sflag [#allocation5], 1
    %12081 = vsyncpa %s12080, 1

</llo_original>
